<compile_context>
chip_gen: v7x
topology: tpu7x:2x2x1
jax: 0.10.0
libtpu: 0.0.40
codegen_flags: <defaults>
</compile_context>

<pallas_src>
import numpy as np

import jax
import jax.numpy as jnp
from jax import lax
from jax.experimental import pallas as pl
from jax.experimental.pallas import tpu as pltpu


BT = 8  # images processed per grid step (batch tile)


# ----------------------------------------------------------------------------
# Fused Pallas kernel
# ----------------------------------------------------------------------------
def _bmm(a, b):
    """Batched (Bt, M, K) @ (Bt, K, N) -> (Bt, M, N) on the MXU."""
    return lax.dot_general(
        a, b, (((2,), (1,)), ((0,), (0,))), preferred_element_type=jnp.float32
    )


def _mm_shared(a, w2d):
    """Batched (Bt, M, K) @ shared (K, N) weight: broadcast rhs once, then _bmm."""
    w = jnp.broadcast_to(w2d[None], (a.shape[0],) + w2d.shape)
    return _bmm(a, w)


def _lenet_fused_kernel(
    x_ref,      # (Bt, 32, 32)   input images (Cin = 1 squeezed)
    w1_ref,     # (5, 32, 168)   conv1 banded weights, one slab per row tap di
    b1_ref,     # (1, 168)       conv1 bias, repeated per output column
    sw1_ref,    # (167, 84)      pool1 width 0/1 selector
    sh1_ref,    # (Bt, 14, 27)   pool1 height 0/1 selector (pre-broadcast over Bt)
    w2_ref,     # (5, 84, 160)   conv2 banded weights, one slab per row tap di
    b2_ref,     # (1, 160)       conv2 bias, repeated per output column
    sw2_ref,    # (159, 80)      pool2 width 0/1 selector
    fc1w_ref,   # (400, 128)     fc1 (K, N): rows permuted to kernel flatten order
    fc1b_ref,   # (1, 128)
    fc2w_ref,   # (128, 128)
    fc2b_ref,   # (1, 128)
    fc3w_ref,   # (128, 128)
    fc3b_ref,   # (1, 128)
    o_ref,      # (Bt, 128)      lane-dense output (cols 0:2 = logits)
):
    x = x_ref[...]                                             # (Bt, 32, 32)

    # ---- conv1 (1 -> 6, 5x5, valid) : 5 accumulated banded MXU GEMMs --------
    # h1[b, h, co*28 + w] = sum_{di,dj} x[b, h+di, w+dj] * w1[co, di, dj]
    h1 = _mm_shared(x[:, 0:28, :], w1_ref[0])
    for di in range(1, 5):
        h1 = h1 + _mm_shared(x[:, di:di + 28, :], w1_ref[di])
    h1 = jnp.maximum(h1 + b1_ref[...][None], 0.0)              # (Bt, 28, 168)

    # ---- pool1 2x2/2 : lanes (width) then sublanes (height) -----------------
    mw1 = jnp.maximum(h1[:, :, :-1], h1[:, :, 1:])             # (Bt, 28, 167)
    v1 = _mm_shared(mw1, sw1_ref[...])                         # (Bt, 28, 84)
    mh1 = jnp.maximum(v1[:, :-1, :], v1[:, 1:, :])             # (Bt, 27, 84)
    p1 = _bmm(sh1_ref[...], mh1)                               # (Bt, 14, 84)

    # ---- conv2 (6 -> 16, 5x5, valid) : 5 accumulated banded MXU GEMMs -------
    # h2[b, h, co*10 + w] = sum_{ci,di,dj} p1[b, h+di, ci*14 + w+dj] * w2[co,ci,di,dj]
    h2 = _mm_shared(p1[:, 0:10, :], w2_ref[0])
    for di in range(1, 5):
        h2 = h2 + _mm_shared(p1[:, di:di + 10, :], w2_ref[di])
    h2 = jnp.maximum(h2 + b2_ref[...][None], 0.0)              # (Bt, 10, 160)

    # ---- pool2 width, then height fused with the NCHW flatten ---------------
    mw2 = jnp.maximum(h2[:, :, :-1], h2[:, :, 1:])             # (Bt, 10, 159)
    v2 = _mm_shared(mw2, sw2_ref[...])                         # (Bt, 10, 80)
    mh2 = jnp.maximum(v2[:, :-1, :], v2[:, 1:, :])             # (Bt, 9, 80)
    # Picking the even rows of the pairwise max completes the 2x2 pool; the
    # lane order (h*80 + co*5 + w) is matched by the fc1 weight-row permutation.
    flat = jnp.concatenate(
        [mh2[:, 2 * i:2 * i + 1, :] for i in range(5)], axis=-1
    )[:, 0, :]                                                 # (Bt, 400)

    # ---- fully connected head (lane-dense, zero-padded to 128 lanes) --------
    y = jnp.dot(flat, fc1w_ref[...], preferred_element_type=jnp.float32) + fc1b_ref[...]
    y = jnp.maximum(y, 0.0)
    y = jnp.dot(y, fc2w_ref[...], preferred_element_type=jnp.float32) + fc2b_ref[...]
    y = jnp.maximum(y, 0.0)
    y = jnp.dot(y, fc3w_ref[...], preferred_element_type=jnp.float32) + fc3b_ref[...]
    o_ref[...] = y.astype(o_ref.dtype)


# ----------------------------------------------------------------------------
# Host-side wrapper (single pallas_call per forward, grid over the batch)
# ----------------------------------------------------------------------------
def _rep_spec(arr):
    """Full-array block replicated across the batch grid (fetched once)."""
    zeros = (0,) * arr.ndim
    return pl.BlockSpec(arr.shape, lambda i, _z=zeros: _z)


_WEIGHT_ORDER = ("w1", "b1", "sw1", "sh1", "w2", "b2", "sw2",
                 "fc1w", "fc1b", "fc2w", "fc2b", "fc3w", "fc3b")


@jax.jit
def lenet_forward(kparams, x):
    """x: (B, 1, 32, 32) float32 NCHW (as in the PyTorch module). Returns (B, 2)."""
    B = x.shape[0]
    x3 = x.reshape(B, 32, 32).astype(jnp.float32)
    pad = (-B) % BT
    if pad:
        x3 = jnp.concatenate([x3, jnp.zeros((pad, 32, 32), jnp.float32)], axis=0)
    bp = B + pad

    weights = tuple(kparams[k] for k in _WEIGHT_ORDER)
    in_specs = [pl.BlockSpec((BT, 32, 32), lambda i: (i, 0, 0))]
    in_specs += [_rep_spec(w) for w in weights]

    out = pl.pallas_call(
        _lenet_fused_kernel,
        out_shape=jax.ShapeDtypeStruct((bp, 128), jnp.float32),
        grid=(bp // BT,),
        in_specs=in_specs,
        out_specs=pl.BlockSpec((BT, 128), lambda i: (i, 0)),
        compiler_params=pltpu.CompilerParams(
            # batch tiles are independent -> v7x's two TensorCores split them
            dimension_semantics=("parallel",),
        ),
    )(x3, *weights)
    return out[:B, :2]


# ----------------------------------------------------------------------------
# Parameters (PyTorch layout) + one-time host repack into the kernel layout
# ----------------------------------------------------------------------------
def init_lenet_params(seed=0):
    keys = jax.random.split(jax.random.PRNGKey(seed), 10)

    def uni(key, shape, bound):
        return jax.random.uniform(key, shape, jnp.float32, -bound, bound)

    def conv(kw, kb, cout, cin, k):
        bound = 1.0 / float(cin * k * k) ** 0.5
        return uni(kw, (cout, cin, k, k), bound), uni(kb, (cout,), bound)

    def lin(kw, kb, cout, cin):
        bound = 1.0 / float(cin) ** 0.5
        return uni(kw, (cout, cin), bound), uni(kb, (cout,), bound)

    p = {}
    p["conv1_w"], p["conv1_b"] = conv(keys[0], keys[1], 6, 1, 5)
    p["conv2_w"], p["conv2_b"] = conv(keys[2], keys[3], 16, 6, 5)
    # conv3 is defined in the PyTorch __init__ but never used in forward(); skipped.
    p["fc1_w"], p["fc1_b"] = lin(keys[4], keys[5], 120, 16 * 5 * 5)
    p["fc2_w"], p["fc2_b"] = lin(keys[6], keys[7], 84, 120)
    p["fc3_w"], p["fc3_b"] = lin(keys[8], keys[9], 2, 84)
    return p


def prepare_kernel_params(p, bt=BT):
    """One-time host-side repack: banded conv GEMM matrices, 0/1 pool selectors,
    FC weights pre-transposed to (K, N), zero-padded to 128 lanes, and the fc1
    rows permuted to the kernel's flatten order (h*80 + co*5 + w)."""
    f32 = np.float32
    c1w = np.asarray(p["conv1_w"], f32)            # (6, 1, 5, 5)
    c1b = np.asarray(p["conv1_b"], f32)            # (6,)
    c2w = np.asarray(p["conv2_w"], f32)            # (16, 6, 5, 5)
    c2b = np.asarray(p["conv2_b"], f32)            # (16,)

    # conv1 banded: w1[di, wj+dj, co*28+wj] = c1w[co, 0, di, dj]
    w1 = np.zeros((5, 32, 6 * 28), f32)
    for co in range(6):
        for di in range(5):
            for dj in range(5):
                for wj in range(28):
                    w1[di, wj + dj, co * 28 + wj] = c1w[co, 0, di, dj]
    b1 = np.repeat(c1b, 28)[None, :]               # (1, 168)

    # conv2 banded: w2[di, ci*14+wj+dj, co*10+wj] = c2w[co, ci, di, dj]
    w2 = np.zeros((5, 6 * 14, 16 * 10), f32)
    for co in range(16):
        for ci in range(6):
            for di in range(5):
                for dj in range(5):
                    for wj in range(10):
                        w2[di, ci * 14 + wj + dj, co * 10 + wj] = c2w[co, ci, di, dj]
    b2 = np.repeat(c2b, 10)[None, :]               # (1, 160)

    # pool width selectors (exact: one 1.0 per column)
    sw1 = np.zeros((6 * 28 - 1, 6 * 14), f32)
    for co in range(6):
        for j in range(14):
            sw1[co * 28 + 2 * j, co * 14 + j] = 1.0
    sw2 = np.zeros((16 * 10 - 1, 16 * 5), f32)
    for co in range(16):
        for j in range(5):
            sw2[co * 10 + 2 * j, co * 5 + j] = 1.0

    # pool1 height selector, pre-broadcast over the batch tile (O(bt), not O(B^2))
    sh1_base = np.zeros((14, 27), f32)
    for i in range(14):
        sh1_base[i, 2 * i] = 1.0
    sh1 = np.broadcast_to(sh1_base[None], (bt, 14, 27)).copy()

    # fc1: kernel flatten lane order k' = h*80 + co*5 + w  <->  torch k = co*25 + h*5 + w
    f1w = np.asarray(p["fc1_w"], f32)              # (120, 400)
    fc1w = np.zeros((400, 128), f32)
    for co in range(16):
        for h in range(5):
            for w in range(5):
                fc1w[h * 80 + co * 5 + w, :120] = f1w[:, co * 25 + h * 5 + w]
    fc1b = np.zeros((1, 128), f32)
    fc1b[0, :120] = np.asarray(p["fc1_b"], f32)

    fc2w = np.zeros((128, 128), f32)
    fc2w[:120, :84] = np.asarray(p["fc2_w"], f32).T
    fc2b = np.zeros((1, 128), f32)
    fc2b[0, :84] = np.asarray(p["fc2_b"], f32)

    fc3w = np.zeros((128, 128), f32)
    fc3w[:84, :2] = np.asarray(p["fc3_w"], f32).T
    fc3b = np.zeros((1, 128), f32)
    fc3b[0, :2] = np.asarray(p["fc3_b"], f32)

    out = dict(w1=w1, b1=b1, sw1=sw1, sh1=sh1, w2=w2, b2=b2, sw2=sw2,
               fc1w=fc1w, fc1b=fc1b, fc2w=fc2w, fc2b=fc2b, fc3w=fc3w, fc3b=fc3b)
    return {k: jnp.asarray(v) for k, v in out.items()}


# ----------------------------------------------------------------------------
# Pure-JAX reference (for self-checking the fused kernel)
# ----------------------------------------------------------------------------
@jax.jit
def lenet_reference(p, x):
    hp = lax.Precision.HIGHEST

    def conv(v, w, b):
        dn = lax.conv_dimension_numbers(v.shape, w.shape, ("NCHW", "OIHW", "NCHW"))
        return lax.conv_general_dilated(
            v, w, (1, 1), "VALID", dimension_numbers=dn, precision=hp
        ) + b[None, :, None, None]

    def pool(v):
        b, c, h, w = v.shape
        return v.reshape(b, c, h // 2, 2, w // 2, 2).max(axis=(3, 5))

    h = pool(jax.nn.relu(conv(x, p["conv1_w"], p["conv1_b"])))
    h = pool(jax.nn.relu(conv(h, p["conv2_w"], p["conv2_b"])))
    h = h.reshape(h.shape[0], -1)
    h = jax.nn.relu(jnp.dot(h, p["fc1_w"].T, precision=hp) + p["fc1_b"])
    h = jax.nn.relu(jnp.dot(h, p["fc2_w"].T, precision=hp) + p["fc2_b"])
    return jnp.dot(h, p["fc3_w"].T, precision=hp) + p["fc3_b"]


if __name__ == "__main__":
    # fc1 hard-codes 16*5*5 inputs, which implies 1x32x32 input images.
    batch = 16  # two grid steps of BT = 8
    x = jax.random.normal(jax.random.PRNGKey(0), (batch, 1, 32, 32), jnp.float32)

    params = init_lenet_params(seed=0)
    kparams = prepare_kernel_params(params, bt=BT)

    out = jax.block_until_ready(lenet_forward(kparams, x))
    assert out.shape == (batch, 2) and out.dtype == jnp.float32

    ref = jax.block_until_ready(lenet_reference(params, x))
    np.testing.assert_allclose(np.asarray(out), np.asarray(ref), rtol=1e-3, atol=1e-3)

    print("KERNEL_OK")
</pallas_src>

<mosaic_0001>
module attributes {stable_mosaic.version = 11 : i64} {
  func.func @_lenet_fused_kernel(%arg0: i32, %arg1: memref<8x32x32xf32, #tpu.memory_space<vmem>>, %arg2: memref<5x32x168xf32, #tpu.memory_space<vmem>>, %arg3: memref<1x168xf32, #tpu.memory_space<vmem>>, %arg4: memref<167x84xf32, #tpu.memory_space<vmem>>, %arg5: memref<8x14x27xf32, #tpu.memory_space<vmem>>, %arg6: memref<5x84x160xf32, #tpu.memory_space<vmem>>, %arg7: memref<1x160xf32, #tpu.memory_space<vmem>>, %arg8: memref<159x80xf32, #tpu.memory_space<vmem>>, %arg9: memref<400x128xf32, #tpu.memory_space<vmem>>, %arg10: memref<1x128xf32, #tpu.memory_space<vmem>>, %arg11: memref<128x128xf32, #tpu.memory_space<vmem>>, %arg12: memref<1x128xf32, #tpu.memory_space<vmem>>, %arg13: memref<128x128xf32, #tpu.memory_space<vmem>>, %arg14: memref<1x128xf32, #tpu.memory_space<vmem>>, %arg15: memref<8x128xf32, #tpu.memory_space<vmem>>) attributes {dimension_semantics = [#tpu.dimension_semantics<parallel>], iteration_bounds = array<i64: 2>, scalar_prefetch = 0 : i64, scratch_operands = 0 : i64, tpu.core_type = #tpu.core_type<tc>, window_params = [{transform_indices = @transform_0, window_bounds = array<i64: 8, 32, 32>}, {pipeline_mode = #tpu.pipeline_mode<synchronous>, transform_indices = @transform_1, window_bounds = array<i64: 5, 32, 168>}, {pipeline_mode = #tpu.pipeline_mode<synchronous>, transform_indices = @transform_2, window_bounds = array<i64: 1, 168>}, {pipeline_mode = #tpu.pipeline_mode<synchronous>, transform_indices = @transform_3, window_bounds = array<i64: 167, 84>}, {pipeline_mode = #tpu.pipeline_mode<synchronous>, transform_indices = @transform_4, window_bounds = array<i64: 8, 14, 27>}, {pipeline_mode = #tpu.pipeline_mode<synchronous>, transform_indices = @transform_5, window_bounds = array<i64: 5, 84, 160>}, {pipeline_mode = #tpu.pipeline_mode<synchronous>, transform_indices = @transform_6, window_bounds = array<i64: 1, 160>}, {pipeline_mode = #tpu.pipeline_mode<synchronous>, transform_indices = @transform_7, window_bounds = array<i64: 159, 80>}, {pipeline_mode = #tpu.pipeline_mode<synchronous>, transform_indices = @transform_8, window_bounds = array<i64: 400, 128>}, {pipeline_mode = #tpu.pipeline_mode<synchronous>, transform_indices = @transform_9, window_bounds = array<i64: 1, 128>}, {pipeline_mode = #tpu.pipeline_mode<synchronous>, transform_indices = @transform_10, window_bounds = array<i64: 128, 128>}, {pipeline_mode = #tpu.pipeline_mode<synchronous>, transform_indices = @transform_11, window_bounds = array<i64: 1, 128>}, {pipeline_mode = #tpu.pipeline_mode<synchronous>, transform_indices = @transform_12, window_bounds = array<i64: 128, 128>}, {pipeline_mode = #tpu.pipeline_mode<synchronous>, transform_indices = @transform_13, window_bounds = array<i64: 1, 128>}, {transform_indices = @transform_14, window_bounds = array<i64: 8, 128>}]} {
    %c0 = arith.constant 0 : index
    %c0_0 = arith.constant 0 : index
    %c0_1 = arith.constant 0 : index
    %0 = vector.load %arg1[%c0, %c0_0, %c0_1] : memref<8x32x32xf32, #tpu.memory_space<vmem>>, vector<8x32x32xf32>
    %1 = vector.extract_strided_slice %0 {offsets = [0, 0, 0], sizes = [8, 28, 32], strides = [1, 1, 1]} : vector<8x32x32xf32> to vector<8x28x32xf32>
    %c0_2 = arith.constant 0 : index
    %c0_3 = arith.constant 0 : index
    %c0_4 = arith.constant 0 : index
    %2 = vector.load %arg2[%c0_2, %c0_3, %c0_4] : memref<5x32x168xf32, #tpu.memory_space<vmem>>, vector<1x32x168xf32>
    %3 = vector.shape_cast %2 : vector<1x32x168xf32> to vector<32x168xf32>
    %4 = vector.shape_cast %3 : vector<32x168xf32> to vector<1x32x168xf32>
    %5 = vector.shape_cast %4 : vector<1x32x168xf32> to vector<1x32x168xf32>
    %6 = vector.broadcast %5 : vector<1x32x168xf32> to vector<8x32x168xf32>
    %cst = arith.constant dense<0.000000e+00> : vector<8x28x168xf32>
    %7 = tpu.matmul %1, %6, %cst {dimension_numbers = #tpu.dot_dimension_numbers<[2], [1], [1], [2], [0, 0, 0, 1, 1, 2], [0], [0]>} : vector<8x28x32xf32>, vector<8x32x168xf32>, vector<8x28x168xf32> -> vector<8x28x168xf32>
    %8 = vector.extract_strided_slice %0 {offsets = [0, 1, 0], sizes = [8, 28, 32], strides = [1, 1, 1]} : vector<8x32x32xf32> to vector<8x28x32xf32>
    %c1 = arith.constant 1 : index
    %c0_5 = arith.constant 0 : index
    %c0_6 = arith.constant 0 : index
    %9 = vector.load %arg2[%c1, %c0_5, %c0_6] : memref<5x32x168xf32, #tpu.memory_space<vmem>>, vector<1x32x168xf32>
    %10 = vector.shape_cast %9 : vector<1x32x168xf32> to vector<32x168xf32>
    %11 = vector.shape_cast %10 : vector<32x168xf32> to vector<1x32x168xf32>
    %12 = vector.shape_cast %11 : vector<1x32x168xf32> to vector<1x32x168xf32>
    %13 = vector.broadcast %12 : vector<1x32x168xf32> to vector<8x32x168xf32>
    %cst_7 = arith.constant dense<0.000000e+00> : vector<8x28x168xf32>
    %14 = tpu.matmul %8, %13, %cst_7 {dimension_numbers = #tpu.dot_dimension_numbers<[2], [1], [1], [2], [0, 0, 0, 1, 1, 2], [0], [0]>} : vector<8x28x32xf32>, vector<8x32x168xf32>, vector<8x28x168xf32> -> vector<8x28x168xf32>
    %15 = arith.addf %7, %14 : vector<8x28x168xf32>
    %16 = vector.extract_strided_slice %0 {offsets = [0, 2, 0], sizes = [8, 28, 32], strides = [1, 1, 1]} : vector<8x32x32xf32> to vector<8x28x32xf32>
    %c2 = arith.constant 2 : index
    %c0_8 = arith.constant 0 : index
    %c0_9 = arith.constant 0 : index
    %17 = vector.load %arg2[%c2, %c0_8, %c0_9] : memref<5x32x168xf32, #tpu.memory_space<vmem>>, vector<1x32x168xf32>
    %18 = vector.shape_cast %17 : vector<1x32x168xf32> to vector<32x168xf32>
    %19 = vector.shape_cast %18 : vector<32x168xf32> to vector<1x32x168xf32>
    %20 = vector.shape_cast %19 : vector<1x32x168xf32> to vector<1x32x168xf32>
    %21 = vector.broadcast %20 : vector<1x32x168xf32> to vector<8x32x168xf32>
    %cst_10 = arith.constant dense<0.000000e+00> : vector<8x28x168xf32>
    %22 = tpu.matmul %16, %21, %cst_10 {dimension_numbers = #tpu.dot_dimension_numbers<[2], [1], [1], [2], [0, 0, 0, 1, 1, 2], [0], [0]>} : vector<8x28x32xf32>, vector<8x32x168xf32>, vector<8x28x168xf32> -> vector<8x28x168xf32>
    %23 = arith.addf %15, %22 : vector<8x28x168xf32>
    %24 = vector.extract_strided_slice %0 {offsets = [0, 3, 0], sizes = [8, 28, 32], strides = [1, 1, 1]} : vector<8x32x32xf32> to vector<8x28x32xf32>
    %c3 = arith.constant 3 : index
    %c0_11 = arith.constant 0 : index
    %c0_12 = arith.constant 0 : index
    %25 = vector.load %arg2[%c3, %c0_11, %c0_12] : memref<5x32x168xf32, #tpu.memory_space<vmem>>, vector<1x32x168xf32>
    %26 = vector.shape_cast %25 : vector<1x32x168xf32> to vector<32x168xf32>
    %27 = vector.shape_cast %26 : vector<32x168xf32> to vector<1x32x168xf32>
    %28 = vector.shape_cast %27 : vector<1x32x168xf32> to vector<1x32x168xf32>
    %29 = vector.broadcast %28 : vector<1x32x168xf32> to vector<8x32x168xf32>
    %cst_13 = arith.constant dense<0.000000e+00> : vector<8x28x168xf32>
    %30 = tpu.matmul %24, %29, %cst_13 {dimension_numbers = #tpu.dot_dimension_numbers<[2], [1], [1], [2], [0, 0, 0, 1, 1, 2], [0], [0]>} : vector<8x28x32xf32>, vector<8x32x168xf32>, vector<8x28x168xf32> -> vector<8x28x168xf32>
    %31 = arith.addf %23, %30 : vector<8x28x168xf32>
    %32 = vector.extract_strided_slice %0 {offsets = [0, 4, 0], sizes = [8, 28, 32], strides = [1, 1, 1]} : vector<8x32x32xf32> to vector<8x28x32xf32>
    %c4 = arith.constant 4 : index
    %c0_14 = arith.constant 0 : index
    %c0_15 = arith.constant 0 : index
    %33 = vector.load %arg2[%c4, %c0_14, %c0_15] : memref<5x32x168xf32, #tpu.memory_space<vmem>>, vector<1x32x168xf32>
    %34 = vector.shape_cast %33 : vector<1x32x168xf32> to vector<32x168xf32>
    %35 = vector.shape_cast %34 : vector<32x168xf32> to vector<1x32x168xf32>
    %36 = vector.shape_cast %35 : vector<1x32x168xf32> to vector<1x32x168xf32>
    %37 = vector.broadcast %36 : vector<1x32x168xf32> to vector<8x32x168xf32>
    %cst_16 = arith.constant dense<0.000000e+00> : vector<8x28x168xf32>
    %38 = tpu.matmul %32, %37, %cst_16 {dimension_numbers = #tpu.dot_dimension_numbers<[2], [1], [1], [2], [0, 0, 0, 1, 1, 2], [0], [0]>} : vector<8x28x32xf32>, vector<8x32x168xf32>, vector<8x28x168xf32> -> vector<8x28x168xf32>
    %39 = arith.addf %31, %38 : vector<8x28x168xf32>
    %c0_17 = arith.constant 0 : index
    %c0_18 = arith.constant 0 : index
    %40 = vector.load %arg3[%c0_17, %c0_18] : memref<1x168xf32, #tpu.memory_space<vmem>>, vector<1x168xf32>
    %41 = vector.shape_cast %40 : vector<1x168xf32> to vector<1x1x168xf32>
    %42 = vector.broadcast %41 : vector<1x1x168xf32> to vector<8x28x168xf32>
    %43 = arith.addf %39, %42 : vector<8x28x168xf32>
    %cst_19 = arith.constant 0.000000e+00 : f32
    %44 = vector.broadcast %cst_19 : f32 to vector<8x28x168xf32>
    %45 = arith.maximumf %43, %44 : vector<8x28x168xf32>
    %46 = vector.extract_strided_slice %45 {offsets = [0, 0, 0], sizes = [8, 28, 167], strides = [1, 1, 1]} : vector<8x28x168xf32> to vector<8x28x167xf32>
    %47 = vector.extract_strided_slice %45 {offsets = [0, 0, 1], sizes = [8, 28, 167], strides = [1, 1, 1]} : vector<8x28x168xf32> to vector<8x28x167xf32>
    %48 = arith.maximumf %46, %47 : vector<8x28x167xf32>
    %c0_20 = arith.constant 0 : index
    %c0_21 = arith.constant 0 : index
    %49 = vector.load %arg4[%c0_20, %c0_21] : memref<167x84xf32, #tpu.memory_space<vmem>>, vector<167x84xf32>
    %50 = vector.shape_cast %49 : vector<167x84xf32> to vector<1x167x84xf32>
    %51 = vector.shape_cast %50 : vector<1x167x84xf32> to vector<1x167x84xf32>
    %52 = vector.broadcast %51 : vector<1x167x84xf32> to vector<8x167x84xf32>
    %cst_22 = arith.constant dense<0.000000e+00> : vector<8x28x84xf32>
    %53 = tpu.matmul %48, %52, %cst_22 {dimension_numbers = #tpu.dot_dimension_numbers<[2], [1], [1], [2], [0, 0, 0, 1, 1, 2], [0], [0]>} : vector<8x28x167xf32>, vector<8x167x84xf32>, vector<8x28x84xf32> -> vector<8x28x84xf32>
    %54 = vector.extract_strided_slice %53 {offsets = [0, 0, 0], sizes = [8, 27, 84], strides = [1, 1, 1]} : vector<8x28x84xf32> to vector<8x27x84xf32>
    %55 = vector.extract_strided_slice %53 {offsets = [0, 1, 0], sizes = [8, 27, 84], strides = [1, 1, 1]} : vector<8x28x84xf32> to vector<8x27x84xf32>
    %56 = arith.maximumf %54, %55 : vector<8x27x84xf32>
    %c0_23 = arith.constant 0 : index
    %c0_24 = arith.constant 0 : index
    %c0_25 = arith.constant 0 : index
    %57 = vector.load %arg5[%c0_23, %c0_24, %c0_25] : memref<8x14x27xf32, #tpu.memory_space<vmem>>, vector<8x14x27xf32>
    %cst_26 = arith.constant dense<0.000000e+00> : vector<8x14x84xf32>
    %58 = tpu.matmul %57, %56, %cst_26 {dimension_numbers = #tpu.dot_dimension_numbers<[2], [1], [1], [2], [0, 0, 0, 1, 1, 2], [0], [0]>} : vector<8x14x27xf32>, vector<8x27x84xf32>, vector<8x14x84xf32> -> vector<8x14x84xf32>
    %59 = vector.extract_strided_slice %58 {offsets = [0, 0, 0], sizes = [8, 10, 84], strides = [1, 1, 1]} : vector<8x14x84xf32> to vector<8x10x84xf32>
    %c0_27 = arith.constant 0 : index
    %c0_28 = arith.constant 0 : index
    %c0_29 = arith.constant 0 : index
    %60 = vector.load %arg6[%c0_27, %c0_28, %c0_29] : memref<5x84x160xf32, #tpu.memory_space<vmem>>, vector<1x84x160xf32>
    %61 = vector.shape_cast %60 : vector<1x84x160xf32> to vector<84x160xf32>
    %62 = vector.shape_cast %61 : vector<84x160xf32> to vector<1x84x160xf32>
    %63 = vector.shape_cast %62 : vector<1x84x160xf32> to vector<1x84x160xf32>
    %64 = vector.broadcast %63 : vector<1x84x160xf32> to vector<8x84x160xf32>
    %cst_30 = arith.constant dense<0.000000e+00> : vector<8x10x160xf32>
    %65 = tpu.matmul %59, %64, %cst_30 {dimension_numbers = #tpu.dot_dimension_numbers<[2], [1], [1], [2], [0, 0, 0, 1, 1, 2], [0], [0]>} : vector<8x10x84xf32>, vector<8x84x160xf32>, vector<8x10x160xf32> -> vector<8x10x160xf32>
    %66 = vector.extract_strided_slice %58 {offsets = [0, 1, 0], sizes = [8, 10, 84], strides = [1, 1, 1]} : vector<8x14x84xf32> to vector<8x10x84xf32>
    %c1_31 = arith.constant 1 : index
    %c0_32 = arith.constant 0 : index
    %c0_33 = arith.constant 0 : index
    %67 = vector.load %arg6[%c1_31, %c0_32, %c0_33] : memref<5x84x160xf32, #tpu.memory_space<vmem>>, vector<1x84x160xf32>
    %68 = vector.shape_cast %67 : vector<1x84x160xf32> to vector<84x160xf32>
    %69 = vector.shape_cast %68 : vector<84x160xf32> to vector<1x84x160xf32>
    %70 = vector.shape_cast %69 : vector<1x84x160xf32> to vector<1x84x160xf32>
    %71 = vector.broadcast %70 : vector<1x84x160xf32> to vector<8x84x160xf32>
    %cst_34 = arith.constant dense<0.000000e+00> : vector<8x10x160xf32>
    %72 = tpu.matmul %66, %71, %cst_34 {dimension_numbers = #tpu.dot_dimension_numbers<[2], [1], [1], [2], [0, 0, 0, 1, 1, 2], [0], [0]>} : vector<8x10x84xf32>, vector<8x84x160xf32>, vector<8x10x160xf32> -> vector<8x10x160xf32>
    %73 = arith.addf %65, %72 : vector<8x10x160xf32>
    %74 = vector.extract_strided_slice %58 {offsets = [0, 2, 0], sizes = [8, 10, 84], strides = [1, 1, 1]} : vector<8x14x84xf32> to vector<8x10x84xf32>
    %c2_35 = arith.constant 2 : index
    %c0_36 = arith.constant 0 : index
    %c0_37 = arith.constant 0 : index
    %75 = vector.load %arg6[%c2_35, %c0_36, %c0_37] : memref<5x84x160xf32, #tpu.memory_space<vmem>>, vector<1x84x160xf32>
    %76 = vector.shape_cast %75 : vector<1x84x160xf32> to vector<84x160xf32>
    %77 = vector.shape_cast %76 : vector<84x160xf32> to vector<1x84x160xf32>
    %78 = vector.shape_cast %77 : vector<1x84x160xf32> to vector<1x84x160xf32>
    %79 = vector.broadcast %78 : vector<1x84x160xf32> to vector<8x84x160xf32>
    %cst_38 = arith.constant dense<0.000000e+00> : vector<8x10x160xf32>
    %80 = tpu.matmul %74, %79, %cst_38 {dimension_numbers = #tpu.dot_dimension_numbers<[2], [1], [1], [2], [0, 0, 0, 1, 1, 2], [0], [0]>} : vector<8x10x84xf32>, vector<8x84x160xf32>, vector<8x10x160xf32> -> vector<8x10x160xf32>
    %81 = arith.addf %73, %80 : vector<8x10x160xf32>
    %82 = vector.extract_strided_slice %58 {offsets = [0, 3, 0], sizes = [8, 10, 84], strides = [1, 1, 1]} : vector<8x14x84xf32> to vector<8x10x84xf32>
    %c3_39 = arith.constant 3 : index
    %c0_40 = arith.constant 0 : index
    %c0_41 = arith.constant 0 : index
    %83 = vector.load %arg6[%c3_39, %c0_40, %c0_41] : memref<5x84x160xf32, #tpu.memory_space<vmem>>, vector<1x84x160xf32>
    %84 = vector.shape_cast %83 : vector<1x84x160xf32> to vector<84x160xf32>
    %85 = vector.shape_cast %84 : vector<84x160xf32> to vector<1x84x160xf32>
    %86 = vector.shape_cast %85 : vector<1x84x160xf32> to vector<1x84x160xf32>
    %87 = vector.broadcast %86 : vector<1x84x160xf32> to vector<8x84x160xf32>
    %cst_42 = arith.constant dense<0.000000e+00> : vector<8x10x160xf32>
    %88 = tpu.matmul %82, %87, %cst_42 {dimension_numbers = #tpu.dot_dimension_numbers<[2], [1], [1], [2], [0, 0, 0, 1, 1, 2], [0], [0]>} : vector<8x10x84xf32>, vector<8x84x160xf32>, vector<8x10x160xf32> -> vector<8x10x160xf32>
    %89 = arith.addf %81, %88 : vector<8x10x160xf32>
    %90 = vector.extract_strided_slice %58 {offsets = [0, 4, 0], sizes = [8, 10, 84], strides = [1, 1, 1]} : vector<8x14x84xf32> to vector<8x10x84xf32>
    %c4_43 = arith.constant 4 : index
    %c0_44 = arith.constant 0 : index
    %c0_45 = arith.constant 0 : index
    %91 = vector.load %arg6[%c4_43, %c0_44, %c0_45] : memref<5x84x160xf32, #tpu.memory_space<vmem>>, vector<1x84x160xf32>
    %92 = vector.shape_cast %91 : vector<1x84x160xf32> to vector<84x160xf32>
    %93 = vector.shape_cast %92 : vector<84x160xf32> to vector<1x84x160xf32>
    %94 = vector.shape_cast %93 : vector<1x84x160xf32> to vector<1x84x160xf32>
    %95 = vector.broadcast %94 : vector<1x84x160xf32> to vector<8x84x160xf32>
    %cst_46 = arith.constant dense<0.000000e+00> : vector<8x10x160xf32>
    %96 = tpu.matmul %90, %95, %cst_46 {dimension_numbers = #tpu.dot_dimension_numbers<[2], [1], [1], [2], [0, 0, 0, 1, 1, 2], [0], [0]>} : vector<8x10x84xf32>, vector<8x84x160xf32>, vector<8x10x160xf32> -> vector<8x10x160xf32>
    %97 = arith.addf %89, %96 : vector<8x10x160xf32>
    %c0_47 = arith.constant 0 : index
    %c0_48 = arith.constant 0 : index
    %98 = vector.load %arg7[%c0_47, %c0_48] : memref<1x160xf32, #tpu.memory_space<vmem>>, vector<1x160xf32>
    %99 = vector.shape_cast %98 : vector<1x160xf32> to vector<1x1x160xf32>
    %100 = vector.broadcast %99 : vector<1x1x160xf32> to vector<8x10x160xf32>
    %101 = arith.addf %97, %100 : vector<8x10x160xf32>
    %cst_49 = arith.constant 0.000000e+00 : f32
    %102 = vector.broadcast %cst_49 : f32 to vector<8x10x160xf32>
    %103 = arith.maximumf %101, %102 : vector<8x10x160xf32>
    %104 = vector.extract_strided_slice %103 {offsets = [0, 0, 0], sizes = [8, 10, 159], strides = [1, 1, 1]} : vector<8x10x160xf32> to vector<8x10x159xf32>
    %105 = vector.extract_strided_slice %103 {offsets = [0, 0, 1], sizes = [8, 10, 159], strides = [1, 1, 1]} : vector<8x10x160xf32> to vector<8x10x159xf32>
    %106 = arith.maximumf %104, %105 : vector<8x10x159xf32>
    %c0_50 = arith.constant 0 : index
    %c0_51 = arith.constant 0 : index
    %107 = vector.load %arg8[%c0_50, %c0_51] : memref<159x80xf32, #tpu.memory_space<vmem>>, vector<159x80xf32>
    %108 = vector.shape_cast %107 : vector<159x80xf32> to vector<1x159x80xf32>
    %109 = vector.shape_cast %108 : vector<1x159x80xf32> to vector<1x159x80xf32>
    %110 = vector.broadcast %109 : vector<1x159x80xf32> to vector<8x159x80xf32>
    %cst_52 = arith.constant dense<0.000000e+00> : vector<8x10x80xf32>
    %111 = tpu.matmul %106, %110, %cst_52 {dimension_numbers = #tpu.dot_dimension_numbers<[2], [1], [1], [2], [0, 0, 0, 1, 1, 2], [0], [0]>} : vector<8x10x159xf32>, vector<8x159x80xf32>, vector<8x10x80xf32> -> vector<8x10x80xf32>
    %112 = vector.extract_strided_slice %111 {offsets = [0, 0, 0], sizes = [8, 9, 80], strides = [1, 1, 1]} : vector<8x10x80xf32> to vector<8x9x80xf32>
    %113 = vector.extract_strided_slice %111 {offsets = [0, 1, 0], sizes = [8, 9, 80], strides = [1, 1, 1]} : vector<8x10x80xf32> to vector<8x9x80xf32>
    %114 = arith.maximumf %112, %113 : vector<8x9x80xf32>
    %115 = vector.extract_strided_slice %114 {offsets = [0, 0, 0], sizes = [8, 1, 80], strides = [1, 1, 1]} : vector<8x9x80xf32> to vector<8x1x80xf32>
    %116 = vector.extract_strided_slice %114 {offsets = [0, 2, 0], sizes = [8, 1, 80], strides = [1, 1, 1]} : vector<8x9x80xf32> to vector<8x1x80xf32>
    %117 = vector.extract_strided_slice %114 {offsets = [0, 4, 0], sizes = [8, 1, 80], strides = [1, 1, 1]} : vector<8x9x80xf32> to vector<8x1x80xf32>
    %118 = vector.extract_strided_slice %114 {offsets = [0, 6, 0], sizes = [8, 1, 80], strides = [1, 1, 1]} : vector<8x9x80xf32> to vector<8x1x80xf32>
    %119 = vector.extract_strided_slice %114 {offsets = [0, 8, 0], sizes = [8, 1, 80], strides = [1, 1, 1]} : vector<8x9x80xf32> to vector<8x1x80xf32>
    %120 = tpu.concatenate %115, %116, %117, %118, %119 in 2 : vector<8x1x80xf32>, vector<8x1x80xf32>, vector<8x1x80xf32>, vector<8x1x80xf32>, vector<8x1x80xf32> -> vector<8x1x400xf32>
    %121 = vector.shape_cast %120 : vector<8x1x400xf32> to vector<8x400xf32>
    %c0_53 = arith.constant 0 : index
    %c0_54 = arith.constant 0 : index
    %122 = vector.load %arg9[%c0_53, %c0_54] : memref<400x128xf32, #tpu.memory_space<vmem>>, vector<400x128xf32>
    %cst_55 = arith.constant dense<0.000000e+00> : vector<8x128xf32>
    %123 = tpu.matmul %121, %122, %cst_55 {dimension_numbers = #tpu.dot_dimension_numbers<[1], [0], [0], [1], [0, 0, 1, 1], [], []>} : vector<8x400xf32>, vector<400x128xf32>, vector<8x128xf32> -> vector<8x128xf32>
    %c0_56 = arith.constant 0 : index
    %c0_57 = arith.constant 0 : index
    %124 = vector.load %arg10[%c0_56, %c0_57] : memref<1x128xf32, #tpu.memory_space<vmem>>, vector<1x128xf32>
    %125 = vector.broadcast %124 : vector<1x128xf32> to vector<8x128xf32>
    %126 = arith.addf %123, %125 : vector<8x128xf32>
    %cst_58 = arith.constant 0.000000e+00 : f32
    %127 = vector.broadcast %cst_58 : f32 to vector<8x128xf32>
    %128 = arith.maximumf %126, %127 : vector<8x128xf32>
    %c0_59 = arith.constant 0 : index
    %c0_60 = arith.constant 0 : index
    %129 = vector.load %arg11[%c0_59, %c0_60] : memref<128x128xf32, #tpu.memory_space<vmem>>, vector<128x128xf32>
    %cst_61 = arith.constant dense<0.000000e+00> : vector<8x128xf32>
    %130 = tpu.matmul %128, %129, %cst_61 {dimension_numbers = #tpu.dot_dimension_numbers<[1], [0], [0], [1], [0, 0, 1, 1], [], []>} : vector<8x128xf32>, vector<128x128xf32>, vector<8x128xf32> -> vector<8x128xf32>
    %c0_62 = arith.constant 0 : index
    %c0_63 = arith.constant 0 : index
    %131 = vector.load %arg12[%c0_62, %c0_63] : memref<1x128xf32, #tpu.memory_space<vmem>>, vector<1x128xf32>
    %132 = vector.broadcast %131 : vector<1x128xf32> to vector<8x128xf32>
    %133 = arith.addf %130, %132 : vector<8x128xf32>
    %cst_64 = arith.constant 0.000000e+00 : f32
    %134 = vector.broadcast %cst_64 : f32 to vector<8x128xf32>
    %135 = arith.maximumf %133, %134 : vector<8x128xf32>
    %c0_65 = arith.constant 0 : index
    %c0_66 = arith.constant 0 : index
    %136 = vector.load %arg13[%c0_65, %c0_66] : memref<128x128xf32, #tpu.memory_space<vmem>>, vector<128x128xf32>
    %cst_67 = arith.constant dense<0.000000e+00> : vector<8x128xf32>
    %137 = tpu.matmul %135, %136, %cst_67 {dimension_numbers = #tpu.dot_dimension_numbers<[1], [0], [0], [1], [0, 0, 1, 1], [], []>} : vector<8x128xf32>, vector<128x128xf32>, vector<8x128xf32> -> vector<8x128xf32>
    %c0_68 = arith.constant 0 : index
    %c0_69 = arith.constant 0 : index
    %138 = vector.load %arg14[%c0_68, %c0_69] : memref<1x128xf32, #tpu.memory_space<vmem>>, vector<1x128xf32>
    %139 = vector.broadcast %138 : vector<1x128xf32> to vector<8x128xf32>
    %140 = arith.addf %137, %139 : vector<8x128xf32>
    %c0_70 = arith.constant 0 : index
    %c0_71 = arith.constant 0 : index
    %141 = vector.load %arg15[%c0_70, %c0_71] : memref<8x128xf32, #tpu.memory_space<vmem>>, vector<8x128xf32>
    tpu.vector_store %arg15[%c0_70, %c0_71], %140 {strides = array<i32>} : memref<8x128xf32, #tpu.memory_space<vmem>>, vector<8x128xf32>,
    return
  }
  func.func @transform_0(%arg0: i32) -> (i32, i32, i32) {
    %c0_i32 = arith.constant 0 : i32
    %c0_i32_0 = arith.constant 0 : i32
    %c0_i32_1 = arith.constant 0 : i32
    return %arg0, %c0_i32, %c0_i32_0 : i32, i32, i32
  }
  func.func @transform_1(%arg0: i32) -> (i32, i32, i32) {
    %c0_i32 = arith.constant 0 : i32
    %c0_i32_0 = arith.constant 0 : i32
    %c0_i32_1 = arith.constant 0 : i32
    %c0_i32_2 = arith.constant 0 : i32
    return %c0_i32, %c0_i32_0, %c0_i32_1 : i32, i32, i32
  }
  func.func @transform_2(%arg0: i32) -> (i32, i32) {
    %c0_i32 = arith.constant 0 : i32
    %c0_i32_0 = arith.constant 0 : i32
    %c0_i32_1 = arith.constant 0 : i32
    return %c0_i32, %c0_i32_0 : i32, i32
  }
  func.func @transform_3(%arg0: i32) -> (i32, i32) {
    %c0_i32 = arith.constant 0 : i32
    %c0_i32_0 = arith.constant 0 : i32
    %c0_i32_1 = arith.constant 0 : i32
    return %c0_i32, %c0_i32_0 : i32, i32
  }
  func.func @transform_4(%arg0: i32) -> (i32, i32, i32) {
    %c0_i32 = arith.constant 0 : i32
    %c0_i32_0 = arith.constant 0 : i32
    %c0_i32_1 = arith.constant 0 : i32
    %c0_i32_2 = arith.constant 0 : i32
    return %c0_i32, %c0_i32_0, %c0_i32_1 : i32, i32, i32
  }
  func.func @transform_5(%arg0: i32) -> (i32, i32, i32) {
    %c0_i32 = arith.constant 0 : i32
    %c0_i32_0 = arith.constant 0 : i32
    %c0_i32_1 = arith.constant 0 : i32
    %c0_i32_2 = arith.constant 0 : i32
    return %c0_i32, %c0_i32_0, %c0_i32_1 : i32, i32, i32
  }
  func.func @transform_6(%arg0: i32) -> (i32, i32) {
    %c0_i32 = arith.constant 0 : i32
    %c0_i32_0 = arith.constant 0 : i32
    %c0_i32_1 = arith.constant 0 : i32
    return %c0_i32, %c0_i32_0 : i32, i32
  }
  func.func @transform_7(%arg0: i32) -> (i32, i32) {
    %c0_i32 = arith.constant 0 : i32
    %c0_i32_0 = arith.constant 0 : i32
    %c0_i32_1 = arith.constant 0 : i32
    return %c0_i32, %c0_i32_0 : i32, i32
  }
  func.func @transform_8(%arg0: i32) -> (i32, i32) {
    %c0_i32 = arith.constant 0 : i32
    %c0_i32_0 = arith.constant 0 : i32
    %c0_i32_1 = arith.constant 0 : i32
    return %c0_i32, %c0_i32_0 : i32, i32
  }
  func.func @transform_9(%arg0: i32) -> (i32, i32) {
    %c0_i32 = arith.constant 0 : i32
    %c0_i32_0 = arith.constant 0 : i32
    %c0_i32_1 = arith.constant 0 : i32
    return %c0_i32, %c0_i32_0 : i32, i32
  }
  func.func @transform_10(%arg0: i32) -> (i32, i32) {
    %c0_i32 = arith.constant 0 : i32
    %c0_i32_0 = arith.constant 0 : i32
    %c0_i32_1 = arith.constant 0 : i32
    return %c0_i32, %c0_i32_0 : i32, i32
  }
  func.func @transform_11(%arg0: i32) -> (i32, i32) {
    %c0_i32 = arith.constant 0 : i32
    %c0_i32_0 = arith.constant 0 : i32
    %c0_i32_1 = arith.constant 0 : i32
    return %c0_i32, %c0_i32_0 : i32, i32
  }
  func.func @transform_12(%arg0: i32) -> (i32, i32) {
    %c0_i32 = arith.constant 0 : i32
    %c0_i32_0 = arith.constant 0 : i32
    %c0_i32_1 = arith.constant 0 : i32
    return %c0_i32, %c0_i32_0 : i32, i32
  }
  func.func @transform_13(%arg0: i32) -> (i32, i32) {
    %c0_i32 = arith.constant 0 : i32
    %c0_i32_0 = arith.constant 0 : i32
    %c0_i32_1 = arith.constant 0 : i32
    return %c0_i32, %c0_i32_0 : i32, i32
  }
  func.func @transform_14(%arg0: i32) -> (i32, i32) {
    %c0_i32 = arith.constant 0 : i32
    %c0_i32_0 = arith.constant 0 : i32
    return %arg0, %c0_i32 : i32, i32
  }
}

</mosaic_0001>

<llo_original>
// kernel: lenet_forward.1
$region0: #{lenet_forward.1}
  #allocation0 [shape = 'u32[]', space=smem, size = 0x4, offset = 0x4, fixed_abs, tag = 'smem constant byte address 0x4 - core index']
  #allocation1 [shape = 'u32[144,128]{1,0:T(1,128)}', space=vmem, size = 0x12000, scoped, tag = 'internal scratch']
  %s0 = inlined_call_operand.vmem [shape: f32[16,32,32], index: 0, kind: input, shape index: {}]
  %s1 = inlined_call_operand.vmem [shape: f32[5,32,168], index: 1, kind: input, shape index: {}]
  %s2 = inlined_call_operand.vmem [shape: f32[1,168], index: 2, kind: input, shape index: {}]
  %s3 = inlined_call_operand.vmem [shape: f32[167,84], index: 3, kind: input, shape index: {}]
  %s4 = inlined_call_operand.vmem [shape: f32[8,14,27], index: 4, kind: input, shape index: {}]
  %s5 = inlined_call_operand.vmem [shape: f32[5,84,160], index: 5, kind: input, shape index: {}]
  %s6 = inlined_call_operand.vmem [shape: f32[1,160], index: 6, kind: input, shape index: {}]
  %s7 = inlined_call_operand.vmem [shape: f32[159,80], index: 7, kind: input, shape index: {}]
  %s8 = inlined_call_operand.vmem [shape: f32[400,128], index: 8, kind: input, shape index: {}]
  %s9 = inlined_call_operand.vmem [shape: f32[1,128], index: 9, kind: input, shape index: {}]
  %s10 = inlined_call_operand.vmem [shape: f32[128,128], index: 10, kind: input, shape index: {}]
  %s11 = inlined_call_operand.vmem [shape: f32[1,128], index: 11, kind: input, shape index: {}]
  %s12 = inlined_call_operand.vmem [shape: f32[128,128], index: 12, kind: input, shape index: {}]
  %s13 = inlined_call_operand.vmem [shape: f32[1,128], index: 13, kind: input, shape index: {}]
  %s14 = inlined_call_operand.vmem [shape: f32[16,128], index: 14, kind: output, shape index: {}]
  %s15 = sld [smem:[#allocation0]]
  $region89: #{lenet_forward.1} parent=0
    _
  %s17 = ssub.s32 1, %s15
  %s18 = scalar_select 0, %s17, %s15
  loop: start=0, step=1, limit=4
  $region2: #{lenet_forward.1} parent=0 // loop_pre_header
    _
  $region3: #{lenet_forward.1} parent=0 // loop_header
    %s20 = sphi 0, %s24
    %p21 = scmp.ge.s32.totalorder %s20, 4
    %s30 = sphi 0, %s32
    %s33 = sphi 0, %s30
    %s34 = sphi 0, %s33
    %s50 = sphi 0, %s34
    %s54 = sphi 0, %s54
    %s56 = sphi 0, %s54
    %s57 = sphi 0, %s56
    %s71 = sphi 0, %s57
    %s75 = sphi 0, %s75
    %s77 = sphi 0, %s75
    %s78 = sphi 0, %s77
    %s92 = sphi 0, %s78
    %s96 = sphi 0, %s96
    %s98 = sphi 0, %s96
    %s99 = sphi 0, %s98
    %s113 = sphi 0, %s99
    %s117 = sphi 0, %s117
    %s119 = sphi 0, %s117
    %s120 = sphi 0, %s119
    %s134 = sphi 0, %s120
    %s138 = sphi 0, %s138
    %s140 = sphi 0, %s138
    %s141 = sphi 0, %s140
    %s155 = sphi 0, %s141
    %s159 = sphi 0, %s159
    %s161 = sphi 0, %s159
    %s162 = sphi 0, %s161
    %s176 = sphi 0, %s162
    %s180 = sphi 0, %s180
    %s182 = sphi 0, %s180
    %s183 = sphi 0, %s182
    %s197 = sphi 0, %s183
    %s201 = sphi 0, %s201
    %s203 = sphi 0, %s201
    %s204 = sphi 0, %s203
    %s218 = sphi 0, %s204
    %s222 = sphi 0, %s222
    %s224 = sphi 0, %s222
    %s225 = sphi 0, %s224
    %s239 = sphi 0, %s225
    %s243 = sphi 0, %s243
    %s245 = sphi 0, %s243
    %s246 = sphi 0, %s245
    %s260 = sphi 0, %s246
    %s264 = sphi 0, %s264
    %s266 = sphi 0, %s264
    %s267 = sphi 0, %s266
    %s281 = sphi 0, %s267
    %s285 = sphi 0, %s285
    %s287 = sphi 0, %s285
    %s288 = sphi 0, %s287
    %s302 = sphi 0, %s288
    %s306 = sphi 0, %s306
    %s308 = sphi 0, %s306
    %s309 = sphi 0, %s308
    %s323 = sphi 0, %s309
    %s329 = sphi 0, %s331
    %s332 = sphi 0, %s329
    %s333 = sphi 0, %s332
    %s349 = sphi 0, %s333
  $region4: #{lenet_forward.1} parent=0 // loop_header_branch
    %23 = sbr.rel (%p21) target = $region8
  $region5: #{lenet_forward.1} parent=0 // loop_body
    %s25 = ssub.s32 %s20, 1
    %s26 = ssub.s32 %s20, 2
    %s27 = sadd.s32 %s20, 1
    %s28 = ssub.s32 %s20, %s27
    %p29 = scmp.eq.s32.totalorder %s28, 0
    %s31 = sadd.s32 %s30, 1
    %s32 = scalar_select %p29, %s30, %s31
    %p35 = pneg %p29
    %p36 = scmp.eq.s32.totalorder %s20, 1
    %p37 = por %p35, %p36
    %p38 = scmp.ne.s32.totalorder %s30, %s33
    %p39 = scmp.eq.s32.totalorder %s20, 0
    %p40 = por %p38, %p39
    %p41 = scmp.ne.s32.totalorder %s30, %s33
    %p42 = scmp.eq.s32.totalorder %s25, 1
    %p43 = por %p41, %p42
    %p44 = scmp.ne.s32.totalorder %s33, %s34
    %p45 = scmp.eq.s32.totalorder %s25, 0
    %p46 = por %p44, %p45
    %p47 = scmp.ne.s32.totalorder %s33, %s34
    %p48 = scmp.eq.s32.totalorder %s26, 1
    %p49 = por %p47, %p48
    %p51 = scmp.ne.s32.totalorder %s34, %s50
    %p52 = scmp.eq.s32.totalorder %s26, 0
    %p53 = por %p51, %p52
    %s55 = sadd.s32 %s54, 1
    %p58 = scmp.eq.s32.totalorder %s20, 1
    %p59 = scmp.ne.s32.totalorder %s54, %s56
    %p60 = scmp.eq.s32.totalorder %s20, 0
    %p61 = por %p59, %p60
    %p62 = scmp.ne.s32.totalorder %s54, %s56
    %p63 = scmp.eq.s32.totalorder %s25, 1
    %p64 = por %p62, %p63
    %p65 = scmp.ne.s32.totalorder %s56, %s57
    %p66 = scmp.eq.s32.totalorder %s25, 0
    %p67 = por %p65, %p66
    %p68 = scmp.ne.s32.totalorder %s56, %s57
    %p69 = scmp.eq.s32.totalorder %s26, 1
    %p70 = por %p68, %p69
    %p72 = scmp.ne.s32.totalorder %s57, %s71
    %p73 = scmp.eq.s32.totalorder %s26, 0
    %p74 = por %p72, %p73
    %s76 = sadd.s32 %s75, 1
    %p79 = scmp.eq.s32.totalorder %s20, 1
    %p80 = scmp.ne.s32.totalorder %s75, %s77
    %p81 = scmp.eq.s32.totalorder %s20, 0
    %p82 = por %p80, %p81
    %p83 = scmp.ne.s32.totalorder %s75, %s77
    %p84 = scmp.eq.s32.totalorder %s25, 1
    %p85 = por %p83, %p84
    %p86 = scmp.ne.s32.totalorder %s77, %s78
    %p87 = scmp.eq.s32.totalorder %s25, 0
    %p88 = por %p86, %p87
    %p89 = scmp.ne.s32.totalorder %s77, %s78
    %p90 = scmp.eq.s32.totalorder %s26, 1
    %p91 = por %p89, %p90
    %p93 = scmp.ne.s32.totalorder %s78, %s92
    %p94 = scmp.eq.s32.totalorder %s26, 0
    %p95 = por %p93, %p94
    %s97 = sadd.s32 %s96, 1
    %p100 = scmp.eq.s32.totalorder %s20, 1
    %p101 = scmp.ne.s32.totalorder %s96, %s98
    %p102 = scmp.eq.s32.totalorder %s20, 0
    %p103 = por %p101, %p102
    %p104 = scmp.ne.s32.totalorder %s96, %s98
    %p105 = scmp.eq.s32.totalorder %s25, 1
    %p106 = por %p104, %p105
    %p107 = scmp.ne.s32.totalorder %s98, %s99
    %p108 = scmp.eq.s32.totalorder %s25, 0
    %p109 = por %p107, %p108
    %p110 = scmp.ne.s32.totalorder %s98, %s99
    %p111 = scmp.eq.s32.totalorder %s26, 1
    %p112 = por %p110, %p111
    %p114 = scmp.ne.s32.totalorder %s99, %s113
    %p115 = scmp.eq.s32.totalorder %s26, 0
    %p116 = por %p114, %p115
    %s118 = sadd.s32 %s117, 1
    %p121 = scmp.eq.s32.totalorder %s20, 1
    %p122 = scmp.ne.s32.totalorder %s117, %s119
    %p123 = scmp.eq.s32.totalorder %s20, 0
    %p124 = por %p122, %p123
    %p125 = scmp.ne.s32.totalorder %s117, %s119
    %p126 = scmp.eq.s32.totalorder %s25, 1
    %p127 = por %p125, %p126
    %p128 = scmp.ne.s32.totalorder %s119, %s120
    %p129 = scmp.eq.s32.totalorder %s25, 0
    %p130 = por %p128, %p129
    %p131 = scmp.ne.s32.totalorder %s119, %s120
    %p132 = scmp.eq.s32.totalorder %s26, 1
    %p133 = por %p131, %p132
    %p135 = scmp.ne.s32.totalorder %s120, %s134
    %p136 = scmp.eq.s32.totalorder %s26, 0
    %p137 = por %p135, %p136
    %s139 = sadd.s32 %s138, 1
    %p142 = scmp.eq.s32.totalorder %s20, 1
    %p143 = scmp.ne.s32.totalorder %s138, %s140
    %p144 = scmp.eq.s32.totalorder %s20, 0
    %p145 = por %p143, %p144
    %p146 = scmp.ne.s32.totalorder %s138, %s140
    %p147 = scmp.eq.s32.totalorder %s25, 1
    %p148 = por %p146, %p147
    %p149 = scmp.ne.s32.totalorder %s140, %s141
    %p150 = scmp.eq.s32.totalorder %s25, 0
    %p151 = por %p149, %p150
    %p152 = scmp.ne.s32.totalorder %s140, %s141
    %p153 = scmp.eq.s32.totalorder %s26, 1
    %p154 = por %p152, %p153
    %p156 = scmp.ne.s32.totalorder %s141, %s155
    %p157 = scmp.eq.s32.totalorder %s26, 0
    %p158 = por %p156, %p157
    %s160 = sadd.s32 %s159, 1
    %p163 = scmp.eq.s32.totalorder %s20, 1
    %p164 = scmp.ne.s32.totalorder %s159, %s161
    %p165 = scmp.eq.s32.totalorder %s20, 0
    %p166 = por %p164, %p165
    %p167 = scmp.ne.s32.totalorder %s159, %s161
    %p168 = scmp.eq.s32.totalorder %s25, 1
    %p169 = por %p167, %p168
    %p170 = scmp.ne.s32.totalorder %s161, %s162
    %p171 = scmp.eq.s32.totalorder %s25, 0
    %p172 = por %p170, %p171
    %p173 = scmp.ne.s32.totalorder %s161, %s162
    %p174 = scmp.eq.s32.totalorder %s26, 1
    %p175 = por %p173, %p174
    %p177 = scmp.ne.s32.totalorder %s162, %s176
    %p178 = scmp.eq.s32.totalorder %s26, 0
    %p179 = por %p177, %p178
    %s181 = sadd.s32 %s180, 1
    %p184 = scmp.eq.s32.totalorder %s20, 1
    %p185 = scmp.ne.s32.totalorder %s180, %s182
    %p186 = scmp.eq.s32.totalorder %s20, 0
    %p187 = por %p185, %p186
    %p188 = scmp.ne.s32.totalorder %s180, %s182
    %p189 = scmp.eq.s32.totalorder %s25, 1
    %p190 = por %p188, %p189
    %p191 = scmp.ne.s32.totalorder %s182, %s183
    %p192 = scmp.eq.s32.totalorder %s25, 0
    %p193 = por %p191, %p192
    %p194 = scmp.ne.s32.totalorder %s182, %s183
    %p195 = scmp.eq.s32.totalorder %s26, 1
    %p196 = por %p194, %p195
    %p198 = scmp.ne.s32.totalorder %s183, %s197
    %p199 = scmp.eq.s32.totalorder %s26, 0
    %p200 = por %p198, %p199
    %s202 = sadd.s32 %s201, 1
    %p205 = scmp.eq.s32.totalorder %s20, 1
    %p206 = scmp.ne.s32.totalorder %s201, %s203
    %p207 = scmp.eq.s32.totalorder %s20, 0
    %p208 = por %p206, %p207
    %p209 = scmp.ne.s32.totalorder %s201, %s203
    %p210 = scmp.eq.s32.totalorder %s25, 1
    %p211 = por %p209, %p210
    %p212 = scmp.ne.s32.totalorder %s203, %s204
    %p213 = scmp.eq.s32.totalorder %s25, 0
    %p214 = por %p212, %p213
    %p215 = scmp.ne.s32.totalorder %s203, %s204
    %p216 = scmp.eq.s32.totalorder %s26, 1
    %p217 = por %p215, %p216
    %p219 = scmp.ne.s32.totalorder %s204, %s218
    %p220 = scmp.eq.s32.totalorder %s26, 0
    %p221 = por %p219, %p220
    %s223 = sadd.s32 %s222, 1
    %p226 = scmp.eq.s32.totalorder %s20, 1
    %p227 = scmp.ne.s32.totalorder %s222, %s224
    %p228 = scmp.eq.s32.totalorder %s20, 0
    %p229 = por %p227, %p228
    %p230 = scmp.ne.s32.totalorder %s222, %s224
    %p231 = scmp.eq.s32.totalorder %s25, 1
    %p232 = por %p230, %p231
    %p233 = scmp.ne.s32.totalorder %s224, %s225
    %p234 = scmp.eq.s32.totalorder %s25, 0
    %p235 = por %p233, %p234
    %p236 = scmp.ne.s32.totalorder %s224, %s225
    %p237 = scmp.eq.s32.totalorder %s26, 1
    %p238 = por %p236, %p237
    %p240 = scmp.ne.s32.totalorder %s225, %s239
    %p241 = scmp.eq.s32.totalorder %s26, 0
    %p242 = por %p240, %p241
    %s244 = sadd.s32 %s243, 1
    %p247 = scmp.eq.s32.totalorder %s20, 1
    %p248 = scmp.ne.s32.totalorder %s243, %s245
    %p249 = scmp.eq.s32.totalorder %s20, 0
    %p250 = por %p248, %p249
    %p251 = scmp.ne.s32.totalorder %s243, %s245
    %p252 = scmp.eq.s32.totalorder %s25, 1
    %p253 = por %p251, %p252
    %p254 = scmp.ne.s32.totalorder %s245, %s246
    %p255 = scmp.eq.s32.totalorder %s25, 0
    %p256 = por %p254, %p255
    %p257 = scmp.ne.s32.totalorder %s245, %s246
    %p258 = scmp.eq.s32.totalorder %s26, 1
    %p259 = por %p257, %p258
    %p261 = scmp.ne.s32.totalorder %s246, %s260
    %p262 = scmp.eq.s32.totalorder %s26, 0
    %p263 = por %p261, %p262
    %s265 = sadd.s32 %s264, 1
    %p268 = scmp.eq.s32.totalorder %s20, 1
    %p269 = scmp.ne.s32.totalorder %s264, %s266
    %p270 = scmp.eq.s32.totalorder %s20, 0
    %p271 = por %p269, %p270
    %p272 = scmp.ne.s32.totalorder %s264, %s266
    %p273 = scmp.eq.s32.totalorder %s25, 1
    %p274 = por %p272, %p273
    %p275 = scmp.ne.s32.totalorder %s266, %s267
    %p276 = scmp.eq.s32.totalorder %s25, 0
    %p277 = por %p275, %p276
    %p278 = scmp.ne.s32.totalorder %s266, %s267
    %p279 = scmp.eq.s32.totalorder %s26, 1
    %p280 = por %p278, %p279
    %p282 = scmp.ne.s32.totalorder %s267, %s281
    %p283 = scmp.eq.s32.totalorder %s26, 0
    %p284 = por %p282, %p283
    %s286 = sadd.s32 %s285, 1
    %p289 = scmp.eq.s32.totalorder %s20, 1
    %p290 = scmp.ne.s32.totalorder %s285, %s287
    %p291 = scmp.eq.s32.totalorder %s20, 0
    %p292 = por %p290, %p291
    %p293 = scmp.ne.s32.totalorder %s285, %s287
    %p294 = scmp.eq.s32.totalorder %s25, 1
    %p295 = por %p293, %p294
    %p296 = scmp.ne.s32.totalorder %s287, %s288
    %p297 = scmp.eq.s32.totalorder %s25, 0
    %p298 = por %p296, %p297
    %p299 = scmp.ne.s32.totalorder %s287, %s288
    %p300 = scmp.eq.s32.totalorder %s26, 1
    %p301 = por %p299, %p300
    %p303 = scmp.ne.s32.totalorder %s288, %s302
    %p304 = scmp.eq.s32.totalorder %s26, 0
    %p305 = por %p303, %p304
    %s307 = sadd.s32 %s306, 1
    %p310 = scmp.eq.s32.totalorder %s20, 1
    %p311 = scmp.ne.s32.totalorder %s306, %s308
    %p312 = scmp.eq.s32.totalorder %s20, 0
    %p313 = por %p311, %p312
    %p314 = scmp.ne.s32.totalorder %s306, %s308
    %p315 = scmp.eq.s32.totalorder %s25, 1
    %p316 = por %p314, %p315
    %p317 = scmp.ne.s32.totalorder %s308, %s309
    %p318 = scmp.eq.s32.totalorder %s25, 0
    %p319 = por %p317, %p318
    %p320 = scmp.ne.s32.totalorder %s308, %s309
    %p321 = scmp.eq.s32.totalorder %s26, 1
    %p322 = por %p320, %p321
    %p324 = scmp.ne.s32.totalorder %s309, %s323
    %p325 = scmp.eq.s32.totalorder %s26, 0
    %p326 = por %p324, %p325
    %s327 = ssub.s32 %s20, %s27
    %p328 = scmp.eq.s32.totalorder %s327, 0
    %s330 = sadd.s32 %s329, 1
    %s331 = scalar_select %p328, %s329, %s330
    %p334 = pneg %p328
    %p335 = scmp.eq.s32.totalorder %s20, 1
    %p336 = por %p334, %p335
    %p337 = scmp.ne.s32.totalorder %s329, %s332
    %p338 = scmp.eq.s32.totalorder %s20, 0
    %p339 = por %p337, %p338
    %p340 = scmp.ne.s32.totalorder %s329, %s332
    %p341 = scmp.eq.s32.totalorder %s25, 1
    %p342 = por %p340, %p341
    %p343 = scmp.ne.s32.totalorder %s332, %s333
    %p344 = scmp.eq.s32.totalorder %s25, 0
    %p345 = por %p343, %p344
    %p346 = scmp.ne.s32.totalorder %s332, %s333
    %p347 = scmp.eq.s32.totalorder %s26, 1
    %p348 = por %p346, %p347
    %p350 = scmp.ne.s32.totalorder %s333, %s349
    %p351 = scmp.eq.s32.totalorder %s26, 0
    %p352 = por %p350, %p351
    %p353 = scmp.le.s32.totalorder 1, %s20
    %p354 = scmp.lt.s32.totalorder %s20, 3
    %p355 = pnand %p353, %p354
    %p356 = pneg %p355
    // Predicated region
    $region9: #{lenet_forward.1} parent=5 // pred_check
      _
    $region10: #{lenet_forward.1} parent=5 // pred_check_branch
      %358 = sbr.rel (%p355) target = $region12
    $region11: #{lenet_forward.1} parent=5 // pred_region
      %s359 = ssub.s32 %s20, 1
      // Predicated region
      $region13: #{lenet_forward.1} parent=11 // pred_check
        %p360 = pneg %p67
      $region14: #{lenet_forward.1} parent=11 // pred_check_branch
        %362 = sbr.rel (%p360) target = $region16
      $region15: #{lenet_forward.1} parent=11 // pred_region
        _
      $region16: #{lenet_forward.1} parent=11 // pred_fallthru
        _
      // Predicated region
      $region17: #{lenet_forward.1} parent=11 // pred_check
        %p363 = pneg %p88
      $region18: #{lenet_forward.1} parent=11 // pred_check_branch
        %365 = sbr.rel (%p363) target = $region20
      $region19: #{lenet_forward.1} parent=11 // pred_region
        _
      $region20: #{lenet_forward.1} parent=11 // pred_fallthru
        _
      // Predicated region
      $region21: #{lenet_forward.1} parent=11 // pred_check
        %p366 = pneg %p109
      $region22: #{lenet_forward.1} parent=11 // pred_check_branch
        %368 = sbr.rel (%p366) target = $region24
      $region23: #{lenet_forward.1} parent=11 // pred_region
        _
      $region24: #{lenet_forward.1} parent=11 // pred_fallthru
        _
      // Predicated region
      $region25: #{lenet_forward.1} parent=11 // pred_check
        %p369 = pneg %p130
      $region26: #{lenet_forward.1} parent=11 // pred_check_branch
        %371 = sbr.rel (%p369) target = $region28
      $region27: #{lenet_forward.1} parent=11 // pred_region
        _
      $region28: #{lenet_forward.1} parent=11 // pred_fallthru
        _
      // Predicated region
      $region29: #{lenet_forward.1} parent=11 // pred_check
        %p372 = pneg %p151
      $region30: #{lenet_forward.1} parent=11 // pred_check_branch
        %374 = sbr.rel (%p372) target = $region32
      $region31: #{lenet_forward.1} parent=11 // pred_region
        _
      $region32: #{lenet_forward.1} parent=11 // pred_fallthru
        _
      // Predicated region
      $region33: #{lenet_forward.1} parent=11 // pred_check
        %p375 = pneg %p172
      $region34: #{lenet_forward.1} parent=11 // pred_check_branch
        %377 = sbr.rel (%p375) target = $region36
      $region35: #{lenet_forward.1} parent=11 // pred_region
        _
      $region36: #{lenet_forward.1} parent=11 // pred_fallthru
        _
      // Predicated region
      $region37: #{lenet_forward.1} parent=11 // pred_check
        %p378 = pneg %p193
      $region38: #{lenet_forward.1} parent=11 // pred_check_branch
        %380 = sbr.rel (%p378) target = $region40
      $region39: #{lenet_forward.1} parent=11 // pred_region
        _
      $region40: #{lenet_forward.1} parent=11 // pred_fallthru
        _
      // Predicated region
      $region41: #{lenet_forward.1} parent=11 // pred_check
        %p381 = pneg %p214
      $region42: #{lenet_forward.1} parent=11 // pred_check_branch
        %383 = sbr.rel (%p381) target = $region44
      $region43: #{lenet_forward.1} parent=11 // pred_region
        _
      $region44: #{lenet_forward.1} parent=11 // pred_fallthru
        _
      // Predicated region
      $region45: #{lenet_forward.1} parent=11 // pred_check
        %p384 = pneg %p235
      $region46: #{lenet_forward.1} parent=11 // pred_check_branch
        %386 = sbr.rel (%p384) target = $region48
      $region47: #{lenet_forward.1} parent=11 // pred_region
        _
      $region48: #{lenet_forward.1} parent=11 // pred_fallthru
        _
      // Predicated region
      $region49: #{lenet_forward.1} parent=11 // pred_check
        %p387 = pneg %p256
      $region50: #{lenet_forward.1} parent=11 // pred_check_branch
        %389 = sbr.rel (%p387) target = $region52
      $region51: #{lenet_forward.1} parent=11 // pred_region
        _
      $region52: #{lenet_forward.1} parent=11 // pred_fallthru
        _
      // Predicated region
      $region53: #{lenet_forward.1} parent=11 // pred_check
        %p390 = pneg %p277
      $region54: #{lenet_forward.1} parent=11 // pred_check_branch
        %392 = sbr.rel (%p390) target = $region56
      $region55: #{lenet_forward.1} parent=11 // pred_region
        _
      $region56: #{lenet_forward.1} parent=11 // pred_fallthru
        _
      // Predicated region
      $region57: #{lenet_forward.1} parent=11 // pred_check
        %p393 = pneg %p298
      $region58: #{lenet_forward.1} parent=11 // pred_check_branch
        %395 = sbr.rel (%p393) target = $region60
      $region59: #{lenet_forward.1} parent=11 // pred_region
        _
      $region60: #{lenet_forward.1} parent=11 // pred_fallthru
        _
      // Predicated region
      $region61: #{lenet_forward.1} parent=11 // pred_check
        %p396 = pneg %p319
      $region62: #{lenet_forward.1} parent=11 // pred_check_branch
        %398 = sbr.rel (%p396) target = $region64
      $region63: #{lenet_forward.1} parent=11 // pred_region
        _
      $region64: #{lenet_forward.1} parent=11 // pred_fallthru
        _
    $region12: #{lenet_forward.1} parent=5 // pred_fallthru
      _
    %p399 = scmp.lt.s32.totalorder %s20, 2
    // Predicated region
    $region65: #{lenet_forward.1} parent=5 // pred_check
      %p400 = pneg %p399
    $region66: #{lenet_forward.1} parent=5 // pred_check_branch
      %402 = sbr.rel (%p400) target = $region68
    $region67: #{lenet_forward.1} parent=5 // pred_region
      // Predicated region
      $region69: #{lenet_forward.1} parent=67 // pred_check
        %p403 = pneg %p40
      $region70: #{lenet_forward.1} parent=67 // pred_check_branch
        %405 = sbr.rel (%p403) target = $region72
      $region71: #{lenet_forward.1} parent=67 // pred_region
        %s406 = smul.u32 8, %s20
        %p407 = scmp.lt.s32.totalorder %s406, 15
        %s408 = scalar_select %p407, %s406, 15
        %s409 = smul.addr %s408, 4
        %s410 = smul.addr %s409, 8
        %s411 = scalar_lea.vmem %s0, %s410
        %s412 = smul.u32 8, %s20
      $region72: #{lenet_forward.1} parent=67 // pred_fallthru
        _
    $region68: #{lenet_forward.1} parent=5 // pred_fallthru
      _
    %p413 = scmp.le.s32.totalorder 1, %s20
    %p414 = scmp.lt.s32.totalorder %s20, 3
    %p415 = pnand %p413, %p414
    %p416 = pneg %p415
    // Predicated region
    $region73: #{lenet_forward.1} parent=5 // pred_check
      _
    $region74: #{lenet_forward.1} parent=5 // pred_check_branch
      %418 = sbr.rel (%p415) target = $region76
    $region75: #{lenet_forward.1} parent=5 // pred_region
      %s419 = ssub.s32 %s20, 1
      %s420 = smul.u32 8, %s25
      %p421 = scmp.lt.s32.totalorder %s420, 15
      %s422 = scalar_select %p421, %s420, 15
      %s423 = smul.addr %s422, 4
      %s424 = smul.addr %s423, 8
      %s425 = scalar_lea.vmem %s0, %s424
      %p426 = pneg %p46
      %p427 = pneg %p43
      %p428 = pneg %p67
      %p429 = pneg %p64
      %p430 = pneg %p88
      %p431 = pneg %p85
      %p432 = pneg %p109
      %p433 = pneg %p106
      %p434 = pneg %p130
      %p435 = pneg %p127
      %p436 = pneg %p151
      %p437 = pneg %p148
      %p438 = pneg %p172
      %p439 = pneg %p169
      %p440 = pneg %p193
      %p441 = pneg %p190
      %p442 = pneg %p214
      %p443 = pneg %p211
      %p444 = pneg %p235
      %p445 = pneg %p232
      %p446 = pneg %p256
      %p447 = pneg %p253
      %p448 = pneg %p277
      %p449 = pneg %p274
      %p450 = pneg %p298
      %p451 = pneg %p295
      %p452 = pneg %p319
      %p453 = pneg %p316
      %p454 = pneg %p345
      %p455 = pneg %p342
      %p456 = scmp.lt.s32.totalorder %s25, 1
      %s457 = scalar_select %p456, %s25, 1
      %s458 = smul.addr %s457, 8
      %s459 = scalar_lea.vmem %s14, %s458
      %s460 = smul.u32 8, %s25
      %p461 = scmp.lt.s32.totalorder %s460, 15
      %s462 = scalar_select %p461, %s460, 15
      %s463 = smul.addr %s462, 4
      %s464 = smul.addr %s463, 8
      %s465 = scalar_lea.vmem %s0, %s464
      %s466 = smul.u32 8, %s25
      %p467 = scmp.lt.s32.totalorder %s25, 1
      %s468 = scalar_select %p467, %s25, 1
      %s469 = smul.addr %s468, 8
      %s470 = scalar_lea.vmem %s14, %s469
      %v471 = vld [vmem:[%s465] sm:$0xff]
      %v472 = vld [vmem:[%s465 + $0x8] sm:$0xff]
      %v473 = vld [vmem:[%s465 + $0x10] sm:$0xff]
      %v474 = vld [vmem:[%s465 + $0x18] sm:$0xff]
      %v475 = vld [vmem:[%s465 + $0x20] sm:$0xff]
      %v476 = vld [vmem:[%s465 + $0x28] sm:$0xff]
      %v477 = vld [vmem:[%s465 + $0x30] sm:$0xff]
      %v478 = vld [vmem:[%s465 + $0x38] sm:$0xff]
      %v479 = vld [vmem:[%s465 + $0x40] sm:$0xff]
      %v480 = vld [vmem:[%s465 + $0x48] sm:$0xff]
      %v481 = vld [vmem:[%s465 + $0x50] sm:$0xff]
      %v482 = vld [vmem:[%s465 + $0x58] sm:$0xff]
      %v483 = vld [vmem:[%s465 + $0x60] sm:$0xff]
      %v484 = vld [vmem:[%s465 + $0x68] sm:$0xff]
      %v485 = vld [vmem:[%s465 + $0x70] sm:$0xff]
      %v486 = vld [vmem:[%s465 + $0x78] sm:$0xff]
      %v487 = vld [vmem:[%s465 + $0x80] sm:$0xff]
      %v488 = vld [vmem:[%s465 + $0x88] sm:$0xff]
      %v489 = vld [vmem:[%s465 + $0x90] sm:$0xff]
      %v490 = vld [vmem:[%s465 + $0x98] sm:$0xff]
      %v491 = vld [vmem:[%s465 + $0xa0] sm:$0xff]
      %v492 = vld [vmem:[%s465 + $0xa8] sm:$0xff]
      %v493 = vld [vmem:[%s465 + $0xb0] sm:$0xff]
      %v494 = vld [vmem:[%s465 + $0xb8] sm:$0xff]
      %v495 = vld [vmem:[%s465 + $0xc0] sm:$0xff]
      %v496 = vld [vmem:[%s465 + $0xc8] sm:$0xff]
      %v497 = vld [vmem:[%s465 + $0xd0] sm:$0xff]
      %v498 = vld [vmem:[%s465 + $0xd8] sm:$0xff]
      %v499 = vld [vmem:[%s465 + $0xe0] sm:$0xff]
      %v500 = vld [vmem:[%s465 + $0xe8] sm:$0xff]
      %v501 = vld [vmem:[%s465 + $0xf0] sm:$0xff]
      %v502 = vld [vmem:[%s465 + $0xf8] sm:$0xff]
      %v503 = vld [vmem:[%s1] sm:$0xff]
      %v504 = vld [vmem:[%s1 + $0x8] sm:$0xff]
      %v505 = vld [vmem:[%s1 + $0x10] sm:$0xff]
      %v506 = vld [vmem:[%s1 + $0x18] sm:$0xff]
      %v507 = vld [vmem:[%s1 + $0x20] sm:$0xff]
      %v508 = vld [vmem:[%s1 + $0x28] sm:$0xff]
      %v509 = vld [vmem:[%s1 + $0x30] sm:$0xff]
      %v510 = vld [vmem:[%s1 + $0x38] sm:$0xff]
      %s511 = scalar_lea.vmem %s1, 64
      %v512 = vld [vmem:[%s511] sm:$0xff]
      %v513 = vld [vmem:[%s511 + $0x8] sm:$0xff]
      %v514 = vld [vmem:[%s511 + $0x10] sm:$0xff]
      %v515 = vld [vmem:[%s511 + $0x18] sm:$0xff]
      %v516 = vld [vmem:[%s511 + $0x20] sm:$0xff]
      %v517 = vld [vmem:[%s511 + $0x28] sm:$0xff]
      %v518 = vld [vmem:[%s511 + $0x30] sm:$0xff]
      %v519 = vld [vmem:[%s511 + $0x38] sm:$0xff]
      %vm524 = vcmask 1046528
      %v525 = vrot.slane %v471, 1
      %v526 = vrot.slane %v472, 1
      %v527 = vsel %vm524, %v525, %v526
      %v528 = vrot.slane %v473, 1
      %v529 = vsel %vm524, %v526, %v528
      %v530 = vrot.slane %v474, 1
      %v531 = vsel %vm524, %v528, %v530
      %vm532 = vcmask 261120
      %v533 = vsel %vm532, %v527, 0
      %v535 = vsel %vm532, %v529, 0
      %v537 = vsel %vm532, %v531, 0
      %v539 = vsel %vm532, %v530, 0
      %541 = vmatprep.subr.mxu0 %v513
      %542 = vmatpush1.msra.mxu0 %v512
      %543 = vmatprep.subr.mxu0 %v515
      %544 = vmatpush1.msra.mxu0 %v514
      %545 = vmatprep.subr.mxu0 %v517
      %546 = vmatpush1.msra.mxu0 %v516
      %547 = vmatprep.subr.mxu0 %v519
      %548 = vmatpush1.msra.mxu0 %v518
      %549 = vmatprep.subr.mxu0 0.0
      %550 = vmatpush1.msra.mxu0 0.0
      %551 = vmatprep.subr.mxu0 0.0
      %552 = vmatpush1.msra.mxu0 0.0
      %553 = vmatprep.subr.mxu0 0.0
      %554 = vmatpush1.msra.mxu0 0.0
      %555 = vmatprep.subr.mxu0 0.0
      %556 = vmatpush1.msra.mxu0 0.0
      %557 = vmatprep.subr.mxu0 0.0
      %558 = vmatpush1.msra.mxu0 0.0
      %559 = vmatprep.subr.mxu0 0.0
      %560 = vmatpush1.msra.mxu0 0.0
      %561 = vmatprep.subr.mxu0 0.0
      %562 = vmatpush1.msra.mxu0 0.0
      %563 = vmatprep.subr.mxu0 0.0
      %564 = vmatpush1.msra.mxu0 0.0
      %565 = vmatprep.subr.mxu0 0.0
      %566 = vmatpush1.msra.mxu0 0.0
      %567 = vmatprep.subr.mxu0 0.0
      %568 = vmatpush1.msra.mxu0 0.0
      %569 = vmatprep.subr.mxu0 0.0
      %570 = vmatpush1.msra.mxu0 0.0
      %571 = vmatprep.subr.mxu0 0.0
      %572 = vmatpush1.msra.mxu0 0.0
      %573 = vmatprep.subr.mxu0 0.0
      %574 = vmatpush1.msra.mxu0 0.0
      %575 = vmatprep.subr.mxu0 0.0
      %576 = vmatpush1.msra.mxu0 0.0
      %577 = vmatprep.subr.mxu0 0.0
      %578 = vmatpush1.msra.mxu0 0.0
      %579 = vmatprep.subr.mxu0 0.0
      %580 = vmatpush1.msra.mxu0 0.0
      %581 = vmatprep.subr.mxu0 0.0
      %582 = vmatpush1.msra.mxu0 0.0
      %583 = vmatprep.subr.mxu0 0.0
      %584 = vmatpush1.msra.mxu0 0.0
      %585 = vmatprep.subr.mxu0 0.0
      %586 = vmatpush1.msra.mxu0 0.0
      %587 = vmatprep.subr.mxu0 0.0
      %588 = vmatpush1.msra.mxu0 0.0
      %589 = vmatprep.subr.mxu0 0.0
      %590 = vmatpush1.msra.mxu0 0.0
      %591 = vmatprep.subr.mxu0 0.0
      %592 = vmatpush1.msra.mxu0 0.0
      %593 = vmatprep.subr.mxu0 0.0
      %594 = vmatpush1.msra.mxu0 0.0
      %595 = vmatprep.subr.mxu0 0.0
      %596 = vmatpush1.msra.mxu0 0.0
      %597 = vmatprep.subr.mxu0 0.0
      %598 = vmatpush1.msra.mxu0 0.0
      %599 = vmatprep.subr.mxu0 0.0
      %600 = vmatpush1.msra.mxu0 0.0
      %601 = vmatprep.subr.mxu0 0.0
      %602 = vmatpush1.msra.mxu0 0.0
      %603 = vmatprep.subr.mxu0 0.0
      %604 = vmatpush1.msra.mxu0 0.0
      %605 = vmatprep.mubr.f32.mxu0 0.0
      %606 = vmatmul.mubr.f32.gmra.mrb[0].mxu0 %v533
      %v607 = vpop.f32.mrb[0].mxu0
      %v608 = vadd.f32 0.0, %v607
      %v609 = vpop.f32.mrb[0].mxu0
      %v610 = vadd.f32 0.0, %v609
      %611 = vmatprep.mubr.f32.mxu0 0.0
      %612 = vmatmul.mubr.f32.gmra.mrb[0].mxu0 %v535
      %v613 = vpop.f32.mrb[0].mxu0
      %v614 = vadd.f32 0.0, %v613
      %v615 = vpop.f32.mrb[0].mxu0
      %v616 = vadd.f32 0.0, %v615
      %617 = vmatprep.mubr.f32.mxu0 0.0
      %618 = vmatmul.mubr.f32.gmra.mrb[0].mxu0 %v537
      %v619 = vpop.f32.mrb[0].mxu0
      %v620 = vadd.f32 0.0, %v619
      %v621 = vpop.f32.mrb[0].mxu0
      %v622 = vadd.f32 0.0, %v621
      %623 = vmatprep.mubr.f32.mxu0 0.0
      %624 = vmatmul.mubr.f32.gmra.mrb[0].mxu0 %v539
      %v625 = vpop.f32.mrb[0].mxu0
      %v626 = vadd.f32 0.0, %v625
      %v627 = vpop.f32.mrb[0].mxu0
      %v628 = vadd.f32 0.0, %v627
      %629 = vdwg.mxu0
      %v634 = vrot.slane %v475, 1
      %v635 = vrot.slane %v476, 1
      %v636 = vsel %vm524, %v634, %v635
      %v637 = vrot.slane %v477, 1
      %v638 = vsel %vm524, %v635, %v637
      %v639 = vrot.slane %v478, 1
      %v640 = vsel %vm524, %v637, %v639
      %v641 = vsel %vm532, %v636, 0
      %v643 = vsel %vm532, %v638, 0
      %v645 = vsel %vm532, %v640, 0
      %v647 = vsel %vm532, %v639, 0
      %649 = vmatprep.subr.mxu0 %v513
      %650 = vmatpush1.msra.mxu0 %v512
      %651 = vmatprep.subr.mxu0 %v515
      %652 = vmatpush1.msra.mxu0 %v514
      %653 = vmatprep.subr.mxu0 %v517
      %654 = vmatpush1.msra.mxu0 %v516
      %655 = vmatprep.subr.mxu0 %v519
      %656 = vmatpush1.msra.mxu0 %v518
      %657 = vmatprep.subr.mxu0 0.0
      %658 = vmatpush1.msra.mxu0 0.0
      %659 = vmatprep.subr.mxu0 0.0
      %660 = vmatpush1.msra.mxu0 0.0
      %661 = vmatprep.subr.mxu0 0.0
      %662 = vmatpush1.msra.mxu0 0.0
      %663 = vmatprep.subr.mxu0 0.0
      %664 = vmatpush1.msra.mxu0 0.0
      %665 = vmatprep.subr.mxu0 0.0
      %666 = vmatpush1.msra.mxu0 0.0
      %667 = vmatprep.subr.mxu0 0.0
      %668 = vmatpush1.msra.mxu0 0.0
      %669 = vmatprep.subr.mxu0 0.0
      %670 = vmatpush1.msra.mxu0 0.0
      %671 = vmatprep.subr.mxu0 0.0
      %672 = vmatpush1.msra.mxu0 0.0
      %673 = vmatprep.subr.mxu0 0.0
      %674 = vmatpush1.msra.mxu0 0.0
      %675 = vmatprep.subr.mxu0 0.0
      %676 = vmatpush1.msra.mxu0 0.0
      %677 = vmatprep.subr.mxu0 0.0
      %678 = vmatpush1.msra.mxu0 0.0
      %679 = vmatprep.subr.mxu0 0.0
      %680 = vmatpush1.msra.mxu0 0.0
      %681 = vmatprep.subr.mxu0 0.0
      %682 = vmatpush1.msra.mxu0 0.0
      %683 = vmatprep.subr.mxu0 0.0
      %684 = vmatpush1.msra.mxu0 0.0
      %685 = vmatprep.subr.mxu0 0.0
      %686 = vmatpush1.msra.mxu0 0.0
      %687 = vmatprep.subr.mxu0 0.0
      %688 = vmatpush1.msra.mxu0 0.0
      %689 = vmatprep.subr.mxu0 0.0
      %690 = vmatpush1.msra.mxu0 0.0
      %691 = vmatprep.subr.mxu0 0.0
      %692 = vmatpush1.msra.mxu0 0.0
      %693 = vmatprep.subr.mxu0 0.0
      %694 = vmatpush1.msra.mxu0 0.0
      %695 = vmatprep.subr.mxu0 0.0
      %696 = vmatpush1.msra.mxu0 0.0
      %697 = vmatprep.subr.mxu0 0.0
      %698 = vmatpush1.msra.mxu0 0.0
      %699 = vmatprep.subr.mxu0 0.0
      %700 = vmatpush1.msra.mxu0 0.0
      %701 = vmatprep.subr.mxu0 0.0
      %702 = vmatpush1.msra.mxu0 0.0
      %703 = vmatprep.subr.mxu0 0.0
      %704 = vmatpush1.msra.mxu0 0.0
      %705 = vmatprep.subr.mxu0 0.0
      %706 = vmatpush1.msra.mxu0 0.0
      %707 = vmatprep.subr.mxu0 0.0
      %708 = vmatpush1.msra.mxu0 0.0
      %709 = vmatprep.subr.mxu0 0.0
      %710 = vmatpush1.msra.mxu0 0.0
      %711 = vmatprep.subr.mxu0 0.0
      %712 = vmatpush1.msra.mxu0 0.0
      %713 = vmatprep.mubr.f32.mxu0 0.0
      %714 = vmatmul.mubr.f32.gmra.mrb[0].mxu0 %v641
      %v715 = vpop.f32.mrb[0].mxu0
      %v716 = vadd.f32 0.0, %v715
      %v717 = vpop.f32.mrb[0].mxu0
      %v718 = vadd.f32 0.0, %v717
      %719 = vmatprep.mubr.f32.mxu0 0.0
      %720 = vmatmul.mubr.f32.gmra.mrb[0].mxu0 %v643
      %v721 = vpop.f32.mrb[0].mxu0
      %v722 = vadd.f32 0.0, %v721
      %v723 = vpop.f32.mrb[0].mxu0
      %v724 = vadd.f32 0.0, %v723
      %725 = vmatprep.mubr.f32.mxu0 0.0
      %726 = vmatmul.mubr.f32.gmra.mrb[0].mxu0 %v645
      %v727 = vpop.f32.mrb[0].mxu0
      %v728 = vadd.f32 0.0, %v727
      %v729 = vpop.f32.mrb[0].mxu0
      %v730 = vadd.f32 0.0, %v729
      %731 = vmatprep.mubr.f32.mxu0 0.0
      %732 = vmatmul.mubr.f32.gmra.mrb[0].mxu0 %v647
      %v733 = vpop.f32.mrb[0].mxu0
      %v734 = vadd.f32 0.0, %v733
      %v735 = vpop.f32.mrb[0].mxu0
      %v736 = vadd.f32 0.0, %v735
      %737 = vdwg.mxu0
      %v742 = vrot.slane %v479, 1
      %v743 = vrot.slane %v480, 1
      %v744 = vsel %vm524, %v742, %v743
      %v745 = vrot.slane %v481, 1
      %v746 = vsel %vm524, %v743, %v745
      %v747 = vrot.slane %v482, 1
      %v748 = vsel %vm524, %v745, %v747
      %v749 = vsel %vm532, %v744, 0
      %v751 = vsel %vm532, %v746, 0
      %v753 = vsel %vm532, %v748, 0
      %v755 = vsel %vm532, %v747, 0
      %757 = vmatprep.subr.mxu0 %v513
      %758 = vmatpush1.msra.mxu0 %v512
      %759 = vmatprep.subr.mxu0 %v515
      %760 = vmatpush1.msra.mxu0 %v514
      %761 = vmatprep.subr.mxu0 %v517
      %762 = vmatpush1.msra.mxu0 %v516
      %763 = vmatprep.subr.mxu0 %v519
      %764 = vmatpush1.msra.mxu0 %v518
      %765 = vmatprep.subr.mxu0 0.0
      %766 = vmatpush1.msra.mxu0 0.0
      %767 = vmatprep.subr.mxu0 0.0
      %768 = vmatpush1.msra.mxu0 0.0
      %769 = vmatprep.subr.mxu0 0.0
      %770 = vmatpush1.msra.mxu0 0.0
      %771 = vmatprep.subr.mxu0 0.0
      %772 = vmatpush1.msra.mxu0 0.0
      %773 = vmatprep.subr.mxu0 0.0
      %774 = vmatpush1.msra.mxu0 0.0
      %775 = vmatprep.subr.mxu0 0.0
      %776 = vmatpush1.msra.mxu0 0.0
      %777 = vmatprep.subr.mxu0 0.0
      %778 = vmatpush1.msra.mxu0 0.0
      %779 = vmatprep.subr.mxu0 0.0
      %780 = vmatpush1.msra.mxu0 0.0
      %781 = vmatprep.subr.mxu0 0.0
      %782 = vmatpush1.msra.mxu0 0.0
      %783 = vmatprep.subr.mxu0 0.0
      %784 = vmatpush1.msra.mxu0 0.0
      %785 = vmatprep.subr.mxu0 0.0
      %786 = vmatpush1.msra.mxu0 0.0
      %787 = vmatprep.subr.mxu0 0.0
      %788 = vmatpush1.msra.mxu0 0.0
      %789 = vmatprep.subr.mxu0 0.0
      %790 = vmatpush1.msra.mxu0 0.0
      %791 = vmatprep.subr.mxu0 0.0
      %792 = vmatpush1.msra.mxu0 0.0
      %793 = vmatprep.subr.mxu0 0.0
      %794 = vmatpush1.msra.mxu0 0.0
      %795 = vmatprep.subr.mxu0 0.0
      %796 = vmatpush1.msra.mxu0 0.0
      %797 = vmatprep.subr.mxu0 0.0
      %798 = vmatpush1.msra.mxu0 0.0
      %799 = vmatprep.subr.mxu0 0.0
      %800 = vmatpush1.msra.mxu0 0.0
      %801 = vmatprep.subr.mxu0 0.0
      %802 = vmatpush1.msra.mxu0 0.0
      %803 = vmatprep.subr.mxu0 0.0
      %804 = vmatpush1.msra.mxu0 0.0
      %805 = vmatprep.subr.mxu0 0.0
      %806 = vmatpush1.msra.mxu0 0.0
      %807 = vmatprep.subr.mxu0 0.0
      %808 = vmatpush1.msra.mxu0 0.0
      %809 = vmatprep.subr.mxu0 0.0
      %810 = vmatpush1.msra.mxu0 0.0
      %811 = vmatprep.subr.mxu0 0.0
      %812 = vmatpush1.msra.mxu0 0.0
      %813 = vmatprep.subr.mxu0 0.0
      %814 = vmatpush1.msra.mxu0 0.0
      %815 = vmatprep.subr.mxu0 0.0
      %816 = vmatpush1.msra.mxu0 0.0
      %817 = vmatprep.subr.mxu0 0.0
      %818 = vmatpush1.msra.mxu0 0.0
      %819 = vmatprep.subr.mxu0 0.0
      %820 = vmatpush1.msra.mxu0 0.0
      %821 = vmatprep.mubr.f32.mxu0 0.0
      %822 = vmatmul.mubr.f32.gmra.mrb[0].mxu0 %v749
      %v823 = vpop.f32.mrb[0].mxu0
      %v824 = vadd.f32 0.0, %v823
      %v825 = vpop.f32.mrb[0].mxu0
      %v826 = vadd.f32 0.0, %v825
      %827 = vmatprep.mubr.f32.mxu0 0.0
      %828 = vmatmul.mubr.f32.gmra.mrb[0].mxu0 %v751
      %v829 = vpop.f32.mrb[0].mxu0
      %v830 = vadd.f32 0.0, %v829
      %v831 = vpop.f32.mrb[0].mxu0
      %v832 = vadd.f32 0.0, %v831
      %833 = vmatprep.mubr.f32.mxu0 0.0
      %834 = vmatmul.mubr.f32.gmra.mrb[0].mxu0 %v753
      %v835 = vpop.f32.mrb[0].mxu0
      %v836 = vadd.f32 0.0, %v835
      %v837 = vpop.f32.mrb[0].mxu0
      %v838 = vadd.f32 0.0, %v837
      %839 = vmatprep.mubr.f32.mxu0 0.0
      %840 = vmatmul.mubr.f32.gmra.mrb[0].mxu0 %v755
      %v841 = vpop.f32.mrb[0].mxu0
      %v842 = vadd.f32 0.0, %v841
      %v843 = vpop.f32.mrb[0].mxu0
      %v844 = vadd.f32 0.0, %v843
      %845 = vdwg.mxu0
      %v850 = vrot.slane %v483, 1
      %v851 = vrot.slane %v484, 1
      %v852 = vsel %vm524, %v850, %v851
      %v853 = vrot.slane %v485, 1
      %v854 = vsel %vm524, %v851, %v853
      %v855 = vrot.slane %v486, 1
      %v856 = vsel %vm524, %v853, %v855
      %v857 = vsel %vm532, %v852, 0
      %v859 = vsel %vm532, %v854, 0
      %v861 = vsel %vm532, %v856, 0
      %v863 = vsel %vm532, %v855, 0
      %865 = vmatprep.subr.mxu0 %v513
      %866 = vmatpush1.msra.mxu0 %v512
      %867 = vmatprep.subr.mxu0 %v515
      %868 = vmatpush1.msra.mxu0 %v514
      %869 = vmatprep.subr.mxu0 %v517
      %870 = vmatpush1.msra.mxu0 %v516
      %871 = vmatprep.subr.mxu0 %v519
      %872 = vmatpush1.msra.mxu0 %v518
      %873 = vmatprep.subr.mxu0 0.0
      %874 = vmatpush1.msra.mxu0 0.0
      %875 = vmatprep.subr.mxu0 0.0
      %876 = vmatpush1.msra.mxu0 0.0
      %877 = vmatprep.subr.mxu0 0.0
      %878 = vmatpush1.msra.mxu0 0.0
      %879 = vmatprep.subr.mxu0 0.0
      %880 = vmatpush1.msra.mxu0 0.0
      %881 = vmatprep.subr.mxu0 0.0
      %882 = vmatpush1.msra.mxu0 0.0
      %883 = vmatprep.subr.mxu0 0.0
      %884 = vmatpush1.msra.mxu0 0.0
      %885 = vmatprep.subr.mxu0 0.0
      %886 = vmatpush1.msra.mxu0 0.0
      %887 = vmatprep.subr.mxu0 0.0
      %888 = vmatpush1.msra.mxu0 0.0
      %889 = vmatprep.subr.mxu0 0.0
      %890 = vmatpush1.msra.mxu0 0.0
      %891 = vmatprep.subr.mxu0 0.0
      %892 = vmatpush1.msra.mxu0 0.0
      %893 = vmatprep.subr.mxu0 0.0
      %894 = vmatpush1.msra.mxu0 0.0
      %895 = vmatprep.subr.mxu0 0.0
      %896 = vmatpush1.msra.mxu0 0.0
      %897 = vmatprep.subr.mxu0 0.0
      %898 = vmatpush1.msra.mxu0 0.0
      %899 = vmatprep.subr.mxu0 0.0
      %900 = vmatpush1.msra.mxu0 0.0
      %901 = vmatprep.subr.mxu0 0.0
      %902 = vmatpush1.msra.mxu0 0.0
      %903 = vmatprep.subr.mxu0 0.0
      %904 = vmatpush1.msra.mxu0 0.0
      %905 = vmatprep.subr.mxu0 0.0
      %906 = vmatpush1.msra.mxu0 0.0
      %907 = vmatprep.subr.mxu0 0.0
      %908 = vmatpush1.msra.mxu0 0.0
      %909 = vmatprep.subr.mxu0 0.0
      %910 = vmatpush1.msra.mxu0 0.0
      %911 = vmatprep.subr.mxu0 0.0
      %912 = vmatpush1.msra.mxu0 0.0
      %913 = vmatprep.subr.mxu0 0.0
      %914 = vmatpush1.msra.mxu0 0.0
      %915 = vmatprep.subr.mxu0 0.0
      %916 = vmatpush1.msra.mxu0 0.0
      %917 = vmatprep.subr.mxu0 0.0
      %918 = vmatpush1.msra.mxu0 0.0
      %919 = vmatprep.subr.mxu0 0.0
      %920 = vmatpush1.msra.mxu0 0.0
      %921 = vmatprep.subr.mxu0 0.0
      %922 = vmatpush1.msra.mxu0 0.0
      %923 = vmatprep.subr.mxu0 0.0
      %924 = vmatpush1.msra.mxu0 0.0
      %925 = vmatprep.subr.mxu0 0.0
      %926 = vmatpush1.msra.mxu0 0.0
      %927 = vmatprep.subr.mxu0 0.0
      %928 = vmatpush1.msra.mxu0 0.0
      %929 = vmatprep.mubr.f32.mxu0 0.0
      %930 = vmatmul.mubr.f32.gmra.mrb[0].mxu0 %v857
      %v931 = vpop.f32.mrb[0].mxu0
      %v932 = vadd.f32 0.0, %v931
      %v933 = vpop.f32.mrb[0].mxu0
      %v934 = vadd.f32 0.0, %v933
      %935 = vmatprep.mubr.f32.mxu0 0.0
      %936 = vmatmul.mubr.f32.gmra.mrb[0].mxu0 %v859
      %v937 = vpop.f32.mrb[0].mxu0
      %v938 = vadd.f32 0.0, %v937
      %v939 = vpop.f32.mrb[0].mxu0
      %v940 = vadd.f32 0.0, %v939
      %941 = vmatprep.mubr.f32.mxu0 0.0
      %942 = vmatmul.mubr.f32.gmra.mrb[0].mxu0 %v861
      %v943 = vpop.f32.mrb[0].mxu0
      %v944 = vadd.f32 0.0, %v943
      %v945 = vpop.f32.mrb[0].mxu0
      %v946 = vadd.f32 0.0, %v945
      %947 = vmatprep.mubr.f32.mxu0 0.0
      %948 = vmatmul.mubr.f32.gmra.mrb[0].mxu0 %v863
      %v949 = vpop.f32.mrb[0].mxu0
      %v950 = vadd.f32 0.0, %v949
      %v951 = vpop.f32.mrb[0].mxu0
      %v952 = vadd.f32 0.0, %v951
      %953 = vdwg.mxu0
      %v958 = vrot.slane %v487, 1
      %v959 = vrot.slane %v488, 1
      %v960 = vsel %vm524, %v958, %v959
      %v961 = vrot.slane %v489, 1
      %v962 = vsel %vm524, %v959, %v961
      %v963 = vrot.slane %v490, 1
      %v964 = vsel %vm524, %v961, %v963
      %v965 = vsel %vm532, %v960, 0
      %v967 = vsel %vm532, %v962, 0
      %v969 = vsel %vm532, %v964, 0
      %v971 = vsel %vm532, %v963, 0
      %973 = vmatprep.subr.mxu0 %v513
      %974 = vmatpush1.msra.mxu0 %v512
      %975 = vmatprep.subr.mxu0 %v515
      %976 = vmatpush1.msra.mxu0 %v514
      %977 = vmatprep.subr.mxu0 %v517
      %978 = vmatpush1.msra.mxu0 %v516
      %979 = vmatprep.subr.mxu0 %v519
      %980 = vmatpush1.msra.mxu0 %v518
      %981 = vmatprep.subr.mxu0 0.0
      %982 = vmatpush1.msra.mxu0 0.0
      %983 = vmatprep.subr.mxu0 0.0
      %984 = vmatpush1.msra.mxu0 0.0
      %985 = vmatprep.subr.mxu0 0.0
      %986 = vmatpush1.msra.mxu0 0.0
      %987 = vmatprep.subr.mxu0 0.0
      %988 = vmatpush1.msra.mxu0 0.0
      %989 = vmatprep.subr.mxu0 0.0
      %990 = vmatpush1.msra.mxu0 0.0
      %991 = vmatprep.subr.mxu0 0.0
      %992 = vmatpush1.msra.mxu0 0.0
      %993 = vmatprep.subr.mxu0 0.0
      %994 = vmatpush1.msra.mxu0 0.0
      %995 = vmatprep.subr.mxu0 0.0
      %996 = vmatpush1.msra.mxu0 0.0
      %997 = vmatprep.subr.mxu0 0.0
      %998 = vmatpush1.msra.mxu0 0.0
      %999 = vmatprep.subr.mxu0 0.0
      %1000 = vmatpush1.msra.mxu0 0.0
      %1001 = vmatprep.subr.mxu0 0.0
      %1002 = vmatpush1.msra.mxu0 0.0
      %1003 = vmatprep.subr.mxu0 0.0
      %1004 = vmatpush1.msra.mxu0 0.0
      %1005 = vmatprep.subr.mxu0 0.0
      %1006 = vmatpush1.msra.mxu0 0.0
      %1007 = vmatprep.subr.mxu0 0.0
      %1008 = vmatpush1.msra.mxu0 0.0
      %1009 = vmatprep.subr.mxu0 0.0
      %1010 = vmatpush1.msra.mxu0 0.0
      %1011 = vmatprep.subr.mxu0 0.0
      %1012 = vmatpush1.msra.mxu0 0.0
      %1013 = vmatprep.subr.mxu0 0.0
      %1014 = vmatpush1.msra.mxu0 0.0
      %1015 = vmatprep.subr.mxu0 0.0
      %1016 = vmatpush1.msra.mxu0 0.0
      %1017 = vmatprep.subr.mxu0 0.0
      %1018 = vmatpush1.msra.mxu0 0.0
      %1019 = vmatprep.subr.mxu0 0.0
      %1020 = vmatpush1.msra.mxu0 0.0
      %1021 = vmatprep.subr.mxu0 0.0
      %1022 = vmatpush1.msra.mxu0 0.0
      %1023 = vmatprep.subr.mxu0 0.0
      %1024 = vmatpush1.msra.mxu0 0.0
      %1025 = vmatprep.subr.mxu0 0.0
      %1026 = vmatpush1.msra.mxu0 0.0
      %1027 = vmatprep.subr.mxu0 0.0
      %1028 = vmatpush1.msra.mxu0 0.0
      %1029 = vmatprep.subr.mxu0 0.0
      %1030 = vmatpush1.msra.mxu0 0.0
      %1031 = vmatprep.subr.mxu0 0.0
      %1032 = vmatpush1.msra.mxu0 0.0
      %1033 = vmatprep.subr.mxu0 0.0
      %1034 = vmatpush1.msra.mxu0 0.0
      %1035 = vmatprep.subr.mxu0 0.0
      %1036 = vmatpush1.msra.mxu0 0.0
      %1037 = vmatprep.mubr.f32.mxu0 0.0
      %1038 = vmatmul.mubr.f32.gmra.mrb[0].mxu0 %v965
      %v1039 = vpop.f32.mrb[0].mxu0
      %v1040 = vadd.f32 0.0, %v1039
      %v1041 = vpop.f32.mrb[0].mxu0
      %v1042 = vadd.f32 0.0, %v1041
      %1043 = vmatprep.mubr.f32.mxu0 0.0
      %1044 = vmatmul.mubr.f32.gmra.mrb[0].mxu0 %v967
      %v1045 = vpop.f32.mrb[0].mxu0
      %v1046 = vadd.f32 0.0, %v1045
      %v1047 = vpop.f32.mrb[0].mxu0
      %v1048 = vadd.f32 0.0, %v1047
      %1049 = vmatprep.mubr.f32.mxu0 0.0
      %1050 = vmatmul.mubr.f32.gmra.mrb[0].mxu0 %v969
      %v1051 = vpop.f32.mrb[0].mxu0
      %v1052 = vadd.f32 0.0, %v1051
      %v1053 = vpop.f32.mrb[0].mxu0
      %v1054 = vadd.f32 0.0, %v1053
      %1055 = vmatprep.mubr.f32.mxu0 0.0
      %1056 = vmatmul.mubr.f32.gmra.mrb[0].mxu0 %v971
      %v1057 = vpop.f32.mrb[0].mxu0
      %v1058 = vadd.f32 0.0, %v1057
      %v1059 = vpop.f32.mrb[0].mxu0
      %v1060 = vadd.f32 0.0, %v1059
      %1061 = vdwg.mxu0
      %v1066 = vrot.slane %v491, 1
      %v1067 = vrot.slane %v492, 1
      %v1068 = vsel %vm524, %v1066, %v1067
      %v1069 = vrot.slane %v493, 1
      %v1070 = vsel %vm524, %v1067, %v1069
      %v1071 = vrot.slane %v494, 1
      %v1072 = vsel %vm524, %v1069, %v1071
      %v1073 = vsel %vm532, %v1068, 0
      %v1075 = vsel %vm532, %v1070, 0
      %v1077 = vsel %vm532, %v1072, 0
      %v1079 = vsel %vm532, %v1071, 0
      %1081 = vmatprep.subr.mxu0 %v513
      %1082 = vmatpush1.msra.mxu0 %v512
      %1083 = vmatprep.subr.mxu0 %v515
      %1084 = vmatpush1.msra.mxu0 %v514
      %1085 = vmatprep.subr.mxu0 %v517
      %1086 = vmatpush1.msra.mxu0 %v516
      %1087 = vmatprep.subr.mxu0 %v519
      %1088 = vmatpush1.msra.mxu0 %v518
      %1089 = vmatprep.subr.mxu0 0.0
      %1090 = vmatpush1.msra.mxu0 0.0
      %1091 = vmatprep.subr.mxu0 0.0
      %1092 = vmatpush1.msra.mxu0 0.0
      %1093 = vmatprep.subr.mxu0 0.0
      %1094 = vmatpush1.msra.mxu0 0.0
      %1095 = vmatprep.subr.mxu0 0.0
      %1096 = vmatpush1.msra.mxu0 0.0
      %1097 = vmatprep.subr.mxu0 0.0
      %1098 = vmatpush1.msra.mxu0 0.0
      %1099 = vmatprep.subr.mxu0 0.0
      %1100 = vmatpush1.msra.mxu0 0.0
      %1101 = vmatprep.subr.mxu0 0.0
      %1102 = vmatpush1.msra.mxu0 0.0
      %1103 = vmatprep.subr.mxu0 0.0
      %1104 = vmatpush1.msra.mxu0 0.0
      %1105 = vmatprep.subr.mxu0 0.0
      %1106 = vmatpush1.msra.mxu0 0.0
      %1107 = vmatprep.subr.mxu0 0.0
      %1108 = vmatpush1.msra.mxu0 0.0
      %1109 = vmatprep.subr.mxu0 0.0
      %1110 = vmatpush1.msra.mxu0 0.0
      %1111 = vmatprep.subr.mxu0 0.0
      %1112 = vmatpush1.msra.mxu0 0.0
      %1113 = vmatprep.subr.mxu0 0.0
      %1114 = vmatpush1.msra.mxu0 0.0
      %1115 = vmatprep.subr.mxu0 0.0
      %1116 = vmatpush1.msra.mxu0 0.0
      %1117 = vmatprep.subr.mxu0 0.0
      %1118 = vmatpush1.msra.mxu0 0.0
      %1119 = vmatprep.subr.mxu0 0.0
      %1120 = vmatpush1.msra.mxu0 0.0
      %1121 = vmatprep.subr.mxu0 0.0
      %1122 = vmatpush1.msra.mxu0 0.0
      %1123 = vmatprep.subr.mxu0 0.0
      %1124 = vmatpush1.msra.mxu0 0.0
      %1125 = vmatprep.subr.mxu0 0.0
      %1126 = vmatpush1.msra.mxu0 0.0
      %1127 = vmatprep.subr.mxu0 0.0
      %1128 = vmatpush1.msra.mxu0 0.0
      %1129 = vmatprep.subr.mxu0 0.0
      %1130 = vmatpush1.msra.mxu0 0.0
      %1131 = vmatprep.subr.mxu0 0.0
      %1132 = vmatpush1.msra.mxu0 0.0
      %1133 = vmatprep.subr.mxu0 0.0
      %1134 = vmatpush1.msra.mxu0 0.0
      %1135 = vmatprep.subr.mxu0 0.0
      %1136 = vmatpush1.msra.mxu0 0.0
      %1137 = vmatprep.subr.mxu0 0.0
      %1138 = vmatpush1.msra.mxu0 0.0
      %1139 = vmatprep.subr.mxu0 0.0
      %1140 = vmatpush1.msra.mxu0 0.0
      %1141 = vmatprep.subr.mxu0 0.0
      %1142 = vmatpush1.msra.mxu0 0.0
      %1143 = vmatprep.subr.mxu0 0.0
      %1144 = vmatpush1.msra.mxu0 0.0
      %1145 = vmatprep.mubr.f32.mxu0 0.0
      %1146 = vmatmul.mubr.f32.gmra.mrb[0].mxu0 %v1073
      %v1147 = vpop.f32.mrb[0].mxu0
      %v1148 = vadd.f32 0.0, %v1147
      %v1149 = vpop.f32.mrb[0].mxu0
      %v1150 = vadd.f32 0.0, %v1149
      %1151 = vmatprep.mubr.f32.mxu0 0.0
      %1152 = vmatmul.mubr.f32.gmra.mrb[0].mxu0 %v1075
      %v1153 = vpop.f32.mrb[0].mxu0
      %v1154 = vadd.f32 0.0, %v1153
      %v1155 = vpop.f32.mrb[0].mxu0
      %v1156 = vadd.f32 0.0, %v1155
      %1157 = vmatprep.mubr.f32.mxu0 0.0
      %1158 = vmatmul.mubr.f32.gmra.mrb[0].mxu0 %v1077
      %v1159 = vpop.f32.mrb[0].mxu0
      %v1160 = vadd.f32 0.0, %v1159
      %v1161 = vpop.f32.mrb[0].mxu0
      %v1162 = vadd.f32 0.0, %v1161
      %1163 = vmatprep.mubr.f32.mxu0 0.0
      %1164 = vmatmul.mubr.f32.gmra.mrb[0].mxu0 %v1079
      %v1165 = vpop.f32.mrb[0].mxu0
      %v1166 = vadd.f32 0.0, %v1165
      %v1167 = vpop.f32.mrb[0].mxu0
      %v1168 = vadd.f32 0.0, %v1167
      %1169 = vdwg.mxu0
      %v1174 = vrot.slane %v495, 1
      %v1175 = vrot.slane %v496, 1
      %v1176 = vsel %vm524, %v1174, %v1175
      %v1177 = vrot.slane %v497, 1
      %v1178 = vsel %vm524, %v1175, %v1177
      %v1179 = vrot.slane %v498, 1
      %v1180 = vsel %vm524, %v1177, %v1179
      %v1181 = vsel %vm532, %v1176, 0
      %v1183 = vsel %vm532, %v1178, 0
      %v1185 = vsel %vm532, %v1180, 0
      %v1187 = vsel %vm532, %v1179, 0
      %1189 = vmatprep.subr.mxu0 %v513
      %1190 = vmatpush1.msra.mxu0 %v512
      %1191 = vmatprep.subr.mxu0 %v515
      %1192 = vmatpush1.msra.mxu0 %v514
      %1193 = vmatprep.subr.mxu0 %v517
      %1194 = vmatpush1.msra.mxu0 %v516
      %1195 = vmatprep.subr.mxu0 %v519
      %1196 = vmatpush1.msra.mxu0 %v518
      %1197 = vmatprep.subr.mxu0 0.0
      %1198 = vmatpush1.msra.mxu0 0.0
      %1199 = vmatprep.subr.mxu0 0.0
      %1200 = vmatpush1.msra.mxu0 0.0
      %1201 = vmatprep.subr.mxu0 0.0
      %1202 = vmatpush1.msra.mxu0 0.0
      %1203 = vmatprep.subr.mxu0 0.0
      %1204 = vmatpush1.msra.mxu0 0.0
      %1205 = vmatprep.subr.mxu0 0.0
      %1206 = vmatpush1.msra.mxu0 0.0
      %1207 = vmatprep.subr.mxu0 0.0
      %1208 = vmatpush1.msra.mxu0 0.0
      %1209 = vmatprep.subr.mxu0 0.0
      %1210 = vmatpush1.msra.mxu0 0.0
      %1211 = vmatprep.subr.mxu0 0.0
      %1212 = vmatpush1.msra.mxu0 0.0
      %1213 = vmatprep.subr.mxu0 0.0
      %1214 = vmatpush1.msra.mxu0 0.0
      %1215 = vmatprep.subr.mxu0 0.0
      %1216 = vmatpush1.msra.mxu0 0.0
      %1217 = vmatprep.subr.mxu0 0.0
      %1218 = vmatpush1.msra.mxu0 0.0
      %1219 = vmatprep.subr.mxu0 0.0
      %1220 = vmatpush1.msra.mxu0 0.0
      %1221 = vmatprep.subr.mxu0 0.0
      %1222 = vmatpush1.msra.mxu0 0.0
      %1223 = vmatprep.subr.mxu0 0.0
      %1224 = vmatpush1.msra.mxu0 0.0
      %1225 = vmatprep.subr.mxu0 0.0
      %1226 = vmatpush1.msra.mxu0 0.0
      %1227 = vmatprep.subr.mxu0 0.0
      %1228 = vmatpush1.msra.mxu0 0.0
      %1229 = vmatprep.subr.mxu0 0.0
      %1230 = vmatpush1.msra.mxu0 0.0
      %1231 = vmatprep.subr.mxu0 0.0
      %1232 = vmatpush1.msra.mxu0 0.0
      %1233 = vmatprep.subr.mxu0 0.0
      %1234 = vmatpush1.msra.mxu0 0.0
      %1235 = vmatprep.subr.mxu0 0.0
      %1236 = vmatpush1.msra.mxu0 0.0
      %1237 = vmatprep.subr.mxu0 0.0
      %1238 = vmatpush1.msra.mxu0 0.0
      %1239 = vmatprep.subr.mxu0 0.0
      %1240 = vmatpush1.msra.mxu0 0.0
      %1241 = vmatprep.subr.mxu0 0.0
      %1242 = vmatpush1.msra.mxu0 0.0
      %1243 = vmatprep.subr.mxu0 0.0
      %1244 = vmatpush1.msra.mxu0 0.0
      %1245 = vmatprep.subr.mxu0 0.0
      %1246 = vmatpush1.msra.mxu0 0.0
      %1247 = vmatprep.subr.mxu0 0.0
      %1248 = vmatpush1.msra.mxu0 0.0
      %1249 = vmatprep.subr.mxu0 0.0
      %1250 = vmatpush1.msra.mxu0 0.0
      %1251 = vmatprep.subr.mxu0 0.0
      %1252 = vmatpush1.msra.mxu0 0.0
      %1253 = vmatprep.mubr.f32.mxu0 0.0
      %1254 = vmatmul.mubr.f32.gmra.mrb[0].mxu0 %v1181
      %v1255 = vpop.f32.mrb[0].mxu0
      %v1256 = vadd.f32 0.0, %v1255
      %v1257 = vpop.f32.mrb[0].mxu0
      %v1258 = vadd.f32 0.0, %v1257
      %1259 = vmatprep.mubr.f32.mxu0 0.0
      %1260 = vmatmul.mubr.f32.gmra.mrb[0].mxu0 %v1183
      %v1261 = vpop.f32.mrb[0].mxu0
      %v1262 = vadd.f32 0.0, %v1261
      %v1263 = vpop.f32.mrb[0].mxu0
      %v1264 = vadd.f32 0.0, %v1263
      %1265 = vmatprep.mubr.f32.mxu0 0.0
      %1266 = vmatmul.mubr.f32.gmra.mrb[0].mxu0 %v1185
      %v1267 = vpop.f32.mrb[0].mxu0
      %v1268 = vadd.f32 0.0, %v1267
      %v1269 = vpop.f32.mrb[0].mxu0
      %v1270 = vadd.f32 0.0, %v1269
      %1271 = vmatprep.mubr.f32.mxu0 0.0
      %1272 = vmatmul.mubr.f32.gmra.mrb[0].mxu0 %v1187
      %v1273 = vpop.f32.mrb[0].mxu0
      %v1274 = vadd.f32 0.0, %v1273
      %v1275 = vpop.f32.mrb[0].mxu0
      %v1276 = vadd.f32 0.0, %v1275
      %1277 = vdwg.mxu0
      %v1282 = vrot.slane %v499, 1
      %v1283 = vrot.slane %v500, 1
      %v1284 = vsel %vm524, %v1282, %v1283
      %v1285 = vrot.slane %v501, 1
      %v1286 = vsel %vm524, %v1283, %v1285
      %v1287 = vrot.slane %v502, 1
      %v1288 = vsel %vm524, %v1285, %v1287
      %v1289 = vsel %vm532, %v1284, 0
      %v1291 = vsel %vm532, %v1286, 0
      %v1293 = vsel %vm532, %v1288, 0
      %v1295 = vsel %vm532, %v1287, 0
      %1297 = vmatprep.subr.mxu0 %v513
      %1298 = vmatpush1.msra.mxu0 %v512
      %1299 = vmatprep.subr.mxu0 %v515
      %1300 = vmatpush1.msra.mxu0 %v514
      %1301 = vmatprep.subr.mxu0 %v517
      %1302 = vmatpush1.msra.mxu0 %v516
      %1303 = vmatprep.subr.mxu0 %v519
      %1304 = vmatpush1.msra.mxu0 %v518
      %1305 = vmatprep.subr.mxu0 0.0
      %1306 = vmatpush1.msra.mxu0 0.0
      %1307 = vmatprep.subr.mxu0 0.0
      %1308 = vmatpush1.msra.mxu0 0.0
      %1309 = vmatprep.subr.mxu0 0.0
      %1310 = vmatpush1.msra.mxu0 0.0
      %1311 = vmatprep.subr.mxu0 0.0
      %1312 = vmatpush1.msra.mxu0 0.0
      %1313 = vmatprep.subr.mxu0 0.0
      %1314 = vmatpush1.msra.mxu0 0.0
      %1315 = vmatprep.subr.mxu0 0.0
      %1316 = vmatpush1.msra.mxu0 0.0
      %1317 = vmatprep.subr.mxu0 0.0
      %1318 = vmatpush1.msra.mxu0 0.0
      %1319 = vmatprep.subr.mxu0 0.0
      %1320 = vmatpush1.msra.mxu0 0.0
      %1321 = vmatprep.subr.mxu0 0.0
      %1322 = vmatpush1.msra.mxu0 0.0
      %1323 = vmatprep.subr.mxu0 0.0
      %1324 = vmatpush1.msra.mxu0 0.0
      %1325 = vmatprep.subr.mxu0 0.0
      %1326 = vmatpush1.msra.mxu0 0.0
      %1327 = vmatprep.subr.mxu0 0.0
      %1328 = vmatpush1.msra.mxu0 0.0
      %1329 = vmatprep.subr.mxu0 0.0
      %1330 = vmatpush1.msra.mxu0 0.0
      %1331 = vmatprep.subr.mxu0 0.0
      %1332 = vmatpush1.msra.mxu0 0.0
      %1333 = vmatprep.subr.mxu0 0.0
      %1334 = vmatpush1.msra.mxu0 0.0
      %1335 = vmatprep.subr.mxu0 0.0
      %1336 = vmatpush1.msra.mxu0 0.0
      %1337 = vmatprep.subr.mxu0 0.0
      %1338 = vmatpush1.msra.mxu0 0.0
      %1339 = vmatprep.subr.mxu0 0.0
      %1340 = vmatpush1.msra.mxu0 0.0
      %1341 = vmatprep.subr.mxu0 0.0
      %1342 = vmatpush1.msra.mxu0 0.0
      %1343 = vmatprep.subr.mxu0 0.0
      %1344 = vmatpush1.msra.mxu0 0.0
      %1345 = vmatprep.subr.mxu0 0.0
      %1346 = vmatpush1.msra.mxu0 0.0
      %1347 = vmatprep.subr.mxu0 0.0
      %1348 = vmatpush1.msra.mxu0 0.0
      %1349 = vmatprep.subr.mxu0 0.0
      %1350 = vmatpush1.msra.mxu0 0.0
      %1351 = vmatprep.subr.mxu0 0.0
      %1352 = vmatpush1.msra.mxu0 0.0
      %1353 = vmatprep.subr.mxu0 0.0
      %1354 = vmatpush1.msra.mxu0 0.0
      %1355 = vmatprep.subr.mxu0 0.0
      %1356 = vmatpush1.msra.mxu0 0.0
      %1357 = vmatprep.subr.mxu0 0.0
      %1358 = vmatpush1.msra.mxu0 0.0
      %1359 = vmatprep.subr.mxu0 0.0
      %1360 = vmatpush1.msra.mxu0 0.0
      %1361 = vmatprep.mubr.f32.mxu0 0.0
      %1362 = vmatmul.mubr.f32.gmra.mrb[0].mxu0 %v1289
      %v1363 = vpop.f32.mrb[0].mxu0
      %v1364 = vadd.f32 0.0, %v1363
      %v1365 = vpop.f32.mrb[0].mxu0
      %v1366 = vadd.f32 0.0, %v1365
      %1367 = vmatprep.mubr.f32.mxu0 0.0
      %1368 = vmatmul.mubr.f32.gmra.mrb[0].mxu0 %v1291
      %v1369 = vpop.f32.mrb[0].mxu0
      %v1370 = vadd.f32 0.0, %v1369
      %v1371 = vpop.f32.mrb[0].mxu0
      %v1372 = vadd.f32 0.0, %v1371
      %1373 = vmatprep.mubr.f32.mxu0 0.0
      %1374 = vmatmul.mubr.f32.gmra.mrb[0].mxu0 %v1293
      %v1375 = vpop.f32.mrb[0].mxu0
      %v1376 = vadd.f32 0.0, %v1375
      %v1377 = vpop.f32.mrb[0].mxu0
      %v1378 = vadd.f32 0.0, %v1377
      %1379 = vmatprep.mubr.f32.mxu0 0.0
      %1380 = vmatmul.mubr.f32.gmra.mrb[0].mxu0 %v1295
      %v1381 = vpop.f32.mrb[0].mxu0
      %v1382 = vadd.f32 0.0, %v1381
      %v1383 = vpop.f32.mrb[0].mxu0
      %v1384 = vadd.f32 0.0, %v1383
      %1385 = vdwg.mxu0
      %v1386 = vsel %vm532, %v471, 0
      %v1388 = vsel %vm532, %v472, 0
      %v1390 = vsel %vm532, %v473, 0
      %v1392 = vsel %vm532, %v474, 0
      %1394 = vmatprep.subr.mxu0 %v504
      %1395 = vmatpush1.msra.mxu0 %v503
      %1396 = vmatprep.subr.mxu0 %v506
      %1397 = vmatpush1.msra.mxu0 %v505
      %1398 = vmatprep.subr.mxu0 %v508
      %1399 = vmatpush1.msra.mxu0 %v507
      %1400 = vmatprep.subr.mxu0 %v510
      %1401 = vmatpush1.msra.mxu0 %v509
      %1402 = vmatprep.subr.mxu0 0.0
      %1403 = vmatpush1.msra.mxu0 0.0
      %1404 = vmatprep.subr.mxu0 0.0
      %1405 = vmatpush1.msra.mxu0 0.0
      %1406 = vmatprep.subr.mxu0 0.0
      %1407 = vmatpush1.msra.mxu0 0.0
      %1408 = vmatprep.subr.mxu0 0.0
      %1409 = vmatpush1.msra.mxu0 0.0
      %1410 = vmatprep.subr.mxu0 0.0
      %1411 = vmatpush1.msra.mxu0 0.0
      %1412 = vmatprep.subr.mxu0 0.0
      %1413 = vmatpush1.msra.mxu0 0.0
      %1414 = vmatprep.subr.mxu0 0.0
      %1415 = vmatpush1.msra.mxu0 0.0
      %1416 = vmatprep.subr.mxu0 0.0
      %1417 = vmatpush1.msra.mxu0 0.0
      %1418 = vmatprep.subr.mxu0 0.0
      %1419 = vmatpush1.msra.mxu0 0.0
      %1420 = vmatprep.subr.mxu0 0.0
      %1421 = vmatpush1.msra.mxu0 0.0
      %1422 = vmatprep.subr.mxu0 0.0
      %1423 = vmatpush1.msra.mxu0 0.0
      %1424 = vmatprep.subr.mxu0 0.0
      %1425 = vmatpush1.msra.mxu0 0.0
      %1426 = vmatprep.subr.mxu0 0.0
      %1427 = vmatpush1.msra.mxu0 0.0
      %1428 = vmatprep.subr.mxu0 0.0
      %1429 = vmatpush1.msra.mxu0 0.0
      %1430 = vmatprep.subr.mxu0 0.0
      %1431 = vmatpush1.msra.mxu0 0.0
      %1432 = vmatprep.subr.mxu0 0.0
      %1433 = vmatpush1.msra.mxu0 0.0
      %1434 = vmatprep.subr.mxu0 0.0
      %1435 = vmatpush1.msra.mxu0 0.0
      %1436 = vmatprep.subr.mxu0 0.0
      %1437 = vmatpush1.msra.mxu0 0.0
      %1438 = vmatprep.subr.mxu0 0.0
      %1439 = vmatpush1.msra.mxu0 0.0
      %1440 = vmatprep.subr.mxu0 0.0
      %1441 = vmatpush1.msra.mxu0 0.0
      %1442 = vmatprep.subr.mxu0 0.0
      %1443 = vmatpush1.msra.mxu0 0.0
      %1444 = vmatprep.subr.mxu0 0.0
      %1445 = vmatpush1.msra.mxu0 0.0
      %1446 = vmatprep.subr.mxu0 0.0
      %1447 = vmatpush1.msra.mxu0 0.0
      %1448 = vmatprep.subr.mxu0 0.0
      %1449 = vmatpush1.msra.mxu0 0.0
      %1450 = vmatprep.subr.mxu0 0.0
      %1451 = vmatpush1.msra.mxu0 0.0
      %1452 = vmatprep.subr.mxu0 0.0
      %1453 = vmatpush1.msra.mxu0 0.0
      %1454 = vmatprep.subr.mxu0 0.0
      %1455 = vmatpush1.msra.mxu0 0.0
      %1456 = vmatprep.subr.mxu0 0.0
      %1457 = vmatpush1.msra.mxu0 0.0
      %1458 = vmatprep.mubr.f32.mxu0 0.0
      %1459 = vmatmul.mubr.f32.gmra.mrb[0].mxu0 %v1386
      %v1460 = vpop.f32.mrb[0].mxu0
      %v1461 = vadd.f32 %v608, %v1460
      %v1462 = vpop.f32.mrb[0].mxu0
      %v1463 = vadd.f32 %v610, %v1462
      %1464 = vmatprep.mubr.f32.mxu0 0.0
      %1465 = vmatmul.mubr.f32.gmra.mrb[0].mxu0 %v1388
      %v1466 = vpop.f32.mrb[0].mxu0
      %v1467 = vadd.f32 %v614, %v1466
      %v1468 = vpop.f32.mrb[0].mxu0
      %v1469 = vadd.f32 %v616, %v1468
      %1470 = vmatprep.mubr.f32.mxu0 0.0
      %1471 = vmatmul.mubr.f32.gmra.mrb[0].mxu0 %v1390
      %v1472 = vpop.f32.mrb[0].mxu0
      %v1473 = vadd.f32 %v620, %v1472
      %v1474 = vpop.f32.mrb[0].mxu0
      %v1475 = vadd.f32 %v622, %v1474
      %1476 = vmatprep.mubr.f32.mxu0 0.0
      %1477 = vmatmul.mubr.f32.gmra.mrb[0].mxu0 %v1392
      %v1478 = vpop.f32.mrb[0].mxu0
      %v1479 = vadd.f32 %v626, %v1478
      %v1480 = vpop.f32.mrb[0].mxu0
      %v1481 = vadd.f32 %v628, %v1480
      %1482 = vdwg.mxu0
      %v1483 = vsel %vm532, %v475, 0
      %v1485 = vsel %vm532, %v476, 0
      %v1487 = vsel %vm532, %v477, 0
      %v1489 = vsel %vm532, %v478, 0
      %1491 = vmatprep.subr.mxu0 %v504
      %1492 = vmatpush1.msra.mxu0 %v503
      %1493 = vmatprep.subr.mxu0 %v506
      %1494 = vmatpush1.msra.mxu0 %v505
      %1495 = vmatprep.subr.mxu0 %v508
      %1496 = vmatpush1.msra.mxu0 %v507
      %1497 = vmatprep.subr.mxu0 %v510
      %1498 = vmatpush1.msra.mxu0 %v509
      %1499 = vmatprep.subr.mxu0 0.0
      %1500 = vmatpush1.msra.mxu0 0.0
      %1501 = vmatprep.subr.mxu0 0.0
      %1502 = vmatpush1.msra.mxu0 0.0
      %1503 = vmatprep.subr.mxu0 0.0
      %1504 = vmatpush1.msra.mxu0 0.0
      %1505 = vmatprep.subr.mxu0 0.0
      %1506 = vmatpush1.msra.mxu0 0.0
      %1507 = vmatprep.subr.mxu0 0.0
      %1508 = vmatpush1.msra.mxu0 0.0
      %1509 = vmatprep.subr.mxu0 0.0
      %1510 = vmatpush1.msra.mxu0 0.0
      %1511 = vmatprep.subr.mxu0 0.0
      %1512 = vmatpush1.msra.mxu0 0.0
      %1513 = vmatprep.subr.mxu0 0.0
      %1514 = vmatpush1.msra.mxu0 0.0
      %1515 = vmatprep.subr.mxu0 0.0
      %1516 = vmatpush1.msra.mxu0 0.0
      %1517 = vmatprep.subr.mxu0 0.0
      %1518 = vmatpush1.msra.mxu0 0.0
      %1519 = vmatprep.subr.mxu0 0.0
      %1520 = vmatpush1.msra.mxu0 0.0
      %1521 = vmatprep.subr.mxu0 0.0
      %1522 = vmatpush1.msra.mxu0 0.0
      %1523 = vmatprep.subr.mxu0 0.0
      %1524 = vmatpush1.msra.mxu0 0.0
      %1525 = vmatprep.subr.mxu0 0.0
      %1526 = vmatpush1.msra.mxu0 0.0
      %1527 = vmatprep.subr.mxu0 0.0
      %1528 = vmatpush1.msra.mxu0 0.0
      %1529 = vmatprep.subr.mxu0 0.0
      %1530 = vmatpush1.msra.mxu0 0.0
      %1531 = vmatprep.subr.mxu0 0.0
      %1532 = vmatpush1.msra.mxu0 0.0
      %1533 = vmatprep.subr.mxu0 0.0
      %1534 = vmatpush1.msra.mxu0 0.0
      %1535 = vmatprep.subr.mxu0 0.0
      %1536 = vmatpush1.msra.mxu0 0.0
      %1537 = vmatprep.subr.mxu0 0.0
      %1538 = vmatpush1.msra.mxu0 0.0
      %1539 = vmatprep.subr.mxu0 0.0
      %1540 = vmatpush1.msra.mxu0 0.0
      %1541 = vmatprep.subr.mxu0 0.0
      %1542 = vmatpush1.msra.mxu0 0.0
      %1543 = vmatprep.subr.mxu0 0.0
      %1544 = vmatpush1.msra.mxu0 0.0
      %1545 = vmatprep.subr.mxu0 0.0
      %1546 = vmatpush1.msra.mxu0 0.0
      %1547 = vmatprep.subr.mxu0 0.0
      %1548 = vmatpush1.msra.mxu0 0.0
      %1549 = vmatprep.subr.mxu0 0.0
      %1550 = vmatpush1.msra.mxu0 0.0
      %1551 = vmatprep.subr.mxu0 0.0
      %1552 = vmatpush1.msra.mxu0 0.0
      %1553 = vmatprep.subr.mxu0 0.0
      %1554 = vmatpush1.msra.mxu0 0.0
      %1555 = vmatprep.mubr.f32.mxu0 0.0
      %1556 = vmatmul.mubr.f32.gmra.mrb[0].mxu0 %v1483
      %v1557 = vpop.f32.mrb[0].mxu0
      %v1558 = vadd.f32 %v716, %v1557
      %v1559 = vpop.f32.mrb[0].mxu0
      %v1560 = vadd.f32 %v718, %v1559
      %1561 = vmatprep.mubr.f32.mxu0 0.0
      %1562 = vmatmul.mubr.f32.gmra.mrb[0].mxu0 %v1485
      %v1563 = vpop.f32.mrb[0].mxu0
      %v1564 = vadd.f32 %v722, %v1563
      %v1565 = vpop.f32.mrb[0].mxu0
      %v1566 = vadd.f32 %v724, %v1565
      %1567 = vmatprep.mubr.f32.mxu0 0.0
      %1568 = vmatmul.mubr.f32.gmra.mrb[0].mxu0 %v1487
      %v1569 = vpop.f32.mrb[0].mxu0
      %v1570 = vadd.f32 %v728, %v1569
      %v1571 = vpop.f32.mrb[0].mxu0
      %v1572 = vadd.f32 %v730, %v1571
      %1573 = vmatprep.mubr.f32.mxu0 0.0
      %1574 = vmatmul.mubr.f32.gmra.mrb[0].mxu0 %v1489
      %v1575 = vpop.f32.mrb[0].mxu0
      %v1576 = vadd.f32 %v734, %v1575
      %v1577 = vpop.f32.mrb[0].mxu0
      %v1578 = vadd.f32 %v736, %v1577
      %1579 = vdwg.mxu0
      %v1580 = vsel %vm532, %v479, 0
      %v1582 = vsel %vm532, %v480, 0
      %v1584 = vsel %vm532, %v481, 0
      %v1586 = vsel %vm532, %v482, 0
      %1588 = vmatprep.subr.mxu0 %v504
      %1589 = vmatpush1.msra.mxu0 %v503
      %1590 = vmatprep.subr.mxu0 %v506
      %1591 = vmatpush1.msra.mxu0 %v505
      %1592 = vmatprep.subr.mxu0 %v508
      %1593 = vmatpush1.msra.mxu0 %v507
      %1594 = vmatprep.subr.mxu0 %v510
      %1595 = vmatpush1.msra.mxu0 %v509
      %1596 = vmatprep.subr.mxu0 0.0
      %1597 = vmatpush1.msra.mxu0 0.0
      %1598 = vmatprep.subr.mxu0 0.0
      %1599 = vmatpush1.msra.mxu0 0.0
      %1600 = vmatprep.subr.mxu0 0.0
      %1601 = vmatpush1.msra.mxu0 0.0
      %1602 = vmatprep.subr.mxu0 0.0
      %1603 = vmatpush1.msra.mxu0 0.0
      %1604 = vmatprep.subr.mxu0 0.0
      %1605 = vmatpush1.msra.mxu0 0.0
      %1606 = vmatprep.subr.mxu0 0.0
      %1607 = vmatpush1.msra.mxu0 0.0
      %1608 = vmatprep.subr.mxu0 0.0
      %1609 = vmatpush1.msra.mxu0 0.0
      %1610 = vmatprep.subr.mxu0 0.0
      %1611 = vmatpush1.msra.mxu0 0.0
      %1612 = vmatprep.subr.mxu0 0.0
      %1613 = vmatpush1.msra.mxu0 0.0
      %1614 = vmatprep.subr.mxu0 0.0
      %1615 = vmatpush1.msra.mxu0 0.0
      %1616 = vmatprep.subr.mxu0 0.0
      %1617 = vmatpush1.msra.mxu0 0.0
      %1618 = vmatprep.subr.mxu0 0.0
      %1619 = vmatpush1.msra.mxu0 0.0
      %1620 = vmatprep.subr.mxu0 0.0
      %1621 = vmatpush1.msra.mxu0 0.0
      %1622 = vmatprep.subr.mxu0 0.0
      %1623 = vmatpush1.msra.mxu0 0.0
      %1624 = vmatprep.subr.mxu0 0.0
      %1625 = vmatpush1.msra.mxu0 0.0
      %1626 = vmatprep.subr.mxu0 0.0
      %1627 = vmatpush1.msra.mxu0 0.0
      %1628 = vmatprep.subr.mxu0 0.0
      %1629 = vmatpush1.msra.mxu0 0.0
      %1630 = vmatprep.subr.mxu0 0.0
      %1631 = vmatpush1.msra.mxu0 0.0
      %1632 = vmatprep.subr.mxu0 0.0
      %1633 = vmatpush1.msra.mxu0 0.0
      %1634 = vmatprep.subr.mxu0 0.0
      %1635 = vmatpush1.msra.mxu0 0.0
      %1636 = vmatprep.subr.mxu0 0.0
      %1637 = vmatpush1.msra.mxu0 0.0
      %1638 = vmatprep.subr.mxu0 0.0
      %1639 = vmatpush1.msra.mxu0 0.0
      %1640 = vmatprep.subr.mxu0 0.0
      %1641 = vmatpush1.msra.mxu0 0.0
      %1642 = vmatprep.subr.mxu0 0.0
      %1643 = vmatpush1.msra.mxu0 0.0
      %1644 = vmatprep.subr.mxu0 0.0
      %1645 = vmatpush1.msra.mxu0 0.0
      %1646 = vmatprep.subr.mxu0 0.0
      %1647 = vmatpush1.msra.mxu0 0.0
      %1648 = vmatprep.subr.mxu0 0.0
      %1649 = vmatpush1.msra.mxu0 0.0
      %1650 = vmatprep.subr.mxu0 0.0
      %1651 = vmatpush1.msra.mxu0 0.0
      %1652 = vmatprep.mubr.f32.mxu0 0.0
      %1653 = vmatmul.mubr.f32.gmra.mrb[0].mxu0 %v1580
      %v1654 = vpop.f32.mrb[0].mxu0
      %v1655 = vadd.f32 %v824, %v1654
      %v1656 = vpop.f32.mrb[0].mxu0
      %v1657 = vadd.f32 %v826, %v1656
      %1658 = vmatprep.mubr.f32.mxu0 0.0
      %1659 = vmatmul.mubr.f32.gmra.mrb[0].mxu0 %v1582
      %v1660 = vpop.f32.mrb[0].mxu0
      %v1661 = vadd.f32 %v830, %v1660
      %v1662 = vpop.f32.mrb[0].mxu0
      %v1663 = vadd.f32 %v832, %v1662
      %1664 = vmatprep.mubr.f32.mxu0 0.0
      %1665 = vmatmul.mubr.f32.gmra.mrb[0].mxu0 %v1584
      %v1666 = vpop.f32.mrb[0].mxu0
      %v1667 = vadd.f32 %v836, %v1666
      %v1668 = vpop.f32.mrb[0].mxu0
      %v1669 = vadd.f32 %v838, %v1668
      %1670 = vmatprep.mubr.f32.mxu0 0.0
      %1671 = vmatmul.mubr.f32.gmra.mrb[0].mxu0 %v1586
      %v1672 = vpop.f32.mrb[0].mxu0
      %v1673 = vadd.f32 %v842, %v1672
      %v1674 = vpop.f32.mrb[0].mxu0
      %v1675 = vadd.f32 %v844, %v1674
      %1676 = vdwg.mxu0
      %v1677 = vsel %vm532, %v483, 0
      %v1679 = vsel %vm532, %v484, 0
      %v1681 = vsel %vm532, %v485, 0
      %v1683 = vsel %vm532, %v486, 0
      %1685 = vmatprep.subr.mxu0 %v504
      %1686 = vmatpush1.msra.mxu0 %v503
      %1687 = vmatprep.subr.mxu0 %v506
      %1688 = vmatpush1.msra.mxu0 %v505
      %1689 = vmatprep.subr.mxu0 %v508
      %1690 = vmatpush1.msra.mxu0 %v507
      %1691 = vmatprep.subr.mxu0 %v510
      %1692 = vmatpush1.msra.mxu0 %v509
      %1693 = vmatprep.subr.mxu0 0.0
      %1694 = vmatpush1.msra.mxu0 0.0
      %1695 = vmatprep.subr.mxu0 0.0
      %1696 = vmatpush1.msra.mxu0 0.0
      %1697 = vmatprep.subr.mxu0 0.0
      %1698 = vmatpush1.msra.mxu0 0.0
      %1699 = vmatprep.subr.mxu0 0.0
      %1700 = vmatpush1.msra.mxu0 0.0
      %1701 = vmatprep.subr.mxu0 0.0
      %1702 = vmatpush1.msra.mxu0 0.0
      %1703 = vmatprep.subr.mxu0 0.0
      %1704 = vmatpush1.msra.mxu0 0.0
      %1705 = vmatprep.subr.mxu0 0.0
      %1706 = vmatpush1.msra.mxu0 0.0
      %1707 = vmatprep.subr.mxu0 0.0
      %1708 = vmatpush1.msra.mxu0 0.0
      %1709 = vmatprep.subr.mxu0 0.0
      %1710 = vmatpush1.msra.mxu0 0.0
      %1711 = vmatprep.subr.mxu0 0.0
      %1712 = vmatpush1.msra.mxu0 0.0
      %1713 = vmatprep.subr.mxu0 0.0
      %1714 = vmatpush1.msra.mxu0 0.0
      %1715 = vmatprep.subr.mxu0 0.0
      %1716 = vmatpush1.msra.mxu0 0.0
      %1717 = vmatprep.subr.mxu0 0.0
      %1718 = vmatpush1.msra.mxu0 0.0
      %1719 = vmatprep.subr.mxu0 0.0
      %1720 = vmatpush1.msra.mxu0 0.0
      %1721 = vmatprep.subr.mxu0 0.0
      %1722 = vmatpush1.msra.mxu0 0.0
      %1723 = vmatprep.subr.mxu0 0.0
      %1724 = vmatpush1.msra.mxu0 0.0
      %1725 = vmatprep.subr.mxu0 0.0
      %1726 = vmatpush1.msra.mxu0 0.0
      %1727 = vmatprep.subr.mxu0 0.0
      %1728 = vmatpush1.msra.mxu0 0.0
      %1729 = vmatprep.subr.mxu0 0.0
      %1730 = vmatpush1.msra.mxu0 0.0
      %1731 = vmatprep.subr.mxu0 0.0
      %1732 = vmatpush1.msra.mxu0 0.0
      %1733 = vmatprep.subr.mxu0 0.0
      %1734 = vmatpush1.msra.mxu0 0.0
      %1735 = vmatprep.subr.mxu0 0.0
      %1736 = vmatpush1.msra.mxu0 0.0
      %1737 = vmatprep.subr.mxu0 0.0
      %1738 = vmatpush1.msra.mxu0 0.0
      %1739 = vmatprep.subr.mxu0 0.0
      %1740 = vmatpush1.msra.mxu0 0.0
      %1741 = vmatprep.subr.mxu0 0.0
      %1742 = vmatpush1.msra.mxu0 0.0
      %1743 = vmatprep.subr.mxu0 0.0
      %1744 = vmatpush1.msra.mxu0 0.0
      %1745 = vmatprep.subr.mxu0 0.0
      %1746 = vmatpush1.msra.mxu0 0.0
      %1747 = vmatprep.subr.mxu0 0.0
      %1748 = vmatpush1.msra.mxu0 0.0
      %1749 = vmatprep.mubr.f32.mxu0 0.0
      %1750 = vmatmul.mubr.f32.gmra.mrb[0].mxu0 %v1677
      %v1751 = vpop.f32.mrb[0].mxu0
      %v1752 = vadd.f32 %v932, %v1751
      %v1753 = vpop.f32.mrb[0].mxu0
      %v1754 = vadd.f32 %v934, %v1753
      %1755 = vmatprep.mubr.f32.mxu0 0.0
      %1756 = vmatmul.mubr.f32.gmra.mrb[0].mxu0 %v1679
      %v1757 = vpop.f32.mrb[0].mxu0
      %v1758 = vadd.f32 %v938, %v1757
      %v1759 = vpop.f32.mrb[0].mxu0
      %v1760 = vadd.f32 %v940, %v1759
      %1761 = vmatprep.mubr.f32.mxu0 0.0
      %1762 = vmatmul.mubr.f32.gmra.mrb[0].mxu0 %v1681
      %v1763 = vpop.f32.mrb[0].mxu0
      %v1764 = vadd.f32 %v944, %v1763
      %v1765 = vpop.f32.mrb[0].mxu0
      %v1766 = vadd.f32 %v946, %v1765
      %1767 = vmatprep.mubr.f32.mxu0 0.0
      %1768 = vmatmul.mubr.f32.gmra.mrb[0].mxu0 %v1683
      %v1769 = vpop.f32.mrb[0].mxu0
      %v1770 = vadd.f32 %v950, %v1769
      %v1771 = vpop.f32.mrb[0].mxu0
      %v1772 = vadd.f32 %v952, %v1771
      %1773 = vdwg.mxu0
      %v1774 = vsel %vm532, %v487, 0
      %v1776 = vsel %vm532, %v488, 0
      %v1778 = vsel %vm532, %v489, 0
      %v1780 = vsel %vm532, %v490, 0
      %1782 = vmatprep.subr.mxu0 %v504
      %1783 = vmatpush1.msra.mxu0 %v503
      %1784 = vmatprep.subr.mxu0 %v506
      %1785 = vmatpush1.msra.mxu0 %v505
      %1786 = vmatprep.subr.mxu0 %v508
      %1787 = vmatpush1.msra.mxu0 %v507
      %1788 = vmatprep.subr.mxu0 %v510
      %1789 = vmatpush1.msra.mxu0 %v509
      %1790 = vmatprep.subr.mxu0 0.0
      %1791 = vmatpush1.msra.mxu0 0.0
      %1792 = vmatprep.subr.mxu0 0.0
      %1793 = vmatpush1.msra.mxu0 0.0
      %1794 = vmatprep.subr.mxu0 0.0
      %1795 = vmatpush1.msra.mxu0 0.0
      %1796 = vmatprep.subr.mxu0 0.0
      %1797 = vmatpush1.msra.mxu0 0.0
      %1798 = vmatprep.subr.mxu0 0.0
      %1799 = vmatpush1.msra.mxu0 0.0
      %1800 = vmatprep.subr.mxu0 0.0
      %1801 = vmatpush1.msra.mxu0 0.0
      %1802 = vmatprep.subr.mxu0 0.0
      %1803 = vmatpush1.msra.mxu0 0.0
      %1804 = vmatprep.subr.mxu0 0.0
      %1805 = vmatpush1.msra.mxu0 0.0
      %1806 = vmatprep.subr.mxu0 0.0
      %1807 = vmatpush1.msra.mxu0 0.0
      %1808 = vmatprep.subr.mxu0 0.0
      %1809 = vmatpush1.msra.mxu0 0.0
      %1810 = vmatprep.subr.mxu0 0.0
      %1811 = vmatpush1.msra.mxu0 0.0
      %1812 = vmatprep.subr.mxu0 0.0
      %1813 = vmatpush1.msra.mxu0 0.0
      %1814 = vmatprep.subr.mxu0 0.0
      %1815 = vmatpush1.msra.mxu0 0.0
      %1816 = vmatprep.subr.mxu0 0.0
      %1817 = vmatpush1.msra.mxu0 0.0
      %1818 = vmatprep.subr.mxu0 0.0
      %1819 = vmatpush1.msra.mxu0 0.0
      %1820 = vmatprep.subr.mxu0 0.0
      %1821 = vmatpush1.msra.mxu0 0.0
      %1822 = vmatprep.subr.mxu0 0.0
      %1823 = vmatpush1.msra.mxu0 0.0
      %1824 = vmatprep.subr.mxu0 0.0
      %1825 = vmatpush1.msra.mxu0 0.0
      %1826 = vmatprep.subr.mxu0 0.0
      %1827 = vmatpush1.msra.mxu0 0.0
      %1828 = vmatprep.subr.mxu0 0.0
      %1829 = vmatpush1.msra.mxu0 0.0
      %1830 = vmatprep.subr.mxu0 0.0
      %1831 = vmatpush1.msra.mxu0 0.0
      %1832 = vmatprep.subr.mxu0 0.0
      %1833 = vmatpush1.msra.mxu0 0.0
      %1834 = vmatprep.subr.mxu0 0.0
      %1835 = vmatpush1.msra.mxu0 0.0
      %1836 = vmatprep.subr.mxu0 0.0
      %1837 = vmatpush1.msra.mxu0 0.0
      %1838 = vmatprep.subr.mxu0 0.0
      %1839 = vmatpush1.msra.mxu0 0.0
      %1840 = vmatprep.subr.mxu0 0.0
      %1841 = vmatpush1.msra.mxu0 0.0
      %1842 = vmatprep.subr.mxu0 0.0
      %1843 = vmatpush1.msra.mxu0 0.0
      %1844 = vmatprep.subr.mxu0 0.0
      %1845 = vmatpush1.msra.mxu0 0.0
      %1846 = vmatprep.mubr.f32.mxu0 0.0
      %1847 = vmatmul.mubr.f32.gmra.mrb[0].mxu0 %v1774
      %v1848 = vpop.f32.mrb[0].mxu0
      %v1849 = vadd.f32 %v1040, %v1848
      %v1850 = vpop.f32.mrb[0].mxu0
      %v1851 = vadd.f32 %v1042, %v1850
      %1852 = vmatprep.mubr.f32.mxu0 0.0
      %1853 = vmatmul.mubr.f32.gmra.mrb[0].mxu0 %v1776
      %v1854 = vpop.f32.mrb[0].mxu0
      %v1855 = vadd.f32 %v1046, %v1854
      %v1856 = vpop.f32.mrb[0].mxu0
      %v1857 = vadd.f32 %v1048, %v1856
      %1858 = vmatprep.mubr.f32.mxu0 0.0
      %1859 = vmatmul.mubr.f32.gmra.mrb[0].mxu0 %v1778
      %v1860 = vpop.f32.mrb[0].mxu0
      %v1861 = vadd.f32 %v1052, %v1860
      %v1862 = vpop.f32.mrb[0].mxu0
      %v1863 = vadd.f32 %v1054, %v1862
      %1864 = vmatprep.mubr.f32.mxu0 0.0
      %1865 = vmatmul.mubr.f32.gmra.mrb[0].mxu0 %v1780
      %v1866 = vpop.f32.mrb[0].mxu0
      %v1867 = vadd.f32 %v1058, %v1866
      %v1868 = vpop.f32.mrb[0].mxu0
      %v1869 = vadd.f32 %v1060, %v1868
      %1870 = vdwg.mxu0
      %v1871 = vsel %vm532, %v491, 0
      %v1873 = vsel %vm532, %v492, 0
      %v1875 = vsel %vm532, %v493, 0
      %v1877 = vsel %vm532, %v494, 0
      %1879 = vmatprep.subr.mxu0 %v504
      %1880 = vmatpush1.msra.mxu0 %v503
      %1881 = vmatprep.subr.mxu0 %v506
      %1882 = vmatpush1.msra.mxu0 %v505
      %1883 = vmatprep.subr.mxu0 %v508
      %1884 = vmatpush1.msra.mxu0 %v507
      %1885 = vmatprep.subr.mxu0 %v510
      %1886 = vmatpush1.msra.mxu0 %v509
      %1887 = vmatprep.subr.mxu0 0.0
      %1888 = vmatpush1.msra.mxu0 0.0
      %1889 = vmatprep.subr.mxu0 0.0
      %1890 = vmatpush1.msra.mxu0 0.0
      %1891 = vmatprep.subr.mxu0 0.0
      %1892 = vmatpush1.msra.mxu0 0.0
      %1893 = vmatprep.subr.mxu0 0.0
      %1894 = vmatpush1.msra.mxu0 0.0
      %1895 = vmatprep.subr.mxu0 0.0
      %1896 = vmatpush1.msra.mxu0 0.0
      %1897 = vmatprep.subr.mxu0 0.0
      %1898 = vmatpush1.msra.mxu0 0.0
      %1899 = vmatprep.subr.mxu0 0.0
      %1900 = vmatpush1.msra.mxu0 0.0
      %1901 = vmatprep.subr.mxu0 0.0
      %1902 = vmatpush1.msra.mxu0 0.0
      %1903 = vmatprep.subr.mxu0 0.0
      %1904 = vmatpush1.msra.mxu0 0.0
      %1905 = vmatprep.subr.mxu0 0.0
      %1906 = vmatpush1.msra.mxu0 0.0
      %1907 = vmatprep.subr.mxu0 0.0
      %1908 = vmatpush1.msra.mxu0 0.0
      %1909 = vmatprep.subr.mxu0 0.0
      %1910 = vmatpush1.msra.mxu0 0.0
      %1911 = vmatprep.subr.mxu0 0.0
      %1912 = vmatpush1.msra.mxu0 0.0
      %1913 = vmatprep.subr.mxu0 0.0
      %1914 = vmatpush1.msra.mxu0 0.0
      %1915 = vmatprep.subr.mxu0 0.0
      %1916 = vmatpush1.msra.mxu0 0.0
      %1917 = vmatprep.subr.mxu0 0.0
      %1918 = vmatpush1.msra.mxu0 0.0
      %1919 = vmatprep.subr.mxu0 0.0
      %1920 = vmatpush1.msra.mxu0 0.0
      %1921 = vmatprep.subr.mxu0 0.0
      %1922 = vmatpush1.msra.mxu0 0.0
      %1923 = vmatprep.subr.mxu0 0.0
      %1924 = vmatpush1.msra.mxu0 0.0
      %1925 = vmatprep.subr.mxu0 0.0
      %1926 = vmatpush1.msra.mxu0 0.0
      %1927 = vmatprep.subr.mxu0 0.0
      %1928 = vmatpush1.msra.mxu0 0.0
      %1929 = vmatprep.subr.mxu0 0.0
      %1930 = vmatpush1.msra.mxu0 0.0
      %1931 = vmatprep.subr.mxu0 0.0
      %1932 = vmatpush1.msra.mxu0 0.0
      %1933 = vmatprep.subr.mxu0 0.0
      %1934 = vmatpush1.msra.mxu0 0.0
      %1935 = vmatprep.subr.mxu0 0.0
      %1936 = vmatpush1.msra.mxu0 0.0
      %1937 = vmatprep.subr.mxu0 0.0
      %1938 = vmatpush1.msra.mxu0 0.0
      %1939 = vmatprep.subr.mxu0 0.0
      %1940 = vmatpush1.msra.mxu0 0.0
      %1941 = vmatprep.subr.mxu0 0.0
      %1942 = vmatpush1.msra.mxu0 0.0
      %1943 = vmatprep.mubr.f32.mxu0 0.0
      %1944 = vmatmul.mubr.f32.gmra.mrb[0].mxu0 %v1871
      %v1945 = vpop.f32.mrb[0].mxu0
      %v1946 = vadd.f32 %v1148, %v1945
      %v1947 = vpop.f32.mrb[0].mxu0
      %v1948 = vadd.f32 %v1150, %v1947
      %1949 = vmatprep.mubr.f32.mxu0 0.0
      %1950 = vmatmul.mubr.f32.gmra.mrb[0].mxu0 %v1873
      %v1951 = vpop.f32.mrb[0].mxu0
      %v1952 = vadd.f32 %v1154, %v1951
      %v1953 = vpop.f32.mrb[0].mxu0
      %v1954 = vadd.f32 %v1156, %v1953
      %1955 = vmatprep.mubr.f32.mxu0 0.0
      %1956 = vmatmul.mubr.f32.gmra.mrb[0].mxu0 %v1875
      %v1957 = vpop.f32.mrb[0].mxu0
      %v1958 = vadd.f32 %v1160, %v1957
      %v1959 = vpop.f32.mrb[0].mxu0
      %v1960 = vadd.f32 %v1162, %v1959
      %1961 = vmatprep.mubr.f32.mxu0 0.0
      %1962 = vmatmul.mubr.f32.gmra.mrb[0].mxu0 %v1877
      %v1963 = vpop.f32.mrb[0].mxu0
      %v1964 = vadd.f32 %v1166, %v1963
      %v1965 = vpop.f32.mrb[0].mxu0
      %v1966 = vadd.f32 %v1168, %v1965
      %1967 = vdwg.mxu0
      %v1968 = vsel %vm532, %v495, 0
      %v1970 = vsel %vm532, %v496, 0
      %v1972 = vsel %vm532, %v497, 0
      %v1974 = vsel %vm532, %v498, 0
      %1976 = vmatprep.subr.mxu0 %v504
      %1977 = vmatpush1.msra.mxu0 %v503
      %1978 = vmatprep.subr.mxu0 %v506
      %1979 = vmatpush1.msra.mxu0 %v505
      %1980 = vmatprep.subr.mxu0 %v508
      %1981 = vmatpush1.msra.mxu0 %v507
      %1982 = vmatprep.subr.mxu0 %v510
      %1983 = vmatpush1.msra.mxu0 %v509
      %1984 = vmatprep.subr.mxu0 0.0
      %1985 = vmatpush1.msra.mxu0 0.0
      %1986 = vmatprep.subr.mxu0 0.0
      %1987 = vmatpush1.msra.mxu0 0.0
      %1988 = vmatprep.subr.mxu0 0.0
      %1989 = vmatpush1.msra.mxu0 0.0
      %1990 = vmatprep.subr.mxu0 0.0
      %1991 = vmatpush1.msra.mxu0 0.0
      %1992 = vmatprep.subr.mxu0 0.0
      %1993 = vmatpush1.msra.mxu0 0.0
      %1994 = vmatprep.subr.mxu0 0.0
      %1995 = vmatpush1.msra.mxu0 0.0
      %1996 = vmatprep.subr.mxu0 0.0
      %1997 = vmatpush1.msra.mxu0 0.0
      %1998 = vmatprep.subr.mxu0 0.0
      %1999 = vmatpush1.msra.mxu0 0.0
      %2000 = vmatprep.subr.mxu0 0.0
      %2001 = vmatpush1.msra.mxu0 0.0
      %2002 = vmatprep.subr.mxu0 0.0
      %2003 = vmatpush1.msra.mxu0 0.0
      %2004 = vmatprep.subr.mxu0 0.0
      %2005 = vmatpush1.msra.mxu0 0.0
      %2006 = vmatprep.subr.mxu0 0.0
      %2007 = vmatpush1.msra.mxu0 0.0
      %2008 = vmatprep.subr.mxu0 0.0
      %2009 = vmatpush1.msra.mxu0 0.0
      %2010 = vmatprep.subr.mxu0 0.0
      %2011 = vmatpush1.msra.mxu0 0.0
      %2012 = vmatprep.subr.mxu0 0.0
      %2013 = vmatpush1.msra.mxu0 0.0
      %2014 = vmatprep.subr.mxu0 0.0
      %2015 = vmatpush1.msra.mxu0 0.0
      %2016 = vmatprep.subr.mxu0 0.0
      %2017 = vmatpush1.msra.mxu0 0.0
      %2018 = vmatprep.subr.mxu0 0.0
      %2019 = vmatpush1.msra.mxu0 0.0
      %2020 = vmatprep.subr.mxu0 0.0
      %2021 = vmatpush1.msra.mxu0 0.0
      %2022 = vmatprep.subr.mxu0 0.0
      %2023 = vmatpush1.msra.mxu0 0.0
      %2024 = vmatprep.subr.mxu0 0.0
      %2025 = vmatpush1.msra.mxu0 0.0
      %2026 = vmatprep.subr.mxu0 0.0
      %2027 = vmatpush1.msra.mxu0 0.0
      %2028 = vmatprep.subr.mxu0 0.0
      %2029 = vmatpush1.msra.mxu0 0.0
      %2030 = vmatprep.subr.mxu0 0.0
      %2031 = vmatpush1.msra.mxu0 0.0
      %2032 = vmatprep.subr.mxu0 0.0
      %2033 = vmatpush1.msra.mxu0 0.0
      %2034 = vmatprep.subr.mxu0 0.0
      %2035 = vmatpush1.msra.mxu0 0.0
      %2036 = vmatprep.subr.mxu0 0.0
      %2037 = vmatpush1.msra.mxu0 0.0
      %2038 = vmatprep.subr.mxu0 0.0
      %2039 = vmatpush1.msra.mxu0 0.0
      %2040 = vmatprep.mubr.f32.mxu0 0.0
      %2041 = vmatmul.mubr.f32.gmra.mrb[0].mxu0 %v1968
      %v2042 = vpop.f32.mrb[0].mxu0
      %v2043 = vadd.f32 %v1256, %v2042
      %v2044 = vpop.f32.mrb[0].mxu0
      %v2045 = vadd.f32 %v1258, %v2044
      %2046 = vmatprep.mubr.f32.mxu0 0.0
      %2047 = vmatmul.mubr.f32.gmra.mrb[0].mxu0 %v1970
      %v2048 = vpop.f32.mrb[0].mxu0
      %v2049 = vadd.f32 %v1262, %v2048
      %v2050 = vpop.f32.mrb[0].mxu0
      %v2051 = vadd.f32 %v1264, %v2050
      %2052 = vmatprep.mubr.f32.mxu0 0.0
      %2053 = vmatmul.mubr.f32.gmra.mrb[0].mxu0 %v1972
      %v2054 = vpop.f32.mrb[0].mxu0
      %v2055 = vadd.f32 %v1268, %v2054
      %v2056 = vpop.f32.mrb[0].mxu0
      %v2057 = vadd.f32 %v1270, %v2056
      %2058 = vmatprep.mubr.f32.mxu0 0.0
      %2059 = vmatmul.mubr.f32.gmra.mrb[0].mxu0 %v1974
      %v2060 = vpop.f32.mrb[0].mxu0
      %v2061 = vadd.f32 %v1274, %v2060
      %v2062 = vpop.f32.mrb[0].mxu0
      %v2063 = vadd.f32 %v1276, %v2062
      %2064 = vdwg.mxu0
      %v2065 = vsel %vm532, %v499, 0
      %v2067 = vsel %vm532, %v500, 0
      %v2069 = vsel %vm532, %v501, 0
      %v2071 = vsel %vm532, %v502, 0
      %2073 = vmatprep.subr.mxu0 %v504
      %2074 = vmatpush1.msra.mxu0 %v503
      %2075 = vmatprep.subr.mxu0 %v506
      %2076 = vmatpush1.msra.mxu0 %v505
      %2077 = vmatprep.subr.mxu0 %v508
      %2078 = vmatpush1.msra.mxu0 %v507
      %2079 = vmatprep.subr.mxu0 %v510
      %2080 = vmatpush1.msra.mxu0 %v509
      %2081 = vmatprep.subr.mxu0 0.0
      %2082 = vmatpush1.msra.mxu0 0.0
      %2083 = vmatprep.subr.mxu0 0.0
      %2084 = vmatpush1.msra.mxu0 0.0
      %2085 = vmatprep.subr.mxu0 0.0
      %2086 = vmatpush1.msra.mxu0 0.0
      %2087 = vmatprep.subr.mxu0 0.0
      %2088 = vmatpush1.msra.mxu0 0.0
      %2089 = vmatprep.subr.mxu0 0.0
      %2090 = vmatpush1.msra.mxu0 0.0
      %2091 = vmatprep.subr.mxu0 0.0
      %2092 = vmatpush1.msra.mxu0 0.0
      %2093 = vmatprep.subr.mxu0 0.0
      %2094 = vmatpush1.msra.mxu0 0.0
      %2095 = vmatprep.subr.mxu0 0.0
      %2096 = vmatpush1.msra.mxu0 0.0
      %2097 = vmatprep.subr.mxu0 0.0
      %2098 = vmatpush1.msra.mxu0 0.0
      %2099 = vmatprep.subr.mxu0 0.0
      %2100 = vmatpush1.msra.mxu0 0.0
      %2101 = vmatprep.subr.mxu0 0.0
      %2102 = vmatpush1.msra.mxu0 0.0
      %2103 = vmatprep.subr.mxu0 0.0
      %2104 = vmatpush1.msra.mxu0 0.0
      %2105 = vmatprep.subr.mxu0 0.0
      %2106 = vmatpush1.msra.mxu0 0.0
      %2107 = vmatprep.subr.mxu0 0.0
      %2108 = vmatpush1.msra.mxu0 0.0
      %2109 = vmatprep.subr.mxu0 0.0
      %2110 = vmatpush1.msra.mxu0 0.0
      %2111 = vmatprep.subr.mxu0 0.0
      %2112 = vmatpush1.msra.mxu0 0.0
      %2113 = vmatprep.subr.mxu0 0.0
      %2114 = vmatpush1.msra.mxu0 0.0
      %2115 = vmatprep.subr.mxu0 0.0
      %2116 = vmatpush1.msra.mxu0 0.0
      %2117 = vmatprep.subr.mxu0 0.0
      %2118 = vmatpush1.msra.mxu0 0.0
      %2119 = vmatprep.subr.mxu0 0.0
      %2120 = vmatpush1.msra.mxu0 0.0
      %2121 = vmatprep.subr.mxu0 0.0
      %2122 = vmatpush1.msra.mxu0 0.0
      %2123 = vmatprep.subr.mxu0 0.0
      %2124 = vmatpush1.msra.mxu0 0.0
      %2125 = vmatprep.subr.mxu0 0.0
      %2126 = vmatpush1.msra.mxu0 0.0
      %2127 = vmatprep.subr.mxu0 0.0
      %2128 = vmatpush1.msra.mxu0 0.0
      %2129 = vmatprep.subr.mxu0 0.0
      %2130 = vmatpush1.msra.mxu0 0.0
      %2131 = vmatprep.subr.mxu0 0.0
      %2132 = vmatpush1.msra.mxu0 0.0
      %2133 = vmatprep.subr.mxu0 0.0
      %2134 = vmatpush1.msra.mxu0 0.0
      %2135 = vmatprep.subr.mxu0 0.0
      %2136 = vmatpush1.msra.mxu0 0.0
      %2137 = vmatprep.mubr.f32.mxu0 0.0
      %2138 = vmatmul.mubr.f32.gmra.mrb[0].mxu0 %v2065
      %v2139 = vpop.f32.mrb[0].mxu0
      %v2140 = vadd.f32 %v1364, %v2139
      %v2141 = vpop.f32.mrb[0].mxu0
      %v2142 = vadd.f32 %v1366, %v2141
      %2143 = vmatprep.mubr.f32.mxu0 0.0
      %2144 = vmatmul.mubr.f32.gmra.mrb[0].mxu0 %v2067
      %v2145 = vpop.f32.mrb[0].mxu0
      %v2146 = vadd.f32 %v1370, %v2145
      %v2147 = vpop.f32.mrb[0].mxu0
      %v2148 = vadd.f32 %v1372, %v2147
      %2149 = vmatprep.mubr.f32.mxu0 0.0
      %2150 = vmatmul.mubr.f32.gmra.mrb[0].mxu0 %v2069
      %v2151 = vpop.f32.mrb[0].mxu0
      %v2152 = vadd.f32 %v1376, %v2151
      %v2153 = vpop.f32.mrb[0].mxu0
      %v2154 = vadd.f32 %v1378, %v2153
      %2155 = vmatprep.mubr.f32.mxu0 0.0
      %2156 = vmatmul.mubr.f32.gmra.mrb[0].mxu0 %v2071
      %v2157 = vpop.f32.mrb[0].mxu0
      %v2158 = vadd.f32 %v1382, %v2157
      %v2159 = vpop.f32.mrb[0].mxu0
      %v2160 = vadd.f32 %v1384, %v2159
      %2161 = vdwg.mxu0
      %s2162 = scalar_lea.vmem %s1, 128
      %v2163 = vld [vmem:[%s2162] sm:$0xff]
      %v2164 = vld [vmem:[%s2162 + $0x8] sm:$0xff]
      %v2165 = vld [vmem:[%s2162 + $0x10] sm:$0xff]
      %v2166 = vld [vmem:[%s2162 + $0x18] sm:$0xff]
      %v2167 = vld [vmem:[%s2162 + $0x20] sm:$0xff]
      %v2168 = vld [vmem:[%s2162 + $0x28] sm:$0xff]
      %v2169 = vld [vmem:[%s2162 + $0x30] sm:$0xff]
      %v2170 = vld [vmem:[%s2162 + $0x38] sm:$0xff]
      %vm2171 = vcmask 1045504
      %v2172 = vrot.slane %v471, 2
      %v2173 = vrot.slane %v472, 2
      %v2174 = vsel %vm2171, %v2172, %v2173
      %v2175 = vrot.slane %v473, 2
      %v2176 = vsel %vm2171, %v2173, %v2175
      %v2177 = vrot.slane %v474, 2
      %v2178 = vsel %vm2171, %v2175, %v2177
      %v2179 = vsel %vm532, %v2174, 0
      %v2181 = vsel %vm532, %v2176, 0
      %v2183 = vsel %vm532, %v2178, 0
      %v2185 = vsel %vm532, %v2177, 0
      %2187 = vmatprep.subr.mxu0 %v2164
      %2188 = vmatpush1.msra.mxu0 %v2163
      %2189 = vmatprep.subr.mxu0 %v2166
      %2190 = vmatpush1.msra.mxu0 %v2165
      %2191 = vmatprep.subr.mxu0 %v2168
      %2192 = vmatpush1.msra.mxu0 %v2167
      %2193 = vmatprep.subr.mxu0 %v2170
      %2194 = vmatpush1.msra.mxu0 %v2169
      %2195 = vmatprep.subr.mxu0 0.0
      %2196 = vmatpush1.msra.mxu0 0.0
      %2197 = vmatprep.subr.mxu0 0.0
      %2198 = vmatpush1.msra.mxu0 0.0
      %2199 = vmatprep.subr.mxu0 0.0
      %2200 = vmatpush1.msra.mxu0 0.0
      %2201 = vmatprep.subr.mxu0 0.0
      %2202 = vmatpush1.msra.mxu0 0.0
      %2203 = vmatprep.subr.mxu0 0.0
      %2204 = vmatpush1.msra.mxu0 0.0
      %2205 = vmatprep.subr.mxu0 0.0
      %2206 = vmatpush1.msra.mxu0 0.0
      %2207 = vmatprep.subr.mxu0 0.0
      %2208 = vmatpush1.msra.mxu0 0.0
      %2209 = vmatprep.subr.mxu0 0.0
      %2210 = vmatpush1.msra.mxu0 0.0
      %2211 = vmatprep.subr.mxu0 0.0
      %2212 = vmatpush1.msra.mxu0 0.0
      %2213 = vmatprep.subr.mxu0 0.0
      %2214 = vmatpush1.msra.mxu0 0.0
      %2215 = vmatprep.subr.mxu0 0.0
      %2216 = vmatpush1.msra.mxu0 0.0
      %2217 = vmatprep.subr.mxu0 0.0
      %2218 = vmatpush1.msra.mxu0 0.0
      %2219 = vmatprep.subr.mxu0 0.0
      %2220 = vmatpush1.msra.mxu0 0.0
      %2221 = vmatprep.subr.mxu0 0.0
      %2222 = vmatpush1.msra.mxu0 0.0
      %2223 = vmatprep.subr.mxu0 0.0
      %2224 = vmatpush1.msra.mxu0 0.0
      %2225 = vmatprep.subr.mxu0 0.0
      %2226 = vmatpush1.msra.mxu0 0.0
      %2227 = vmatprep.subr.mxu0 0.0
      %2228 = vmatpush1.msra.mxu0 0.0
      %2229 = vmatprep.subr.mxu0 0.0
      %2230 = vmatpush1.msra.mxu0 0.0
      %2231 = vmatprep.subr.mxu0 0.0
      %2232 = vmatpush1.msra.mxu0 0.0
      %2233 = vmatprep.subr.mxu0 0.0
      %2234 = vmatpush1.msra.mxu0 0.0
      %2235 = vmatprep.subr.mxu0 0.0
      %2236 = vmatpush1.msra.mxu0 0.0
      %2237 = vmatprep.subr.mxu0 0.0
      %2238 = vmatpush1.msra.mxu0 0.0
      %2239 = vmatprep.subr.mxu0 0.0
      %2240 = vmatpush1.msra.mxu0 0.0
      %2241 = vmatprep.subr.mxu0 0.0
      %2242 = vmatpush1.msra.mxu0 0.0
      %2243 = vmatprep.subr.mxu0 0.0
      %2244 = vmatpush1.msra.mxu0 0.0
      %2245 = vmatprep.subr.mxu0 0.0
      %2246 = vmatpush1.msra.mxu0 0.0
      %2247 = vmatprep.subr.mxu0 0.0
      %2248 = vmatpush1.msra.mxu0 0.0
      %2249 = vmatprep.subr.mxu0 0.0
      %2250 = vmatpush1.msra.mxu0 0.0
      %2251 = vmatprep.mubr.f32.mxu0 0.0
      %2252 = vmatmul.mubr.f32.gmra.mrb[0].mxu0 %v2179
      %v2253 = vpop.f32.mrb[0].mxu0
      %v2254 = vadd.f32 0.0, %v2253
      %v2255 = vpop.f32.mrb[0].mxu0
      %v2256 = vadd.f32 0.0, %v2255
      %2257 = vmatprep.mubr.f32.mxu0 0.0
      %2258 = vmatmul.mubr.f32.gmra.mrb[0].mxu0 %v2181
      %v2259 = vpop.f32.mrb[0].mxu0
      %v2260 = vadd.f32 0.0, %v2259
      %v2261 = vpop.f32.mrb[0].mxu0
      %v2262 = vadd.f32 0.0, %v2261
      %2263 = vmatprep.mubr.f32.mxu0 0.0
      %2264 = vmatmul.mubr.f32.gmra.mrb[0].mxu0 %v2183
      %v2265 = vpop.f32.mrb[0].mxu0
      %v2266 = vadd.f32 0.0, %v2265
      %v2267 = vpop.f32.mrb[0].mxu0
      %v2268 = vadd.f32 0.0, %v2267
      %2269 = vmatprep.mubr.f32.mxu0 0.0
      %2270 = vmatmul.mubr.f32.gmra.mrb[0].mxu0 %v2185
      %v2271 = vpop.f32.mrb[0].mxu0
      %v2272 = vadd.f32 0.0, %v2271
      %v2273 = vpop.f32.mrb[0].mxu0
      %v2274 = vadd.f32 0.0, %v2273
      %2275 = vdwg.mxu0
      %v2276 = vrot.slane %v475, 2
      %v2277 = vrot.slane %v476, 2
      %v2278 = vsel %vm2171, %v2276, %v2277
      %v2279 = vrot.slane %v477, 2
      %v2280 = vsel %vm2171, %v2277, %v2279
      %v2281 = vrot.slane %v478, 2
      %v2282 = vsel %vm2171, %v2279, %v2281
      %v2283 = vsel %vm532, %v2278, 0
      %v2285 = vsel %vm532, %v2280, 0
      %v2287 = vsel %vm532, %v2282, 0
      %v2289 = vsel %vm532, %v2281, 0
      %2291 = vmatprep.subr.mxu0 %v2164
      %2292 = vmatpush1.msra.mxu0 %v2163
      %2293 = vmatprep.subr.mxu0 %v2166
      %2294 = vmatpush1.msra.mxu0 %v2165
      %2295 = vmatprep.subr.mxu0 %v2168
      %2296 = vmatpush1.msra.mxu0 %v2167
      %2297 = vmatprep.subr.mxu0 %v2170
      %2298 = vmatpush1.msra.mxu0 %v2169
      %2299 = vmatprep.subr.mxu0 0.0
      %2300 = vmatpush1.msra.mxu0 0.0
      %2301 = vmatprep.subr.mxu0 0.0
      %2302 = vmatpush1.msra.mxu0 0.0
      %2303 = vmatprep.subr.mxu0 0.0
      %2304 = vmatpush1.msra.mxu0 0.0
      %2305 = vmatprep.subr.mxu0 0.0
      %2306 = vmatpush1.msra.mxu0 0.0
      %2307 = vmatprep.subr.mxu0 0.0
      %2308 = vmatpush1.msra.mxu0 0.0
      %2309 = vmatprep.subr.mxu0 0.0
      %2310 = vmatpush1.msra.mxu0 0.0
      %2311 = vmatprep.subr.mxu0 0.0
      %2312 = vmatpush1.msra.mxu0 0.0
      %2313 = vmatprep.subr.mxu0 0.0
      %2314 = vmatpush1.msra.mxu0 0.0
      %2315 = vmatprep.subr.mxu0 0.0
      %2316 = vmatpush1.msra.mxu0 0.0
      %2317 = vmatprep.subr.mxu0 0.0
      %2318 = vmatpush1.msra.mxu0 0.0
      %2319 = vmatprep.subr.mxu0 0.0
      %2320 = vmatpush1.msra.mxu0 0.0
      %2321 = vmatprep.subr.mxu0 0.0
      %2322 = vmatpush1.msra.mxu0 0.0
      %2323 = vmatprep.subr.mxu0 0.0
      %2324 = vmatpush1.msra.mxu0 0.0
      %2325 = vmatprep.subr.mxu0 0.0
      %2326 = vmatpush1.msra.mxu0 0.0
      %2327 = vmatprep.subr.mxu0 0.0
      %2328 = vmatpush1.msra.mxu0 0.0
      %2329 = vmatprep.subr.mxu0 0.0
      %2330 = vmatpush1.msra.mxu0 0.0
      %2331 = vmatprep.subr.mxu0 0.0
      %2332 = vmatpush1.msra.mxu0 0.0
      %2333 = vmatprep.subr.mxu0 0.0
      %2334 = vmatpush1.msra.mxu0 0.0
      %2335 = vmatprep.subr.mxu0 0.0
      %2336 = vmatpush1.msra.mxu0 0.0
      %2337 = vmatprep.subr.mxu0 0.0
      %2338 = vmatpush1.msra.mxu0 0.0
      %2339 = vmatprep.subr.mxu0 0.0
      %2340 = vmatpush1.msra.mxu0 0.0
      %2341 = vmatprep.subr.mxu0 0.0
      %2342 = vmatpush1.msra.mxu0 0.0
      %2343 = vmatprep.subr.mxu0 0.0
      %2344 = vmatpush1.msra.mxu0 0.0
      %2345 = vmatprep.subr.mxu0 0.0
      %2346 = vmatpush1.msra.mxu0 0.0
      %2347 = vmatprep.subr.mxu0 0.0
      %2348 = vmatpush1.msra.mxu0 0.0
      %2349 = vmatprep.subr.mxu0 0.0
      %2350 = vmatpush1.msra.mxu0 0.0
      %2351 = vmatprep.subr.mxu0 0.0
      %2352 = vmatpush1.msra.mxu0 0.0
      %2353 = vmatprep.subr.mxu0 0.0
      %2354 = vmatpush1.msra.mxu0 0.0
      %2355 = vmatprep.mubr.f32.mxu0 0.0
      %2356 = vmatmul.mubr.f32.gmra.mrb[0].mxu0 %v2283
      %v2357 = vpop.f32.mrb[0].mxu0
      %v2358 = vadd.f32 0.0, %v2357
      %v2359 = vpop.f32.mrb[0].mxu0
      %v2360 = vadd.f32 0.0, %v2359
      %2361 = vmatprep.mubr.f32.mxu0 0.0
      %2362 = vmatmul.mubr.f32.gmra.mrb[0].mxu0 %v2285
      %v2363 = vpop.f32.mrb[0].mxu0
      %v2364 = vadd.f32 0.0, %v2363
      %v2365 = vpop.f32.mrb[0].mxu0
      %v2366 = vadd.f32 0.0, %v2365
      %2367 = vmatprep.mubr.f32.mxu0 0.0
      %2368 = vmatmul.mubr.f32.gmra.mrb[0].mxu0 %v2287
      %v2369 = vpop.f32.mrb[0].mxu0
      %v2370 = vadd.f32 0.0, %v2369
      %v2371 = vpop.f32.mrb[0].mxu0
      %v2372 = vadd.f32 0.0, %v2371
      %2373 = vmatprep.mubr.f32.mxu0 0.0
      %2374 = vmatmul.mubr.f32.gmra.mrb[0].mxu0 %v2289
      %v2375 = vpop.f32.mrb[0].mxu0
      %v2376 = vadd.f32 0.0, %v2375
      %v2377 = vpop.f32.mrb[0].mxu0
      %v2378 = vadd.f32 0.0, %v2377
      %2379 = vdwg.mxu0
      %v2380 = vrot.slane %v479, 2
      %v2381 = vrot.slane %v480, 2
      %v2382 = vsel %vm2171, %v2380, %v2381
      %v2383 = vrot.slane %v481, 2
      %v2384 = vsel %vm2171, %v2381, %v2383
      %v2385 = vrot.slane %v482, 2
      %v2386 = vsel %vm2171, %v2383, %v2385
      %v2387 = vsel %vm532, %v2382, 0
      %v2389 = vsel %vm532, %v2384, 0
      %v2391 = vsel %vm532, %v2386, 0
      %v2393 = vsel %vm532, %v2385, 0
      %2395 = vmatprep.subr.mxu0 %v2164
      %2396 = vmatpush1.msra.mxu0 %v2163
      %2397 = vmatprep.subr.mxu0 %v2166
      %2398 = vmatpush1.msra.mxu0 %v2165
      %2399 = vmatprep.subr.mxu0 %v2168
      %2400 = vmatpush1.msra.mxu0 %v2167
      %2401 = vmatprep.subr.mxu0 %v2170
      %2402 = vmatpush1.msra.mxu0 %v2169
      %2403 = vmatprep.subr.mxu0 0.0
      %2404 = vmatpush1.msra.mxu0 0.0
      %2405 = vmatprep.subr.mxu0 0.0
      %2406 = vmatpush1.msra.mxu0 0.0
      %2407 = vmatprep.subr.mxu0 0.0
      %2408 = vmatpush1.msra.mxu0 0.0
      %2409 = vmatprep.subr.mxu0 0.0
      %2410 = vmatpush1.msra.mxu0 0.0
      %2411 = vmatprep.subr.mxu0 0.0
      %2412 = vmatpush1.msra.mxu0 0.0
      %2413 = vmatprep.subr.mxu0 0.0
      %2414 = vmatpush1.msra.mxu0 0.0
      %2415 = vmatprep.subr.mxu0 0.0
      %2416 = vmatpush1.msra.mxu0 0.0
      %2417 = vmatprep.subr.mxu0 0.0
      %2418 = vmatpush1.msra.mxu0 0.0
      %2419 = vmatprep.subr.mxu0 0.0
      %2420 = vmatpush1.msra.mxu0 0.0
      %2421 = vmatprep.subr.mxu0 0.0
      %2422 = vmatpush1.msra.mxu0 0.0
      %2423 = vmatprep.subr.mxu0 0.0
      %2424 = vmatpush1.msra.mxu0 0.0
      %2425 = vmatprep.subr.mxu0 0.0
      %2426 = vmatpush1.msra.mxu0 0.0
      %2427 = vmatprep.subr.mxu0 0.0
      %2428 = vmatpush1.msra.mxu0 0.0
      %2429 = vmatprep.subr.mxu0 0.0
      %2430 = vmatpush1.msra.mxu0 0.0
      %2431 = vmatprep.subr.mxu0 0.0
      %2432 = vmatpush1.msra.mxu0 0.0
      %2433 = vmatprep.subr.mxu0 0.0
      %2434 = vmatpush1.msra.mxu0 0.0
      %2435 = vmatprep.subr.mxu0 0.0
      %2436 = vmatpush1.msra.mxu0 0.0
      %2437 = vmatprep.subr.mxu0 0.0
      %2438 = vmatpush1.msra.mxu0 0.0
      %2439 = vmatprep.subr.mxu0 0.0
      %2440 = vmatpush1.msra.mxu0 0.0
      %2441 = vmatprep.subr.mxu0 0.0
      %2442 = vmatpush1.msra.mxu0 0.0
      %2443 = vmatprep.subr.mxu0 0.0
      %2444 = vmatpush1.msra.mxu0 0.0
      %2445 = vmatprep.subr.mxu0 0.0
      %2446 = vmatpush1.msra.mxu0 0.0
      %2447 = vmatprep.subr.mxu0 0.0
      %2448 = vmatpush1.msra.mxu0 0.0
      %2449 = vmatprep.subr.mxu0 0.0
      %2450 = vmatpush1.msra.mxu0 0.0
      %2451 = vmatprep.subr.mxu0 0.0
      %2452 = vmatpush1.msra.mxu0 0.0
      %2453 = vmatprep.subr.mxu0 0.0
      %2454 = vmatpush1.msra.mxu0 0.0
      %2455 = vmatprep.subr.mxu0 0.0
      %2456 = vmatpush1.msra.mxu0 0.0
      %2457 = vmatprep.subr.mxu0 0.0
      %2458 = vmatpush1.msra.mxu0 0.0
      %2459 = vmatprep.mubr.f32.mxu0 0.0
      %2460 = vmatmul.mubr.f32.gmra.mrb[0].mxu0 %v2387
      %v2461 = vpop.f32.mrb[0].mxu0
      %v2462 = vadd.f32 0.0, %v2461
      %v2463 = vpop.f32.mrb[0].mxu0
      %v2464 = vadd.f32 0.0, %v2463
      %2465 = vmatprep.mubr.f32.mxu0 0.0
      %2466 = vmatmul.mubr.f32.gmra.mrb[0].mxu0 %v2389
      %v2467 = vpop.f32.mrb[0].mxu0
      %v2468 = vadd.f32 0.0, %v2467
      %v2469 = vpop.f32.mrb[0].mxu0
      %v2470 = vadd.f32 0.0, %v2469
      %2471 = vmatprep.mubr.f32.mxu0 0.0
      %2472 = vmatmul.mubr.f32.gmra.mrb[0].mxu0 %v2391
      %v2473 = vpop.f32.mrb[0].mxu0
      %v2474 = vadd.f32 0.0, %v2473
      %v2475 = vpop.f32.mrb[0].mxu0
      %v2476 = vadd.f32 0.0, %v2475
      %2477 = vmatprep.mubr.f32.mxu0 0.0
      %2478 = vmatmul.mubr.f32.gmra.mrb[0].mxu0 %v2393
      %v2479 = vpop.f32.mrb[0].mxu0
      %v2480 = vadd.f32 0.0, %v2479
      %v2481 = vpop.f32.mrb[0].mxu0
      %v2482 = vadd.f32 0.0, %v2481
      %2483 = vdwg.mxu0
      %v2484 = vrot.slane %v483, 2
      %v2485 = vrot.slane %v484, 2
      %v2486 = vsel %vm2171, %v2484, %v2485
      %v2487 = vrot.slane %v485, 2
      %v2488 = vsel %vm2171, %v2485, %v2487
      %v2489 = vrot.slane %v486, 2
      %v2490 = vsel %vm2171, %v2487, %v2489
      %v2491 = vsel %vm532, %v2486, 0
      %v2493 = vsel %vm532, %v2488, 0
      %v2495 = vsel %vm532, %v2490, 0
      %v2497 = vsel %vm532, %v2489, 0
      %2499 = vmatprep.subr.mxu0 %v2164
      %2500 = vmatpush1.msra.mxu0 %v2163
      %2501 = vmatprep.subr.mxu0 %v2166
      %2502 = vmatpush1.msra.mxu0 %v2165
      %2503 = vmatprep.subr.mxu0 %v2168
      %2504 = vmatpush1.msra.mxu0 %v2167
      %2505 = vmatprep.subr.mxu0 %v2170
      %2506 = vmatpush1.msra.mxu0 %v2169
      %2507 = vmatprep.subr.mxu0 0.0
      %2508 = vmatpush1.msra.mxu0 0.0
      %2509 = vmatprep.subr.mxu0 0.0
      %2510 = vmatpush1.msra.mxu0 0.0
      %2511 = vmatprep.subr.mxu0 0.0
      %2512 = vmatpush1.msra.mxu0 0.0
      %2513 = vmatprep.subr.mxu0 0.0
      %2514 = vmatpush1.msra.mxu0 0.0
      %2515 = vmatprep.subr.mxu0 0.0
      %2516 = vmatpush1.msra.mxu0 0.0
      %2517 = vmatprep.subr.mxu0 0.0
      %2518 = vmatpush1.msra.mxu0 0.0
      %2519 = vmatprep.subr.mxu0 0.0
      %2520 = vmatpush1.msra.mxu0 0.0
      %2521 = vmatprep.subr.mxu0 0.0
      %2522 = vmatpush1.msra.mxu0 0.0
      %2523 = vmatprep.subr.mxu0 0.0
      %2524 = vmatpush1.msra.mxu0 0.0
      %2525 = vmatprep.subr.mxu0 0.0
      %2526 = vmatpush1.msra.mxu0 0.0
      %2527 = vmatprep.subr.mxu0 0.0
      %2528 = vmatpush1.msra.mxu0 0.0
      %2529 = vmatprep.subr.mxu0 0.0
      %2530 = vmatpush1.msra.mxu0 0.0
      %2531 = vmatprep.subr.mxu0 0.0
      %2532 = vmatpush1.msra.mxu0 0.0
      %2533 = vmatprep.subr.mxu0 0.0
      %2534 = vmatpush1.msra.mxu0 0.0
      %2535 = vmatprep.subr.mxu0 0.0
      %2536 = vmatpush1.msra.mxu0 0.0
      %2537 = vmatprep.subr.mxu0 0.0
      %2538 = vmatpush1.msra.mxu0 0.0
      %2539 = vmatprep.subr.mxu0 0.0
      %2540 = vmatpush1.msra.mxu0 0.0
      %2541 = vmatprep.subr.mxu0 0.0
      %2542 = vmatpush1.msra.mxu0 0.0
      %2543 = vmatprep.subr.mxu0 0.0
      %2544 = vmatpush1.msra.mxu0 0.0
      %2545 = vmatprep.subr.mxu0 0.0
      %2546 = vmatpush1.msra.mxu0 0.0
      %2547 = vmatprep.subr.mxu0 0.0
      %2548 = vmatpush1.msra.mxu0 0.0
      %2549 = vmatprep.subr.mxu0 0.0
      %2550 = vmatpush1.msra.mxu0 0.0
      %2551 = vmatprep.subr.mxu0 0.0
      %2552 = vmatpush1.msra.mxu0 0.0
      %2553 = vmatprep.subr.mxu0 0.0
      %2554 = vmatpush1.msra.mxu0 0.0
      %2555 = vmatprep.subr.mxu0 0.0
      %2556 = vmatpush1.msra.mxu0 0.0
      %2557 = vmatprep.subr.mxu0 0.0
      %2558 = vmatpush1.msra.mxu0 0.0
      %2559 = vmatprep.subr.mxu0 0.0
      %2560 = vmatpush1.msra.mxu0 0.0
      %2561 = vmatprep.subr.mxu0 0.0
      %2562 = vmatpush1.msra.mxu0 0.0
      %2563 = vmatprep.mubr.f32.mxu0 0.0
      %2564 = vmatmul.mubr.f32.gmra.mrb[0].mxu0 %v2491
      %v2565 = vpop.f32.mrb[0].mxu0
      %v2566 = vadd.f32 0.0, %v2565
      %v2567 = vpop.f32.mrb[0].mxu0
      %v2568 = vadd.f32 0.0, %v2567
      %2569 = vmatprep.mubr.f32.mxu0 0.0
      %2570 = vmatmul.mubr.f32.gmra.mrb[0].mxu0 %v2493
      %v2571 = vpop.f32.mrb[0].mxu0
      %v2572 = vadd.f32 0.0, %v2571
      %v2573 = vpop.f32.mrb[0].mxu0
      %v2574 = vadd.f32 0.0, %v2573
      %2575 = vmatprep.mubr.f32.mxu0 0.0
      %2576 = vmatmul.mubr.f32.gmra.mrb[0].mxu0 %v2495
      %v2577 = vpop.f32.mrb[0].mxu0
      %v2578 = vadd.f32 0.0, %v2577
      %v2579 = vpop.f32.mrb[0].mxu0
      %v2580 = vadd.f32 0.0, %v2579
      %2581 = vmatprep.mubr.f32.mxu0 0.0
      %2582 = vmatmul.mubr.f32.gmra.mrb[0].mxu0 %v2497
      %v2583 = vpop.f32.mrb[0].mxu0
      %v2584 = vadd.f32 0.0, %v2583
      %v2585 = vpop.f32.mrb[0].mxu0
      %v2586 = vadd.f32 0.0, %v2585
      %2587 = vdwg.mxu0
      %v2588 = vrot.slane %v487, 2
      %v2589 = vrot.slane %v488, 2
      %v2590 = vsel %vm2171, %v2588, %v2589
      %v2591 = vrot.slane %v489, 2
      %v2592 = vsel %vm2171, %v2589, %v2591
      %v2593 = vrot.slane %v490, 2
      %v2594 = vsel %vm2171, %v2591, %v2593
      %v2595 = vsel %vm532, %v2590, 0
      %v2597 = vsel %vm532, %v2592, 0
      %v2599 = vsel %vm532, %v2594, 0
      %v2601 = vsel %vm532, %v2593, 0
      %2603 = vmatprep.subr.mxu0 %v2164
      %2604 = vmatpush1.msra.mxu0 %v2163
      %2605 = vmatprep.subr.mxu0 %v2166
      %2606 = vmatpush1.msra.mxu0 %v2165
      %2607 = vmatprep.subr.mxu0 %v2168
      %2608 = vmatpush1.msra.mxu0 %v2167
      %2609 = vmatprep.subr.mxu0 %v2170
      %2610 = vmatpush1.msra.mxu0 %v2169
      %2611 = vmatprep.subr.mxu0 0.0
      %2612 = vmatpush1.msra.mxu0 0.0
      %2613 = vmatprep.subr.mxu0 0.0
      %2614 = vmatpush1.msra.mxu0 0.0
      %2615 = vmatprep.subr.mxu0 0.0
      %2616 = vmatpush1.msra.mxu0 0.0
      %2617 = vmatprep.subr.mxu0 0.0
      %2618 = vmatpush1.msra.mxu0 0.0
      %2619 = vmatprep.subr.mxu0 0.0
      %2620 = vmatpush1.msra.mxu0 0.0
      %2621 = vmatprep.subr.mxu0 0.0
      %2622 = vmatpush1.msra.mxu0 0.0
      %2623 = vmatprep.subr.mxu0 0.0
      %2624 = vmatpush1.msra.mxu0 0.0
      %2625 = vmatprep.subr.mxu0 0.0
      %2626 = vmatpush1.msra.mxu0 0.0
      %2627 = vmatprep.subr.mxu0 0.0
      %2628 = vmatpush1.msra.mxu0 0.0
      %2629 = vmatprep.subr.mxu0 0.0
      %2630 = vmatpush1.msra.mxu0 0.0
      %2631 = vmatprep.subr.mxu0 0.0
      %2632 = vmatpush1.msra.mxu0 0.0
      %2633 = vmatprep.subr.mxu0 0.0
      %2634 = vmatpush1.msra.mxu0 0.0
      %2635 = vmatprep.subr.mxu0 0.0
      %2636 = vmatpush1.msra.mxu0 0.0
      %2637 = vmatprep.subr.mxu0 0.0
      %2638 = vmatpush1.msra.mxu0 0.0
      %2639 = vmatprep.subr.mxu0 0.0
      %2640 = vmatpush1.msra.mxu0 0.0
      %2641 = vmatprep.subr.mxu0 0.0
      %2642 = vmatpush1.msra.mxu0 0.0
      %2643 = vmatprep.subr.mxu0 0.0
      %2644 = vmatpush1.msra.mxu0 0.0
      %2645 = vmatprep.subr.mxu0 0.0
      %2646 = vmatpush1.msra.mxu0 0.0
      %2647 = vmatprep.subr.mxu0 0.0
      %2648 = vmatpush1.msra.mxu0 0.0
      %2649 = vmatprep.subr.mxu0 0.0
      %2650 = vmatpush1.msra.mxu0 0.0
      %2651 = vmatprep.subr.mxu0 0.0
      %2652 = vmatpush1.msra.mxu0 0.0
      %2653 = vmatprep.subr.mxu0 0.0
      %2654 = vmatpush1.msra.mxu0 0.0
      %2655 = vmatprep.subr.mxu0 0.0
      %2656 = vmatpush1.msra.mxu0 0.0
      %2657 = vmatprep.subr.mxu0 0.0
      %2658 = vmatpush1.msra.mxu0 0.0
      %2659 = vmatprep.subr.mxu0 0.0
      %2660 = vmatpush1.msra.mxu0 0.0
      %2661 = vmatprep.subr.mxu0 0.0
      %2662 = vmatpush1.msra.mxu0 0.0
      %2663 = vmatprep.subr.mxu0 0.0
      %2664 = vmatpush1.msra.mxu0 0.0
      %2665 = vmatprep.subr.mxu0 0.0
      %2666 = vmatpush1.msra.mxu0 0.0
      %2667 = vmatprep.mubr.f32.mxu0 0.0
      %2668 = vmatmul.mubr.f32.gmra.mrb[0].mxu0 %v2595
      %v2669 = vpop.f32.mrb[0].mxu0
      %v2670 = vadd.f32 0.0, %v2669
      %v2671 = vpop.f32.mrb[0].mxu0
      %v2672 = vadd.f32 0.0, %v2671
      %2673 = vmatprep.mubr.f32.mxu0 0.0
      %2674 = vmatmul.mubr.f32.gmra.mrb[0].mxu0 %v2597
      %v2675 = vpop.f32.mrb[0].mxu0
      %v2676 = vadd.f32 0.0, %v2675
      %v2677 = vpop.f32.mrb[0].mxu0
      %v2678 = vadd.f32 0.0, %v2677
      %2679 = vmatprep.mubr.f32.mxu0 0.0
      %2680 = vmatmul.mubr.f32.gmra.mrb[0].mxu0 %v2599
      %v2681 = vpop.f32.mrb[0].mxu0
      %v2682 = vadd.f32 0.0, %v2681
      %v2683 = vpop.f32.mrb[0].mxu0
      %v2684 = vadd.f32 0.0, %v2683
      %2685 = vmatprep.mubr.f32.mxu0 0.0
      %2686 = vmatmul.mubr.f32.gmra.mrb[0].mxu0 %v2601
      %v2687 = vpop.f32.mrb[0].mxu0
      %v2688 = vadd.f32 0.0, %v2687
      %v2689 = vpop.f32.mrb[0].mxu0
      %v2690 = vadd.f32 0.0, %v2689
      %2691 = vdwg.mxu0
      %v2692 = vrot.slane %v491, 2
      %v2693 = vrot.slane %v492, 2
      %v2694 = vsel %vm2171, %v2692, %v2693
      %v2695 = vrot.slane %v493, 2
      %v2696 = vsel %vm2171, %v2693, %v2695
      %v2697 = vrot.slane %v494, 2
      %v2698 = vsel %vm2171, %v2695, %v2697
      %v2699 = vsel %vm532, %v2694, 0
      %v2701 = vsel %vm532, %v2696, 0
      %v2703 = vsel %vm532, %v2698, 0
      %v2705 = vsel %vm532, %v2697, 0
      %2707 = vmatprep.subr.mxu0 %v2164
      %2708 = vmatpush1.msra.mxu0 %v2163
      %2709 = vmatprep.subr.mxu0 %v2166
      %2710 = vmatpush1.msra.mxu0 %v2165
      %2711 = vmatprep.subr.mxu0 %v2168
      %2712 = vmatpush1.msra.mxu0 %v2167
      %2713 = vmatprep.subr.mxu0 %v2170
      %2714 = vmatpush1.msra.mxu0 %v2169
      %2715 = vmatprep.subr.mxu0 0.0
      %2716 = vmatpush1.msra.mxu0 0.0
      %2717 = vmatprep.subr.mxu0 0.0
      %2718 = vmatpush1.msra.mxu0 0.0
      %2719 = vmatprep.subr.mxu0 0.0
      %2720 = vmatpush1.msra.mxu0 0.0
      %2721 = vmatprep.subr.mxu0 0.0
      %2722 = vmatpush1.msra.mxu0 0.0
      %2723 = vmatprep.subr.mxu0 0.0
      %2724 = vmatpush1.msra.mxu0 0.0
      %2725 = vmatprep.subr.mxu0 0.0
      %2726 = vmatpush1.msra.mxu0 0.0
      %2727 = vmatprep.subr.mxu0 0.0
      %2728 = vmatpush1.msra.mxu0 0.0
      %2729 = vmatprep.subr.mxu0 0.0
      %2730 = vmatpush1.msra.mxu0 0.0
      %2731 = vmatprep.subr.mxu0 0.0
      %2732 = vmatpush1.msra.mxu0 0.0
      %2733 = vmatprep.subr.mxu0 0.0
      %2734 = vmatpush1.msra.mxu0 0.0
      %2735 = vmatprep.subr.mxu0 0.0
      %2736 = vmatpush1.msra.mxu0 0.0
      %2737 = vmatprep.subr.mxu0 0.0
      %2738 = vmatpush1.msra.mxu0 0.0
      %2739 = vmatprep.subr.mxu0 0.0
      %2740 = vmatpush1.msra.mxu0 0.0
      %2741 = vmatprep.subr.mxu0 0.0
      %2742 = vmatpush1.msra.mxu0 0.0
      %2743 = vmatprep.subr.mxu0 0.0
      %2744 = vmatpush1.msra.mxu0 0.0
      %2745 = vmatprep.subr.mxu0 0.0
      %2746 = vmatpush1.msra.mxu0 0.0
      %2747 = vmatprep.subr.mxu0 0.0
      %2748 = vmatpush1.msra.mxu0 0.0
      %2749 = vmatprep.subr.mxu0 0.0
      %2750 = vmatpush1.msra.mxu0 0.0
      %2751 = vmatprep.subr.mxu0 0.0
      %2752 = vmatpush1.msra.mxu0 0.0
      %2753 = vmatprep.subr.mxu0 0.0
      %2754 = vmatpush1.msra.mxu0 0.0
      %2755 = vmatprep.subr.mxu0 0.0
      %2756 = vmatpush1.msra.mxu0 0.0
      %2757 = vmatprep.subr.mxu0 0.0
      %2758 = vmatpush1.msra.mxu0 0.0
      %2759 = vmatprep.subr.mxu0 0.0
      %2760 = vmatpush1.msra.mxu0 0.0
      %2761 = vmatprep.subr.mxu0 0.0
      %2762 = vmatpush1.msra.mxu0 0.0
      %2763 = vmatprep.subr.mxu0 0.0
      %2764 = vmatpush1.msra.mxu0 0.0
      %2765 = vmatprep.subr.mxu0 0.0
      %2766 = vmatpush1.msra.mxu0 0.0
      %2767 = vmatprep.subr.mxu0 0.0
      %2768 = vmatpush1.msra.mxu0 0.0
      %2769 = vmatprep.subr.mxu0 0.0
      %2770 = vmatpush1.msra.mxu0 0.0
      %2771 = vmatprep.mubr.f32.mxu0 0.0
      %2772 = vmatmul.mubr.f32.gmra.mrb[0].mxu0 %v2699
      %v2773 = vpop.f32.mrb[0].mxu0
      %v2774 = vadd.f32 0.0, %v2773
      %v2775 = vpop.f32.mrb[0].mxu0
      %v2776 = vadd.f32 0.0, %v2775
      %2777 = vmatprep.mubr.f32.mxu0 0.0
      %2778 = vmatmul.mubr.f32.gmra.mrb[0].mxu0 %v2701
      %v2779 = vpop.f32.mrb[0].mxu0
      %v2780 = vadd.f32 0.0, %v2779
      %v2781 = vpop.f32.mrb[0].mxu0
      %v2782 = vadd.f32 0.0, %v2781
      %2783 = vmatprep.mubr.f32.mxu0 0.0
      %2784 = vmatmul.mubr.f32.gmra.mrb[0].mxu0 %v2703
      %v2785 = vpop.f32.mrb[0].mxu0
      %v2786 = vadd.f32 0.0, %v2785
      %v2787 = vpop.f32.mrb[0].mxu0
      %v2788 = vadd.f32 0.0, %v2787
      %2789 = vmatprep.mubr.f32.mxu0 0.0
      %2790 = vmatmul.mubr.f32.gmra.mrb[0].mxu0 %v2705
      %v2791 = vpop.f32.mrb[0].mxu0
      %v2792 = vadd.f32 0.0, %v2791
      %v2793 = vpop.f32.mrb[0].mxu0
      %v2794 = vadd.f32 0.0, %v2793
      %2795 = vdwg.mxu0
      %v2796 = vrot.slane %v495, 2
      %v2797 = vrot.slane %v496, 2
      %v2798 = vsel %vm2171, %v2796, %v2797
      %v2799 = vrot.slane %v497, 2
      %v2800 = vsel %vm2171, %v2797, %v2799
      %v2801 = vrot.slane %v498, 2
      %v2802 = vsel %vm2171, %v2799, %v2801
      %v2803 = vsel %vm532, %v2798, 0
      %v2805 = vsel %vm532, %v2800, 0
      %v2807 = vsel %vm532, %v2802, 0
      %v2809 = vsel %vm532, %v2801, 0
      %2811 = vmatprep.subr.mxu0 %v2164
      %2812 = vmatpush1.msra.mxu0 %v2163
      %2813 = vmatprep.subr.mxu0 %v2166
      %2814 = vmatpush1.msra.mxu0 %v2165
      %2815 = vmatprep.subr.mxu0 %v2168
      %2816 = vmatpush1.msra.mxu0 %v2167
      %2817 = vmatprep.subr.mxu0 %v2170
      %2818 = vmatpush1.msra.mxu0 %v2169
      %2819 = vmatprep.subr.mxu0 0.0
      %2820 = vmatpush1.msra.mxu0 0.0
      %2821 = vmatprep.subr.mxu0 0.0
      %2822 = vmatpush1.msra.mxu0 0.0
      %2823 = vmatprep.subr.mxu0 0.0
      %2824 = vmatpush1.msra.mxu0 0.0
      %2825 = vmatprep.subr.mxu0 0.0
      %2826 = vmatpush1.msra.mxu0 0.0
      %2827 = vmatprep.subr.mxu0 0.0
      %2828 = vmatpush1.msra.mxu0 0.0
      %2829 = vmatprep.subr.mxu0 0.0
      %2830 = vmatpush1.msra.mxu0 0.0
      %2831 = vmatprep.subr.mxu0 0.0
      %2832 = vmatpush1.msra.mxu0 0.0
      %2833 = vmatprep.subr.mxu0 0.0
      %2834 = vmatpush1.msra.mxu0 0.0
      %2835 = vmatprep.subr.mxu0 0.0
      %2836 = vmatpush1.msra.mxu0 0.0
      %2837 = vmatprep.subr.mxu0 0.0
      %2838 = vmatpush1.msra.mxu0 0.0
      %2839 = vmatprep.subr.mxu0 0.0
      %2840 = vmatpush1.msra.mxu0 0.0
      %2841 = vmatprep.subr.mxu0 0.0
      %2842 = vmatpush1.msra.mxu0 0.0
      %2843 = vmatprep.subr.mxu0 0.0
      %2844 = vmatpush1.msra.mxu0 0.0
      %2845 = vmatprep.subr.mxu0 0.0
      %2846 = vmatpush1.msra.mxu0 0.0
      %2847 = vmatprep.subr.mxu0 0.0
      %2848 = vmatpush1.msra.mxu0 0.0
      %2849 = vmatprep.subr.mxu0 0.0
      %2850 = vmatpush1.msra.mxu0 0.0
      %2851 = vmatprep.subr.mxu0 0.0
      %2852 = vmatpush1.msra.mxu0 0.0
      %2853 = vmatprep.subr.mxu0 0.0
      %2854 = vmatpush1.msra.mxu0 0.0
      %2855 = vmatprep.subr.mxu0 0.0
      %2856 = vmatpush1.msra.mxu0 0.0
      %2857 = vmatprep.subr.mxu0 0.0
      %2858 = vmatpush1.msra.mxu0 0.0
      %2859 = vmatprep.subr.mxu0 0.0
      %2860 = vmatpush1.msra.mxu0 0.0
      %2861 = vmatprep.subr.mxu0 0.0
      %2862 = vmatpush1.msra.mxu0 0.0
      %2863 = vmatprep.subr.mxu0 0.0
      %2864 = vmatpush1.msra.mxu0 0.0
      %2865 = vmatprep.subr.mxu0 0.0
      %2866 = vmatpush1.msra.mxu0 0.0
      %2867 = vmatprep.subr.mxu0 0.0
      %2868 = vmatpush1.msra.mxu0 0.0
      %2869 = vmatprep.subr.mxu0 0.0
      %2870 = vmatpush1.msra.mxu0 0.0
      %2871 = vmatprep.subr.mxu0 0.0
      %2872 = vmatpush1.msra.mxu0 0.0
      %2873 = vmatprep.subr.mxu0 0.0
      %2874 = vmatpush1.msra.mxu0 0.0
      %2875 = vmatprep.mubr.f32.mxu0 0.0
      %2876 = vmatmul.mubr.f32.gmra.mrb[0].mxu0 %v2803
      %v2877 = vpop.f32.mrb[0].mxu0
      %v2878 = vadd.f32 0.0, %v2877
      %v2879 = vpop.f32.mrb[0].mxu0
      %v2880 = vadd.f32 0.0, %v2879
      %2881 = vmatprep.mubr.f32.mxu0 0.0
      %2882 = vmatmul.mubr.f32.gmra.mrb[0].mxu0 %v2805
      %v2883 = vpop.f32.mrb[0].mxu0
      %v2884 = vadd.f32 0.0, %v2883
      %v2885 = vpop.f32.mrb[0].mxu0
      %v2886 = vadd.f32 0.0, %v2885
      %2887 = vmatprep.mubr.f32.mxu0 0.0
      %2888 = vmatmul.mubr.f32.gmra.mrb[0].mxu0 %v2807
      %v2889 = vpop.f32.mrb[0].mxu0
      %v2890 = vadd.f32 0.0, %v2889
      %v2891 = vpop.f32.mrb[0].mxu0
      %v2892 = vadd.f32 0.0, %v2891
      %2893 = vmatprep.mubr.f32.mxu0 0.0
      %2894 = vmatmul.mubr.f32.gmra.mrb[0].mxu0 %v2809
      %v2895 = vpop.f32.mrb[0].mxu0
      %v2896 = vadd.f32 0.0, %v2895
      %v2897 = vpop.f32.mrb[0].mxu0
      %v2898 = vadd.f32 0.0, %v2897
      %2899 = vdwg.mxu0
      %v2900 = vrot.slane %v499, 2
      %v2901 = vrot.slane %v500, 2
      %v2902 = vsel %vm2171, %v2900, %v2901
      %v2903 = vrot.slane %v501, 2
      %v2904 = vsel %vm2171, %v2901, %v2903
      %v2905 = vrot.slane %v502, 2
      %v2906 = vsel %vm2171, %v2903, %v2905
      %v2907 = vsel %vm532, %v2902, 0
      %v2909 = vsel %vm532, %v2904, 0
      %v2911 = vsel %vm532, %v2906, 0
      %v2913 = vsel %vm532, %v2905, 0
      %2915 = vmatprep.subr.mxu0 %v2164
      %2916 = vmatpush1.msra.mxu0 %v2163
      %2917 = vmatprep.subr.mxu0 %v2166
      %2918 = vmatpush1.msra.mxu0 %v2165
      %2919 = vmatprep.subr.mxu0 %v2168
      %2920 = vmatpush1.msra.mxu0 %v2167
      %2921 = vmatprep.subr.mxu0 %v2170
      %2922 = vmatpush1.msra.mxu0 %v2169
      %2923 = vmatprep.subr.mxu0 0.0
      %2924 = vmatpush1.msra.mxu0 0.0
      %2925 = vmatprep.subr.mxu0 0.0
      %2926 = vmatpush1.msra.mxu0 0.0
      %2927 = vmatprep.subr.mxu0 0.0
      %2928 = vmatpush1.msra.mxu0 0.0
      %2929 = vmatprep.subr.mxu0 0.0
      %2930 = vmatpush1.msra.mxu0 0.0
      %2931 = vmatprep.subr.mxu0 0.0
      %2932 = vmatpush1.msra.mxu0 0.0
      %2933 = vmatprep.subr.mxu0 0.0
      %2934 = vmatpush1.msra.mxu0 0.0
      %2935 = vmatprep.subr.mxu0 0.0
      %2936 = vmatpush1.msra.mxu0 0.0
      %2937 = vmatprep.subr.mxu0 0.0
      %2938 = vmatpush1.msra.mxu0 0.0
      %2939 = vmatprep.subr.mxu0 0.0
      %2940 = vmatpush1.msra.mxu0 0.0
      %2941 = vmatprep.subr.mxu0 0.0
      %2942 = vmatpush1.msra.mxu0 0.0
      %2943 = vmatprep.subr.mxu0 0.0
      %2944 = vmatpush1.msra.mxu0 0.0
      %2945 = vmatprep.subr.mxu0 0.0
      %2946 = vmatpush1.msra.mxu0 0.0
      %2947 = vmatprep.subr.mxu0 0.0
      %2948 = vmatpush1.msra.mxu0 0.0
      %2949 = vmatprep.subr.mxu0 0.0
      %2950 = vmatpush1.msra.mxu0 0.0
      %2951 = vmatprep.subr.mxu0 0.0
      %2952 = vmatpush1.msra.mxu0 0.0
      %2953 = vmatprep.subr.mxu0 0.0
      %2954 = vmatpush1.msra.mxu0 0.0
      %2955 = vmatprep.subr.mxu0 0.0
      %2956 = vmatpush1.msra.mxu0 0.0
      %2957 = vmatprep.subr.mxu0 0.0
      %2958 = vmatpush1.msra.mxu0 0.0
      %2959 = vmatprep.subr.mxu0 0.0
      %2960 = vmatpush1.msra.mxu0 0.0
      %2961 = vmatprep.subr.mxu0 0.0
      %2962 = vmatpush1.msra.mxu0 0.0
      %2963 = vmatprep.subr.mxu0 0.0
      %2964 = vmatpush1.msra.mxu0 0.0
      %2965 = vmatprep.subr.mxu0 0.0
      %2966 = vmatpush1.msra.mxu0 0.0
      %2967 = vmatprep.subr.mxu0 0.0
      %2968 = vmatpush1.msra.mxu0 0.0
      %2969 = vmatprep.subr.mxu0 0.0
      %2970 = vmatpush1.msra.mxu0 0.0
      %2971 = vmatprep.subr.mxu0 0.0
      %2972 = vmatpush1.msra.mxu0 0.0
      %2973 = vmatprep.subr.mxu0 0.0
      %2974 = vmatpush1.msra.mxu0 0.0
      %2975 = vmatprep.subr.mxu0 0.0
      %2976 = vmatpush1.msra.mxu0 0.0
      %2977 = vmatprep.subr.mxu0 0.0
      %2978 = vmatpush1.msra.mxu0 0.0
      %2979 = vmatprep.mubr.f32.mxu0 0.0
      %2980 = vmatmul.mubr.f32.gmra.mrb[0].mxu0 %v2907
      %v2981 = vpop.f32.mrb[0].mxu0
      %v2982 = vadd.f32 0.0, %v2981
      %v2983 = vpop.f32.mrb[0].mxu0
      %v2984 = vadd.f32 0.0, %v2983
      %2985 = vmatprep.mubr.f32.mxu0 0.0
      %2986 = vmatmul.mubr.f32.gmra.mrb[0].mxu0 %v2909
      %v2987 = vpop.f32.mrb[0].mxu0
      %v2988 = vadd.f32 0.0, %v2987
      %v2989 = vpop.f32.mrb[0].mxu0
      %v2990 = vadd.f32 0.0, %v2989
      %2991 = vmatprep.mubr.f32.mxu0 0.0
      %2992 = vmatmul.mubr.f32.gmra.mrb[0].mxu0 %v2911
      %v2993 = vpop.f32.mrb[0].mxu0
      %v2994 = vadd.f32 0.0, %v2993
      %v2995 = vpop.f32.mrb[0].mxu0
      %v2996 = vadd.f32 0.0, %v2995
      %2997 = vmatprep.mubr.f32.mxu0 0.0
      %2998 = vmatmul.mubr.f32.gmra.mrb[0].mxu0 %v2913
      %v2999 = vpop.f32.mrb[0].mxu0
      %v3000 = vadd.f32 0.0, %v2999
      %v3001 = vpop.f32.mrb[0].mxu0
      %v3002 = vadd.f32 0.0, %v3001
      %3003 = vdwg.mxu0
      %v3004 = vadd.f32 %v1461, %v2254
      %v3005 = vadd.f32 %v1463, %v2256
      %v3006 = vadd.f32 %v1467, %v2260
      %v3007 = vadd.f32 %v1469, %v2262
      %v3008 = vadd.f32 %v1473, %v2266
      %v3009 = vadd.f32 %v1475, %v2268
      %v3010 = vadd.f32 %v1479, %v2272
      %v3011 = vadd.f32 %v1481, %v2274
      %v3012 = vadd.f32 %v1558, %v2358
      %v3013 = vadd.f32 %v1560, %v2360
      %v3014 = vadd.f32 %v1564, %v2364
      %v3015 = vadd.f32 %v1566, %v2366
      %v3016 = vadd.f32 %v1570, %v2370
      %v3017 = vadd.f32 %v1572, %v2372
      %v3018 = vadd.f32 %v1576, %v2376
      %v3019 = vadd.f32 %v1578, %v2378
      %v3020 = vadd.f32 %v1655, %v2462
      %v3021 = vadd.f32 %v1657, %v2464
      %v3022 = vadd.f32 %v1661, %v2468
      %v3023 = vadd.f32 %v1663, %v2470
      %v3024 = vadd.f32 %v1667, %v2474
      %v3025 = vadd.f32 %v1669, %v2476
      %v3026 = vadd.f32 %v1673, %v2480
      %v3027 = vadd.f32 %v1675, %v2482
      %v3028 = vadd.f32 %v1752, %v2566
      %v3029 = vadd.f32 %v1754, %v2568
      %v3030 = vadd.f32 %v1758, %v2572
      %v3031 = vadd.f32 %v1760, %v2574
      %v3032 = vadd.f32 %v1764, %v2578
      %v3033 = vadd.f32 %v1766, %v2580
      %v3034 = vadd.f32 %v1770, %v2584
      %v3035 = vadd.f32 %v1772, %v2586
      %v3036 = vadd.f32 %v1849, %v2670
      %v3037 = vadd.f32 %v1851, %v2672
      %v3038 = vadd.f32 %v1855, %v2676
      %v3039 = vadd.f32 %v1857, %v2678
      %v3040 = vadd.f32 %v1861, %v2682
      %v3041 = vadd.f32 %v1863, %v2684
      %v3042 = vadd.f32 %v1867, %v2688
      %v3043 = vadd.f32 %v1869, %v2690
      %v3044 = vadd.f32 %v1946, %v2774
      %v3045 = vadd.f32 %v1948, %v2776
      %v3046 = vadd.f32 %v1952, %v2780
      %v3047 = vadd.f32 %v1954, %v2782
      %v3048 = vadd.f32 %v1958, %v2786
      %v3049 = vadd.f32 %v1960, %v2788
      %v3050 = vadd.f32 %v1964, %v2792
      %v3051 = vadd.f32 %v1966, %v2794
      %v3052 = vadd.f32 %v2043, %v2878
      %v3053 = vadd.f32 %v2045, %v2880
      %v3054 = vadd.f32 %v2049, %v2884
      %v3055 = vadd.f32 %v2051, %v2886
      %v3056 = vadd.f32 %v2055, %v2890
      %v3057 = vadd.f32 %v2057, %v2892
      %v3058 = vadd.f32 %v2061, %v2896
      %v3059 = vadd.f32 %v2063, %v2898
      %v3060 = vadd.f32 %v2140, %v2982
      %v3061 = vadd.f32 %v2142, %v2984
      %v3062 = vadd.f32 %v2146, %v2988
      %v3063 = vadd.f32 %v2148, %v2990
      %v3064 = vadd.f32 %v2152, %v2994
      %v3065 = vadd.f32 %v2154, %v2996
      %v3066 = vadd.f32 %v2158, %v3000
      %v3067 = vadd.f32 %v2160, %v3002
      %s3068 = scalar_lea.vmem %s1, 192
      %v3069 = vld [vmem:[%s3068] sm:$0xff]
      %v3070 = vld [vmem:[%s3068 + $0x8] sm:$0xff]
      %v3071 = vld [vmem:[%s3068 + $0x10] sm:$0xff]
      %v3072 = vld [vmem:[%s3068 + $0x18] sm:$0xff]
      %v3073 = vld [vmem:[%s3068 + $0x20] sm:$0xff]
      %v3074 = vld [vmem:[%s3068 + $0x28] sm:$0xff]
      %v3075 = vld [vmem:[%s3068 + $0x30] sm:$0xff]
      %v3076 = vld [vmem:[%s3068 + $0x38] sm:$0xff]
      %vm3077 = vcmask 1044480
      %v3078 = vrot.slane %v471, 3
      %v3079 = vrot.slane %v472, 3
      %v3080 = vsel %vm3077, %v3078, %v3079
      %v3081 = vrot.slane %v473, 3
      %v3082 = vsel %vm3077, %v3079, %v3081
      %v3083 = vrot.slane %v474, 3
      %v3084 = vsel %vm3077, %v3081, %v3083
      %v3085 = vsel %vm532, %v3080, 0
      %v3087 = vsel %vm532, %v3082, 0
      %v3089 = vsel %vm532, %v3084, 0
      %v3091 = vsel %vm532, %v3083, 0
      %3093 = vmatprep.subr.mxu0 %v3070
      %3094 = vmatpush1.msra.mxu0 %v3069
      %3095 = vmatprep.subr.mxu0 %v3072
      %3096 = vmatpush1.msra.mxu0 %v3071
      %3097 = vmatprep.subr.mxu0 %v3074
      %3098 = vmatpush1.msra.mxu0 %v3073
      %3099 = vmatprep.subr.mxu0 %v3076
      %3100 = vmatpush1.msra.mxu0 %v3075
      %3101 = vmatprep.subr.mxu0 0.0
      %3102 = vmatpush1.msra.mxu0 0.0
      %3103 = vmatprep.subr.mxu0 0.0
      %3104 = vmatpush1.msra.mxu0 0.0
      %3105 = vmatprep.subr.mxu0 0.0
      %3106 = vmatpush1.msra.mxu0 0.0
      %3107 = vmatprep.subr.mxu0 0.0
      %3108 = vmatpush1.msra.mxu0 0.0
      %3109 = vmatprep.subr.mxu0 0.0
      %3110 = vmatpush1.msra.mxu0 0.0
      %3111 = vmatprep.subr.mxu0 0.0
      %3112 = vmatpush1.msra.mxu0 0.0
      %3113 = vmatprep.subr.mxu0 0.0
      %3114 = vmatpush1.msra.mxu0 0.0
      %3115 = vmatprep.subr.mxu0 0.0
      %3116 = vmatpush1.msra.mxu0 0.0
      %3117 = vmatprep.subr.mxu0 0.0
      %3118 = vmatpush1.msra.mxu0 0.0
      %3119 = vmatprep.subr.mxu0 0.0
      %3120 = vmatpush1.msra.mxu0 0.0
      %3121 = vmatprep.subr.mxu0 0.0
      %3122 = vmatpush1.msra.mxu0 0.0
      %3123 = vmatprep.subr.mxu0 0.0
      %3124 = vmatpush1.msra.mxu0 0.0
      %3125 = vmatprep.subr.mxu0 0.0
      %3126 = vmatpush1.msra.mxu0 0.0
      %3127 = vmatprep.subr.mxu0 0.0
      %3128 = vmatpush1.msra.mxu0 0.0
      %3129 = vmatprep.subr.mxu0 0.0
      %3130 = vmatpush1.msra.mxu0 0.0
      %3131 = vmatprep.subr.mxu0 0.0
      %3132 = vmatpush1.msra.mxu0 0.0
      %3133 = vmatprep.subr.mxu0 0.0
      %3134 = vmatpush1.msra.mxu0 0.0
      %3135 = vmatprep.subr.mxu0 0.0
      %3136 = vmatpush1.msra.mxu0 0.0
      %3137 = vmatprep.subr.mxu0 0.0
      %3138 = vmatpush1.msra.mxu0 0.0
      %3139 = vmatprep.subr.mxu0 0.0
      %3140 = vmatpush1.msra.mxu0 0.0
      %3141 = vmatprep.subr.mxu0 0.0
      %3142 = vmatpush1.msra.mxu0 0.0
      %3143 = vmatprep.subr.mxu0 0.0
      %3144 = vmatpush1.msra.mxu0 0.0
      %3145 = vmatprep.subr.mxu0 0.0
      %3146 = vmatpush1.msra.mxu0 0.0
      %3147 = vmatprep.subr.mxu0 0.0
      %3148 = vmatpush1.msra.mxu0 0.0
      %3149 = vmatprep.subr.mxu0 0.0
      %3150 = vmatpush1.msra.mxu0 0.0
      %3151 = vmatprep.subr.mxu0 0.0
      %3152 = vmatpush1.msra.mxu0 0.0
      %3153 = vmatprep.subr.mxu0 0.0
      %3154 = vmatpush1.msra.mxu0 0.0
      %3155 = vmatprep.subr.mxu0 0.0
      %3156 = vmatpush1.msra.mxu0 0.0
      %3157 = vmatprep.mubr.f32.mxu0 0.0
      %3158 = vmatmul.mubr.f32.gmra.mrb[0].mxu0 %v3085
      %v3159 = vpop.f32.mrb[0].mxu0
      %v3160 = vadd.f32 0.0, %v3159
      %v3161 = vpop.f32.mrb[0].mxu0
      %v3162 = vadd.f32 0.0, %v3161
      %3163 = vmatprep.mubr.f32.mxu0 0.0
      %3164 = vmatmul.mubr.f32.gmra.mrb[0].mxu0 %v3087
      %v3165 = vpop.f32.mrb[0].mxu0
      %v3166 = vadd.f32 0.0, %v3165
      %v3167 = vpop.f32.mrb[0].mxu0
      %v3168 = vadd.f32 0.0, %v3167
      %3169 = vmatprep.mubr.f32.mxu0 0.0
      %3170 = vmatmul.mubr.f32.gmra.mrb[0].mxu0 %v3089
      %v3171 = vpop.f32.mrb[0].mxu0
      %v3172 = vadd.f32 0.0, %v3171
      %v3173 = vpop.f32.mrb[0].mxu0
      %v3174 = vadd.f32 0.0, %v3173
      %3175 = vmatprep.mubr.f32.mxu0 0.0
      %3176 = vmatmul.mubr.f32.gmra.mrb[0].mxu0 %v3091
      %v3177 = vpop.f32.mrb[0].mxu0
      %v3178 = vadd.f32 0.0, %v3177
      %v3179 = vpop.f32.mrb[0].mxu0
      %v3180 = vadd.f32 0.0, %v3179
      %3181 = vdwg.mxu0
      %v3182 = vrot.slane %v475, 3
      %v3183 = vrot.slane %v476, 3
      %v3184 = vsel %vm3077, %v3182, %v3183
      %v3185 = vrot.slane %v477, 3
      %v3186 = vsel %vm3077, %v3183, %v3185
      %v3187 = vrot.slane %v478, 3
      %v3188 = vsel %vm3077, %v3185, %v3187
      %v3189 = vsel %vm532, %v3184, 0
      %v3191 = vsel %vm532, %v3186, 0
      %v3193 = vsel %vm532, %v3188, 0
      %v3195 = vsel %vm532, %v3187, 0
      %3197 = vmatprep.subr.mxu0 %v3070
      %3198 = vmatpush1.msra.mxu0 %v3069
      %3199 = vmatprep.subr.mxu0 %v3072
      %3200 = vmatpush1.msra.mxu0 %v3071
      %3201 = vmatprep.subr.mxu0 %v3074
      %3202 = vmatpush1.msra.mxu0 %v3073
      %3203 = vmatprep.subr.mxu0 %v3076
      %3204 = vmatpush1.msra.mxu0 %v3075
      %3205 = vmatprep.subr.mxu0 0.0
      %3206 = vmatpush1.msra.mxu0 0.0
      %3207 = vmatprep.subr.mxu0 0.0
      %3208 = vmatpush1.msra.mxu0 0.0
      %3209 = vmatprep.subr.mxu0 0.0
      %3210 = vmatpush1.msra.mxu0 0.0
      %3211 = vmatprep.subr.mxu0 0.0
      %3212 = vmatpush1.msra.mxu0 0.0
      %3213 = vmatprep.subr.mxu0 0.0
      %3214 = vmatpush1.msra.mxu0 0.0
      %3215 = vmatprep.subr.mxu0 0.0
      %3216 = vmatpush1.msra.mxu0 0.0
      %3217 = vmatprep.subr.mxu0 0.0
      %3218 = vmatpush1.msra.mxu0 0.0
      %3219 = vmatprep.subr.mxu0 0.0
      %3220 = vmatpush1.msra.mxu0 0.0
      %3221 = vmatprep.subr.mxu0 0.0
      %3222 = vmatpush1.msra.mxu0 0.0
      %3223 = vmatprep.subr.mxu0 0.0
      %3224 = vmatpush1.msra.mxu0 0.0
      %3225 = vmatprep.subr.mxu0 0.0
      %3226 = vmatpush1.msra.mxu0 0.0
      %3227 = vmatprep.subr.mxu0 0.0
      %3228 = vmatpush1.msra.mxu0 0.0
      %3229 = vmatprep.subr.mxu0 0.0
      %3230 = vmatpush1.msra.mxu0 0.0
      %3231 = vmatprep.subr.mxu0 0.0
      %3232 = vmatpush1.msra.mxu0 0.0
      %3233 = vmatprep.subr.mxu0 0.0
      %3234 = vmatpush1.msra.mxu0 0.0
      %3235 = vmatprep.subr.mxu0 0.0
      %3236 = vmatpush1.msra.mxu0 0.0
      %3237 = vmatprep.subr.mxu0 0.0
      %3238 = vmatpush1.msra.mxu0 0.0
      %3239 = vmatprep.subr.mxu0 0.0
      %3240 = vmatpush1.msra.mxu0 0.0
      %3241 = vmatprep.subr.mxu0 0.0
      %3242 = vmatpush1.msra.mxu0 0.0
      %3243 = vmatprep.subr.mxu0 0.0
      %3244 = vmatpush1.msra.mxu0 0.0
      %3245 = vmatprep.subr.mxu0 0.0
      %3246 = vmatpush1.msra.mxu0 0.0
      %3247 = vmatprep.subr.mxu0 0.0
      %3248 = vmatpush1.msra.mxu0 0.0
      %3249 = vmatprep.subr.mxu0 0.0
      %3250 = vmatpush1.msra.mxu0 0.0
      %3251 = vmatprep.subr.mxu0 0.0
      %3252 = vmatpush1.msra.mxu0 0.0
      %3253 = vmatprep.subr.mxu0 0.0
      %3254 = vmatpush1.msra.mxu0 0.0
      %3255 = vmatprep.subr.mxu0 0.0
      %3256 = vmatpush1.msra.mxu0 0.0
      %3257 = vmatprep.subr.mxu0 0.0
      %3258 = vmatpush1.msra.mxu0 0.0
      %3259 = vmatprep.subr.mxu0 0.0
      %3260 = vmatpush1.msra.mxu0 0.0
      %3261 = vmatprep.mubr.f32.mxu0 0.0
      %3262 = vmatmul.mubr.f32.gmra.mrb[0].mxu0 %v3189
      %v3263 = vpop.f32.mrb[0].mxu0
      %v3264 = vadd.f32 0.0, %v3263
      %v3265 = vpop.f32.mrb[0].mxu0
      %v3266 = vadd.f32 0.0, %v3265
      %3267 = vmatprep.mubr.f32.mxu0 0.0
      %3268 = vmatmul.mubr.f32.gmra.mrb[0].mxu0 %v3191
      %v3269 = vpop.f32.mrb[0].mxu0
      %v3270 = vadd.f32 0.0, %v3269
      %v3271 = vpop.f32.mrb[0].mxu0
      %v3272 = vadd.f32 0.0, %v3271
      %3273 = vmatprep.mubr.f32.mxu0 0.0
      %3274 = vmatmul.mubr.f32.gmra.mrb[0].mxu0 %v3193
      %v3275 = vpop.f32.mrb[0].mxu0
      %v3276 = vadd.f32 0.0, %v3275
      %v3277 = vpop.f32.mrb[0].mxu0
      %v3278 = vadd.f32 0.0, %v3277
      %3279 = vmatprep.mubr.f32.mxu0 0.0
      %3280 = vmatmul.mubr.f32.gmra.mrb[0].mxu0 %v3195
      %v3281 = vpop.f32.mrb[0].mxu0
      %v3282 = vadd.f32 0.0, %v3281
      %v3283 = vpop.f32.mrb[0].mxu0
      %v3284 = vadd.f32 0.0, %v3283
      %3285 = vdwg.mxu0
      %v3286 = vrot.slane %v479, 3
      %v3287 = vrot.slane %v480, 3
      %v3288 = vsel %vm3077, %v3286, %v3287
      %v3289 = vrot.slane %v481, 3
      %v3290 = vsel %vm3077, %v3287, %v3289
      %v3291 = vrot.slane %v482, 3
      %v3292 = vsel %vm3077, %v3289, %v3291
      %v3293 = vsel %vm532, %v3288, 0
      %v3295 = vsel %vm532, %v3290, 0
      %v3297 = vsel %vm532, %v3292, 0
      %v3299 = vsel %vm532, %v3291, 0
      %3301 = vmatprep.subr.mxu0 %v3070
      %3302 = vmatpush1.msra.mxu0 %v3069
      %3303 = vmatprep.subr.mxu0 %v3072
      %3304 = vmatpush1.msra.mxu0 %v3071
      %3305 = vmatprep.subr.mxu0 %v3074
      %3306 = vmatpush1.msra.mxu0 %v3073
      %3307 = vmatprep.subr.mxu0 %v3076
      %3308 = vmatpush1.msra.mxu0 %v3075
      %3309 = vmatprep.subr.mxu0 0.0
      %3310 = vmatpush1.msra.mxu0 0.0
      %3311 = vmatprep.subr.mxu0 0.0
      %3312 = vmatpush1.msra.mxu0 0.0
      %3313 = vmatprep.subr.mxu0 0.0
      %3314 = vmatpush1.msra.mxu0 0.0
      %3315 = vmatprep.subr.mxu0 0.0
      %3316 = vmatpush1.msra.mxu0 0.0
      %3317 = vmatprep.subr.mxu0 0.0
      %3318 = vmatpush1.msra.mxu0 0.0
      %3319 = vmatprep.subr.mxu0 0.0
      %3320 = vmatpush1.msra.mxu0 0.0
      %3321 = vmatprep.subr.mxu0 0.0
      %3322 = vmatpush1.msra.mxu0 0.0
      %3323 = vmatprep.subr.mxu0 0.0
      %3324 = vmatpush1.msra.mxu0 0.0
      %3325 = vmatprep.subr.mxu0 0.0
      %3326 = vmatpush1.msra.mxu0 0.0
      %3327 = vmatprep.subr.mxu0 0.0
      %3328 = vmatpush1.msra.mxu0 0.0
      %3329 = vmatprep.subr.mxu0 0.0
      %3330 = vmatpush1.msra.mxu0 0.0
      %3331 = vmatprep.subr.mxu0 0.0
      %3332 = vmatpush1.msra.mxu0 0.0
      %3333 = vmatprep.subr.mxu0 0.0
      %3334 = vmatpush1.msra.mxu0 0.0
      %3335 = vmatprep.subr.mxu0 0.0
      %3336 = vmatpush1.msra.mxu0 0.0
      %3337 = vmatprep.subr.mxu0 0.0
      %3338 = vmatpush1.msra.mxu0 0.0
      %3339 = vmatprep.subr.mxu0 0.0
      %3340 = vmatpush1.msra.mxu0 0.0
      %3341 = vmatprep.subr.mxu0 0.0
      %3342 = vmatpush1.msra.mxu0 0.0
      %3343 = vmatprep.subr.mxu0 0.0
      %3344 = vmatpush1.msra.mxu0 0.0
      %3345 = vmatprep.subr.mxu0 0.0
      %3346 = vmatpush1.msra.mxu0 0.0
      %3347 = vmatprep.subr.mxu0 0.0
      %3348 = vmatpush1.msra.mxu0 0.0
      %3349 = vmatprep.subr.mxu0 0.0
      %3350 = vmatpush1.msra.mxu0 0.0
      %3351 = vmatprep.subr.mxu0 0.0
      %3352 = vmatpush1.msra.mxu0 0.0
      %3353 = vmatprep.subr.mxu0 0.0
      %3354 = vmatpush1.msra.mxu0 0.0
      %3355 = vmatprep.subr.mxu0 0.0
      %3356 = vmatpush1.msra.mxu0 0.0
      %3357 = vmatprep.subr.mxu0 0.0
      %3358 = vmatpush1.msra.mxu0 0.0
      %3359 = vmatprep.subr.mxu0 0.0
      %3360 = vmatpush1.msra.mxu0 0.0
      %3361 = vmatprep.subr.mxu0 0.0
      %3362 = vmatpush1.msra.mxu0 0.0
      %3363 = vmatprep.subr.mxu0 0.0
      %3364 = vmatpush1.msra.mxu0 0.0
      %3365 = vmatprep.mubr.f32.mxu0 0.0
      %3366 = vmatmul.mubr.f32.gmra.mrb[0].mxu0 %v3293
      %v3367 = vpop.f32.mrb[0].mxu0
      %v3368 = vadd.f32 0.0, %v3367
      %v3369 = vpop.f32.mrb[0].mxu0
      %v3370 = vadd.f32 0.0, %v3369
      %3371 = vmatprep.mubr.f32.mxu0 0.0
      %3372 = vmatmul.mubr.f32.gmra.mrb[0].mxu0 %v3295
      %v3373 = vpop.f32.mrb[0].mxu0
      %v3374 = vadd.f32 0.0, %v3373
      %v3375 = vpop.f32.mrb[0].mxu0
      %v3376 = vadd.f32 0.0, %v3375
      %3377 = vmatprep.mubr.f32.mxu0 0.0
      %3378 = vmatmul.mubr.f32.gmra.mrb[0].mxu0 %v3297
      %v3379 = vpop.f32.mrb[0].mxu0
      %v3380 = vadd.f32 0.0, %v3379
      %v3381 = vpop.f32.mrb[0].mxu0
      %v3382 = vadd.f32 0.0, %v3381
      %3383 = vmatprep.mubr.f32.mxu0 0.0
      %3384 = vmatmul.mubr.f32.gmra.mrb[0].mxu0 %v3299
      %v3385 = vpop.f32.mrb[0].mxu0
      %v3386 = vadd.f32 0.0, %v3385
      %v3387 = vpop.f32.mrb[0].mxu0
      %v3388 = vadd.f32 0.0, %v3387
      %3389 = vdwg.mxu0
      %v3390 = vrot.slane %v483, 3
      %v3391 = vrot.slane %v484, 3
      %v3392 = vsel %vm3077, %v3390, %v3391
      %v3393 = vrot.slane %v485, 3
      %v3394 = vsel %vm3077, %v3391, %v3393
      %v3395 = vrot.slane %v486, 3
      %v3396 = vsel %vm3077, %v3393, %v3395
      %v3397 = vsel %vm532, %v3392, 0
      %v3399 = vsel %vm532, %v3394, 0
      %v3401 = vsel %vm532, %v3396, 0
      %v3403 = vsel %vm532, %v3395, 0
      %3405 = vmatprep.subr.mxu0 %v3070
      %3406 = vmatpush1.msra.mxu0 %v3069
      %3407 = vmatprep.subr.mxu0 %v3072
      %3408 = vmatpush1.msra.mxu0 %v3071
      %3409 = vmatprep.subr.mxu0 %v3074
      %3410 = vmatpush1.msra.mxu0 %v3073
      %3411 = vmatprep.subr.mxu0 %v3076
      %3412 = vmatpush1.msra.mxu0 %v3075
      %3413 = vmatprep.subr.mxu0 0.0
      %3414 = vmatpush1.msra.mxu0 0.0
      %3415 = vmatprep.subr.mxu0 0.0
      %3416 = vmatpush1.msra.mxu0 0.0
      %3417 = vmatprep.subr.mxu0 0.0
      %3418 = vmatpush1.msra.mxu0 0.0
      %3419 = vmatprep.subr.mxu0 0.0
      %3420 = vmatpush1.msra.mxu0 0.0
      %3421 = vmatprep.subr.mxu0 0.0
      %3422 = vmatpush1.msra.mxu0 0.0
      %3423 = vmatprep.subr.mxu0 0.0
      %3424 = vmatpush1.msra.mxu0 0.0
      %3425 = vmatprep.subr.mxu0 0.0
      %3426 = vmatpush1.msra.mxu0 0.0
      %3427 = vmatprep.subr.mxu0 0.0
      %3428 = vmatpush1.msra.mxu0 0.0
      %3429 = vmatprep.subr.mxu0 0.0
      %3430 = vmatpush1.msra.mxu0 0.0
      %3431 = vmatprep.subr.mxu0 0.0
      %3432 = vmatpush1.msra.mxu0 0.0
      %3433 = vmatprep.subr.mxu0 0.0
      %3434 = vmatpush1.msra.mxu0 0.0
      %3435 = vmatprep.subr.mxu0 0.0
      %3436 = vmatpush1.msra.mxu0 0.0
      %3437 = vmatprep.subr.mxu0 0.0
      %3438 = vmatpush1.msra.mxu0 0.0
      %3439 = vmatprep.subr.mxu0 0.0
      %3440 = vmatpush1.msra.mxu0 0.0
      %3441 = vmatprep.subr.mxu0 0.0
      %3442 = vmatpush1.msra.mxu0 0.0
      %3443 = vmatprep.subr.mxu0 0.0
      %3444 = vmatpush1.msra.mxu0 0.0
      %3445 = vmatprep.subr.mxu0 0.0
      %3446 = vmatpush1.msra.mxu0 0.0
      %3447 = vmatprep.subr.mxu0 0.0
      %3448 = vmatpush1.msra.mxu0 0.0
      %3449 = vmatprep.subr.mxu0 0.0
      %3450 = vmatpush1.msra.mxu0 0.0
      %3451 = vmatprep.subr.mxu0 0.0
      %3452 = vmatpush1.msra.mxu0 0.0
      %3453 = vmatprep.subr.mxu0 0.0
      %3454 = vmatpush1.msra.mxu0 0.0
      %3455 = vmatprep.subr.mxu0 0.0
      %3456 = vmatpush1.msra.mxu0 0.0
      %3457 = vmatprep.subr.mxu0 0.0
      %3458 = vmatpush1.msra.mxu0 0.0
      %3459 = vmatprep.subr.mxu0 0.0
      %3460 = vmatpush1.msra.mxu0 0.0
      %3461 = vmatprep.subr.mxu0 0.0
      %3462 = vmatpush1.msra.mxu0 0.0
      %3463 = vmatprep.subr.mxu0 0.0
      %3464 = vmatpush1.msra.mxu0 0.0
      %3465 = vmatprep.subr.mxu0 0.0
      %3466 = vmatpush1.msra.mxu0 0.0
      %3467 = vmatprep.subr.mxu0 0.0
      %3468 = vmatpush1.msra.mxu0 0.0
      %3469 = vmatprep.mubr.f32.mxu0 0.0
      %3470 = vmatmul.mubr.f32.gmra.mrb[0].mxu0 %v3397
      %v3471 = vpop.f32.mrb[0].mxu0
      %v3472 = vadd.f32 0.0, %v3471
      %v3473 = vpop.f32.mrb[0].mxu0
      %v3474 = vadd.f32 0.0, %v3473
      %3475 = vmatprep.mubr.f32.mxu0 0.0
      %3476 = vmatmul.mubr.f32.gmra.mrb[0].mxu0 %v3399
      %v3477 = vpop.f32.mrb[0].mxu0
      %v3478 = vadd.f32 0.0, %v3477
      %v3479 = vpop.f32.mrb[0].mxu0
      %v3480 = vadd.f32 0.0, %v3479
      %3481 = vmatprep.mubr.f32.mxu0 0.0
      %3482 = vmatmul.mubr.f32.gmra.mrb[0].mxu0 %v3401
      %v3483 = vpop.f32.mrb[0].mxu0
      %v3484 = vadd.f32 0.0, %v3483
      %v3485 = vpop.f32.mrb[0].mxu0
      %v3486 = vadd.f32 0.0, %v3485
      %3487 = vmatprep.mubr.f32.mxu0 0.0
      %3488 = vmatmul.mubr.f32.gmra.mrb[0].mxu0 %v3403
      %v3489 = vpop.f32.mrb[0].mxu0
      %v3490 = vadd.f32 0.0, %v3489
      %v3491 = vpop.f32.mrb[0].mxu0
      %v3492 = vadd.f32 0.0, %v3491
      %3493 = vdwg.mxu0
      %v3494 = vrot.slane %v487, 3
      %v3495 = vrot.slane %v488, 3
      %v3496 = vsel %vm3077, %v3494, %v3495
      %v3497 = vrot.slane %v489, 3
      %v3498 = vsel %vm3077, %v3495, %v3497
      %v3499 = vrot.slane %v490, 3
      %v3500 = vsel %vm3077, %v3497, %v3499
      %v3501 = vsel %vm532, %v3496, 0
      %v3503 = vsel %vm532, %v3498, 0
      %v3505 = vsel %vm532, %v3500, 0
      %v3507 = vsel %vm532, %v3499, 0
      %3509 = vmatprep.subr.mxu0 %v3070
      %3510 = vmatpush1.msra.mxu0 %v3069
      %3511 = vmatprep.subr.mxu0 %v3072
      %3512 = vmatpush1.msra.mxu0 %v3071
      %3513 = vmatprep.subr.mxu0 %v3074
      %3514 = vmatpush1.msra.mxu0 %v3073
      %3515 = vmatprep.subr.mxu0 %v3076
      %3516 = vmatpush1.msra.mxu0 %v3075
      %3517 = vmatprep.subr.mxu0 0.0
      %3518 = vmatpush1.msra.mxu0 0.0
      %3519 = vmatprep.subr.mxu0 0.0
      %3520 = vmatpush1.msra.mxu0 0.0
      %3521 = vmatprep.subr.mxu0 0.0
      %3522 = vmatpush1.msra.mxu0 0.0
      %3523 = vmatprep.subr.mxu0 0.0
      %3524 = vmatpush1.msra.mxu0 0.0
      %3525 = vmatprep.subr.mxu0 0.0
      %3526 = vmatpush1.msra.mxu0 0.0
      %3527 = vmatprep.subr.mxu0 0.0
      %3528 = vmatpush1.msra.mxu0 0.0
      %3529 = vmatprep.subr.mxu0 0.0
      %3530 = vmatpush1.msra.mxu0 0.0
      %3531 = vmatprep.subr.mxu0 0.0
      %3532 = vmatpush1.msra.mxu0 0.0
      %3533 = vmatprep.subr.mxu0 0.0
      %3534 = vmatpush1.msra.mxu0 0.0
      %3535 = vmatprep.subr.mxu0 0.0
      %3536 = vmatpush1.msra.mxu0 0.0
      %3537 = vmatprep.subr.mxu0 0.0
      %3538 = vmatpush1.msra.mxu0 0.0
      %3539 = vmatprep.subr.mxu0 0.0
      %3540 = vmatpush1.msra.mxu0 0.0
      %3541 = vmatprep.subr.mxu0 0.0
      %3542 = vmatpush1.msra.mxu0 0.0
      %3543 = vmatprep.subr.mxu0 0.0
      %3544 = vmatpush1.msra.mxu0 0.0
      %3545 = vmatprep.subr.mxu0 0.0
      %3546 = vmatpush1.msra.mxu0 0.0
      %3547 = vmatprep.subr.mxu0 0.0
      %3548 = vmatpush1.msra.mxu0 0.0
      %3549 = vmatprep.subr.mxu0 0.0
      %3550 = vmatpush1.msra.mxu0 0.0
      %3551 = vmatprep.subr.mxu0 0.0
      %3552 = vmatpush1.msra.mxu0 0.0
      %3553 = vmatprep.subr.mxu0 0.0
      %3554 = vmatpush1.msra.mxu0 0.0
      %3555 = vmatprep.subr.mxu0 0.0
      %3556 = vmatpush1.msra.mxu0 0.0
      %3557 = vmatprep.subr.mxu0 0.0
      %3558 = vmatpush1.msra.mxu0 0.0
      %3559 = vmatprep.subr.mxu0 0.0
      %3560 = vmatpush1.msra.mxu0 0.0
      %3561 = vmatprep.subr.mxu0 0.0
      %3562 = vmatpush1.msra.mxu0 0.0
      %3563 = vmatprep.subr.mxu0 0.0
      %3564 = vmatpush1.msra.mxu0 0.0
      %3565 = vmatprep.subr.mxu0 0.0
      %3566 = vmatpush1.msra.mxu0 0.0
      %3567 = vmatprep.subr.mxu0 0.0
      %3568 = vmatpush1.msra.mxu0 0.0
      %3569 = vmatprep.subr.mxu0 0.0
      %3570 = vmatpush1.msra.mxu0 0.0
      %3571 = vmatprep.subr.mxu0 0.0
      %3572 = vmatpush1.msra.mxu0 0.0
      %3573 = vmatprep.mubr.f32.mxu0 0.0
      %3574 = vmatmul.mubr.f32.gmra.mrb[0].mxu0 %v3501
      %v3575 = vpop.f32.mrb[0].mxu0
      %v3576 = vadd.f32 0.0, %v3575
      %v3577 = vpop.f32.mrb[0].mxu0
      %v3578 = vadd.f32 0.0, %v3577
      %3579 = vmatprep.mubr.f32.mxu0 0.0
      %3580 = vmatmul.mubr.f32.gmra.mrb[0].mxu0 %v3503
      %v3581 = vpop.f32.mrb[0].mxu0
      %v3582 = vadd.f32 0.0, %v3581
      %v3583 = vpop.f32.mrb[0].mxu0
      %v3584 = vadd.f32 0.0, %v3583
      %3585 = vmatprep.mubr.f32.mxu0 0.0
      %3586 = vmatmul.mubr.f32.gmra.mrb[0].mxu0 %v3505
      %v3587 = vpop.f32.mrb[0].mxu0
      %v3588 = vadd.f32 0.0, %v3587
      %v3589 = vpop.f32.mrb[0].mxu0
      %v3590 = vadd.f32 0.0, %v3589
      %3591 = vmatprep.mubr.f32.mxu0 0.0
      %3592 = vmatmul.mubr.f32.gmra.mrb[0].mxu0 %v3507
      %v3593 = vpop.f32.mrb[0].mxu0
      %v3594 = vadd.f32 0.0, %v3593
      %v3595 = vpop.f32.mrb[0].mxu0
      %v3596 = vadd.f32 0.0, %v3595
      %3597 = vdwg.mxu0
      %v3598 = vrot.slane %v491, 3
      %v3599 = vrot.slane %v492, 3
      %v3600 = vsel %vm3077, %v3598, %v3599
      %v3601 = vrot.slane %v493, 3
      %v3602 = vsel %vm3077, %v3599, %v3601
      %v3603 = vrot.slane %v494, 3
      %v3604 = vsel %vm3077, %v3601, %v3603
      %v3605 = vsel %vm532, %v3600, 0
      %v3607 = vsel %vm532, %v3602, 0
      %v3609 = vsel %vm532, %v3604, 0
      %v3611 = vsel %vm532, %v3603, 0
      %3613 = vmatprep.subr.mxu0 %v3070
      %3614 = vmatpush1.msra.mxu0 %v3069
      %3615 = vmatprep.subr.mxu0 %v3072
      %3616 = vmatpush1.msra.mxu0 %v3071
      %3617 = vmatprep.subr.mxu0 %v3074
      %3618 = vmatpush1.msra.mxu0 %v3073
      %3619 = vmatprep.subr.mxu0 %v3076
      %3620 = vmatpush1.msra.mxu0 %v3075
      %3621 = vmatprep.subr.mxu0 0.0
      %3622 = vmatpush1.msra.mxu0 0.0
      %3623 = vmatprep.subr.mxu0 0.0
      %3624 = vmatpush1.msra.mxu0 0.0
      %3625 = vmatprep.subr.mxu0 0.0
      %3626 = vmatpush1.msra.mxu0 0.0
      %3627 = vmatprep.subr.mxu0 0.0
      %3628 = vmatpush1.msra.mxu0 0.0
      %3629 = vmatprep.subr.mxu0 0.0
      %3630 = vmatpush1.msra.mxu0 0.0
      %3631 = vmatprep.subr.mxu0 0.0
      %3632 = vmatpush1.msra.mxu0 0.0
      %3633 = vmatprep.subr.mxu0 0.0
      %3634 = vmatpush1.msra.mxu0 0.0
      %3635 = vmatprep.subr.mxu0 0.0
      %3636 = vmatpush1.msra.mxu0 0.0
      %3637 = vmatprep.subr.mxu0 0.0
      %3638 = vmatpush1.msra.mxu0 0.0
      %3639 = vmatprep.subr.mxu0 0.0
      %3640 = vmatpush1.msra.mxu0 0.0
      %3641 = vmatprep.subr.mxu0 0.0
      %3642 = vmatpush1.msra.mxu0 0.0
      %3643 = vmatprep.subr.mxu0 0.0
      %3644 = vmatpush1.msra.mxu0 0.0
      %3645 = vmatprep.subr.mxu0 0.0
      %3646 = vmatpush1.msra.mxu0 0.0
      %3647 = vmatprep.subr.mxu0 0.0
      %3648 = vmatpush1.msra.mxu0 0.0
      %3649 = vmatprep.subr.mxu0 0.0
      %3650 = vmatpush1.msra.mxu0 0.0
      %3651 = vmatprep.subr.mxu0 0.0
      %3652 = vmatpush1.msra.mxu0 0.0
      %3653 = vmatprep.subr.mxu0 0.0
      %3654 = vmatpush1.msra.mxu0 0.0
      %3655 = vmatprep.subr.mxu0 0.0
      %3656 = vmatpush1.msra.mxu0 0.0
      %3657 = vmatprep.subr.mxu0 0.0
      %3658 = vmatpush1.msra.mxu0 0.0
      %3659 = vmatprep.subr.mxu0 0.0
      %3660 = vmatpush1.msra.mxu0 0.0
      %3661 = vmatprep.subr.mxu0 0.0
      %3662 = vmatpush1.msra.mxu0 0.0
      %3663 = vmatprep.subr.mxu0 0.0
      %3664 = vmatpush1.msra.mxu0 0.0
      %3665 = vmatprep.subr.mxu0 0.0
      %3666 = vmatpush1.msra.mxu0 0.0
      %3667 = vmatprep.subr.mxu0 0.0
      %3668 = vmatpush1.msra.mxu0 0.0
      %3669 = vmatprep.subr.mxu0 0.0
      %3670 = vmatpush1.msra.mxu0 0.0
      %3671 = vmatprep.subr.mxu0 0.0
      %3672 = vmatpush1.msra.mxu0 0.0
      %3673 = vmatprep.subr.mxu0 0.0
      %3674 = vmatpush1.msra.mxu0 0.0
      %3675 = vmatprep.subr.mxu0 0.0
      %3676 = vmatpush1.msra.mxu0 0.0
      %3677 = vmatprep.mubr.f32.mxu0 0.0
      %3678 = vmatmul.mubr.f32.gmra.mrb[0].mxu0 %v3605
      %v3679 = vpop.f32.mrb[0].mxu0
      %v3680 = vadd.f32 0.0, %v3679
      %v3681 = vpop.f32.mrb[0].mxu0
      %v3682 = vadd.f32 0.0, %v3681
      %3683 = vmatprep.mubr.f32.mxu0 0.0
      %3684 = vmatmul.mubr.f32.gmra.mrb[0].mxu0 %v3607
      %v3685 = vpop.f32.mrb[0].mxu0
      %v3686 = vadd.f32 0.0, %v3685
      %v3687 = vpop.f32.mrb[0].mxu0
      %v3688 = vadd.f32 0.0, %v3687
      %3689 = vmatprep.mubr.f32.mxu0 0.0
      %3690 = vmatmul.mubr.f32.gmra.mrb[0].mxu0 %v3609
      %v3691 = vpop.f32.mrb[0].mxu0
      %v3692 = vadd.f32 0.0, %v3691
      %v3693 = vpop.f32.mrb[0].mxu0
      %v3694 = vadd.f32 0.0, %v3693
      %3695 = vmatprep.mubr.f32.mxu0 0.0
      %3696 = vmatmul.mubr.f32.gmra.mrb[0].mxu0 %v3611
      %v3697 = vpop.f32.mrb[0].mxu0
      %v3698 = vadd.f32 0.0, %v3697
      %v3699 = vpop.f32.mrb[0].mxu0
      %v3700 = vadd.f32 0.0, %v3699
      %3701 = vdwg.mxu0
      %v3702 = vrot.slane %v495, 3
      %v3703 = vrot.slane %v496, 3
      %v3704 = vsel %vm3077, %v3702, %v3703
      %v3705 = vrot.slane %v497, 3
      %v3706 = vsel %vm3077, %v3703, %v3705
      %v3707 = vrot.slane %v498, 3
      %v3708 = vsel %vm3077, %v3705, %v3707
      %v3709 = vsel %vm532, %v3704, 0
      %v3711 = vsel %vm532, %v3706, 0
      %v3713 = vsel %vm532, %v3708, 0
      %v3715 = vsel %vm532, %v3707, 0
      %3717 = vmatprep.subr.mxu0 %v3070
      %3718 = vmatpush1.msra.mxu0 %v3069
      %3719 = vmatprep.subr.mxu0 %v3072
      %3720 = vmatpush1.msra.mxu0 %v3071
      %3721 = vmatprep.subr.mxu0 %v3074
      %3722 = vmatpush1.msra.mxu0 %v3073
      %3723 = vmatprep.subr.mxu0 %v3076
      %3724 = vmatpush1.msra.mxu0 %v3075
      %3725 = vmatprep.subr.mxu0 0.0
      %3726 = vmatpush1.msra.mxu0 0.0
      %3727 = vmatprep.subr.mxu0 0.0
      %3728 = vmatpush1.msra.mxu0 0.0
      %3729 = vmatprep.subr.mxu0 0.0
      %3730 = vmatpush1.msra.mxu0 0.0
      %3731 = vmatprep.subr.mxu0 0.0
      %3732 = vmatpush1.msra.mxu0 0.0
      %3733 = vmatprep.subr.mxu0 0.0
      %3734 = vmatpush1.msra.mxu0 0.0
      %3735 = vmatprep.subr.mxu0 0.0
      %3736 = vmatpush1.msra.mxu0 0.0
      %3737 = vmatprep.subr.mxu0 0.0
      %3738 = vmatpush1.msra.mxu0 0.0
      %3739 = vmatprep.subr.mxu0 0.0
      %3740 = vmatpush1.msra.mxu0 0.0
      %3741 = vmatprep.subr.mxu0 0.0
      %3742 = vmatpush1.msra.mxu0 0.0
      %3743 = vmatprep.subr.mxu0 0.0
      %3744 = vmatpush1.msra.mxu0 0.0
      %3745 = vmatprep.subr.mxu0 0.0
      %3746 = vmatpush1.msra.mxu0 0.0
      %3747 = vmatprep.subr.mxu0 0.0
      %3748 = vmatpush1.msra.mxu0 0.0
      %3749 = vmatprep.subr.mxu0 0.0
      %3750 = vmatpush1.msra.mxu0 0.0
      %3751 = vmatprep.subr.mxu0 0.0
      %3752 = vmatpush1.msra.mxu0 0.0
      %3753 = vmatprep.subr.mxu0 0.0
      %3754 = vmatpush1.msra.mxu0 0.0
      %3755 = vmatprep.subr.mxu0 0.0
      %3756 = vmatpush1.msra.mxu0 0.0
      %3757 = vmatprep.subr.mxu0 0.0
      %3758 = vmatpush1.msra.mxu0 0.0
      %3759 = vmatprep.subr.mxu0 0.0
      %3760 = vmatpush1.msra.mxu0 0.0
      %3761 = vmatprep.subr.mxu0 0.0
      %3762 = vmatpush1.msra.mxu0 0.0
      %3763 = vmatprep.subr.mxu0 0.0
      %3764 = vmatpush1.msra.mxu0 0.0
      %3765 = vmatprep.subr.mxu0 0.0
      %3766 = vmatpush1.msra.mxu0 0.0
      %3767 = vmatprep.subr.mxu0 0.0
      %3768 = vmatpush1.msra.mxu0 0.0
      %3769 = vmatprep.subr.mxu0 0.0
      %3770 = vmatpush1.msra.mxu0 0.0
      %3771 = vmatprep.subr.mxu0 0.0
      %3772 = vmatpush1.msra.mxu0 0.0
      %3773 = vmatprep.subr.mxu0 0.0
      %3774 = vmatpush1.msra.mxu0 0.0
      %3775 = vmatprep.subr.mxu0 0.0
      %3776 = vmatpush1.msra.mxu0 0.0
      %3777 = vmatprep.subr.mxu0 0.0
      %3778 = vmatpush1.msra.mxu0 0.0
      %3779 = vmatprep.subr.mxu0 0.0
      %3780 = vmatpush1.msra.mxu0 0.0
      %3781 = vmatprep.mubr.f32.mxu0 0.0
      %3782 = vmatmul.mubr.f32.gmra.mrb[0].mxu0 %v3709
      %v3783 = vpop.f32.mrb[0].mxu0
      %v3784 = vadd.f32 0.0, %v3783
      %v3785 = vpop.f32.mrb[0].mxu0
      %v3786 = vadd.f32 0.0, %v3785
      %3787 = vmatprep.mubr.f32.mxu0 0.0
      %3788 = vmatmul.mubr.f32.gmra.mrb[0].mxu0 %v3711
      %v3789 = vpop.f32.mrb[0].mxu0
      %v3790 = vadd.f32 0.0, %v3789
      %v3791 = vpop.f32.mrb[0].mxu0
      %v3792 = vadd.f32 0.0, %v3791
      %3793 = vmatprep.mubr.f32.mxu0 0.0
      %3794 = vmatmul.mubr.f32.gmra.mrb[0].mxu0 %v3713
      %v3795 = vpop.f32.mrb[0].mxu0
      %v3796 = vadd.f32 0.0, %v3795
      %v3797 = vpop.f32.mrb[0].mxu0
      %v3798 = vadd.f32 0.0, %v3797
      %3799 = vmatprep.mubr.f32.mxu0 0.0
      %3800 = vmatmul.mubr.f32.gmra.mrb[0].mxu0 %v3715
      %v3801 = vpop.f32.mrb[0].mxu0
      %v3802 = vadd.f32 0.0, %v3801
      %v3803 = vpop.f32.mrb[0].mxu0
      %v3804 = vadd.f32 0.0, %v3803
      %3805 = vdwg.mxu0
      %v3806 = vrot.slane %v499, 3
      %v3807 = vrot.slane %v500, 3
      %v3808 = vsel %vm3077, %v3806, %v3807
      %v3809 = vrot.slane %v501, 3
      %v3810 = vsel %vm3077, %v3807, %v3809
      %v3811 = vrot.slane %v502, 3
      %v3812 = vsel %vm3077, %v3809, %v3811
      %v3813 = vsel %vm532, %v3808, 0
      %v3815 = vsel %vm532, %v3810, 0
      %v3817 = vsel %vm532, %v3812, 0
      %v3819 = vsel %vm532, %v3811, 0
      %3821 = vmatprep.subr.mxu0 %v3070
      %3822 = vmatpush1.msra.mxu0 %v3069
      %3823 = vmatprep.subr.mxu0 %v3072
      %3824 = vmatpush1.msra.mxu0 %v3071
      %3825 = vmatprep.subr.mxu0 %v3074
      %3826 = vmatpush1.msra.mxu0 %v3073
      %3827 = vmatprep.subr.mxu0 %v3076
      %3828 = vmatpush1.msra.mxu0 %v3075
      %3829 = vmatprep.subr.mxu0 0.0
      %3830 = vmatpush1.msra.mxu0 0.0
      %3831 = vmatprep.subr.mxu0 0.0
      %3832 = vmatpush1.msra.mxu0 0.0
      %3833 = vmatprep.subr.mxu0 0.0
      %3834 = vmatpush1.msra.mxu0 0.0
      %3835 = vmatprep.subr.mxu0 0.0
      %3836 = vmatpush1.msra.mxu0 0.0
      %3837 = vmatprep.subr.mxu0 0.0
      %3838 = vmatpush1.msra.mxu0 0.0
      %3839 = vmatprep.subr.mxu0 0.0
      %3840 = vmatpush1.msra.mxu0 0.0
      %3841 = vmatprep.subr.mxu0 0.0
      %3842 = vmatpush1.msra.mxu0 0.0
      %3843 = vmatprep.subr.mxu0 0.0
      %3844 = vmatpush1.msra.mxu0 0.0
      %3845 = vmatprep.subr.mxu0 0.0
      %3846 = vmatpush1.msra.mxu0 0.0
      %3847 = vmatprep.subr.mxu0 0.0
      %3848 = vmatpush1.msra.mxu0 0.0
      %3849 = vmatprep.subr.mxu0 0.0
      %3850 = vmatpush1.msra.mxu0 0.0
      %3851 = vmatprep.subr.mxu0 0.0
      %3852 = vmatpush1.msra.mxu0 0.0
      %3853 = vmatprep.subr.mxu0 0.0
      %3854 = vmatpush1.msra.mxu0 0.0
      %3855 = vmatprep.subr.mxu0 0.0
      %3856 = vmatpush1.msra.mxu0 0.0
      %3857 = vmatprep.subr.mxu0 0.0
      %3858 = vmatpush1.msra.mxu0 0.0
      %3859 = vmatprep.subr.mxu0 0.0
      %3860 = vmatpush1.msra.mxu0 0.0
      %3861 = vmatprep.subr.mxu0 0.0
      %3862 = vmatpush1.msra.mxu0 0.0
      %3863 = vmatprep.subr.mxu0 0.0
      %3864 = vmatpush1.msra.mxu0 0.0
      %3865 = vmatprep.subr.mxu0 0.0
      %3866 = vmatpush1.msra.mxu0 0.0
      %3867 = vmatprep.subr.mxu0 0.0
      %3868 = vmatpush1.msra.mxu0 0.0
      %3869 = vmatprep.subr.mxu0 0.0
      %3870 = vmatpush1.msra.mxu0 0.0
      %3871 = vmatprep.subr.mxu0 0.0
      %3872 = vmatpush1.msra.mxu0 0.0
      %3873 = vmatprep.subr.mxu0 0.0
      %3874 = vmatpush1.msra.mxu0 0.0
      %3875 = vmatprep.subr.mxu0 0.0
      %3876 = vmatpush1.msra.mxu0 0.0
      %3877 = vmatprep.subr.mxu0 0.0
      %3878 = vmatpush1.msra.mxu0 0.0
      %3879 = vmatprep.subr.mxu0 0.0
      %3880 = vmatpush1.msra.mxu0 0.0
      %3881 = vmatprep.subr.mxu0 0.0
      %3882 = vmatpush1.msra.mxu0 0.0
      %3883 = vmatprep.subr.mxu0 0.0
      %3884 = vmatpush1.msra.mxu0 0.0
      %3885 = vmatprep.mubr.f32.mxu0 0.0
      %3886 = vmatmul.mubr.f32.gmra.mrb[0].mxu0 %v3813
      %v3887 = vpop.f32.mrb[0].mxu0
      %v3888 = vadd.f32 0.0, %v3887
      %v3889 = vpop.f32.mrb[0].mxu0
      %v3890 = vadd.f32 0.0, %v3889
      %3891 = vmatprep.mubr.f32.mxu0 0.0
      %3892 = vmatmul.mubr.f32.gmra.mrb[0].mxu0 %v3815
      %v3893 = vpop.f32.mrb[0].mxu0
      %v3894 = vadd.f32 0.0, %v3893
      %v3895 = vpop.f32.mrb[0].mxu0
      %v3896 = vadd.f32 0.0, %v3895
      %3897 = vmatprep.mubr.f32.mxu0 0.0
      %3898 = vmatmul.mubr.f32.gmra.mrb[0].mxu0 %v3817
      %v3899 = vpop.f32.mrb[0].mxu0
      %v3900 = vadd.f32 0.0, %v3899
      %v3901 = vpop.f32.mrb[0].mxu0
      %v3902 = vadd.f32 0.0, %v3901
      %3903 = vmatprep.mubr.f32.mxu0 0.0
      %3904 = vmatmul.mubr.f32.gmra.mrb[0].mxu0 %v3819
      %v3905 = vpop.f32.mrb[0].mxu0
      %v3906 = vadd.f32 0.0, %v3905
      %v3907 = vpop.f32.mrb[0].mxu0
      %v3908 = vadd.f32 0.0, %v3907
      %3909 = vdwg.mxu0
      %v3910 = vadd.f32 %v3004, %v3160
      %v3911 = vadd.f32 %v3005, %v3162
      %v3912 = vadd.f32 %v3006, %v3166
      %v3913 = vadd.f32 %v3007, %v3168
      %v3914 = vadd.f32 %v3008, %v3172
      %v3915 = vadd.f32 %v3009, %v3174
      %v3916 = vadd.f32 %v3010, %v3178
      %v3917 = vadd.f32 %v3011, %v3180
      %v3918 = vadd.f32 %v3012, %v3264
      %v3919 = vadd.f32 %v3013, %v3266
      %v3920 = vadd.f32 %v3014, %v3270
      %v3921 = vadd.f32 %v3015, %v3272
      %v3922 = vadd.f32 %v3016, %v3276
      %v3923 = vadd.f32 %v3017, %v3278
      %v3924 = vadd.f32 %v3018, %v3282
      %v3925 = vadd.f32 %v3019, %v3284
      %v3926 = vadd.f32 %v3020, %v3368
      %v3927 = vadd.f32 %v3021, %v3370
      %v3928 = vadd.f32 %v3022, %v3374
      %v3929 = vadd.f32 %v3023, %v3376
      %v3930 = vadd.f32 %v3024, %v3380
      %v3931 = vadd.f32 %v3025, %v3382
      %v3932 = vadd.f32 %v3026, %v3386
      %v3933 = vadd.f32 %v3027, %v3388
      %v3934 = vadd.f32 %v3028, %v3472
      %v3935 = vadd.f32 %v3029, %v3474
      %v3936 = vadd.f32 %v3030, %v3478
      %v3937 = vadd.f32 %v3031, %v3480
      %v3938 = vadd.f32 %v3032, %v3484
      %v3939 = vadd.f32 %v3033, %v3486
      %v3940 = vadd.f32 %v3034, %v3490
      %v3941 = vadd.f32 %v3035, %v3492
      %v3942 = vadd.f32 %v3036, %v3576
      %v3943 = vadd.f32 %v3037, %v3578
      %v3944 = vadd.f32 %v3038, %v3582
      %v3945 = vadd.f32 %v3039, %v3584
      %v3946 = vadd.f32 %v3040, %v3588
      %v3947 = vadd.f32 %v3041, %v3590
      %v3948 = vadd.f32 %v3042, %v3594
      %v3949 = vadd.f32 %v3043, %v3596
      %v3950 = vadd.f32 %v3044, %v3680
      %v3951 = vadd.f32 %v3045, %v3682
      %v3952 = vadd.f32 %v3046, %v3686
      %v3953 = vadd.f32 %v3047, %v3688
      %v3954 = vadd.f32 %v3048, %v3692
      %v3955 = vadd.f32 %v3049, %v3694
      %v3956 = vadd.f32 %v3050, %v3698
      %v3957 = vadd.f32 %v3051, %v3700
      %v3958 = vadd.f32 %v3052, %v3784
      %v3959 = vadd.f32 %v3053, %v3786
      %v3960 = vadd.f32 %v3054, %v3790
      %v3961 = vadd.f32 %v3055, %v3792
      %v3962 = vadd.f32 %v3056, %v3796
      %v3963 = vadd.f32 %v3057, %v3798
      %v3964 = vadd.f32 %v3058, %v3802
      %v3965 = vadd.f32 %v3059, %v3804
      %v3966 = vadd.f32 %v3060, %v3888
      %v3967 = vadd.f32 %v3061, %v3890
      %v3968 = vadd.f32 %v3062, %v3894
      %v3969 = vadd.f32 %v3063, %v3896
      %v3970 = vadd.f32 %v3064, %v3900
      %v3971 = vadd.f32 %v3065, %v3902
      %v3972 = vadd.f32 %v3066, %v3906
      %v3973 = vadd.f32 %v3067, %v3908
      %s3974 = scalar_lea.vmem %s1, 256
      %v3975 = vld [vmem:[%s3974] sm:$0xff]
      %v3976 = vld [vmem:[%s3974 + $0x8] sm:$0xff]
      %v3977 = vld [vmem:[%s3974 + $0x10] sm:$0xff]
      %v3978 = vld [vmem:[%s3974 + $0x18] sm:$0xff]
      %v3979 = vld [vmem:[%s3974 + $0x20] sm:$0xff]
      %v3980 = vld [vmem:[%s3974 + $0x28] sm:$0xff]
      %v3981 = vld [vmem:[%s3974 + $0x30] sm:$0xff]
      %v3982 = vld [vmem:[%s3974 + $0x38] sm:$0xff]
      %vm3983 = vcmask 1043456
      %v3984 = vrot.slane %v471, 4
      %v3985 = vrot.slane %v472, 4
      %v3986 = vsel %vm3983, %v3984, %v3985
      %v3987 = vrot.slane %v473, 4
      %v3988 = vsel %vm3983, %v3985, %v3987
      %v3989 = vrot.slane %v474, 4
      %v3990 = vsel %vm3983, %v3987, %v3989
      %v3991 = vsel %vm532, %v3986, 0
      %v3993 = vsel %vm532, %v3988, 0
      %v3995 = vsel %vm532, %v3990, 0
      %v3997 = vsel %vm532, %v3989, 0
      %3999 = vmatprep.subr.mxu0 %v3976
      %4000 = vmatpush1.msra.mxu0 %v3975
      %4001 = vmatprep.subr.mxu0 %v3978
      %4002 = vmatpush1.msra.mxu0 %v3977
      %4003 = vmatprep.subr.mxu0 %v3980
      %4004 = vmatpush1.msra.mxu0 %v3979
      %4005 = vmatprep.subr.mxu0 %v3982
      %4006 = vmatpush1.msra.mxu0 %v3981
      %4007 = vmatprep.subr.mxu0 0.0
      %4008 = vmatpush1.msra.mxu0 0.0
      %4009 = vmatprep.subr.mxu0 0.0
      %4010 = vmatpush1.msra.mxu0 0.0
      %4011 = vmatprep.subr.mxu0 0.0
      %4012 = vmatpush1.msra.mxu0 0.0
      %4013 = vmatprep.subr.mxu0 0.0
      %4014 = vmatpush1.msra.mxu0 0.0
      %4015 = vmatprep.subr.mxu0 0.0
      %4016 = vmatpush1.msra.mxu0 0.0
      %4017 = vmatprep.subr.mxu0 0.0
      %4018 = vmatpush1.msra.mxu0 0.0
      %4019 = vmatprep.subr.mxu0 0.0
      %4020 = vmatpush1.msra.mxu0 0.0
      %4021 = vmatprep.subr.mxu0 0.0
      %4022 = vmatpush1.msra.mxu0 0.0
      %4023 = vmatprep.subr.mxu0 0.0
      %4024 = vmatpush1.msra.mxu0 0.0
      %4025 = vmatprep.subr.mxu0 0.0
      %4026 = vmatpush1.msra.mxu0 0.0
      %4027 = vmatprep.subr.mxu0 0.0
      %4028 = vmatpush1.msra.mxu0 0.0
      %4029 = vmatprep.subr.mxu0 0.0
      %4030 = vmatpush1.msra.mxu0 0.0
      %4031 = vmatprep.subr.mxu0 0.0
      %4032 = vmatpush1.msra.mxu0 0.0
      %4033 = vmatprep.subr.mxu0 0.0
      %4034 = vmatpush1.msra.mxu0 0.0
      %4035 = vmatprep.subr.mxu0 0.0
      %4036 = vmatpush1.msra.mxu0 0.0
      %4037 = vmatprep.subr.mxu0 0.0
      %4038 = vmatpush1.msra.mxu0 0.0
      %4039 = vmatprep.subr.mxu0 0.0
      %4040 = vmatpush1.msra.mxu0 0.0
      %4041 = vmatprep.subr.mxu0 0.0
      %4042 = vmatpush1.msra.mxu0 0.0
      %4043 = vmatprep.subr.mxu0 0.0
      %4044 = vmatpush1.msra.mxu0 0.0
      %4045 = vmatprep.subr.mxu0 0.0
      %4046 = vmatpush1.msra.mxu0 0.0
      %4047 = vmatprep.subr.mxu0 0.0
      %4048 = vmatpush1.msra.mxu0 0.0
      %4049 = vmatprep.subr.mxu0 0.0
      %4050 = vmatpush1.msra.mxu0 0.0
      %4051 = vmatprep.subr.mxu0 0.0
      %4052 = vmatpush1.msra.mxu0 0.0
      %4053 = vmatprep.subr.mxu0 0.0
      %4054 = vmatpush1.msra.mxu0 0.0
      %4055 = vmatprep.subr.mxu0 0.0
      %4056 = vmatpush1.msra.mxu0 0.0
      %4057 = vmatprep.subr.mxu0 0.0
      %4058 = vmatpush1.msra.mxu0 0.0
      %4059 = vmatprep.subr.mxu0 0.0
      %4060 = vmatpush1.msra.mxu0 0.0
      %4061 = vmatprep.subr.mxu0 0.0
      %4062 = vmatpush1.msra.mxu0 0.0
      %4063 = vmatprep.mubr.f32.mxu0 0.0
      %4064 = vmatmul.mubr.f32.gmra.mrb[0].mxu0 %v3991
      %v4065 = vpop.f32.mrb[0].mxu0
      %v4066 = vadd.f32 0.0, %v4065
      %v4067 = vpop.f32.mrb[0].mxu0
      %v4068 = vadd.f32 0.0, %v4067
      %4069 = vmatprep.mubr.f32.mxu0 0.0
      %4070 = vmatmul.mubr.f32.gmra.mrb[0].mxu0 %v3993
      %v4071 = vpop.f32.mrb[0].mxu0
      %v4072 = vadd.f32 0.0, %v4071
      %v4073 = vpop.f32.mrb[0].mxu0
      %v4074 = vadd.f32 0.0, %v4073
      %4075 = vmatprep.mubr.f32.mxu0 0.0
      %4076 = vmatmul.mubr.f32.gmra.mrb[0].mxu0 %v3995
      %v4077 = vpop.f32.mrb[0].mxu0
      %v4078 = vadd.f32 0.0, %v4077
      %v4079 = vpop.f32.mrb[0].mxu0
      %v4080 = vadd.f32 0.0, %v4079
      %4081 = vmatprep.mubr.f32.mxu0 0.0
      %4082 = vmatmul.mubr.f32.gmra.mrb[0].mxu0 %v3997
      %v4083 = vpop.f32.mrb[0].mxu0
      %v4084 = vadd.f32 0.0, %v4083
      %v4085 = vpop.f32.mrb[0].mxu0
      %v4086 = vadd.f32 0.0, %v4085
      %4087 = vdwg.mxu0
      %v4088 = vrot.slane %v475, 4
      %v4089 = vrot.slane %v476, 4
      %v4090 = vsel %vm3983, %v4088, %v4089
      %v4091 = vrot.slane %v477, 4
      %v4092 = vsel %vm3983, %v4089, %v4091
      %v4093 = vrot.slane %v478, 4
      %v4094 = vsel %vm3983, %v4091, %v4093
      %v4095 = vsel %vm532, %v4090, 0
      %v4097 = vsel %vm532, %v4092, 0
      %v4099 = vsel %vm532, %v4094, 0
      %v4101 = vsel %vm532, %v4093, 0
      %4103 = vmatprep.subr.mxu0 %v3976
      %4104 = vmatpush1.msra.mxu0 %v3975
      %4105 = vmatprep.subr.mxu0 %v3978
      %4106 = vmatpush1.msra.mxu0 %v3977
      %4107 = vmatprep.subr.mxu0 %v3980
      %4108 = vmatpush1.msra.mxu0 %v3979
      %4109 = vmatprep.subr.mxu0 %v3982
      %4110 = vmatpush1.msra.mxu0 %v3981
      %4111 = vmatprep.subr.mxu0 0.0
      %4112 = vmatpush1.msra.mxu0 0.0
      %4113 = vmatprep.subr.mxu0 0.0
      %4114 = vmatpush1.msra.mxu0 0.0
      %4115 = vmatprep.subr.mxu0 0.0
      %4116 = vmatpush1.msra.mxu0 0.0
      %4117 = vmatprep.subr.mxu0 0.0
      %4118 = vmatpush1.msra.mxu0 0.0
      %4119 = vmatprep.subr.mxu0 0.0
      %4120 = vmatpush1.msra.mxu0 0.0
      %4121 = vmatprep.subr.mxu0 0.0
      %4122 = vmatpush1.msra.mxu0 0.0
      %4123 = vmatprep.subr.mxu0 0.0
      %4124 = vmatpush1.msra.mxu0 0.0
      %4125 = vmatprep.subr.mxu0 0.0
      %4126 = vmatpush1.msra.mxu0 0.0
      %4127 = vmatprep.subr.mxu0 0.0
      %4128 = vmatpush1.msra.mxu0 0.0
      %4129 = vmatprep.subr.mxu0 0.0
      %4130 = vmatpush1.msra.mxu0 0.0
      %4131 = vmatprep.subr.mxu0 0.0
      %4132 = vmatpush1.msra.mxu0 0.0
      %4133 = vmatprep.subr.mxu0 0.0
      %4134 = vmatpush1.msra.mxu0 0.0
      %4135 = vmatprep.subr.mxu0 0.0
      %4136 = vmatpush1.msra.mxu0 0.0
      %4137 = vmatprep.subr.mxu0 0.0
      %4138 = vmatpush1.msra.mxu0 0.0
      %4139 = vmatprep.subr.mxu0 0.0
      %4140 = vmatpush1.msra.mxu0 0.0
      %4141 = vmatprep.subr.mxu0 0.0
      %4142 = vmatpush1.msra.mxu0 0.0
      %4143 = vmatprep.subr.mxu0 0.0
      %4144 = vmatpush1.msra.mxu0 0.0
      %4145 = vmatprep.subr.mxu0 0.0
      %4146 = vmatpush1.msra.mxu0 0.0
      %4147 = vmatprep.subr.mxu0 0.0
      %4148 = vmatpush1.msra.mxu0 0.0
      %4149 = vmatprep.subr.mxu0 0.0
      %4150 = vmatpush1.msra.mxu0 0.0
      %4151 = vmatprep.subr.mxu0 0.0
      %4152 = vmatpush1.msra.mxu0 0.0
      %4153 = vmatprep.subr.mxu0 0.0
      %4154 = vmatpush1.msra.mxu0 0.0
      %4155 = vmatprep.subr.mxu0 0.0
      %4156 = vmatpush1.msra.mxu0 0.0
      %4157 = vmatprep.subr.mxu0 0.0
      %4158 = vmatpush1.msra.mxu0 0.0
      %4159 = vmatprep.subr.mxu0 0.0
      %4160 = vmatpush1.msra.mxu0 0.0
      %4161 = vmatprep.subr.mxu0 0.0
      %4162 = vmatpush1.msra.mxu0 0.0
      %4163 = vmatprep.subr.mxu0 0.0
      %4164 = vmatpush1.msra.mxu0 0.0
      %4165 = vmatprep.subr.mxu0 0.0
      %4166 = vmatpush1.msra.mxu0 0.0
      %4167 = vmatprep.mubr.f32.mxu0 0.0
      %4168 = vmatmul.mubr.f32.gmra.mrb[0].mxu0 %v4095
      %v4169 = vpop.f32.mrb[0].mxu0
      %v4170 = vadd.f32 0.0, %v4169
      %v4171 = vpop.f32.mrb[0].mxu0
      %v4172 = vadd.f32 0.0, %v4171
      %4173 = vmatprep.mubr.f32.mxu0 0.0
      %4174 = vmatmul.mubr.f32.gmra.mrb[0].mxu0 %v4097
      %v4175 = vpop.f32.mrb[0].mxu0
      %v4176 = vadd.f32 0.0, %v4175
      %v4177 = vpop.f32.mrb[0].mxu0
      %v4178 = vadd.f32 0.0, %v4177
      %4179 = vmatprep.mubr.f32.mxu0 0.0
      %4180 = vmatmul.mubr.f32.gmra.mrb[0].mxu0 %v4099
      %v4181 = vpop.f32.mrb[0].mxu0
      %v4182 = vadd.f32 0.0, %v4181
      %v4183 = vpop.f32.mrb[0].mxu0
      %v4184 = vadd.f32 0.0, %v4183
      %4185 = vmatprep.mubr.f32.mxu0 0.0
      %4186 = vmatmul.mubr.f32.gmra.mrb[0].mxu0 %v4101
      %v4187 = vpop.f32.mrb[0].mxu0
      %v4188 = vadd.f32 0.0, %v4187
      %v4189 = vpop.f32.mrb[0].mxu0
      %v4190 = vadd.f32 0.0, %v4189
      %4191 = vdwg.mxu0
      %v4192 = vrot.slane %v479, 4
      %v4193 = vrot.slane %v480, 4
      %v4194 = vsel %vm3983, %v4192, %v4193
      %v4195 = vrot.slane %v481, 4
      %v4196 = vsel %vm3983, %v4193, %v4195
      %v4197 = vrot.slane %v482, 4
      %v4198 = vsel %vm3983, %v4195, %v4197
      %v4199 = vsel %vm532, %v4194, 0
      %v4201 = vsel %vm532, %v4196, 0
      %v4203 = vsel %vm532, %v4198, 0
      %v4205 = vsel %vm532, %v4197, 0
      %4207 = vmatprep.subr.mxu0 %v3976
      %4208 = vmatpush1.msra.mxu0 %v3975
      %4209 = vmatprep.subr.mxu0 %v3978
      %4210 = vmatpush1.msra.mxu0 %v3977
      %4211 = vmatprep.subr.mxu0 %v3980
      %4212 = vmatpush1.msra.mxu0 %v3979
      %4213 = vmatprep.subr.mxu0 %v3982
      %4214 = vmatpush1.msra.mxu0 %v3981
      %4215 = vmatprep.subr.mxu0 0.0
      %4216 = vmatpush1.msra.mxu0 0.0
      %4217 = vmatprep.subr.mxu0 0.0
      %4218 = vmatpush1.msra.mxu0 0.0
      %4219 = vmatprep.subr.mxu0 0.0
      %4220 = vmatpush1.msra.mxu0 0.0
      %4221 = vmatprep.subr.mxu0 0.0
      %4222 = vmatpush1.msra.mxu0 0.0
      %4223 = vmatprep.subr.mxu0 0.0
      %4224 = vmatpush1.msra.mxu0 0.0
      %4225 = vmatprep.subr.mxu0 0.0
      %4226 = vmatpush1.msra.mxu0 0.0
      %4227 = vmatprep.subr.mxu0 0.0
      %4228 = vmatpush1.msra.mxu0 0.0
      %4229 = vmatprep.subr.mxu0 0.0
      %4230 = vmatpush1.msra.mxu0 0.0
      %4231 = vmatprep.subr.mxu0 0.0
      %4232 = vmatpush1.msra.mxu0 0.0
      %4233 = vmatprep.subr.mxu0 0.0
      %4234 = vmatpush1.msra.mxu0 0.0
      %4235 = vmatprep.subr.mxu0 0.0
      %4236 = vmatpush1.msra.mxu0 0.0
      %4237 = vmatprep.subr.mxu0 0.0
      %4238 = vmatpush1.msra.mxu0 0.0
      %4239 = vmatprep.subr.mxu0 0.0
      %4240 = vmatpush1.msra.mxu0 0.0
      %4241 = vmatprep.subr.mxu0 0.0
      %4242 = vmatpush1.msra.mxu0 0.0
      %4243 = vmatprep.subr.mxu0 0.0
      %4244 = vmatpush1.msra.mxu0 0.0
      %4245 = vmatprep.subr.mxu0 0.0
      %4246 = vmatpush1.msra.mxu0 0.0
      %4247 = vmatprep.subr.mxu0 0.0
      %4248 = vmatpush1.msra.mxu0 0.0
      %4249 = vmatprep.subr.mxu0 0.0
      %4250 = vmatpush1.msra.mxu0 0.0
      %4251 = vmatprep.subr.mxu0 0.0
      %4252 = vmatpush1.msra.mxu0 0.0
      %4253 = vmatprep.subr.mxu0 0.0
      %4254 = vmatpush1.msra.mxu0 0.0
      %4255 = vmatprep.subr.mxu0 0.0
      %4256 = vmatpush1.msra.mxu0 0.0
      %4257 = vmatprep.subr.mxu0 0.0
      %4258 = vmatpush1.msra.mxu0 0.0
      %4259 = vmatprep.subr.mxu0 0.0
      %4260 = vmatpush1.msra.mxu0 0.0
      %4261 = vmatprep.subr.mxu0 0.0
      %4262 = vmatpush1.msra.mxu0 0.0
      %4263 = vmatprep.subr.mxu0 0.0
      %4264 = vmatpush1.msra.mxu0 0.0
      %4265 = vmatprep.subr.mxu0 0.0
      %4266 = vmatpush1.msra.mxu0 0.0
      %4267 = vmatprep.subr.mxu0 0.0
      %4268 = vmatpush1.msra.mxu0 0.0
      %4269 = vmatprep.subr.mxu0 0.0
      %4270 = vmatpush1.msra.mxu0 0.0
      %4271 = vmatprep.mubr.f32.mxu0 0.0
      %4272 = vmatmul.mubr.f32.gmra.mrb[0].mxu0 %v4199
      %v4273 = vpop.f32.mrb[0].mxu0
      %v4274 = vadd.f32 0.0, %v4273
      %v4275 = vpop.f32.mrb[0].mxu0
      %v4276 = vadd.f32 0.0, %v4275
      %4277 = vmatprep.mubr.f32.mxu0 0.0
      %4278 = vmatmul.mubr.f32.gmra.mrb[0].mxu0 %v4201
      %v4279 = vpop.f32.mrb[0].mxu0
      %v4280 = vadd.f32 0.0, %v4279
      %v4281 = vpop.f32.mrb[0].mxu0
      %v4282 = vadd.f32 0.0, %v4281
      %4283 = vmatprep.mubr.f32.mxu0 0.0
      %4284 = vmatmul.mubr.f32.gmra.mrb[0].mxu0 %v4203
      %v4285 = vpop.f32.mrb[0].mxu0
      %v4286 = vadd.f32 0.0, %v4285
      %v4287 = vpop.f32.mrb[0].mxu0
      %v4288 = vadd.f32 0.0, %v4287
      %4289 = vmatprep.mubr.f32.mxu0 0.0
      %4290 = vmatmul.mubr.f32.gmra.mrb[0].mxu0 %v4205
      %v4291 = vpop.f32.mrb[0].mxu0
      %v4292 = vadd.f32 0.0, %v4291
      %v4293 = vpop.f32.mrb[0].mxu0
      %v4294 = vadd.f32 0.0, %v4293
      %4295 = vdwg.mxu0
      %v4296 = vrot.slane %v483, 4
      %v4297 = vrot.slane %v484, 4
      %v4298 = vsel %vm3983, %v4296, %v4297
      %v4299 = vrot.slane %v485, 4
      %v4300 = vsel %vm3983, %v4297, %v4299
      %v4301 = vrot.slane %v486, 4
      %v4302 = vsel %vm3983, %v4299, %v4301
      %v4303 = vsel %vm532, %v4298, 0
      %v4305 = vsel %vm532, %v4300, 0
      %v4307 = vsel %vm532, %v4302, 0
      %v4309 = vsel %vm532, %v4301, 0
      %4311 = vmatprep.subr.mxu0 %v3976
      %4312 = vmatpush1.msra.mxu0 %v3975
      %4313 = vmatprep.subr.mxu0 %v3978
      %4314 = vmatpush1.msra.mxu0 %v3977
      %4315 = vmatprep.subr.mxu0 %v3980
      %4316 = vmatpush1.msra.mxu0 %v3979
      %4317 = vmatprep.subr.mxu0 %v3982
      %4318 = vmatpush1.msra.mxu0 %v3981
      %4319 = vmatprep.subr.mxu0 0.0
      %4320 = vmatpush1.msra.mxu0 0.0
      %4321 = vmatprep.subr.mxu0 0.0
      %4322 = vmatpush1.msra.mxu0 0.0
      %4323 = vmatprep.subr.mxu0 0.0
      %4324 = vmatpush1.msra.mxu0 0.0
      %4325 = vmatprep.subr.mxu0 0.0
      %4326 = vmatpush1.msra.mxu0 0.0
      %4327 = vmatprep.subr.mxu0 0.0
      %4328 = vmatpush1.msra.mxu0 0.0
      %4329 = vmatprep.subr.mxu0 0.0
      %4330 = vmatpush1.msra.mxu0 0.0
      %4331 = vmatprep.subr.mxu0 0.0
      %4332 = vmatpush1.msra.mxu0 0.0
      %4333 = vmatprep.subr.mxu0 0.0
      %4334 = vmatpush1.msra.mxu0 0.0
      %4335 = vmatprep.subr.mxu0 0.0
      %4336 = vmatpush1.msra.mxu0 0.0
      %4337 = vmatprep.subr.mxu0 0.0
      %4338 = vmatpush1.msra.mxu0 0.0
      %4339 = vmatprep.subr.mxu0 0.0
      %4340 = vmatpush1.msra.mxu0 0.0
      %4341 = vmatprep.subr.mxu0 0.0
      %4342 = vmatpush1.msra.mxu0 0.0
      %4343 = vmatprep.subr.mxu0 0.0
      %4344 = vmatpush1.msra.mxu0 0.0
      %4345 = vmatprep.subr.mxu0 0.0
      %4346 = vmatpush1.msra.mxu0 0.0
      %4347 = vmatprep.subr.mxu0 0.0
      %4348 = vmatpush1.msra.mxu0 0.0
      %4349 = vmatprep.subr.mxu0 0.0
      %4350 = vmatpush1.msra.mxu0 0.0
      %4351 = vmatprep.subr.mxu0 0.0
      %4352 = vmatpush1.msra.mxu0 0.0
      %4353 = vmatprep.subr.mxu0 0.0
      %4354 = vmatpush1.msra.mxu0 0.0
      %4355 = vmatprep.subr.mxu0 0.0
      %4356 = vmatpush1.msra.mxu0 0.0
      %4357 = vmatprep.subr.mxu0 0.0
      %4358 = vmatpush1.msra.mxu0 0.0
      %4359 = vmatprep.subr.mxu0 0.0
      %4360 = vmatpush1.msra.mxu0 0.0
      %4361 = vmatprep.subr.mxu0 0.0
      %4362 = vmatpush1.msra.mxu0 0.0
      %4363 = vmatprep.subr.mxu0 0.0
      %4364 = vmatpush1.msra.mxu0 0.0
      %4365 = vmatprep.subr.mxu0 0.0
      %4366 = vmatpush1.msra.mxu0 0.0
      %4367 = vmatprep.subr.mxu0 0.0
      %4368 = vmatpush1.msra.mxu0 0.0
      %4369 = vmatprep.subr.mxu0 0.0
      %4370 = vmatpush1.msra.mxu0 0.0
      %4371 = vmatprep.subr.mxu0 0.0
      %4372 = vmatpush1.msra.mxu0 0.0
      %4373 = vmatprep.subr.mxu0 0.0
      %4374 = vmatpush1.msra.mxu0 0.0
      %4375 = vmatprep.mubr.f32.mxu0 0.0
      %4376 = vmatmul.mubr.f32.gmra.mrb[0].mxu0 %v4303
      %v4377 = vpop.f32.mrb[0].mxu0
      %v4378 = vadd.f32 0.0, %v4377
      %v4379 = vpop.f32.mrb[0].mxu0
      %v4380 = vadd.f32 0.0, %v4379
      %4381 = vmatprep.mubr.f32.mxu0 0.0
      %4382 = vmatmul.mubr.f32.gmra.mrb[0].mxu0 %v4305
      %v4383 = vpop.f32.mrb[0].mxu0
      %v4384 = vadd.f32 0.0, %v4383
      %v4385 = vpop.f32.mrb[0].mxu0
      %v4386 = vadd.f32 0.0, %v4385
      %4387 = vmatprep.mubr.f32.mxu0 0.0
      %4388 = vmatmul.mubr.f32.gmra.mrb[0].mxu0 %v4307
      %v4389 = vpop.f32.mrb[0].mxu0
      %v4390 = vadd.f32 0.0, %v4389
      %v4391 = vpop.f32.mrb[0].mxu0
      %v4392 = vadd.f32 0.0, %v4391
      %4393 = vmatprep.mubr.f32.mxu0 0.0
      %4394 = vmatmul.mubr.f32.gmra.mrb[0].mxu0 %v4309
      %v4395 = vpop.f32.mrb[0].mxu0
      %v4396 = vadd.f32 0.0, %v4395
      %v4397 = vpop.f32.mrb[0].mxu0
      %v4398 = vadd.f32 0.0, %v4397
      %4399 = vdwg.mxu0
      %v4400 = vrot.slane %v487, 4
      %v4401 = vrot.slane %v488, 4
      %v4402 = vsel %vm3983, %v4400, %v4401
      %v4403 = vrot.slane %v489, 4
      %v4404 = vsel %vm3983, %v4401, %v4403
      %v4405 = vrot.slane %v490, 4
      %v4406 = vsel %vm3983, %v4403, %v4405
      %v4407 = vsel %vm532, %v4402, 0
      %v4409 = vsel %vm532, %v4404, 0
      %v4411 = vsel %vm532, %v4406, 0
      %v4413 = vsel %vm532, %v4405, 0
      %4415 = vmatprep.subr.mxu0 %v3976
      %4416 = vmatpush1.msra.mxu0 %v3975
      %4417 = vmatprep.subr.mxu0 %v3978
      %4418 = vmatpush1.msra.mxu0 %v3977
      %4419 = vmatprep.subr.mxu0 %v3980
      %4420 = vmatpush1.msra.mxu0 %v3979
      %4421 = vmatprep.subr.mxu0 %v3982
      %4422 = vmatpush1.msra.mxu0 %v3981
      %4423 = vmatprep.subr.mxu0 0.0
      %4424 = vmatpush1.msra.mxu0 0.0
      %4425 = vmatprep.subr.mxu0 0.0
      %4426 = vmatpush1.msra.mxu0 0.0
      %4427 = vmatprep.subr.mxu0 0.0
      %4428 = vmatpush1.msra.mxu0 0.0
      %4429 = vmatprep.subr.mxu0 0.0
      %4430 = vmatpush1.msra.mxu0 0.0
      %4431 = vmatprep.subr.mxu0 0.0
      %4432 = vmatpush1.msra.mxu0 0.0
      %4433 = vmatprep.subr.mxu0 0.0
      %4434 = vmatpush1.msra.mxu0 0.0
      %4435 = vmatprep.subr.mxu0 0.0
      %4436 = vmatpush1.msra.mxu0 0.0
      %4437 = vmatprep.subr.mxu0 0.0
      %4438 = vmatpush1.msra.mxu0 0.0
      %4439 = vmatprep.subr.mxu0 0.0
      %4440 = vmatpush1.msra.mxu0 0.0
      %4441 = vmatprep.subr.mxu0 0.0
      %4442 = vmatpush1.msra.mxu0 0.0
      %4443 = vmatprep.subr.mxu0 0.0
      %4444 = vmatpush1.msra.mxu0 0.0
      %4445 = vmatprep.subr.mxu0 0.0
      %4446 = vmatpush1.msra.mxu0 0.0
      %4447 = vmatprep.subr.mxu0 0.0
      %4448 = vmatpush1.msra.mxu0 0.0
      %4449 = vmatprep.subr.mxu0 0.0
      %4450 = vmatpush1.msra.mxu0 0.0
      %4451 = vmatprep.subr.mxu0 0.0
      %4452 = vmatpush1.msra.mxu0 0.0
      %4453 = vmatprep.subr.mxu0 0.0
      %4454 = vmatpush1.msra.mxu0 0.0
      %4455 = vmatprep.subr.mxu0 0.0
      %4456 = vmatpush1.msra.mxu0 0.0
      %4457 = vmatprep.subr.mxu0 0.0
      %4458 = vmatpush1.msra.mxu0 0.0
      %4459 = vmatprep.subr.mxu0 0.0
      %4460 = vmatpush1.msra.mxu0 0.0
      %4461 = vmatprep.subr.mxu0 0.0
      %4462 = vmatpush1.msra.mxu0 0.0
      %4463 = vmatprep.subr.mxu0 0.0
      %4464 = vmatpush1.msra.mxu0 0.0
      %4465 = vmatprep.subr.mxu0 0.0
      %4466 = vmatpush1.msra.mxu0 0.0
      %4467 = vmatprep.subr.mxu0 0.0
      %4468 = vmatpush1.msra.mxu0 0.0
      %4469 = vmatprep.subr.mxu0 0.0
      %4470 = vmatpush1.msra.mxu0 0.0
      %4471 = vmatprep.subr.mxu0 0.0
      %4472 = vmatpush1.msra.mxu0 0.0
      %4473 = vmatprep.subr.mxu0 0.0
      %4474 = vmatpush1.msra.mxu0 0.0
      %4475 = vmatprep.subr.mxu0 0.0
      %4476 = vmatpush1.msra.mxu0 0.0
      %4477 = vmatprep.subr.mxu0 0.0
      %4478 = vmatpush1.msra.mxu0 0.0
      %4479 = vmatprep.mubr.f32.mxu0 0.0
      %4480 = vmatmul.mubr.f32.gmra.mrb[0].mxu0 %v4407
      %v4481 = vpop.f32.mrb[0].mxu0
      %v4482 = vadd.f32 0.0, %v4481
      %v4483 = vpop.f32.mrb[0].mxu0
      %v4484 = vadd.f32 0.0, %v4483
      %4485 = vmatprep.mubr.f32.mxu0 0.0
      %4486 = vmatmul.mubr.f32.gmra.mrb[0].mxu0 %v4409
      %v4487 = vpop.f32.mrb[0].mxu0
      %v4488 = vadd.f32 0.0, %v4487
      %v4489 = vpop.f32.mrb[0].mxu0
      %v4490 = vadd.f32 0.0, %v4489
      %4491 = vmatprep.mubr.f32.mxu0 0.0
      %4492 = vmatmul.mubr.f32.gmra.mrb[0].mxu0 %v4411
      %v4493 = vpop.f32.mrb[0].mxu0
      %v4494 = vadd.f32 0.0, %v4493
      %v4495 = vpop.f32.mrb[0].mxu0
      %v4496 = vadd.f32 0.0, %v4495
      %4497 = vmatprep.mubr.f32.mxu0 0.0
      %4498 = vmatmul.mubr.f32.gmra.mrb[0].mxu0 %v4413
      %v4499 = vpop.f32.mrb[0].mxu0
      %v4500 = vadd.f32 0.0, %v4499
      %v4501 = vpop.f32.mrb[0].mxu0
      %v4502 = vadd.f32 0.0, %v4501
      %4503 = vdwg.mxu0
      %v4504 = vrot.slane %v491, 4
      %v4505 = vrot.slane %v492, 4
      %v4506 = vsel %vm3983, %v4504, %v4505
      %v4507 = vrot.slane %v493, 4
      %v4508 = vsel %vm3983, %v4505, %v4507
      %v4509 = vrot.slane %v494, 4
      %v4510 = vsel %vm3983, %v4507, %v4509
      %v4511 = vsel %vm532, %v4506, 0
      %v4513 = vsel %vm532, %v4508, 0
      %v4515 = vsel %vm532, %v4510, 0
      %v4517 = vsel %vm532, %v4509, 0
      %4519 = vmatprep.subr.mxu0 %v3976
      %4520 = vmatpush1.msra.mxu0 %v3975
      %4521 = vmatprep.subr.mxu0 %v3978
      %4522 = vmatpush1.msra.mxu0 %v3977
      %4523 = vmatprep.subr.mxu0 %v3980
      %4524 = vmatpush1.msra.mxu0 %v3979
      %4525 = vmatprep.subr.mxu0 %v3982
      %4526 = vmatpush1.msra.mxu0 %v3981
      %4527 = vmatprep.subr.mxu0 0.0
      %4528 = vmatpush1.msra.mxu0 0.0
      %4529 = vmatprep.subr.mxu0 0.0
      %4530 = vmatpush1.msra.mxu0 0.0
      %4531 = vmatprep.subr.mxu0 0.0
      %4532 = vmatpush1.msra.mxu0 0.0
      %4533 = vmatprep.subr.mxu0 0.0
      %4534 = vmatpush1.msra.mxu0 0.0
      %4535 = vmatprep.subr.mxu0 0.0
      %4536 = vmatpush1.msra.mxu0 0.0
      %4537 = vmatprep.subr.mxu0 0.0
      %4538 = vmatpush1.msra.mxu0 0.0
      %4539 = vmatprep.subr.mxu0 0.0
      %4540 = vmatpush1.msra.mxu0 0.0
      %4541 = vmatprep.subr.mxu0 0.0
      %4542 = vmatpush1.msra.mxu0 0.0
      %4543 = vmatprep.subr.mxu0 0.0
      %4544 = vmatpush1.msra.mxu0 0.0
      %4545 = vmatprep.subr.mxu0 0.0
      %4546 = vmatpush1.msra.mxu0 0.0
      %4547 = vmatprep.subr.mxu0 0.0
      %4548 = vmatpush1.msra.mxu0 0.0
      %4549 = vmatprep.subr.mxu0 0.0
      %4550 = vmatpush1.msra.mxu0 0.0
      %4551 = vmatprep.subr.mxu0 0.0
      %4552 = vmatpush1.msra.mxu0 0.0
      %4553 = vmatprep.subr.mxu0 0.0
      %4554 = vmatpush1.msra.mxu0 0.0
      %4555 = vmatprep.subr.mxu0 0.0
      %4556 = vmatpush1.msra.mxu0 0.0
      %4557 = vmatprep.subr.mxu0 0.0
      %4558 = vmatpush1.msra.mxu0 0.0
      %4559 = vmatprep.subr.mxu0 0.0
      %4560 = vmatpush1.msra.mxu0 0.0
      %4561 = vmatprep.subr.mxu0 0.0
      %4562 = vmatpush1.msra.mxu0 0.0
      %4563 = vmatprep.subr.mxu0 0.0
      %4564 = vmatpush1.msra.mxu0 0.0
      %4565 = vmatprep.subr.mxu0 0.0
      %4566 = vmatpush1.msra.mxu0 0.0
      %4567 = vmatprep.subr.mxu0 0.0
      %4568 = vmatpush1.msra.mxu0 0.0
      %4569 = vmatprep.subr.mxu0 0.0
      %4570 = vmatpush1.msra.mxu0 0.0
      %4571 = vmatprep.subr.mxu0 0.0
      %4572 = vmatpush1.msra.mxu0 0.0
      %4573 = vmatprep.subr.mxu0 0.0
      %4574 = vmatpush1.msra.mxu0 0.0
      %4575 = vmatprep.subr.mxu0 0.0
      %4576 = vmatpush1.msra.mxu0 0.0
      %4577 = vmatprep.subr.mxu0 0.0
      %4578 = vmatpush1.msra.mxu0 0.0
      %4579 = vmatprep.subr.mxu0 0.0
      %4580 = vmatpush1.msra.mxu0 0.0
      %4581 = vmatprep.subr.mxu0 0.0
      %4582 = vmatpush1.msra.mxu0 0.0
      %4583 = vmatprep.mubr.f32.mxu0 0.0
      %4584 = vmatmul.mubr.f32.gmra.mrb[0].mxu0 %v4511
      %v4585 = vpop.f32.mrb[0].mxu0
      %v4586 = vadd.f32 0.0, %v4585
      %v4587 = vpop.f32.mrb[0].mxu0
      %v4588 = vadd.f32 0.0, %v4587
      %4589 = vmatprep.mubr.f32.mxu0 0.0
      %4590 = vmatmul.mubr.f32.gmra.mrb[0].mxu0 %v4513
      %v4591 = vpop.f32.mrb[0].mxu0
      %v4592 = vadd.f32 0.0, %v4591
      %v4593 = vpop.f32.mrb[0].mxu0
      %v4594 = vadd.f32 0.0, %v4593
      %4595 = vmatprep.mubr.f32.mxu0 0.0
      %4596 = vmatmul.mubr.f32.gmra.mrb[0].mxu0 %v4515
      %v4597 = vpop.f32.mrb[0].mxu0
      %v4598 = vadd.f32 0.0, %v4597
      %v4599 = vpop.f32.mrb[0].mxu0
      %v4600 = vadd.f32 0.0, %v4599
      %4601 = vmatprep.mubr.f32.mxu0 0.0
      %4602 = vmatmul.mubr.f32.gmra.mrb[0].mxu0 %v4517
      %v4603 = vpop.f32.mrb[0].mxu0
      %v4604 = vadd.f32 0.0, %v4603
      %v4605 = vpop.f32.mrb[0].mxu0
      %v4606 = vadd.f32 0.0, %v4605
      %4607 = vdwg.mxu0
      %v4608 = vrot.slane %v495, 4
      %v4609 = vrot.slane %v496, 4
      %v4610 = vsel %vm3983, %v4608, %v4609
      %v4611 = vrot.slane %v497, 4
      %v4612 = vsel %vm3983, %v4609, %v4611
      %v4613 = vrot.slane %v498, 4
      %v4614 = vsel %vm3983, %v4611, %v4613
      %v4615 = vsel %vm532, %v4610, 0
      %v4617 = vsel %vm532, %v4612, 0
      %v4619 = vsel %vm532, %v4614, 0
      %v4621 = vsel %vm532, %v4613, 0
      %4623 = vmatprep.subr.mxu0 %v3976
      %4624 = vmatpush1.msra.mxu0 %v3975
      %4625 = vmatprep.subr.mxu0 %v3978
      %4626 = vmatpush1.msra.mxu0 %v3977
      %4627 = vmatprep.subr.mxu0 %v3980
      %4628 = vmatpush1.msra.mxu0 %v3979
      %4629 = vmatprep.subr.mxu0 %v3982
      %4630 = vmatpush1.msra.mxu0 %v3981
      %4631 = vmatprep.subr.mxu0 0.0
      %4632 = vmatpush1.msra.mxu0 0.0
      %4633 = vmatprep.subr.mxu0 0.0
      %4634 = vmatpush1.msra.mxu0 0.0
      %4635 = vmatprep.subr.mxu0 0.0
      %4636 = vmatpush1.msra.mxu0 0.0
      %4637 = vmatprep.subr.mxu0 0.0
      %4638 = vmatpush1.msra.mxu0 0.0
      %4639 = vmatprep.subr.mxu0 0.0
      %4640 = vmatpush1.msra.mxu0 0.0
      %4641 = vmatprep.subr.mxu0 0.0
      %4642 = vmatpush1.msra.mxu0 0.0
      %4643 = vmatprep.subr.mxu0 0.0
      %4644 = vmatpush1.msra.mxu0 0.0
      %4645 = vmatprep.subr.mxu0 0.0
      %4646 = vmatpush1.msra.mxu0 0.0
      %4647 = vmatprep.subr.mxu0 0.0
      %4648 = vmatpush1.msra.mxu0 0.0
      %4649 = vmatprep.subr.mxu0 0.0
      %4650 = vmatpush1.msra.mxu0 0.0
      %4651 = vmatprep.subr.mxu0 0.0
      %4652 = vmatpush1.msra.mxu0 0.0
      %4653 = vmatprep.subr.mxu0 0.0
      %4654 = vmatpush1.msra.mxu0 0.0
      %4655 = vmatprep.subr.mxu0 0.0
      %4656 = vmatpush1.msra.mxu0 0.0
      %4657 = vmatprep.subr.mxu0 0.0
      %4658 = vmatpush1.msra.mxu0 0.0
      %4659 = vmatprep.subr.mxu0 0.0
      %4660 = vmatpush1.msra.mxu0 0.0
      %4661 = vmatprep.subr.mxu0 0.0
      %4662 = vmatpush1.msra.mxu0 0.0
      %4663 = vmatprep.subr.mxu0 0.0
      %4664 = vmatpush1.msra.mxu0 0.0
      %4665 = vmatprep.subr.mxu0 0.0
      %4666 = vmatpush1.msra.mxu0 0.0
      %4667 = vmatprep.subr.mxu0 0.0
      %4668 = vmatpush1.msra.mxu0 0.0
      %4669 = vmatprep.subr.mxu0 0.0
      %4670 = vmatpush1.msra.mxu0 0.0
      %4671 = vmatprep.subr.mxu0 0.0
      %4672 = vmatpush1.msra.mxu0 0.0
      %4673 = vmatprep.subr.mxu0 0.0
      %4674 = vmatpush1.msra.mxu0 0.0
      %4675 = vmatprep.subr.mxu0 0.0
      %4676 = vmatpush1.msra.mxu0 0.0
      %4677 = vmatprep.subr.mxu0 0.0
      %4678 = vmatpush1.msra.mxu0 0.0
      %4679 = vmatprep.subr.mxu0 0.0
      %4680 = vmatpush1.msra.mxu0 0.0
      %4681 = vmatprep.subr.mxu0 0.0
      %4682 = vmatpush1.msra.mxu0 0.0
      %4683 = vmatprep.subr.mxu0 0.0
      %4684 = vmatpush1.msra.mxu0 0.0
      %4685 = vmatprep.subr.mxu0 0.0
      %4686 = vmatpush1.msra.mxu0 0.0
      %4687 = vmatprep.mubr.f32.mxu0 0.0
      %4688 = vmatmul.mubr.f32.gmra.mrb[0].mxu0 %v4615
      %v4689 = vpop.f32.mrb[0].mxu0
      %v4690 = vadd.f32 0.0, %v4689
      %v4691 = vpop.f32.mrb[0].mxu0
      %v4692 = vadd.f32 0.0, %v4691
      %4693 = vmatprep.mubr.f32.mxu0 0.0
      %4694 = vmatmul.mubr.f32.gmra.mrb[0].mxu0 %v4617
      %v4695 = vpop.f32.mrb[0].mxu0
      %v4696 = vadd.f32 0.0, %v4695
      %v4697 = vpop.f32.mrb[0].mxu0
      %v4698 = vadd.f32 0.0, %v4697
      %4699 = vmatprep.mubr.f32.mxu0 0.0
      %4700 = vmatmul.mubr.f32.gmra.mrb[0].mxu0 %v4619
      %v4701 = vpop.f32.mrb[0].mxu0
      %v4702 = vadd.f32 0.0, %v4701
      %v4703 = vpop.f32.mrb[0].mxu0
      %v4704 = vadd.f32 0.0, %v4703
      %4705 = vmatprep.mubr.f32.mxu0 0.0
      %4706 = vmatmul.mubr.f32.gmra.mrb[0].mxu0 %v4621
      %v4707 = vpop.f32.mrb[0].mxu0
      %v4708 = vadd.f32 0.0, %v4707
      %v4709 = vpop.f32.mrb[0].mxu0
      %v4710 = vadd.f32 0.0, %v4709
      %4711 = vdwg.mxu0
      %v4712 = vrot.slane %v499, 4
      %v4713 = vrot.slane %v500, 4
      %v4714 = vsel %vm3983, %v4712, %v4713
      %v4715 = vrot.slane %v501, 4
      %v4716 = vsel %vm3983, %v4713, %v4715
      %v4717 = vrot.slane %v502, 4
      %v4718 = vsel %vm3983, %v4715, %v4717
      %v4719 = vsel %vm532, %v4714, 0
      %v4721 = vsel %vm532, %v4716, 0
      %v4723 = vsel %vm532, %v4718, 0
      %v4725 = vsel %vm532, %v4717, 0
      %4727 = vmatprep.subr.mxu0 %v3976
      %4728 = vmatpush1.msra.mxu0 %v3975
      %4729 = vmatprep.subr.mxu0 %v3978
      %4730 = vmatpush1.msra.mxu0 %v3977
      %4731 = vmatprep.subr.mxu0 %v3980
      %4732 = vmatpush1.msra.mxu0 %v3979
      %4733 = vmatprep.subr.mxu0 %v3982
      %4734 = vmatpush1.msra.mxu0 %v3981
      %4735 = vmatprep.subr.mxu0 0.0
      %4736 = vmatpush1.msra.mxu0 0.0
      %4737 = vmatprep.subr.mxu0 0.0
      %4738 = vmatpush1.msra.mxu0 0.0
      %4739 = vmatprep.subr.mxu0 0.0
      %4740 = vmatpush1.msra.mxu0 0.0
      %4741 = vmatprep.subr.mxu0 0.0
      %4742 = vmatpush1.msra.mxu0 0.0
      %4743 = vmatprep.subr.mxu0 0.0
      %4744 = vmatpush1.msra.mxu0 0.0
      %4745 = vmatprep.subr.mxu0 0.0
      %4746 = vmatpush1.msra.mxu0 0.0
      %4747 = vmatprep.subr.mxu0 0.0
      %4748 = vmatpush1.msra.mxu0 0.0
      %4749 = vmatprep.subr.mxu0 0.0
      %4750 = vmatpush1.msra.mxu0 0.0
      %4751 = vmatprep.subr.mxu0 0.0
      %4752 = vmatpush1.msra.mxu0 0.0
      %4753 = vmatprep.subr.mxu0 0.0
      %4754 = vmatpush1.msra.mxu0 0.0
      %4755 = vmatprep.subr.mxu0 0.0
      %4756 = vmatpush1.msra.mxu0 0.0
      %4757 = vmatprep.subr.mxu0 0.0
      %4758 = vmatpush1.msra.mxu0 0.0
      %4759 = vmatprep.subr.mxu0 0.0
      %4760 = vmatpush1.msra.mxu0 0.0
      %4761 = vmatprep.subr.mxu0 0.0
      %4762 = vmatpush1.msra.mxu0 0.0
      %4763 = vmatprep.subr.mxu0 0.0
      %4764 = vmatpush1.msra.mxu0 0.0
      %4765 = vmatprep.subr.mxu0 0.0
      %4766 = vmatpush1.msra.mxu0 0.0
      %4767 = vmatprep.subr.mxu0 0.0
      %4768 = vmatpush1.msra.mxu0 0.0
      %4769 = vmatprep.subr.mxu0 0.0
      %4770 = vmatpush1.msra.mxu0 0.0
      %4771 = vmatprep.subr.mxu0 0.0
      %4772 = vmatpush1.msra.mxu0 0.0
      %4773 = vmatprep.subr.mxu0 0.0
      %4774 = vmatpush1.msra.mxu0 0.0
      %4775 = vmatprep.subr.mxu0 0.0
      %4776 = vmatpush1.msra.mxu0 0.0
      %4777 = vmatprep.subr.mxu0 0.0
      %4778 = vmatpush1.msra.mxu0 0.0
      %4779 = vmatprep.subr.mxu0 0.0
      %4780 = vmatpush1.msra.mxu0 0.0
      %4781 = vmatprep.subr.mxu0 0.0
      %4782 = vmatpush1.msra.mxu0 0.0
      %4783 = vmatprep.subr.mxu0 0.0
      %4784 = vmatpush1.msra.mxu0 0.0
      %4785 = vmatprep.subr.mxu0 0.0
      %4786 = vmatpush1.msra.mxu0 0.0
      %4787 = vmatprep.subr.mxu0 0.0
      %4788 = vmatpush1.msra.mxu0 0.0
      %4789 = vmatprep.subr.mxu0 0.0
      %4790 = vmatpush1.msra.mxu0 0.0
      %4791 = vmatprep.mubr.f32.mxu0 0.0
      %4792 = vmatmul.mubr.f32.gmra.mrb[0].mxu0 %v4719
      %v4793 = vpop.f32.mrb[0].mxu0
      %v4794 = vadd.f32 0.0, %v4793
      %v4795 = vpop.f32.mrb[0].mxu0
      %v4796 = vadd.f32 0.0, %v4795
      %4797 = vmatprep.mubr.f32.mxu0 0.0
      %4798 = vmatmul.mubr.f32.gmra.mrb[0].mxu0 %v4721
      %v4799 = vpop.f32.mrb[0].mxu0
      %v4800 = vadd.f32 0.0, %v4799
      %v4801 = vpop.f32.mrb[0].mxu0
      %v4802 = vadd.f32 0.0, %v4801
      %4803 = vmatprep.mubr.f32.mxu0 0.0
      %4804 = vmatmul.mubr.f32.gmra.mrb[0].mxu0 %v4723
      %v4805 = vpop.f32.mrb[0].mxu0
      %v4806 = vadd.f32 0.0, %v4805
      %v4807 = vpop.f32.mrb[0].mxu0
      %v4808 = vadd.f32 0.0, %v4807
      %4809 = vmatprep.mubr.f32.mxu0 0.0
      %4810 = vmatmul.mubr.f32.gmra.mrb[0].mxu0 %v4725
      %v4811 = vpop.f32.mrb[0].mxu0
      %v4812 = vadd.f32 0.0, %v4811
      %v4813 = vpop.f32.mrb[0].mxu0
      %v4814 = vadd.f32 0.0, %v4813
      %4815 = vdwg.mxu0
      %v4816 = vadd.f32 %v3910, %v4066
      %v4817 = vadd.f32 %v3911, %v4068
      %v4818 = vadd.f32 %v3912, %v4072
      %v4819 = vadd.f32 %v3913, %v4074
      %v4820 = vadd.f32 %v3914, %v4078
      %v4821 = vadd.f32 %v3915, %v4080
      %v4822 = vadd.f32 %v3916, %v4084
      %v4823 = vadd.f32 %v3917, %v4086
      %v4824 = vadd.f32 %v3918, %v4170
      %v4825 = vadd.f32 %v3919, %v4172
      %v4826 = vadd.f32 %v3920, %v4176
      %v4827 = vadd.f32 %v3921, %v4178
      %v4828 = vadd.f32 %v3922, %v4182
      %v4829 = vadd.f32 %v3923, %v4184
      %v4830 = vadd.f32 %v3924, %v4188
      %v4831 = vadd.f32 %v3925, %v4190
      %v4832 = vadd.f32 %v3926, %v4274
      %v4833 = vadd.f32 %v3927, %v4276
      %v4834 = vadd.f32 %v3928, %v4280
      %v4835 = vadd.f32 %v3929, %v4282
      %v4836 = vadd.f32 %v3930, %v4286
      %v4837 = vadd.f32 %v3931, %v4288
      %v4838 = vadd.f32 %v3932, %v4292
      %v4839 = vadd.f32 %v3933, %v4294
      %v4840 = vadd.f32 %v3934, %v4378
      %v4841 = vadd.f32 %v3935, %v4380
      %v4842 = vadd.f32 %v3936, %v4384
      %v4843 = vadd.f32 %v3937, %v4386
      %v4844 = vadd.f32 %v3938, %v4390
      %v4845 = vadd.f32 %v3939, %v4392
      %v4846 = vadd.f32 %v3940, %v4396
      %v4847 = vadd.f32 %v3941, %v4398
      %v4848 = vadd.f32 %v3942, %v4482
      %v4849 = vadd.f32 %v3943, %v4484
      %v4850 = vadd.f32 %v3944, %v4488
      %v4851 = vadd.f32 %v3945, %v4490
      %v4852 = vadd.f32 %v3946, %v4494
      %v4853 = vadd.f32 %v3947, %v4496
      %v4854 = vadd.f32 %v3948, %v4500
      %v4855 = vadd.f32 %v3949, %v4502
      %v4856 = vadd.f32 %v3950, %v4586
      %v4857 = vadd.f32 %v3951, %v4588
      %v4858 = vadd.f32 %v3952, %v4592
      %v4859 = vadd.f32 %v3953, %v4594
      %v4860 = vadd.f32 %v3954, %v4598
      %v4861 = vadd.f32 %v3955, %v4600
      %v4862 = vadd.f32 %v3956, %v4604
      %v4863 = vadd.f32 %v3957, %v4606
      %v4864 = vadd.f32 %v3958, %v4690
      %v4865 = vadd.f32 %v3959, %v4692
      %v4866 = vadd.f32 %v3960, %v4696
      %v4867 = vadd.f32 %v3961, %v4698
      %v4868 = vadd.f32 %v3962, %v4702
      %v4869 = vadd.f32 %v3963, %v4704
      %v4870 = vadd.f32 %v3964, %v4708
      %v4871 = vadd.f32 %v3965, %v4710
      %v4872 = vadd.f32 %v3966, %v4794
      %v4873 = vadd.f32 %v3967, %v4796
      %v4874 = vadd.f32 %v3968, %v4800
      %v4875 = vadd.f32 %v3969, %v4802
      %v4876 = vadd.f32 %v3970, %v4806
      %v4877 = vadd.f32 %v3971, %v4808
      %v4878 = vadd.f32 %v3972, %v4812
      %v4879 = vadd.f32 %v3973, %v4814
      %v4880 = vld [vmem:[%s2] sm:$0x3]
      %v4882 = vlaneseq
      %v4883 = vshrl.u32 %v4882, 7
      %v4884 = vsub.s32 0, %v4883
      %v4885 = vrot.slane %v4880, %v4884
      %v4886 = vlaneseq
      %v4887 = vshrl.u32 %v4886, 7
      %v4888 = vsub.s32 1, %v4887
      %v4889 = vrot.slane %v4880, %v4888
      %v4892 = vadd.f32 %v4816, %v4885
      %v4893 = vadd.f32 %v4817, %v4889
      %v4894 = vadd.f32 %v4818, %v4885
      %v4895 = vadd.f32 %v4819, %v4889
      %v4896 = vadd.f32 %v4820, %v4885
      %v4897 = vadd.f32 %v4821, %v4889
      %v4898 = vadd.f32 %v4822, %v4885
      %v4899 = vadd.f32 %v4823, %v4889
      %v4900 = vadd.f32 %v4824, %v4885
      %v4901 = vadd.f32 %v4825, %v4889
      %v4902 = vadd.f32 %v4826, %v4885
      %v4903 = vadd.f32 %v4827, %v4889
      %v4904 = vadd.f32 %v4828, %v4885
      %v4905 = vadd.f32 %v4829, %v4889
      %v4906 = vadd.f32 %v4830, %v4885
      %v4907 = vadd.f32 %v4831, %v4889
      %v4908 = vadd.f32 %v4832, %v4885
      %v4909 = vadd.f32 %v4833, %v4889
      %v4910 = vadd.f32 %v4834, %v4885
      %v4911 = vadd.f32 %v4835, %v4889
      %v4912 = vadd.f32 %v4836, %v4885
      %v4913 = vadd.f32 %v4837, %v4889
      %v4914 = vadd.f32 %v4838, %v4885
      %v4915 = vadd.f32 %v4839, %v4889
      %v4916 = vadd.f32 %v4840, %v4885
      %v4917 = vadd.f32 %v4841, %v4889
      %v4918 = vadd.f32 %v4842, %v4885
      %v4919 = vadd.f32 %v4843, %v4889
      %v4920 = vadd.f32 %v4844, %v4885
      %v4921 = vadd.f32 %v4845, %v4889
      %v4922 = vadd.f32 %v4846, %v4885
      %v4923 = vadd.f32 %v4847, %v4889
      %v4924 = vadd.f32 %v4848, %v4885
      %v4925 = vadd.f32 %v4849, %v4889
      %v4926 = vadd.f32 %v4850, %v4885
      %v4927 = vadd.f32 %v4851, %v4889
      %v4928 = vadd.f32 %v4852, %v4885
      %v4929 = vadd.f32 %v4853, %v4889
      %v4930 = vadd.f32 %v4854, %v4885
      %v4931 = vadd.f32 %v4855, %v4889
      %v4932 = vadd.f32 %v4856, %v4885
      %v4933 = vadd.f32 %v4857, %v4889
      %v4934 = vadd.f32 %v4858, %v4885
      %v4935 = vadd.f32 %v4859, %v4889
      %v4936 = vadd.f32 %v4860, %v4885
      %v4937 = vadd.f32 %v4861, %v4889
      %v4938 = vadd.f32 %v4862, %v4885
      %v4939 = vadd.f32 %v4863, %v4889
      %v4940 = vadd.f32 %v4864, %v4885
      %v4941 = vadd.f32 %v4865, %v4889
      %v4942 = vadd.f32 %v4866, %v4885
      %v4943 = vadd.f32 %v4867, %v4889
      %v4944 = vadd.f32 %v4868, %v4885
      %v4945 = vadd.f32 %v4869, %v4889
      %v4946 = vadd.f32 %v4870, %v4885
      %v4947 = vadd.f32 %v4871, %v4889
      %v4948 = vadd.f32 %v4872, %v4885
      %v4949 = vadd.f32 %v4873, %v4889
      %v4950 = vadd.f32 %v4874, %v4885
      %v4951 = vadd.f32 %v4875, %v4889
      %v4952 = vadd.f32 %v4876, %v4885
      %v4953 = vadd.f32 %v4877, %v4889
      %v4954 = vadd.f32 %v4878, %v4885
      %v4955 = vadd.f32 %v4879, %v4889
      %v4956 = vmax.f32 %v4892, 0.0
      %v4957 = vmax.f32 %v4893, 0.0
      %v4958 = vmax.f32 %v4894, 0.0
      %v4959 = vmax.f32 %v4895, 0.0
      %v4960 = vmax.f32 %v4896, 0.0
      %v4961 = vmax.f32 %v4897, 0.0
      %v4962 = vmax.f32 %v4898, 0.0
      %v4963 = vmax.f32 %v4899, 0.0
      %v4964 = vmax.f32 %v4900, 0.0
      %v4965 = vmax.f32 %v4901, 0.0
      %v4966 = vmax.f32 %v4902, 0.0
      %v4967 = vmax.f32 %v4903, 0.0
      %v4968 = vmax.f32 %v4904, 0.0
      %v4969 = vmax.f32 %v4905, 0.0
      %v4970 = vmax.f32 %v4906, 0.0
      %v4971 = vmax.f32 %v4907, 0.0
      %v4972 = vmax.f32 %v4908, 0.0
      %v4973 = vmax.f32 %v4909, 0.0
      %v4974 = vmax.f32 %v4910, 0.0
      %v4975 = vmax.f32 %v4911, 0.0
      %v4976 = vmax.f32 %v4912, 0.0
      %v4977 = vmax.f32 %v4913, 0.0
      %v4978 = vmax.f32 %v4914, 0.0
      %v4979 = vmax.f32 %v4915, 0.0
      %v4980 = vmax.f32 %v4916, 0.0
      %v4981 = vmax.f32 %v4917, 0.0
      %v4982 = vmax.f32 %v4918, 0.0
      %v4983 = vmax.f32 %v4919, 0.0
      %v4984 = vmax.f32 %v4920, 0.0
      %v4985 = vmax.f32 %v4921, 0.0
      %v4986 = vmax.f32 %v4922, 0.0
      %v4987 = vmax.f32 %v4923, 0.0
      %v4988 = vmax.f32 %v4924, 0.0
      %v4989 = vmax.f32 %v4925, 0.0
      %v4990 = vmax.f32 %v4926, 0.0
      %v4991 = vmax.f32 %v4927, 0.0
      %v4992 = vmax.f32 %v4928, 0.0
      %v4993 = vmax.f32 %v4929, 0.0
      %v4994 = vmax.f32 %v4930, 0.0
      %v4995 = vmax.f32 %v4931, 0.0
      %v4996 = vmax.f32 %v4932, 0.0
      %v4997 = vmax.f32 %v4933, 0.0
      %v4998 = vmax.f32 %v4934, 0.0
      %v4999 = vmax.f32 %v4935, 0.0
      %v5000 = vmax.f32 %v4936, 0.0
      %v5001 = vmax.f32 %v4937, 0.0
      %v5002 = vmax.f32 %v4938, 0.0
      %v5003 = vmax.f32 %v4939, 0.0
      %v5004 = vmax.f32 %v4940, 0.0
      %v5005 = vmax.f32 %v4941, 0.0
      %v5006 = vmax.f32 %v4942, 0.0
      %v5007 = vmax.f32 %v4943, 0.0
      %v5008 = vmax.f32 %v4944, 0.0
      %v5009 = vmax.f32 %v4945, 0.0
      %v5010 = vmax.f32 %v4946, 0.0
      %v5011 = vmax.f32 %v4947, 0.0
      %v5012 = vmax.f32 %v4948, 0.0
      %v5013 = vmax.f32 %v4949, 0.0
      %v5014 = vmax.f32 %v4950, 0.0
      %v5015 = vmax.f32 %v4951, 0.0
      %v5016 = vmax.f32 %v4952, 0.0
      %v5017 = vmax.f32 %v4953, 0.0
      %v5018 = vmax.f32 %v4954, 0.0
      %v5019 = vmax.f32 %v4955, 0.0
      %5084 = vrot.lane.b32.xlu0 %v4956, 127
      %v5085 = vpop.permute.xlu0 %5084
      %5086 = vrot.lane.b32.xlu0 %v4957, 127
      %v5087 = vpop.permute.xlu0 %5086
      %5088 = vrot.lane.b32.xlu0 %v4958, 127
      %v5089 = vpop.permute.xlu0 %5088
      %5090 = vrot.lane.b32.xlu0 %v4959, 127
      %v5091 = vpop.permute.xlu0 %5090
      %5092 = vrot.lane.b32.xlu0 %v4960, 127
      %v5093 = vpop.permute.xlu0 %5092
      %5094 = vrot.lane.b32.xlu0 %v4961, 127
      %v5095 = vpop.permute.xlu0 %5094
      %5096 = vrot.lane.b32.xlu0 %v4962, 127
      %v5097 = vpop.permute.xlu0 %5096
      %5098 = vrot.lane.b32.xlu0 %v4963, 127
      %v5099 = vpop.permute.xlu0 %5098
      %5100 = vrot.lane.b32.xlu0 %v4964, 127
      %v5101 = vpop.permute.xlu0 %5100
      %5102 = vrot.lane.b32.xlu0 %v4965, 127
      %v5103 = vpop.permute.xlu0 %5102
      %5104 = vrot.lane.b32.xlu0 %v4966, 127
      %v5105 = vpop.permute.xlu0 %5104
      %5106 = vrot.lane.b32.xlu0 %v4967, 127
      %v5107 = vpop.permute.xlu0 %5106
      %5108 = vrot.lane.b32.xlu0 %v4968, 127
      %v5109 = vpop.permute.xlu0 %5108
      %5110 = vrot.lane.b32.xlu0 %v4969, 127
      %v5111 = vpop.permute.xlu0 %5110
      %5112 = vrot.lane.b32.xlu0 %v4970, 127
      %v5113 = vpop.permute.xlu0 %5112
      %5114 = vrot.lane.b32.xlu0 %v4971, 127
      %v5115 = vpop.permute.xlu0 %5114
      %5116 = vrot.lane.b32.xlu0 %v4972, 127
      %v5117 = vpop.permute.xlu0 %5116
      %5118 = vrot.lane.b32.xlu0 %v4973, 127
      %v5119 = vpop.permute.xlu0 %5118
      %5120 = vrot.lane.b32.xlu0 %v4974, 127
      %v5121 = vpop.permute.xlu0 %5120
      %5122 = vrot.lane.b32.xlu0 %v4975, 127
      %v5123 = vpop.permute.xlu0 %5122
      %5124 = vrot.lane.b32.xlu0 %v4976, 127
      %v5125 = vpop.permute.xlu0 %5124
      %5126 = vrot.lane.b32.xlu0 %v4977, 127
      %v5127 = vpop.permute.xlu0 %5126
      %5128 = vrot.lane.b32.xlu0 %v4978, 127
      %v5129 = vpop.permute.xlu0 %5128
      %5130 = vrot.lane.b32.xlu0 %v4979, 127
      %v5131 = vpop.permute.xlu0 %5130
      %5132 = vrot.lane.b32.xlu0 %v4980, 127
      %v5133 = vpop.permute.xlu0 %5132
      %5134 = vrot.lane.b32.xlu0 %v4981, 127
      %v5135 = vpop.permute.xlu0 %5134
      %5136 = vrot.lane.b32.xlu0 %v4982, 127
      %v5137 = vpop.permute.xlu0 %5136
      %5138 = vrot.lane.b32.xlu0 %v4983, 127
      %v5139 = vpop.permute.xlu0 %5138
      %5140 = vrot.lane.b32.xlu0 %v4984, 127
      %v5141 = vpop.permute.xlu0 %5140
      %5142 = vrot.lane.b32.xlu0 %v4985, 127
      %v5143 = vpop.permute.xlu0 %5142
      %5144 = vrot.lane.b32.xlu0 %v4986, 127
      %v5145 = vpop.permute.xlu0 %5144
      %5146 = vrot.lane.b32.xlu0 %v4987, 127
      %v5147 = vpop.permute.xlu0 %5146
      %5148 = vrot.lane.b32.xlu0 %v4988, 127
      %v5149 = vpop.permute.xlu0 %5148
      %5150 = vrot.lane.b32.xlu0 %v4989, 127
      %v5151 = vpop.permute.xlu0 %5150
      %5152 = vrot.lane.b32.xlu0 %v4990, 127
      %v5153 = vpop.permute.xlu0 %5152
      %5154 = vrot.lane.b32.xlu0 %v4991, 127
      %v5155 = vpop.permute.xlu0 %5154
      %5156 = vrot.lane.b32.xlu0 %v4992, 127
      %v5157 = vpop.permute.xlu0 %5156
      %5158 = vrot.lane.b32.xlu0 %v4993, 127
      %v5159 = vpop.permute.xlu0 %5158
      %5160 = vrot.lane.b32.xlu0 %v4994, 127
      %v5161 = vpop.permute.xlu0 %5160
      %5162 = vrot.lane.b32.xlu0 %v4995, 127
      %v5163 = vpop.permute.xlu0 %5162
      %5164 = vrot.lane.b32.xlu0 %v4996, 127
      %v5165 = vpop.permute.xlu0 %5164
      %5166 = vrot.lane.b32.xlu0 %v4997, 127
      %v5167 = vpop.permute.xlu0 %5166
      %5168 = vrot.lane.b32.xlu0 %v4998, 127
      %v5169 = vpop.permute.xlu0 %5168
      %5170 = vrot.lane.b32.xlu0 %v4999, 127
      %v5171 = vpop.permute.xlu0 %5170
      %5172 = vrot.lane.b32.xlu0 %v5000, 127
      %v5173 = vpop.permute.xlu0 %5172
      %5174 = vrot.lane.b32.xlu0 %v5001, 127
      %v5175 = vpop.permute.xlu0 %5174
      %5176 = vrot.lane.b32.xlu0 %v5002, 127
      %v5177 = vpop.permute.xlu0 %5176
      %5178 = vrot.lane.b32.xlu0 %v5003, 127
      %v5179 = vpop.permute.xlu0 %5178
      %5180 = vrot.lane.b32.xlu0 %v5004, 127
      %v5181 = vpop.permute.xlu0 %5180
      %5182 = vrot.lane.b32.xlu0 %v5005, 127
      %v5183 = vpop.permute.xlu0 %5182
      %5184 = vrot.lane.b32.xlu0 %v5006, 127
      %v5185 = vpop.permute.xlu0 %5184
      %5186 = vrot.lane.b32.xlu0 %v5007, 127
      %v5187 = vpop.permute.xlu0 %5186
      %5188 = vrot.lane.b32.xlu0 %v5008, 127
      %v5189 = vpop.permute.xlu0 %5188
      %5190 = vrot.lane.b32.xlu0 %v5009, 127
      %v5191 = vpop.permute.xlu0 %5190
      %5192 = vrot.lane.b32.xlu0 %v5010, 127
      %v5193 = vpop.permute.xlu0 %5192
      %5194 = vrot.lane.b32.xlu0 %v5011, 127
      %v5195 = vpop.permute.xlu0 %5194
      %5196 = vrot.lane.b32.xlu0 %v5012, 127
      %v5197 = vpop.permute.xlu0 %5196
      %5198 = vrot.lane.b32.xlu0 %v5013, 127
      %v5199 = vpop.permute.xlu0 %5198
      %5200 = vrot.lane.b32.xlu0 %v5014, 127
      %v5201 = vpop.permute.xlu0 %5200
      %5202 = vrot.lane.b32.xlu0 %v5015, 127
      %v5203 = vpop.permute.xlu0 %5202
      %5204 = vrot.lane.b32.xlu0 %v5016, 127
      %v5205 = vpop.permute.xlu0 %5204
      %5206 = vrot.lane.b32.xlu0 %v5017, 127
      %v5207 = vpop.permute.xlu0 %5206
      %5208 = vrot.lane.b32.xlu0 %v5018, 127
      %v5209 = vpop.permute.xlu0 %5208
      %5210 = vrot.lane.b32.xlu0 %v5019, 127
      %v5211 = vpop.permute.xlu0 %5210
      %vm5212 = vcmask 1039360
      %v5213 = vsel %vm5212, %v5085, %v5087
      %v5214 = vsel %vm5212, %v5089, %v5091
      %v5215 = vsel %vm5212, %v5093, %v5095
      %v5216 = vsel %vm5212, %v5097, %v5099
      %v5217 = vsel %vm5212, %v5101, %v5103
      %v5218 = vsel %vm5212, %v5105, %v5107
      %v5219 = vsel %vm5212, %v5109, %v5111
      %v5220 = vsel %vm5212, %v5113, %v5115
      %v5221 = vsel %vm5212, %v5117, %v5119
      %v5222 = vsel %vm5212, %v5121, %v5123
      %v5223 = vsel %vm5212, %v5125, %v5127
      %v5224 = vsel %vm5212, %v5129, %v5131
      %v5225 = vsel %vm5212, %v5133, %v5135
      %v5226 = vsel %vm5212, %v5137, %v5139
      %v5227 = vsel %vm5212, %v5141, %v5143
      %v5228 = vsel %vm5212, %v5145, %v5147
      %v5229 = vsel %vm5212, %v5149, %v5151
      %v5230 = vsel %vm5212, %v5153, %v5155
      %v5231 = vsel %vm5212, %v5157, %v5159
      %v5232 = vsel %vm5212, %v5161, %v5163
      %v5233 = vsel %vm5212, %v5165, %v5167
      %v5234 = vsel %vm5212, %v5169, %v5171
      %v5235 = vsel %vm5212, %v5173, %v5175
      %v5236 = vsel %vm5212, %v5177, %v5179
      %v5237 = vsel %vm5212, %v5181, %v5183
      %v5238 = vsel %vm5212, %v5185, %v5187
      %v5239 = vsel %vm5212, %v5189, %v5191
      %v5240 = vsel %vm5212, %v5193, %v5195
      %v5241 = vsel %vm5212, %v5197, %v5199
      %v5242 = vsel %vm5212, %v5201, %v5203
      %v5243 = vsel %vm5212, %v5205, %v5207
      %v5244 = vsel %vm5212, %v5209, %v5211
      %v5309 = vmax.f32 %v4956, %v5213
      %v5310 = vmax.f32 %v4957, %v5087
      %v5311 = vmax.f32 %v4958, %v5214
      %v5312 = vmax.f32 %v4959, %v5091
      %v5313 = vmax.f32 %v4960, %v5215
      %v5314 = vmax.f32 %v4961, %v5095
      %v5315 = vmax.f32 %v4962, %v5216
      %v5316 = vmax.f32 %v4963, %v5099
      %v5317 = vmax.f32 %v4964, %v5217
      %v5318 = vmax.f32 %v4965, %v5103
      %v5319 = vmax.f32 %v4966, %v5218
      %v5320 = vmax.f32 %v4967, %v5107
      %v5321 = vmax.f32 %v4968, %v5219
      %v5322 = vmax.f32 %v4969, %v5111
      %v5323 = vmax.f32 %v4970, %v5220
      %v5324 = vmax.f32 %v4971, %v5115
      %v5325 = vmax.f32 %v4972, %v5221
      %v5326 = vmax.f32 %v4973, %v5119
      %v5327 = vmax.f32 %v4974, %v5222
      %v5328 = vmax.f32 %v4975, %v5123
      %v5329 = vmax.f32 %v4976, %v5223
      %v5330 = vmax.f32 %v4977, %v5127
      %v5331 = vmax.f32 %v4978, %v5224
      %v5332 = vmax.f32 %v4979, %v5131
      %v5333 = vmax.f32 %v4980, %v5225
      %v5334 = vmax.f32 %v4981, %v5135
      %v5335 = vmax.f32 %v4982, %v5226
      %v5336 = vmax.f32 %v4983, %v5139
      %v5337 = vmax.f32 %v4984, %v5227
      %v5338 = vmax.f32 %v4985, %v5143
      %v5339 = vmax.f32 %v4986, %v5228
      %v5340 = vmax.f32 %v4987, %v5147
      %v5341 = vmax.f32 %v4988, %v5229
      %v5342 = vmax.f32 %v4989, %v5151
      %v5343 = vmax.f32 %v4990, %v5230
      %v5344 = vmax.f32 %v4991, %v5155
      %v5345 = vmax.f32 %v4992, %v5231
      %v5346 = vmax.f32 %v4993, %v5159
      %v5347 = vmax.f32 %v4994, %v5232
      %v5348 = vmax.f32 %v4995, %v5163
      %v5349 = vmax.f32 %v4996, %v5233
      %v5350 = vmax.f32 %v4997, %v5167
      %v5351 = vmax.f32 %v4998, %v5234
      %v5352 = vmax.f32 %v4999, %v5171
      %v5353 = vmax.f32 %v5000, %v5235
      %v5354 = vmax.f32 %v5001, %v5175
      %v5355 = vmax.f32 %v5002, %v5236
      %v5356 = vmax.f32 %v5003, %v5179
      %v5357 = vmax.f32 %v5004, %v5237
      %v5358 = vmax.f32 %v5005, %v5183
      %v5359 = vmax.f32 %v5006, %v5238
      %v5360 = vmax.f32 %v5007, %v5187
      %v5361 = vmax.f32 %v5008, %v5239
      %v5362 = vmax.f32 %v5009, %v5191
      %v5363 = vmax.f32 %v5010, %v5240
      %v5364 = vmax.f32 %v5011, %v5195
      %v5365 = vmax.f32 %v5012, %v5241
      %v5366 = vmax.f32 %v5013, %v5199
      %v5367 = vmax.f32 %v5014, %v5242
      %v5368 = vmax.f32 %v5015, %v5203
      %v5369 = vmax.f32 %v5016, %v5243
      %v5370 = vmax.f32 %v5017, %v5207
      %v5371 = vmax.f32 %v5018, %v5244
      %v5372 = vmax.f32 %v5019, %v5211
      %v5373 = vld [vmem:[%s3] sm:$0xff]
      %v5374 = vld [vmem:[%s3 + $0x8] sm:$0xff]
      %v5375 = vld [vmem:[%s3 + $0x10] sm:$0xff]
      %v5376 = vld [vmem:[%s3 + $0x18] sm:$0xff]
      %v5377 = vld [vmem:[%s3 + $0x20] sm:$0xff]
      %v5378 = vld [vmem:[%s3 + $0x28] sm:$0xff]
      %v5379 = vld [vmem:[%s3 + $0x30] sm:$0xff]
      %v5380 = vld [vmem:[%s3 + $0x38] sm:$0xff]
      %v5381 = vld [vmem:[%s3 + $0x40] sm:$0xff]
      %v5382 = vld [vmem:[%s3 + $0x48] sm:$0xff]
      %v5383 = vld [vmem:[%s3 + $0x50] sm:$0xff]
      %v5384 = vld [vmem:[%s3 + $0x58] sm:$0xff]
      %v5385 = vld [vmem:[%s3 + $0x60] sm:$0xff]
      %v5386 = vld [vmem:[%s3 + $0x68] sm:$0xff]
      %v5387 = vld [vmem:[%s3 + $0x70] sm:$0xff]
      %v5388 = vld [vmem:[%s3 + $0x78] sm:$0xff]
      %v5389 = vld [vmem:[%s3 + $0x80] sm:$0xff]
      %v5390 = vld [vmem:[%s3 + $0x88] sm:$0xff]
      %v5391 = vld [vmem:[%s3 + $0x90] sm:$0xff]
      %v5392 = vld [vmem:[%s3 + $0x98] sm:$0xff]
      %v5393 = vld [vmem:[%s3 + $0xa0] sm:$0x7f]
      %vm5394 = vcmask 318464
      %v5396 = vsel %vm5394, %v5310, 0
      %v5399 = vsel %vm5394, %v5312, 0
      %v5402 = vsel %vm5394, %v5314, 0
      %v5405 = vsel %vm5394, %v5316, 0
      %v5408 = vsel %vm524, %v5393, 0
      %5410 = vmatprep.subr.mxu0 0.0
      %5411 = vmatpush1.msra.mxu0 %v5373
      %5412 = vmatprep.subr.mxu0 0.0
      %5413 = vmatpush1.msra.mxu0 %v5374
      %5414 = vmatprep.subr.mxu0 0.0
      %5415 = vmatpush1.msra.mxu0 %v5375
      %5416 = vmatprep.subr.mxu0 0.0
      %5417 = vmatpush1.msra.mxu0 %v5376
      %5418 = vmatprep.subr.mxu0 0.0
      %5419 = vmatpush1.msra.mxu0 %v5377
      %5420 = vmatprep.subr.mxu0 0.0
      %5421 = vmatpush1.msra.mxu0 %v5378
      %5422 = vmatprep.subr.mxu0 0.0
      %5423 = vmatpush1.msra.mxu0 %v5379
      %5424 = vmatprep.subr.mxu0 0.0
      %5425 = vmatpush1.msra.mxu0 %v5380
      %5426 = vmatprep.subr.mxu0 0.0
      %5427 = vmatpush1.msra.mxu0 %v5381
      %5428 = vmatprep.subr.mxu0 0.0
      %5429 = vmatpush1.msra.mxu0 %v5382
      %5430 = vmatprep.subr.mxu0 0.0
      %5431 = vmatpush1.msra.mxu0 %v5383
      %5432 = vmatprep.subr.mxu0 0.0
      %5433 = vmatpush1.msra.mxu0 %v5384
      %5434 = vmatprep.subr.mxu0 0.0
      %5435 = vmatpush1.msra.mxu0 %v5385
      %5436 = vmatprep.subr.mxu0 0.0
      %5437 = vmatpush1.msra.mxu0 %v5386
      %5438 = vmatprep.subr.mxu0 0.0
      %5439 = vmatpush1.msra.mxu0 %v5387
      %5440 = vmatprep.subr.mxu0 0.0
      %5441 = vmatpush1.msra.mxu0 %v5388
      %5442 = vmatprep.subr.mxu0 0.0
      %5443 = vmatpush1.msra.mxu0 %v5389
      %5444 = vmatprep.subr.mxu0 0.0
      %5445 = vmatpush1.msra.mxu0 %v5390
      %5446 = vmatprep.subr.mxu0 0.0
      %5447 = vmatpush1.msra.mxu0 %v5391
      %5448 = vmatprep.subr.mxu0 0.0
      %5449 = vmatpush1.msra.mxu0 %v5392
      %5450 = vmatprep.subr.mxu0 0.0
      %5451 = vmatpush1.msra.mxu0 %v5408
      %5452 = vmatprep.subr.mxu0 0.0
      %5453 = vmatpush1.msra.mxu0 0.0
      %5454 = vmatprep.subr.mxu0 0.0
      %5455 = vmatpush1.msra.mxu0 0.0
      %5456 = vmatprep.subr.mxu0 0.0
      %5457 = vmatpush1.msra.mxu0 0.0
      %5458 = vmatprep.subr.mxu0 0.0
      %5459 = vmatpush1.msra.mxu0 0.0
      %5460 = vmatprep.subr.mxu0 0.0
      %5461 = vmatpush1.msra.mxu0 0.0
      %5462 = vmatprep.subr.mxu0 0.0
      %5463 = vmatpush1.msra.mxu0 0.0
      %5464 = vmatprep.subr.mxu0 0.0
      %5465 = vmatpush1.msra.mxu0 0.0
      %5466 = vmatprep.subr.mxu0 0.0
      %5467 = vmatpush1.msra.mxu0 0.0
      %5468 = vmatprep.subr.mxu0 0.0
      %5469 = vmatpush1.msra.mxu0 0.0
      %5470 = vmatprep.subr.mxu0 0.0
      %5471 = vmatpush1.msra.mxu0 0.0
      %5472 = vmatprep.subr.mxu0 0.0
      %5473 = vmatpush1.msra.mxu0 0.0
      %5474 = vmatprep.mubr.f32.mxu0 %v5396
      %5475 = vmatmul.mubr.f32.gmra.mrb[0].mxu0 %v5309
      %v5476 = vpop.f32.mrb[0].mxu0
      %v5477 = vadd.f32 0.0, %v5476
      %v5478 = vpop.f32.mrb[0].mxu0
      %5479 = vmatprep.mubr.f32.mxu0 %v5399
      %5480 = vmatmul.mubr.f32.gmra.mrb[0].mxu0 %v5311
      %v5481 = vpop.f32.mrb[0].mxu0
      %v5482 = vadd.f32 0.0, %v5481
      %v5483 = vpop.f32.mrb[0].mxu0
      %5484 = vmatprep.mubr.f32.mxu0 %v5402
      %5485 = vmatmul.mubr.f32.gmra.mrb[0].mxu0 %v5313
      %v5486 = vpop.f32.mrb[0].mxu0
      %v5487 = vadd.f32 0.0, %v5486
      %v5488 = vpop.f32.mrb[0].mxu0
      %5489 = vmatprep.mubr.f32.mxu0 %v5405
      %5490 = vmatmul.mubr.f32.gmra.mrb[0].mxu0 %v5315
      %v5491 = vpop.f32.mrb[0].mxu0
      %v5492 = vadd.f32 0.0, %v5491
      %v5493 = vpop.f32.mrb[0].mxu0
      %5494 = vdwg.mxu0
      %v5496 = vsel %vm5394, %v5318, 0
      %v5499 = vsel %vm5394, %v5320, 0
      %v5502 = vsel %vm5394, %v5322, 0
      %v5505 = vsel %vm5394, %v5324, 0
      %5507 = vmatprep.subr.mxu0 0.0
      %5508 = vmatpush1.msra.mxu0 %v5373
      %5509 = vmatprep.subr.mxu0 0.0
      %5510 = vmatpush1.msra.mxu0 %v5374
      %5511 = vmatprep.subr.mxu0 0.0
      %5512 = vmatpush1.msra.mxu0 %v5375
      %5513 = vmatprep.subr.mxu0 0.0
      %5514 = vmatpush1.msra.mxu0 %v5376
      %5515 = vmatprep.subr.mxu0 0.0
      %5516 = vmatpush1.msra.mxu0 %v5377
      %5517 = vmatprep.subr.mxu0 0.0
      %5518 = vmatpush1.msra.mxu0 %v5378
      %5519 = vmatprep.subr.mxu0 0.0
      %5520 = vmatpush1.msra.mxu0 %v5379
      %5521 = vmatprep.subr.mxu0 0.0
      %5522 = vmatpush1.msra.mxu0 %v5380
      %5523 = vmatprep.subr.mxu0 0.0
      %5524 = vmatpush1.msra.mxu0 %v5381
      %5525 = vmatprep.subr.mxu0 0.0
      %5526 = vmatpush1.msra.mxu0 %v5382
      %5527 = vmatprep.subr.mxu0 0.0
      %5528 = vmatpush1.msra.mxu0 %v5383
      %5529 = vmatprep.subr.mxu0 0.0
      %5530 = vmatpush1.msra.mxu0 %v5384
      %5531 = vmatprep.subr.mxu0 0.0
      %5532 = vmatpush1.msra.mxu0 %v5385
      %5533 = vmatprep.subr.mxu0 0.0
      %5534 = vmatpush1.msra.mxu0 %v5386
      %5535 = vmatprep.subr.mxu0 0.0
      %5536 = vmatpush1.msra.mxu0 %v5387
      %5537 = vmatprep.subr.mxu0 0.0
      %5538 = vmatpush1.msra.mxu0 %v5388
      %5539 = vmatprep.subr.mxu0 0.0
      %5540 = vmatpush1.msra.mxu0 %v5389
      %5541 = vmatprep.subr.mxu0 0.0
      %5542 = vmatpush1.msra.mxu0 %v5390
      %5543 = vmatprep.subr.mxu0 0.0
      %5544 = vmatpush1.msra.mxu0 %v5391
      %5545 = vmatprep.subr.mxu0 0.0
      %5546 = vmatpush1.msra.mxu0 %v5392
      %5547 = vmatprep.subr.mxu0 0.0
      %5548 = vmatpush1.msra.mxu0 %v5408
      %5549 = vmatprep.subr.mxu0 0.0
      %5550 = vmatpush1.msra.mxu0 0.0
      %5551 = vmatprep.subr.mxu0 0.0
      %5552 = vmatpush1.msra.mxu0 0.0
      %5553 = vmatprep.subr.mxu0 0.0
      %5554 = vmatpush1.msra.mxu0 0.0
      %5555 = vmatprep.subr.mxu0 0.0
      %5556 = vmatpush1.msra.mxu0 0.0
      %5557 = vmatprep.subr.mxu0 0.0
      %5558 = vmatpush1.msra.mxu0 0.0
      %5559 = vmatprep.subr.mxu0 0.0
      %5560 = vmatpush1.msra.mxu0 0.0
      %5561 = vmatprep.subr.mxu0 0.0
      %5562 = vmatpush1.msra.mxu0 0.0
      %5563 = vmatprep.subr.mxu0 0.0
      %5564 = vmatpush1.msra.mxu0 0.0
      %5565 = vmatprep.subr.mxu0 0.0
      %5566 = vmatpush1.msra.mxu0 0.0
      %5567 = vmatprep.subr.mxu0 0.0
      %5568 = vmatpush1.msra.mxu0 0.0
      %5569 = vmatprep.subr.mxu0 0.0
      %5570 = vmatpush1.msra.mxu0 0.0
      %5571 = vmatprep.mubr.f32.mxu0 %v5496
      %5572 = vmatmul.mubr.f32.gmra.mrb[0].mxu0 %v5317
      %v5573 = vpop.f32.mrb[0].mxu0
      %v5574 = vadd.f32 0.0, %v5573
      %v5575 = vpop.f32.mrb[0].mxu0
      %5576 = vmatprep.mubr.f32.mxu0 %v5499
      %5577 = vmatmul.mubr.f32.gmra.mrb[0].mxu0 %v5319
      %v5578 = vpop.f32.mrb[0].mxu0
      %v5579 = vadd.f32 0.0, %v5578
      %v5580 = vpop.f32.mrb[0].mxu0
      %5581 = vmatprep.mubr.f32.mxu0 %v5502
      %5582 = vmatmul.mubr.f32.gmra.mrb[0].mxu0 %v5321
      %v5583 = vpop.f32.mrb[0].mxu0
      %v5584 = vadd.f32 0.0, %v5583
      %v5585 = vpop.f32.mrb[0].mxu0
      %5586 = vmatprep.mubr.f32.mxu0 %v5505
      %5587 = vmatmul.mubr.f32.gmra.mrb[0].mxu0 %v5323
      %v5588 = vpop.f32.mrb[0].mxu0
      %v5589 = vadd.f32 0.0, %v5588
      %v5590 = vpop.f32.mrb[0].mxu0
      %5591 = vdwg.mxu0
      %v5593 = vsel %vm5394, %v5326, 0
      %v5596 = vsel %vm5394, %v5328, 0
      %v5599 = vsel %vm5394, %v5330, 0
      %v5602 = vsel %vm5394, %v5332, 0
      %5604 = vmatprep.subr.mxu0 0.0
      %5605 = vmatpush1.msra.mxu0 %v5373
      %5606 = vmatprep.subr.mxu0 0.0
      %5607 = vmatpush1.msra.mxu0 %v5374
      %5608 = vmatprep.subr.mxu0 0.0
      %5609 = vmatpush1.msra.mxu0 %v5375
      %5610 = vmatprep.subr.mxu0 0.0
      %5611 = vmatpush1.msra.mxu0 %v5376
      %5612 = vmatprep.subr.mxu0 0.0
      %5613 = vmatpush1.msra.mxu0 %v5377
      %5614 = vmatprep.subr.mxu0 0.0
      %5615 = vmatpush1.msra.mxu0 %v5378
      %5616 = vmatprep.subr.mxu0 0.0
      %5617 = vmatpush1.msra.mxu0 %v5379
      %5618 = vmatprep.subr.mxu0 0.0
      %5619 = vmatpush1.msra.mxu0 %v5380
      %5620 = vmatprep.subr.mxu0 0.0
      %5621 = vmatpush1.msra.mxu0 %v5381
      %5622 = vmatprep.subr.mxu0 0.0
      %5623 = vmatpush1.msra.mxu0 %v5382
      %5624 = vmatprep.subr.mxu0 0.0
      %5625 = vmatpush1.msra.mxu0 %v5383
      %5626 = vmatprep.subr.mxu0 0.0
      %5627 = vmatpush1.msra.mxu0 %v5384
      %5628 = vmatprep.subr.mxu0 0.0
      %5629 = vmatpush1.msra.mxu0 %v5385
      %5630 = vmatprep.subr.mxu0 0.0
      %5631 = vmatpush1.msra.mxu0 %v5386
      %5632 = vmatprep.subr.mxu0 0.0
      %5633 = vmatpush1.msra.mxu0 %v5387
      %5634 = vmatprep.subr.mxu0 0.0
      %5635 = vmatpush1.msra.mxu0 %v5388
      %5636 = vmatprep.subr.mxu0 0.0
      %5637 = vmatpush1.msra.mxu0 %v5389
      %5638 = vmatprep.subr.mxu0 0.0
      %5639 = vmatpush1.msra.mxu0 %v5390
      %5640 = vmatprep.subr.mxu0 0.0
      %5641 = vmatpush1.msra.mxu0 %v5391
      %5642 = vmatprep.subr.mxu0 0.0
      %5643 = vmatpush1.msra.mxu0 %v5392
      %5644 = vmatprep.subr.mxu0 0.0
      %5645 = vmatpush1.msra.mxu0 %v5408
      %5646 = vmatprep.subr.mxu0 0.0
      %5647 = vmatpush1.msra.mxu0 0.0
      %5648 = vmatprep.subr.mxu0 0.0
      %5649 = vmatpush1.msra.mxu0 0.0
      %5650 = vmatprep.subr.mxu0 0.0
      %5651 = vmatpush1.msra.mxu0 0.0
      %5652 = vmatprep.subr.mxu0 0.0
      %5653 = vmatpush1.msra.mxu0 0.0
      %5654 = vmatprep.subr.mxu0 0.0
      %5655 = vmatpush1.msra.mxu0 0.0
      %5656 = vmatprep.subr.mxu0 0.0
      %5657 = vmatpush1.msra.mxu0 0.0
      %5658 = vmatprep.subr.mxu0 0.0
      %5659 = vmatpush1.msra.mxu0 0.0
      %5660 = vmatprep.subr.mxu0 0.0
      %5661 = vmatpush1.msra.mxu0 0.0
      %5662 = vmatprep.subr.mxu0 0.0
      %5663 = vmatpush1.msra.mxu0 0.0
      %5664 = vmatprep.subr.mxu0 0.0
      %5665 = vmatpush1.msra.mxu0 0.0
      %5666 = vmatprep.subr.mxu0 0.0
      %5667 = vmatpush1.msra.mxu0 0.0
      %5668 = vmatprep.mubr.f32.mxu0 %v5593
      %5669 = vmatmul.mubr.f32.gmra.mrb[0].mxu0 %v5325
      %v5670 = vpop.f32.mrb[0].mxu0
      %v5671 = vadd.f32 0.0, %v5670
      %v5672 = vpop.f32.mrb[0].mxu0
      %5673 = vmatprep.mubr.f32.mxu0 %v5596
      %5674 = vmatmul.mubr.f32.gmra.mrb[0].mxu0 %v5327
      %v5675 = vpop.f32.mrb[0].mxu0
      %v5676 = vadd.f32 0.0, %v5675
      %v5677 = vpop.f32.mrb[0].mxu0
      %5678 = vmatprep.mubr.f32.mxu0 %v5599
      %5679 = vmatmul.mubr.f32.gmra.mrb[0].mxu0 %v5329
      %v5680 = vpop.f32.mrb[0].mxu0
      %v5681 = vadd.f32 0.0, %v5680
      %v5682 = vpop.f32.mrb[0].mxu0
      %5683 = vmatprep.mubr.f32.mxu0 %v5602
      %5684 = vmatmul.mubr.f32.gmra.mrb[0].mxu0 %v5331
      %v5685 = vpop.f32.mrb[0].mxu0
      %v5686 = vadd.f32 0.0, %v5685
      %v5687 = vpop.f32.mrb[0].mxu0
      %5688 = vdwg.mxu0
      %v5690 = vsel %vm5394, %v5334, 0
      %v5693 = vsel %vm5394, %v5336, 0
      %v5696 = vsel %vm5394, %v5338, 0
      %v5699 = vsel %vm5394, %v5340, 0
      %5701 = vmatprep.subr.mxu0 0.0
      %5702 = vmatpush1.msra.mxu0 %v5373
      %5703 = vmatprep.subr.mxu0 0.0
      %5704 = vmatpush1.msra.mxu0 %v5374
      %5705 = vmatprep.subr.mxu0 0.0
      %5706 = vmatpush1.msra.mxu0 %v5375
      %5707 = vmatprep.subr.mxu0 0.0
      %5708 = vmatpush1.msra.mxu0 %v5376
      %5709 = vmatprep.subr.mxu0 0.0
      %5710 = vmatpush1.msra.mxu0 %v5377
      %5711 = vmatprep.subr.mxu0 0.0
      %5712 = vmatpush1.msra.mxu0 %v5378
      %5713 = vmatprep.subr.mxu0 0.0
      %5714 = vmatpush1.msra.mxu0 %v5379
      %5715 = vmatprep.subr.mxu0 0.0
      %5716 = vmatpush1.msra.mxu0 %v5380
      %5717 = vmatprep.subr.mxu0 0.0
      %5718 = vmatpush1.msra.mxu0 %v5381
      %5719 = vmatprep.subr.mxu0 0.0
      %5720 = vmatpush1.msra.mxu0 %v5382
      %5721 = vmatprep.subr.mxu0 0.0
      %5722 = vmatpush1.msra.mxu0 %v5383
      %5723 = vmatprep.subr.mxu0 0.0
      %5724 = vmatpush1.msra.mxu0 %v5384
      %5725 = vmatprep.subr.mxu0 0.0
      %5726 = vmatpush1.msra.mxu0 %v5385
      %5727 = vmatprep.subr.mxu0 0.0
      %5728 = vmatpush1.msra.mxu0 %v5386
      %5729 = vmatprep.subr.mxu0 0.0
      %5730 = vmatpush1.msra.mxu0 %v5387
      %5731 = vmatprep.subr.mxu0 0.0
      %5732 = vmatpush1.msra.mxu0 %v5388
      %5733 = vmatprep.subr.mxu0 0.0
      %5734 = vmatpush1.msra.mxu0 %v5389
      %5735 = vmatprep.subr.mxu0 0.0
      %5736 = vmatpush1.msra.mxu0 %v5390
      %5737 = vmatprep.subr.mxu0 0.0
      %5738 = vmatpush1.msra.mxu0 %v5391
      %5739 = vmatprep.subr.mxu0 0.0
      %5740 = vmatpush1.msra.mxu0 %v5392
      %5741 = vmatprep.subr.mxu0 0.0
      %5742 = vmatpush1.msra.mxu0 %v5408
      %5743 = vmatprep.subr.mxu0 0.0
      %5744 = vmatpush1.msra.mxu0 0.0
      %5745 = vmatprep.subr.mxu0 0.0
      %5746 = vmatpush1.msra.mxu0 0.0
      %5747 = vmatprep.subr.mxu0 0.0
      %5748 = vmatpush1.msra.mxu0 0.0
      %5749 = vmatprep.subr.mxu0 0.0
      %5750 = vmatpush1.msra.mxu0 0.0
      %5751 = vmatprep.subr.mxu0 0.0
      %5752 = vmatpush1.msra.mxu0 0.0
      %5753 = vmatprep.subr.mxu0 0.0
      %5754 = vmatpush1.msra.mxu0 0.0
      %5755 = vmatprep.subr.mxu0 0.0
      %5756 = vmatpush1.msra.mxu0 0.0
      %5757 = vmatprep.subr.mxu0 0.0
      %5758 = vmatpush1.msra.mxu0 0.0
      %5759 = vmatprep.subr.mxu0 0.0
      %5760 = vmatpush1.msra.mxu0 0.0
      %5761 = vmatprep.subr.mxu0 0.0
      %5762 = vmatpush1.msra.mxu0 0.0
      %5763 = vmatprep.subr.mxu0 0.0
      %5764 = vmatpush1.msra.mxu0 0.0
      %5765 = vmatprep.mubr.f32.mxu0 %v5690
      %5766 = vmatmul.mubr.f32.gmra.mrb[0].mxu0 %v5333
      %v5767 = vpop.f32.mrb[0].mxu0
      %v5768 = vadd.f32 0.0, %v5767
      %v5769 = vpop.f32.mrb[0].mxu0
      %5770 = vmatprep.mubr.f32.mxu0 %v5693
      %5771 = vmatmul.mubr.f32.gmra.mrb[0].mxu0 %v5335
      %v5772 = vpop.f32.mrb[0].mxu0
      %v5773 = vadd.f32 0.0, %v5772
      %v5774 = vpop.f32.mrb[0].mxu0
      %5775 = vmatprep.mubr.f32.mxu0 %v5696
      %5776 = vmatmul.mubr.f32.gmra.mrb[0].mxu0 %v5337
      %v5777 = vpop.f32.mrb[0].mxu0
      %v5778 = vadd.f32 0.0, %v5777
      %v5779 = vpop.f32.mrb[0].mxu0
      %5780 = vmatprep.mubr.f32.mxu0 %v5699
      %5781 = vmatmul.mubr.f32.gmra.mrb[0].mxu0 %v5339
      %v5782 = vpop.f32.mrb[0].mxu0
      %v5783 = vadd.f32 0.0, %v5782
      %v5784 = vpop.f32.mrb[0].mxu0
      %5785 = vdwg.mxu0
      %v5787 = vsel %vm5394, %v5342, 0
      %v5790 = vsel %vm5394, %v5344, 0
      %v5793 = vsel %vm5394, %v5346, 0
      %v5796 = vsel %vm5394, %v5348, 0
      %5798 = vmatprep.subr.mxu0 0.0
      %5799 = vmatpush1.msra.mxu0 %v5373
      %5800 = vmatprep.subr.mxu0 0.0
      %5801 = vmatpush1.msra.mxu0 %v5374
      %5802 = vmatprep.subr.mxu0 0.0
      %5803 = vmatpush1.msra.mxu0 %v5375
      %5804 = vmatprep.subr.mxu0 0.0
      %5805 = vmatpush1.msra.mxu0 %v5376
      %5806 = vmatprep.subr.mxu0 0.0
      %5807 = vmatpush1.msra.mxu0 %v5377
      %5808 = vmatprep.subr.mxu0 0.0
      %5809 = vmatpush1.msra.mxu0 %v5378
      %5810 = vmatprep.subr.mxu0 0.0
      %5811 = vmatpush1.msra.mxu0 %v5379
      %5812 = vmatprep.subr.mxu0 0.0
      %5813 = vmatpush1.msra.mxu0 %v5380
      %5814 = vmatprep.subr.mxu0 0.0
      %5815 = vmatpush1.msra.mxu0 %v5381
      %5816 = vmatprep.subr.mxu0 0.0
      %5817 = vmatpush1.msra.mxu0 %v5382
      %5818 = vmatprep.subr.mxu0 0.0
      %5819 = vmatpush1.msra.mxu0 %v5383
      %5820 = vmatprep.subr.mxu0 0.0
      %5821 = vmatpush1.msra.mxu0 %v5384
      %5822 = vmatprep.subr.mxu0 0.0
      %5823 = vmatpush1.msra.mxu0 %v5385
      %5824 = vmatprep.subr.mxu0 0.0
      %5825 = vmatpush1.msra.mxu0 %v5386
      %5826 = vmatprep.subr.mxu0 0.0
      %5827 = vmatpush1.msra.mxu0 %v5387
      %5828 = vmatprep.subr.mxu0 0.0
      %5829 = vmatpush1.msra.mxu0 %v5388
      %5830 = vmatprep.subr.mxu0 0.0
      %5831 = vmatpush1.msra.mxu0 %v5389
      %5832 = vmatprep.subr.mxu0 0.0
      %5833 = vmatpush1.msra.mxu0 %v5390
      %5834 = vmatprep.subr.mxu0 0.0
      %5835 = vmatpush1.msra.mxu0 %v5391
      %5836 = vmatprep.subr.mxu0 0.0
      %5837 = vmatpush1.msra.mxu0 %v5392
      %5838 = vmatprep.subr.mxu0 0.0
      %5839 = vmatpush1.msra.mxu0 %v5408
      %5840 = vmatprep.subr.mxu0 0.0
      %5841 = vmatpush1.msra.mxu0 0.0
      %5842 = vmatprep.subr.mxu0 0.0
      %5843 = vmatpush1.msra.mxu0 0.0
      %5844 = vmatprep.subr.mxu0 0.0
      %5845 = vmatpush1.msra.mxu0 0.0
      %5846 = vmatprep.subr.mxu0 0.0
      %5847 = vmatpush1.msra.mxu0 0.0
      %5848 = vmatprep.subr.mxu0 0.0
      %5849 = vmatpush1.msra.mxu0 0.0
      %5850 = vmatprep.subr.mxu0 0.0
      %5851 = vmatpush1.msra.mxu0 0.0
      %5852 = vmatprep.subr.mxu0 0.0
      %5853 = vmatpush1.msra.mxu0 0.0
      %5854 = vmatprep.subr.mxu0 0.0
      %5855 = vmatpush1.msra.mxu0 0.0
      %5856 = vmatprep.subr.mxu0 0.0
      %5857 = vmatpush1.msra.mxu0 0.0
      %5858 = vmatprep.subr.mxu0 0.0
      %5859 = vmatpush1.msra.mxu0 0.0
      %5860 = vmatprep.subr.mxu0 0.0
      %5861 = vmatpush1.msra.mxu0 0.0
      %5862 = vmatprep.mubr.f32.mxu0 %v5787
      %5863 = vmatmul.mubr.f32.gmra.mrb[0].mxu0 %v5341
      %v5864 = vpop.f32.mrb[0].mxu0
      %v5865 = vadd.f32 0.0, %v5864
      %v5866 = vpop.f32.mrb[0].mxu0
      %5867 = vmatprep.mubr.f32.mxu0 %v5790
      %5868 = vmatmul.mubr.f32.gmra.mrb[0].mxu0 %v5343
      %v5869 = vpop.f32.mrb[0].mxu0
      %v5870 = vadd.f32 0.0, %v5869
      %v5871 = vpop.f32.mrb[0].mxu0
      %5872 = vmatprep.mubr.f32.mxu0 %v5793
      %5873 = vmatmul.mubr.f32.gmra.mrb[0].mxu0 %v5345
      %v5874 = vpop.f32.mrb[0].mxu0
      %v5875 = vadd.f32 0.0, %v5874
      %v5876 = vpop.f32.mrb[0].mxu0
      %5877 = vmatprep.mubr.f32.mxu0 %v5796
      %5878 = vmatmul.mubr.f32.gmra.mrb[0].mxu0 %v5347
      %v5879 = vpop.f32.mrb[0].mxu0
      %v5880 = vadd.f32 0.0, %v5879
      %v5881 = vpop.f32.mrb[0].mxu0
      %5882 = vdwg.mxu0
      %v5884 = vsel %vm5394, %v5350, 0
      %v5887 = vsel %vm5394, %v5352, 0
      %v5890 = vsel %vm5394, %v5354, 0
      %v5893 = vsel %vm5394, %v5356, 0
      %5895 = vmatprep.subr.mxu0 0.0
      %5896 = vmatpush1.msra.mxu0 %v5373
      %5897 = vmatprep.subr.mxu0 0.0
      %5898 = vmatpush1.msra.mxu0 %v5374
      %5899 = vmatprep.subr.mxu0 0.0
      %5900 = vmatpush1.msra.mxu0 %v5375
      %5901 = vmatprep.subr.mxu0 0.0
      %5902 = vmatpush1.msra.mxu0 %v5376
      %5903 = vmatprep.subr.mxu0 0.0
      %5904 = vmatpush1.msra.mxu0 %v5377
      %5905 = vmatprep.subr.mxu0 0.0
      %5906 = vmatpush1.msra.mxu0 %v5378
      %5907 = vmatprep.subr.mxu0 0.0
      %5908 = vmatpush1.msra.mxu0 %v5379
      %5909 = vmatprep.subr.mxu0 0.0
      %5910 = vmatpush1.msra.mxu0 %v5380
      %5911 = vmatprep.subr.mxu0 0.0
      %5912 = vmatpush1.msra.mxu0 %v5381
      %5913 = vmatprep.subr.mxu0 0.0
      %5914 = vmatpush1.msra.mxu0 %v5382
      %5915 = vmatprep.subr.mxu0 0.0
      %5916 = vmatpush1.msra.mxu0 %v5383
      %5917 = vmatprep.subr.mxu0 0.0
      %5918 = vmatpush1.msra.mxu0 %v5384
      %5919 = vmatprep.subr.mxu0 0.0
      %5920 = vmatpush1.msra.mxu0 %v5385
      %5921 = vmatprep.subr.mxu0 0.0
      %5922 = vmatpush1.msra.mxu0 %v5386
      %5923 = vmatprep.subr.mxu0 0.0
      %5924 = vmatpush1.msra.mxu0 %v5387
      %5925 = vmatprep.subr.mxu0 0.0
      %5926 = vmatpush1.msra.mxu0 %v5388
      %5927 = vmatprep.subr.mxu0 0.0
      %5928 = vmatpush1.msra.mxu0 %v5389
      %5929 = vmatprep.subr.mxu0 0.0
      %5930 = vmatpush1.msra.mxu0 %v5390
      %5931 = vmatprep.subr.mxu0 0.0
      %5932 = vmatpush1.msra.mxu0 %v5391
      %5933 = vmatprep.subr.mxu0 0.0
      %5934 = vmatpush1.msra.mxu0 %v5392
      %5935 = vmatprep.subr.mxu0 0.0
      %5936 = vmatpush1.msra.mxu0 %v5408
      %5937 = vmatprep.subr.mxu0 0.0
      %5938 = vmatpush1.msra.mxu0 0.0
      %5939 = vmatprep.subr.mxu0 0.0
      %5940 = vmatpush1.msra.mxu0 0.0
      %5941 = vmatprep.subr.mxu0 0.0
      %5942 = vmatpush1.msra.mxu0 0.0
      %5943 = vmatprep.subr.mxu0 0.0
      %5944 = vmatpush1.msra.mxu0 0.0
      %5945 = vmatprep.subr.mxu0 0.0
      %5946 = vmatpush1.msra.mxu0 0.0
      %5947 = vmatprep.subr.mxu0 0.0
      %5948 = vmatpush1.msra.mxu0 0.0
      %5949 = vmatprep.subr.mxu0 0.0
      %5950 = vmatpush1.msra.mxu0 0.0
      %5951 = vmatprep.subr.mxu0 0.0
      %5952 = vmatpush1.msra.mxu0 0.0
      %5953 = vmatprep.subr.mxu0 0.0
      %5954 = vmatpush1.msra.mxu0 0.0
      %5955 = vmatprep.subr.mxu0 0.0
      %5956 = vmatpush1.msra.mxu0 0.0
      %5957 = vmatprep.subr.mxu0 0.0
      %5958 = vmatpush1.msra.mxu0 0.0
      %5959 = vmatprep.mubr.f32.mxu0 %v5884
      %5960 = vmatmul.mubr.f32.gmra.mrb[0].mxu0 %v5349
      %v5961 = vpop.f32.mrb[0].mxu0
      %v5962 = vadd.f32 0.0, %v5961
      %v5963 = vpop.f32.mrb[0].mxu0
      %5964 = vmatprep.mubr.f32.mxu0 %v5887
      %5965 = vmatmul.mubr.f32.gmra.mrb[0].mxu0 %v5351
      %v5966 = vpop.f32.mrb[0].mxu0
      %v5967 = vadd.f32 0.0, %v5966
      %v5968 = vpop.f32.mrb[0].mxu0
      %5969 = vmatprep.mubr.f32.mxu0 %v5890
      %5970 = vmatmul.mubr.f32.gmra.mrb[0].mxu0 %v5353
      %v5971 = vpop.f32.mrb[0].mxu0
      %v5972 = vadd.f32 0.0, %v5971
      %v5973 = vpop.f32.mrb[0].mxu0
      %5974 = vmatprep.mubr.f32.mxu0 %v5893
      %5975 = vmatmul.mubr.f32.gmra.mrb[0].mxu0 %v5355
      %v5976 = vpop.f32.mrb[0].mxu0
      %v5977 = vadd.f32 0.0, %v5976
      %v5978 = vpop.f32.mrb[0].mxu0
      %5979 = vdwg.mxu0
      %v5981 = vsel %vm5394, %v5358, 0
      %v5984 = vsel %vm5394, %v5360, 0
      %v5987 = vsel %vm5394, %v5362, 0
      %v5990 = vsel %vm5394, %v5364, 0
      %5992 = vmatprep.subr.mxu0 0.0
      %5993 = vmatpush1.msra.mxu0 %v5373
      %5994 = vmatprep.subr.mxu0 0.0
      %5995 = vmatpush1.msra.mxu0 %v5374
      %5996 = vmatprep.subr.mxu0 0.0
      %5997 = vmatpush1.msra.mxu0 %v5375
      %5998 = vmatprep.subr.mxu0 0.0
      %5999 = vmatpush1.msra.mxu0 %v5376
      %6000 = vmatprep.subr.mxu0 0.0
      %6001 = vmatpush1.msra.mxu0 %v5377
      %6002 = vmatprep.subr.mxu0 0.0
      %6003 = vmatpush1.msra.mxu0 %v5378
      %6004 = vmatprep.subr.mxu0 0.0
      %6005 = vmatpush1.msra.mxu0 %v5379
      %6006 = vmatprep.subr.mxu0 0.0
      %6007 = vmatpush1.msra.mxu0 %v5380
      %6008 = vmatprep.subr.mxu0 0.0
      %6009 = vmatpush1.msra.mxu0 %v5381
      %6010 = vmatprep.subr.mxu0 0.0
      %6011 = vmatpush1.msra.mxu0 %v5382
      %6012 = vmatprep.subr.mxu0 0.0
      %6013 = vmatpush1.msra.mxu0 %v5383
      %6014 = vmatprep.subr.mxu0 0.0
      %6015 = vmatpush1.msra.mxu0 %v5384
      %6016 = vmatprep.subr.mxu0 0.0
      %6017 = vmatpush1.msra.mxu0 %v5385
      %6018 = vmatprep.subr.mxu0 0.0
      %6019 = vmatpush1.msra.mxu0 %v5386
      %6020 = vmatprep.subr.mxu0 0.0
      %6021 = vmatpush1.msra.mxu0 %v5387
      %6022 = vmatprep.subr.mxu0 0.0
      %6023 = vmatpush1.msra.mxu0 %v5388
      %6024 = vmatprep.subr.mxu0 0.0
      %6025 = vmatpush1.msra.mxu0 %v5389
      %6026 = vmatprep.subr.mxu0 0.0
      %6027 = vmatpush1.msra.mxu0 %v5390
      %6028 = vmatprep.subr.mxu0 0.0
      %6029 = vmatpush1.msra.mxu0 %v5391
      %6030 = vmatprep.subr.mxu0 0.0
      %6031 = vmatpush1.msra.mxu0 %v5392
      %6032 = vmatprep.subr.mxu0 0.0
      %6033 = vmatpush1.msra.mxu0 %v5408
      %6034 = vmatprep.subr.mxu0 0.0
      %6035 = vmatpush1.msra.mxu0 0.0
      %6036 = vmatprep.subr.mxu0 0.0
      %6037 = vmatpush1.msra.mxu0 0.0
      %6038 = vmatprep.subr.mxu0 0.0
      %6039 = vmatpush1.msra.mxu0 0.0
      %6040 = vmatprep.subr.mxu0 0.0
      %6041 = vmatpush1.msra.mxu0 0.0
      %6042 = vmatprep.subr.mxu0 0.0
      %6043 = vmatpush1.msra.mxu0 0.0
      %6044 = vmatprep.subr.mxu0 0.0
      %6045 = vmatpush1.msra.mxu0 0.0
      %6046 = vmatprep.subr.mxu0 0.0
      %6047 = vmatpush1.msra.mxu0 0.0
      %6048 = vmatprep.subr.mxu0 0.0
      %6049 = vmatpush1.msra.mxu0 0.0
      %6050 = vmatprep.subr.mxu0 0.0
      %6051 = vmatpush1.msra.mxu0 0.0
      %6052 = vmatprep.subr.mxu0 0.0
      %6053 = vmatpush1.msra.mxu0 0.0
      %6054 = vmatprep.subr.mxu0 0.0
      %6055 = vmatpush1.msra.mxu0 0.0
      %6056 = vmatprep.mubr.f32.mxu0 %v5981
      %6057 = vmatmul.mubr.f32.gmra.mrb[0].mxu0 %v5357
      %v6058 = vpop.f32.mrb[0].mxu0
      %v6059 = vadd.f32 0.0, %v6058
      %v6060 = vpop.f32.mrb[0].mxu0
      %6061 = vmatprep.mubr.f32.mxu0 %v5984
      %6062 = vmatmul.mubr.f32.gmra.mrb[0].mxu0 %v5359
      %v6063 = vpop.f32.mrb[0].mxu0
      %v6064 = vadd.f32 0.0, %v6063
      %v6065 = vpop.f32.mrb[0].mxu0
      %6066 = vmatprep.mubr.f32.mxu0 %v5987
      %6067 = vmatmul.mubr.f32.gmra.mrb[0].mxu0 %v5361
      %v6068 = vpop.f32.mrb[0].mxu0
      %v6069 = vadd.f32 0.0, %v6068
      %v6070 = vpop.f32.mrb[0].mxu0
      %6071 = vmatprep.mubr.f32.mxu0 %v5990
      %6072 = vmatmul.mubr.f32.gmra.mrb[0].mxu0 %v5363
      %v6073 = vpop.f32.mrb[0].mxu0
      %v6074 = vadd.f32 0.0, %v6073
      %v6075 = vpop.f32.mrb[0].mxu0
      %6076 = vdwg.mxu0
      %v6078 = vsel %vm5394, %v5366, 0
      %v6081 = vsel %vm5394, %v5368, 0
      %v6084 = vsel %vm5394, %v5370, 0
      %v6087 = vsel %vm5394, %v5372, 0
      %6089 = vmatprep.subr.mxu0 0.0
      %6090 = vmatpush1.msra.mxu0 %v5373
      %6091 = vmatprep.subr.mxu0 0.0
      %6092 = vmatpush1.msra.mxu0 %v5374
      %6093 = vmatprep.subr.mxu0 0.0
      %6094 = vmatpush1.msra.mxu0 %v5375
      %6095 = vmatprep.subr.mxu0 0.0
      %6096 = vmatpush1.msra.mxu0 %v5376
      %6097 = vmatprep.subr.mxu0 0.0
      %6098 = vmatpush1.msra.mxu0 %v5377
      %6099 = vmatprep.subr.mxu0 0.0
      %6100 = vmatpush1.msra.mxu0 %v5378
      %6101 = vmatprep.subr.mxu0 0.0
      %6102 = vmatpush1.msra.mxu0 %v5379
      %6103 = vmatprep.subr.mxu0 0.0
      %6104 = vmatpush1.msra.mxu0 %v5380
      %6105 = vmatprep.subr.mxu0 0.0
      %6106 = vmatpush1.msra.mxu0 %v5381
      %6107 = vmatprep.subr.mxu0 0.0
      %6108 = vmatpush1.msra.mxu0 %v5382
      %6109 = vmatprep.subr.mxu0 0.0
      %6110 = vmatpush1.msra.mxu0 %v5383
      %6111 = vmatprep.subr.mxu0 0.0
      %6112 = vmatpush1.msra.mxu0 %v5384
      %6113 = vmatprep.subr.mxu0 0.0
      %6114 = vmatpush1.msra.mxu0 %v5385
      %6115 = vmatprep.subr.mxu0 0.0
      %6116 = vmatpush1.msra.mxu0 %v5386
      %6117 = vmatprep.subr.mxu0 0.0
      %6118 = vmatpush1.msra.mxu0 %v5387
      %6119 = vmatprep.subr.mxu0 0.0
      %6120 = vmatpush1.msra.mxu0 %v5388
      %6121 = vmatprep.subr.mxu0 0.0
      %6122 = vmatpush1.msra.mxu0 %v5389
      %6123 = vmatprep.subr.mxu0 0.0
      %6124 = vmatpush1.msra.mxu0 %v5390
      %6125 = vmatprep.subr.mxu0 0.0
      %6126 = vmatpush1.msra.mxu0 %v5391
      %6127 = vmatprep.subr.mxu0 0.0
      %6128 = vmatpush1.msra.mxu0 %v5392
      %6129 = vmatprep.subr.mxu0 0.0
      %6130 = vmatpush1.msra.mxu0 %v5408
      %6131 = vmatprep.subr.mxu0 0.0
      %6132 = vmatpush1.msra.mxu0 0.0
      %6133 = vmatprep.subr.mxu0 0.0
      %6134 = vmatpush1.msra.mxu0 0.0
      %6135 = vmatprep.subr.mxu0 0.0
      %6136 = vmatpush1.msra.mxu0 0.0
      %6137 = vmatprep.subr.mxu0 0.0
      %6138 = vmatpush1.msra.mxu0 0.0
      %6139 = vmatprep.subr.mxu0 0.0
      %6140 = vmatpush1.msra.mxu0 0.0
      %6141 = vmatprep.subr.mxu0 0.0
      %6142 = vmatpush1.msra.mxu0 0.0
      %6143 = vmatprep.subr.mxu0 0.0
      %6144 = vmatpush1.msra.mxu0 0.0
      %6145 = vmatprep.subr.mxu0 0.0
      %6146 = vmatpush1.msra.mxu0 0.0
      %6147 = vmatprep.subr.mxu0 0.0
      %6148 = vmatpush1.msra.mxu0 0.0
      %6149 = vmatprep.subr.mxu0 0.0
      %6150 = vmatpush1.msra.mxu0 0.0
      %6151 = vmatprep.subr.mxu0 0.0
      %6152 = vmatpush1.msra.mxu0 0.0
      %6153 = vmatprep.mubr.f32.mxu0 %v6078
      %6154 = vmatmul.mubr.f32.gmra.mrb[0].mxu0 %v5365
      %v6155 = vpop.f32.mrb[0].mxu0
      %v6156 = vadd.f32 0.0, %v6155
      %v6157 = vpop.f32.mrb[0].mxu0
      %6158 = vmatprep.mubr.f32.mxu0 %v6081
      %6159 = vmatmul.mubr.f32.gmra.mrb[0].mxu0 %v5367
      %v6160 = vpop.f32.mrb[0].mxu0
      %v6161 = vadd.f32 0.0, %v6160
      %v6162 = vpop.f32.mrb[0].mxu0
      %6163 = vmatprep.mubr.f32.mxu0 %v6084
      %6164 = vmatmul.mubr.f32.gmra.mrb[0].mxu0 %v5369
      %v6165 = vpop.f32.mrb[0].mxu0
      %v6166 = vadd.f32 0.0, %v6165
      %v6167 = vpop.f32.mrb[0].mxu0
      %6168 = vmatprep.mubr.f32.mxu0 %v6087
      %6169 = vmatmul.mubr.f32.gmra.mrb[0].mxu0 %v5371
      %v6170 = vpop.f32.mrb[0].mxu0
      %v6171 = vadd.f32 0.0, %v6170
      %v6172 = vpop.f32.mrb[0].mxu0
      %6173 = vdwg.mxu0
      %v6206 = vrot.slane %v5477, 1
      %v6207 = vrot.slane %v5482, 1
      %v6208 = vsel %vm524, %v6206, %v6207
      %v6209 = vrot.slane %v5487, 1
      %v6210 = vsel %vm524, %v6207, %v6209
      %v6211 = vrot.slane %v5492, 1
      %v6212 = vsel %vm524, %v6209, %v6211
      %v6213 = vrot.slane %v5574, 1
      %v6214 = vrot.slane %v5579, 1
      %v6215 = vsel %vm524, %v6213, %v6214
      %v6216 = vrot.slane %v5584, 1
      %v6217 = vsel %vm524, %v6214, %v6216
      %v6218 = vrot.slane %v5589, 1
      %v6219 = vsel %vm524, %v6216, %v6218
      %v6220 = vrot.slane %v5671, 1
      %v6221 = vrot.slane %v5676, 1
      %v6222 = vsel %vm524, %v6220, %v6221
      %v6223 = vrot.slane %v5681, 1
      %v6224 = vsel %vm524, %v6221, %v6223
      %v6225 = vrot.slane %v5686, 1
      %v6226 = vsel %vm524, %v6223, %v6225
      %v6227 = vrot.slane %v5768, 1
      %v6228 = vrot.slane %v5773, 1
      %v6229 = vsel %vm524, %v6227, %v6228
      %v6230 = vrot.slane %v5778, 1
      %v6231 = vsel %vm524, %v6228, %v6230
      %v6232 = vrot.slane %v5783, 1
      %v6233 = vsel %vm524, %v6230, %v6232
      %v6234 = vrot.slane %v5865, 1
      %v6235 = vrot.slane %v5870, 1
      %v6236 = vsel %vm524, %v6234, %v6235
      %v6237 = vrot.slane %v5875, 1
      %v6238 = vsel %vm524, %v6235, %v6237
      %v6239 = vrot.slane %v5880, 1
      %v6240 = vsel %vm524, %v6237, %v6239
      %v6241 = vrot.slane %v5962, 1
      %v6242 = vrot.slane %v5967, 1
      %v6243 = vsel %vm524, %v6241, %v6242
      %v6244 = vrot.slane %v5972, 1
      %v6245 = vsel %vm524, %v6242, %v6244
      %v6246 = vrot.slane %v5977, 1
      %v6247 = vsel %vm524, %v6244, %v6246
      %v6248 = vrot.slane %v6059, 1
      %v6249 = vrot.slane %v6064, 1
      %v6250 = vsel %vm524, %v6248, %v6249
      %v6251 = vrot.slane %v6069, 1
      %v6252 = vsel %vm524, %v6249, %v6251
      %v6253 = vrot.slane %v6074, 1
      %v6254 = vsel %vm524, %v6251, %v6253
      %v6255 = vrot.slane %v6156, 1
      %v6256 = vrot.slane %v6161, 1
      %v6257 = vsel %vm524, %v6255, %v6256
      %v6258 = vrot.slane %v6166, 1
      %v6259 = vsel %vm524, %v6256, %v6258
      %v6260 = vrot.slane %v6171, 1
      %v6261 = vsel %vm524, %v6258, %v6260
      %v6294 = vmax.f32 %v5477, %v6208
      %v6295 = vmax.f32 %v5482, %v6210
      %v6296 = vmax.f32 %v5487, %v6212
      %v6297 = vmax.f32 %v5492, %v6211
      %v6298 = vmax.f32 %v5574, %v6215
      %v6299 = vmax.f32 %v5579, %v6217
      %v6300 = vmax.f32 %v5584, %v6219
      %v6301 = vmax.f32 %v5589, %v6218
      %v6302 = vmax.f32 %v5671, %v6222
      %v6303 = vmax.f32 %v5676, %v6224
      %v6304 = vmax.f32 %v5681, %v6226
      %v6305 = vmax.f32 %v5686, %v6225
      %v6306 = vmax.f32 %v5768, %v6229
      %v6307 = vmax.f32 %v5773, %v6231
      %v6308 = vmax.f32 %v5778, %v6233
      %v6309 = vmax.f32 %v5783, %v6232
      %v6310 = vmax.f32 %v5865, %v6236
      %v6311 = vmax.f32 %v5870, %v6238
      %v6312 = vmax.f32 %v5875, %v6240
      %v6313 = vmax.f32 %v5880, %v6239
      %v6314 = vmax.f32 %v5962, %v6243
      %v6315 = vmax.f32 %v5967, %v6245
      %v6316 = vmax.f32 %v5972, %v6247
      %v6317 = vmax.f32 %v5977, %v6246
      %v6318 = vmax.f32 %v6059, %v6250
      %v6319 = vmax.f32 %v6064, %v6252
      %v6320 = vmax.f32 %v6069, %v6254
      %v6321 = vmax.f32 %v6074, %v6253
      %v6322 = vmax.f32 %v6156, %v6257
      %v6323 = vmax.f32 %v6161, %v6259
      %v6324 = vmax.f32 %v6166, %v6261
      %v6325 = vmax.f32 %v6171, %v6260
      %v6326 = vld [vmem:[%s4] sm:$0xff]
      %v6327 = vld [vmem:[%s4 + $0x8] sm:$0x3f]
      %v6328 = vld [vmem:[%s4 + $0x10] sm:$0xff]
      %v6329 = vld [vmem:[%s4 + $0x18] sm:$0x3f]
      %v6330 = vld [vmem:[%s4 + $0x20] sm:$0xff]
      %v6331 = vld [vmem:[%s4 + $0x28] sm:$0x3f]
      %v6332 = vld [vmem:[%s4 + $0x30] sm:$0xff]
      %v6333 = vld [vmem:[%s4 + $0x38] sm:$0x3f]
      %v6334 = vld [vmem:[%s4 + $0x40] sm:$0xff]
      %v6335 = vld [vmem:[%s4 + $0x48] sm:$0x3f]
      %v6336 = vld [vmem:[%s4 + $0x50] sm:$0xff]
      %v6337 = vld [vmem:[%s4 + $0x58] sm:$0x3f]
      %v6338 = vld [vmem:[%s4 + $0x60] sm:$0xff]
      %v6339 = vld [vmem:[%s4 + $0x68] sm:$0x3f]
      %v6340 = vld [vmem:[%s4 + $0x70] sm:$0xff]
      %v6341 = vld [vmem:[%s4 + $0x78] sm:$0x3f]
      %vm6342 = vcmask 220160
      %v6344 = vsel %vm6342, %v6326, 0
      %v6347 = vsel %vm6342, %v6327, 0
      %vm6349 = vcmask 1042432
      %v6351 = vsel %vm6349, %v6297, 0
      %6353 = vmatprep.subr.mxu0 0.0
      %6354 = vmatpush1.msra.mxu0 %v6294
      %6355 = vmatprep.subr.mxu0 0.0
      %6356 = vmatpush1.msra.mxu0 %v6295
      %6357 = vmatprep.subr.mxu0 0.0
      %6358 = vmatpush1.msra.mxu0 %v6296
      %6359 = vmatprep.subr.mxu0 0.0
      %6360 = vmatpush1.msra.mxu0 %v6351
      %6361 = vmatprep.subr.mxu0 0.0
      %6362 = vmatpush1.msra.mxu0 0.0
      %6363 = vmatprep.subr.mxu0 0.0
      %6364 = vmatpush1.msra.mxu0 0.0
      %6365 = vmatprep.subr.mxu0 0.0
      %6366 = vmatpush1.msra.mxu0 0.0
      %6367 = vmatprep.subr.mxu0 0.0
      %6368 = vmatpush1.msra.mxu0 0.0
      %6369 = vmatprep.subr.mxu0 0.0
      %6370 = vmatpush1.msra.mxu0 0.0
      %6371 = vmatprep.subr.mxu0 0.0
      %6372 = vmatpush1.msra.mxu0 0.0
      %6373 = vmatprep.subr.mxu0 0.0
      %6374 = vmatpush1.msra.mxu0 0.0
      %6375 = vmatprep.subr.mxu0 0.0
      %6376 = vmatpush1.msra.mxu0 0.0
      %6377 = vmatprep.subr.mxu0 0.0
      %6378 = vmatpush1.msra.mxu0 0.0
      %6379 = vmatprep.subr.mxu0 0.0
      %6380 = vmatpush1.msra.mxu0 0.0
      %6381 = vmatprep.subr.mxu0 0.0
      %6382 = vmatpush1.msra.mxu0 0.0
      %6383 = vmatprep.subr.mxu0 0.0
      %6384 = vmatpush1.msra.mxu0 0.0
      %6385 = vmatprep.subr.mxu0 0.0
      %6386 = vmatpush1.msra.mxu0 0.0
      %6387 = vmatprep.subr.mxu0 0.0
      %6388 = vmatpush1.msra.mxu0 0.0
      %6389 = vmatprep.subr.mxu0 0.0
      %6390 = vmatpush1.msra.mxu0 0.0
      %6391 = vmatprep.subr.mxu0 0.0
      %6392 = vmatpush1.msra.mxu0 0.0
      %6393 = vmatprep.subr.mxu0 0.0
      %6394 = vmatpush1.msra.mxu0 0.0
      %6395 = vmatprep.subr.mxu0 0.0
      %6396 = vmatpush1.msra.mxu0 0.0
      %6397 = vmatprep.subr.mxu0 0.0
      %6398 = vmatpush1.msra.mxu0 0.0
      %6399 = vmatprep.subr.mxu0 0.0
      %6400 = vmatpush1.msra.mxu0 0.0
      %6401 = vmatprep.subr.mxu0 0.0
      %6402 = vmatpush1.msra.mxu0 0.0
      %6403 = vmatprep.subr.mxu0 0.0
      %6404 = vmatpush1.msra.mxu0 0.0
      %6405 = vmatprep.subr.mxu0 0.0
      %6406 = vmatpush1.msra.mxu0 0.0
      %6407 = vmatprep.subr.mxu0 0.0
      %6408 = vmatpush1.msra.mxu0 0.0
      %6409 = vmatprep.subr.mxu0 0.0
      %6410 = vmatpush1.msra.mxu0 0.0
      %6411 = vmatprep.subr.mxu0 0.0
      %6412 = vmatpush1.msra.mxu0 0.0
      %6413 = vmatprep.subr.mxu0 0.0
      %6414 = vmatpush1.msra.mxu0 0.0
      %6415 = vmatprep.subr.mxu0 0.0
      %6416 = vmatpush1.msra.mxu0 0.0
      %6417 = vmatprep.mubr.f32.mxu0 0.0
      %6418 = vmatmul.mubr.f32.gmra.mrb[0].mxu0 %v6344
      %v6419 = vpop.f32.mrb[0].mxu0
      %v6420 = vadd.f32 0.0, %v6419
      %v6421 = vpop.f32.mrb[0].mxu0
      %6422 = vmatprep.mubr.f32.mxu0 0.0
      %6423 = vmatmul.mubr.f32.gmra.mrb[0].mxu0 %v6347
      %v6424 = vpop.f32.mrb[0].mxu0
      %v6425 = vadd.f32 0.0, %v6424
      %v6426 = vpop.f32.mrb[0].mxu0
      %6427 = vdwg.mxu0
      %v6429 = vsel %vm6342, %v6328, 0
      %v6432 = vsel %vm6342, %v6329, 0
      %v6435 = vsel %vm6349, %v6301, 0
      %6437 = vmatprep.subr.mxu0 0.0
      %6438 = vmatpush1.msra.mxu0 %v6298
      %6439 = vmatprep.subr.mxu0 0.0
      %6440 = vmatpush1.msra.mxu0 %v6299
      %6441 = vmatprep.subr.mxu0 0.0
      %6442 = vmatpush1.msra.mxu0 %v6300
      %6443 = vmatprep.subr.mxu0 0.0
      %6444 = vmatpush1.msra.mxu0 %v6435
      %6445 = vmatprep.subr.mxu0 0.0
      %6446 = vmatpush1.msra.mxu0 0.0
      %6447 = vmatprep.subr.mxu0 0.0
      %6448 = vmatpush1.msra.mxu0 0.0
      %6449 = vmatprep.subr.mxu0 0.0
      %6450 = vmatpush1.msra.mxu0 0.0
      %6451 = vmatprep.subr.mxu0 0.0
      %6452 = vmatpush1.msra.mxu0 0.0
      %6453 = vmatprep.subr.mxu0 0.0
      %6454 = vmatpush1.msra.mxu0 0.0
      %6455 = vmatprep.subr.mxu0 0.0
      %6456 = vmatpush1.msra.mxu0 0.0
      %6457 = vmatprep.subr.mxu0 0.0
      %6458 = vmatpush1.msra.mxu0 0.0
      %6459 = vmatprep.subr.mxu0 0.0
      %6460 = vmatpush1.msra.mxu0 0.0
      %6461 = vmatprep.subr.mxu0 0.0
      %6462 = vmatpush1.msra.mxu0 0.0
      %6463 = vmatprep.subr.mxu0 0.0
      %6464 = vmatpush1.msra.mxu0 0.0
      %6465 = vmatprep.subr.mxu0 0.0
      %6466 = vmatpush1.msra.mxu0 0.0
      %6467 = vmatprep.subr.mxu0 0.0
      %6468 = vmatpush1.msra.mxu0 0.0
      %6469 = vmatprep.subr.mxu0 0.0
      %6470 = vmatpush1.msra.mxu0 0.0
      %6471 = vmatprep.subr.mxu0 0.0
      %6472 = vmatpush1.msra.mxu0 0.0
      %6473 = vmatprep.subr.mxu0 0.0
      %6474 = vmatpush1.msra.mxu0 0.0
      %6475 = vmatprep.subr.mxu0 0.0
      %6476 = vmatpush1.msra.mxu0 0.0
      %6477 = vmatprep.subr.mxu0 0.0
      %6478 = vmatpush1.msra.mxu0 0.0
      %6479 = vmatprep.subr.mxu0 0.0
      %6480 = vmatpush1.msra.mxu0 0.0
      %6481 = vmatprep.subr.mxu0 0.0
      %6482 = vmatpush1.msra.mxu0 0.0
      %6483 = vmatprep.subr.mxu0 0.0
      %6484 = vmatpush1.msra.mxu0 0.0
      %6485 = vmatprep.subr.mxu0 0.0
      %6486 = vmatpush1.msra.mxu0 0.0
      %6487 = vmatprep.subr.mxu0 0.0
      %6488 = vmatpush1.msra.mxu0 0.0
      %6489 = vmatprep.subr.mxu0 0.0
      %6490 = vmatpush1.msra.mxu0 0.0
      %6491 = vmatprep.subr.mxu0 0.0
      %6492 = vmatpush1.msra.mxu0 0.0
      %6493 = vmatprep.subr.mxu0 0.0
      %6494 = vmatpush1.msra.mxu0 0.0
      %6495 = vmatprep.subr.mxu0 0.0
      %6496 = vmatpush1.msra.mxu0 0.0
      %6497 = vmatprep.subr.mxu0 0.0
      %6498 = vmatpush1.msra.mxu0 0.0
      %6499 = vmatprep.subr.mxu0 0.0
      %6500 = vmatpush1.msra.mxu0 0.0
      %6501 = vmatprep.mubr.f32.mxu0 0.0
      %6502 = vmatmul.mubr.f32.gmra.mrb[0].mxu0 %v6429
      %v6503 = vpop.f32.mrb[0].mxu0
      %v6504 = vadd.f32 0.0, %v6503
      %v6505 = vpop.f32.mrb[0].mxu0
      %6506 = vmatprep.mubr.f32.mxu0 0.0
      %6507 = vmatmul.mubr.f32.gmra.mrb[0].mxu0 %v6432
      %v6508 = vpop.f32.mrb[0].mxu0
      %v6509 = vadd.f32 0.0, %v6508
      %v6510 = vpop.f32.mrb[0].mxu0
      %6511 = vdwg.mxu0
      %v6513 = vsel %vm6342, %v6330, 0
      %v6516 = vsel %vm6342, %v6331, 0
      %v6519 = vsel %vm6349, %v6305, 0
      %6521 = vmatprep.subr.mxu0 0.0
      %6522 = vmatpush1.msra.mxu0 %v6302
      %6523 = vmatprep.subr.mxu0 0.0
      %6524 = vmatpush1.msra.mxu0 %v6303
      %6525 = vmatprep.subr.mxu0 0.0
      %6526 = vmatpush1.msra.mxu0 %v6304
      %6527 = vmatprep.subr.mxu0 0.0
      %6528 = vmatpush1.msra.mxu0 %v6519
      %6529 = vmatprep.subr.mxu0 0.0
      %6530 = vmatpush1.msra.mxu0 0.0
      %6531 = vmatprep.subr.mxu0 0.0
      %6532 = vmatpush1.msra.mxu0 0.0
      %6533 = vmatprep.subr.mxu0 0.0
      %6534 = vmatpush1.msra.mxu0 0.0
      %6535 = vmatprep.subr.mxu0 0.0
      %6536 = vmatpush1.msra.mxu0 0.0
      %6537 = vmatprep.subr.mxu0 0.0
      %6538 = vmatpush1.msra.mxu0 0.0
      %6539 = vmatprep.subr.mxu0 0.0
      %6540 = vmatpush1.msra.mxu0 0.0
      %6541 = vmatprep.subr.mxu0 0.0
      %6542 = vmatpush1.msra.mxu0 0.0
      %6543 = vmatprep.subr.mxu0 0.0
      %6544 = vmatpush1.msra.mxu0 0.0
      %6545 = vmatprep.subr.mxu0 0.0
      %6546 = vmatpush1.msra.mxu0 0.0
      %6547 = vmatprep.subr.mxu0 0.0
      %6548 = vmatpush1.msra.mxu0 0.0
      %6549 = vmatprep.subr.mxu0 0.0
      %6550 = vmatpush1.msra.mxu0 0.0
      %6551 = vmatprep.subr.mxu0 0.0
      %6552 = vmatpush1.msra.mxu0 0.0
      %6553 = vmatprep.subr.mxu0 0.0
      %6554 = vmatpush1.msra.mxu0 0.0
      %6555 = vmatprep.subr.mxu0 0.0
      %6556 = vmatpush1.msra.mxu0 0.0
      %6557 = vmatprep.subr.mxu0 0.0
      %6558 = vmatpush1.msra.mxu0 0.0
      %6559 = vmatprep.subr.mxu0 0.0
      %6560 = vmatpush1.msra.mxu0 0.0
      %6561 = vmatprep.subr.mxu0 0.0
      %6562 = vmatpush1.msra.mxu0 0.0
      %6563 = vmatprep.subr.mxu0 0.0
      %6564 = vmatpush1.msra.mxu0 0.0
      %6565 = vmatprep.subr.mxu0 0.0
      %6566 = vmatpush1.msra.mxu0 0.0
      %6567 = vmatprep.subr.mxu0 0.0
      %6568 = vmatpush1.msra.mxu0 0.0
      %6569 = vmatprep.subr.mxu0 0.0
      %6570 = vmatpush1.msra.mxu0 0.0
      %6571 = vmatprep.subr.mxu0 0.0
      %6572 = vmatpush1.msra.mxu0 0.0
      %6573 = vmatprep.subr.mxu0 0.0
      %6574 = vmatpush1.msra.mxu0 0.0
      %6575 = vmatprep.subr.mxu0 0.0
      %6576 = vmatpush1.msra.mxu0 0.0
      %6577 = vmatprep.subr.mxu0 0.0
      %6578 = vmatpush1.msra.mxu0 0.0
      %6579 = vmatprep.subr.mxu0 0.0
      %6580 = vmatpush1.msra.mxu0 0.0
      %6581 = vmatprep.subr.mxu0 0.0
      %6582 = vmatpush1.msra.mxu0 0.0
      %6583 = vmatprep.subr.mxu0 0.0
      %6584 = vmatpush1.msra.mxu0 0.0
      %6585 = vmatprep.mubr.f32.mxu0 0.0
      %6586 = vmatmul.mubr.f32.gmra.mrb[0].mxu0 %v6513
      %v6587 = vpop.f32.mrb[0].mxu0
      %v6588 = vadd.f32 0.0, %v6587
      %v6589 = vpop.f32.mrb[0].mxu0
      %6590 = vmatprep.mubr.f32.mxu0 0.0
      %6591 = vmatmul.mubr.f32.gmra.mrb[0].mxu0 %v6516
      %v6592 = vpop.f32.mrb[0].mxu0
      %v6593 = vadd.f32 0.0, %v6592
      %v6594 = vpop.f32.mrb[0].mxu0
      %6595 = vdwg.mxu0
      %v6597 = vsel %vm6342, %v6332, 0
      %v6600 = vsel %vm6342, %v6333, 0
      %v6603 = vsel %vm6349, %v6309, 0
      %6605 = vmatprep.subr.mxu0 0.0
      %6606 = vmatpush1.msra.mxu0 %v6306
      %6607 = vmatprep.subr.mxu0 0.0
      %6608 = vmatpush1.msra.mxu0 %v6307
      %6609 = vmatprep.subr.mxu0 0.0
      %6610 = vmatpush1.msra.mxu0 %v6308
      %6611 = vmatprep.subr.mxu0 0.0
      %6612 = vmatpush1.msra.mxu0 %v6603
      %6613 = vmatprep.subr.mxu0 0.0
      %6614 = vmatpush1.msra.mxu0 0.0
      %6615 = vmatprep.subr.mxu0 0.0
      %6616 = vmatpush1.msra.mxu0 0.0
      %6617 = vmatprep.subr.mxu0 0.0
      %6618 = vmatpush1.msra.mxu0 0.0
      %6619 = vmatprep.subr.mxu0 0.0
      %6620 = vmatpush1.msra.mxu0 0.0
      %6621 = vmatprep.subr.mxu0 0.0
      %6622 = vmatpush1.msra.mxu0 0.0
      %6623 = vmatprep.subr.mxu0 0.0
      %6624 = vmatpush1.msra.mxu0 0.0
      %6625 = vmatprep.subr.mxu0 0.0
      %6626 = vmatpush1.msra.mxu0 0.0
      %6627 = vmatprep.subr.mxu0 0.0
      %6628 = vmatpush1.msra.mxu0 0.0
      %6629 = vmatprep.subr.mxu0 0.0
      %6630 = vmatpush1.msra.mxu0 0.0
      %6631 = vmatprep.subr.mxu0 0.0
      %6632 = vmatpush1.msra.mxu0 0.0
      %6633 = vmatprep.subr.mxu0 0.0
      %6634 = vmatpush1.msra.mxu0 0.0
      %6635 = vmatprep.subr.mxu0 0.0
      %6636 = vmatpush1.msra.mxu0 0.0
      %6637 = vmatprep.subr.mxu0 0.0
      %6638 = vmatpush1.msra.mxu0 0.0
      %6639 = vmatprep.subr.mxu0 0.0
      %6640 = vmatpush1.msra.mxu0 0.0
      %6641 = vmatprep.subr.mxu0 0.0
      %6642 = vmatpush1.msra.mxu0 0.0
      %6643 = vmatprep.subr.mxu0 0.0
      %6644 = vmatpush1.msra.mxu0 0.0
      %6645 = vmatprep.subr.mxu0 0.0
      %6646 = vmatpush1.msra.mxu0 0.0
      %6647 = vmatprep.subr.mxu0 0.0
      %6648 = vmatpush1.msra.mxu0 0.0
      %6649 = vmatprep.subr.mxu0 0.0
      %6650 = vmatpush1.msra.mxu0 0.0
      %6651 = vmatprep.subr.mxu0 0.0
      %6652 = vmatpush1.msra.mxu0 0.0
      %6653 = vmatprep.subr.mxu0 0.0
      %6654 = vmatpush1.msra.mxu0 0.0
      %6655 = vmatprep.subr.mxu0 0.0
      %6656 = vmatpush1.msra.mxu0 0.0
      %6657 = vmatprep.subr.mxu0 0.0
      %6658 = vmatpush1.msra.mxu0 0.0
      %6659 = vmatprep.subr.mxu0 0.0
      %6660 = vmatpush1.msra.mxu0 0.0
      %6661 = vmatprep.subr.mxu0 0.0
      %6662 = vmatpush1.msra.mxu0 0.0
      %6663 = vmatprep.subr.mxu0 0.0
      %6664 = vmatpush1.msra.mxu0 0.0
      %6665 = vmatprep.subr.mxu0 0.0
      %6666 = vmatpush1.msra.mxu0 0.0
      %6667 = vmatprep.subr.mxu0 0.0
      %6668 = vmatpush1.msra.mxu0 0.0
      %6669 = vmatprep.mubr.f32.mxu0 0.0
      %6670 = vmatmul.mubr.f32.gmra.mrb[0].mxu0 %v6597
      %v6671 = vpop.f32.mrb[0].mxu0
      %v6672 = vadd.f32 0.0, %v6671
      %v6673 = vpop.f32.mrb[0].mxu0
      %6674 = vmatprep.mubr.f32.mxu0 0.0
      %6675 = vmatmul.mubr.f32.gmra.mrb[0].mxu0 %v6600
      %v6676 = vpop.f32.mrb[0].mxu0
      %v6677 = vadd.f32 0.0, %v6676
      %v6678 = vpop.f32.mrb[0].mxu0
      %6679 = vdwg.mxu0
      %v6681 = vsel %vm6342, %v6334, 0
      %v6684 = vsel %vm6342, %v6335, 0
      %v6687 = vsel %vm6349, %v6313, 0
      %6689 = vmatprep.subr.mxu0 0.0
      %6690 = vmatpush1.msra.mxu0 %v6310
      %6691 = vmatprep.subr.mxu0 0.0
      %6692 = vmatpush1.msra.mxu0 %v6311
      %6693 = vmatprep.subr.mxu0 0.0
      %6694 = vmatpush1.msra.mxu0 %v6312
      %6695 = vmatprep.subr.mxu0 0.0
      %6696 = vmatpush1.msra.mxu0 %v6687
      %6697 = vmatprep.subr.mxu0 0.0
      %6698 = vmatpush1.msra.mxu0 0.0
      %6699 = vmatprep.subr.mxu0 0.0
      %6700 = vmatpush1.msra.mxu0 0.0
      %6701 = vmatprep.subr.mxu0 0.0
      %6702 = vmatpush1.msra.mxu0 0.0
      %6703 = vmatprep.subr.mxu0 0.0
      %6704 = vmatpush1.msra.mxu0 0.0
      %6705 = vmatprep.subr.mxu0 0.0
      %6706 = vmatpush1.msra.mxu0 0.0
      %6707 = vmatprep.subr.mxu0 0.0
      %6708 = vmatpush1.msra.mxu0 0.0
      %6709 = vmatprep.subr.mxu0 0.0
      %6710 = vmatpush1.msra.mxu0 0.0
      %6711 = vmatprep.subr.mxu0 0.0
      %6712 = vmatpush1.msra.mxu0 0.0
      %6713 = vmatprep.subr.mxu0 0.0
      %6714 = vmatpush1.msra.mxu0 0.0
      %6715 = vmatprep.subr.mxu0 0.0
      %6716 = vmatpush1.msra.mxu0 0.0
      %6717 = vmatprep.subr.mxu0 0.0
      %6718 = vmatpush1.msra.mxu0 0.0
      %6719 = vmatprep.subr.mxu0 0.0
      %6720 = vmatpush1.msra.mxu0 0.0
      %6721 = vmatprep.subr.mxu0 0.0
      %6722 = vmatpush1.msra.mxu0 0.0
      %6723 = vmatprep.subr.mxu0 0.0
      %6724 = vmatpush1.msra.mxu0 0.0
      %6725 = vmatprep.subr.mxu0 0.0
      %6726 = vmatpush1.msra.mxu0 0.0
      %6727 = vmatprep.subr.mxu0 0.0
      %6728 = vmatpush1.msra.mxu0 0.0
      %6729 = vmatprep.subr.mxu0 0.0
      %6730 = vmatpush1.msra.mxu0 0.0
      %6731 = vmatprep.subr.mxu0 0.0
      %6732 = vmatpush1.msra.mxu0 0.0
      %6733 = vmatprep.subr.mxu0 0.0
      %6734 = vmatpush1.msra.mxu0 0.0
      %6735 = vmatprep.subr.mxu0 0.0
      %6736 = vmatpush1.msra.mxu0 0.0
      %6737 = vmatprep.subr.mxu0 0.0
      %6738 = vmatpush1.msra.mxu0 0.0
      %6739 = vmatprep.subr.mxu0 0.0
      %6740 = vmatpush1.msra.mxu0 0.0
      %6741 = vmatprep.subr.mxu0 0.0
      %6742 = vmatpush1.msra.mxu0 0.0
      %6743 = vmatprep.subr.mxu0 0.0
      %6744 = vmatpush1.msra.mxu0 0.0
      %6745 = vmatprep.subr.mxu0 0.0
      %6746 = vmatpush1.msra.mxu0 0.0
      %6747 = vmatprep.subr.mxu0 0.0
      %6748 = vmatpush1.msra.mxu0 0.0
      %6749 = vmatprep.subr.mxu0 0.0
      %6750 = vmatpush1.msra.mxu0 0.0
      %6751 = vmatprep.subr.mxu0 0.0
      %6752 = vmatpush1.msra.mxu0 0.0
      %6753 = vmatprep.mubr.f32.mxu0 0.0
      %6754 = vmatmul.mubr.f32.gmra.mrb[0].mxu0 %v6681
      %v6755 = vpop.f32.mrb[0].mxu0
      %v6756 = vadd.f32 0.0, %v6755
      %v6757 = vpop.f32.mrb[0].mxu0
      %6758 = vmatprep.mubr.f32.mxu0 0.0
      %6759 = vmatmul.mubr.f32.gmra.mrb[0].mxu0 %v6684
      %v6760 = vpop.f32.mrb[0].mxu0
      %v6761 = vadd.f32 0.0, %v6760
      %v6762 = vpop.f32.mrb[0].mxu0
      %6763 = vdwg.mxu0
      %v6765 = vsel %vm6342, %v6336, 0
      %v6768 = vsel %vm6342, %v6337, 0
      %v6771 = vsel %vm6349, %v6317, 0
      %6773 = vmatprep.subr.mxu0 0.0
      %6774 = vmatpush1.msra.mxu0 %v6314
      %6775 = vmatprep.subr.mxu0 0.0
      %6776 = vmatpush1.msra.mxu0 %v6315
      %6777 = vmatprep.subr.mxu0 0.0
      %6778 = vmatpush1.msra.mxu0 %v6316
      %6779 = vmatprep.subr.mxu0 0.0
      %6780 = vmatpush1.msra.mxu0 %v6771
      %6781 = vmatprep.subr.mxu0 0.0
      %6782 = vmatpush1.msra.mxu0 0.0
      %6783 = vmatprep.subr.mxu0 0.0
      %6784 = vmatpush1.msra.mxu0 0.0
      %6785 = vmatprep.subr.mxu0 0.0
      %6786 = vmatpush1.msra.mxu0 0.0
      %6787 = vmatprep.subr.mxu0 0.0
      %6788 = vmatpush1.msra.mxu0 0.0
      %6789 = vmatprep.subr.mxu0 0.0
      %6790 = vmatpush1.msra.mxu0 0.0
      %6791 = vmatprep.subr.mxu0 0.0
      %6792 = vmatpush1.msra.mxu0 0.0
      %6793 = vmatprep.subr.mxu0 0.0
      %6794 = vmatpush1.msra.mxu0 0.0
      %6795 = vmatprep.subr.mxu0 0.0
      %6796 = vmatpush1.msra.mxu0 0.0
      %6797 = vmatprep.subr.mxu0 0.0
      %6798 = vmatpush1.msra.mxu0 0.0
      %6799 = vmatprep.subr.mxu0 0.0
      %6800 = vmatpush1.msra.mxu0 0.0
      %6801 = vmatprep.subr.mxu0 0.0
      %6802 = vmatpush1.msra.mxu0 0.0
      %6803 = vmatprep.subr.mxu0 0.0
      %6804 = vmatpush1.msra.mxu0 0.0
      %6805 = vmatprep.subr.mxu0 0.0
      %6806 = vmatpush1.msra.mxu0 0.0
      %6807 = vmatprep.subr.mxu0 0.0
      %6808 = vmatpush1.msra.mxu0 0.0
      %6809 = vmatprep.subr.mxu0 0.0
      %6810 = vmatpush1.msra.mxu0 0.0
      %6811 = vmatprep.subr.mxu0 0.0
      %6812 = vmatpush1.msra.mxu0 0.0
      %6813 = vmatprep.subr.mxu0 0.0
      %6814 = vmatpush1.msra.mxu0 0.0
      %6815 = vmatprep.subr.mxu0 0.0
      %6816 = vmatpush1.msra.mxu0 0.0
      %6817 = vmatprep.subr.mxu0 0.0
      %6818 = vmatpush1.msra.mxu0 0.0
      %6819 = vmatprep.subr.mxu0 0.0
      %6820 = vmatpush1.msra.mxu0 0.0
      %6821 = vmatprep.subr.mxu0 0.0
      %6822 = vmatpush1.msra.mxu0 0.0
      %6823 = vmatprep.subr.mxu0 0.0
      %6824 = vmatpush1.msra.mxu0 0.0
      %6825 = vmatprep.subr.mxu0 0.0
      %6826 = vmatpush1.msra.mxu0 0.0
      %6827 = vmatprep.subr.mxu0 0.0
      %6828 = vmatpush1.msra.mxu0 0.0
      %6829 = vmatprep.subr.mxu0 0.0
      %6830 = vmatpush1.msra.mxu0 0.0
      %6831 = vmatprep.subr.mxu0 0.0
      %6832 = vmatpush1.msra.mxu0 0.0
      %6833 = vmatprep.subr.mxu0 0.0
      %6834 = vmatpush1.msra.mxu0 0.0
      %6835 = vmatprep.subr.mxu0 0.0
      %6836 = vmatpush1.msra.mxu0 0.0
      %6837 = vmatprep.mubr.f32.mxu0 0.0
      %6838 = vmatmul.mubr.f32.gmra.mrb[0].mxu0 %v6765
      %v6839 = vpop.f32.mrb[0].mxu0
      %v6840 = vadd.f32 0.0, %v6839
      %v6841 = vpop.f32.mrb[0].mxu0
      %6842 = vmatprep.mubr.f32.mxu0 0.0
      %6843 = vmatmul.mubr.f32.gmra.mrb[0].mxu0 %v6768
      %v6844 = vpop.f32.mrb[0].mxu0
      %v6845 = vadd.f32 0.0, %v6844
      %v6846 = vpop.f32.mrb[0].mxu0
      %6847 = vdwg.mxu0
      %v6849 = vsel %vm6342, %v6338, 0
      %v6852 = vsel %vm6342, %v6339, 0
      %v6855 = vsel %vm6349, %v6321, 0
      %6857 = vmatprep.subr.mxu0 0.0
      %6858 = vmatpush1.msra.mxu0 %v6318
      %6859 = vmatprep.subr.mxu0 0.0
      %6860 = vmatpush1.msra.mxu0 %v6319
      %6861 = vmatprep.subr.mxu0 0.0
      %6862 = vmatpush1.msra.mxu0 %v6320
      %6863 = vmatprep.subr.mxu0 0.0
      %6864 = vmatpush1.msra.mxu0 %v6855
      %6865 = vmatprep.subr.mxu0 0.0
      %6866 = vmatpush1.msra.mxu0 0.0
      %6867 = vmatprep.subr.mxu0 0.0
      %6868 = vmatpush1.msra.mxu0 0.0
      %6869 = vmatprep.subr.mxu0 0.0
      %6870 = vmatpush1.msra.mxu0 0.0
      %6871 = vmatprep.subr.mxu0 0.0
      %6872 = vmatpush1.msra.mxu0 0.0
      %6873 = vmatprep.subr.mxu0 0.0
      %6874 = vmatpush1.msra.mxu0 0.0
      %6875 = vmatprep.subr.mxu0 0.0
      %6876 = vmatpush1.msra.mxu0 0.0
      %6877 = vmatprep.subr.mxu0 0.0
      %6878 = vmatpush1.msra.mxu0 0.0
      %6879 = vmatprep.subr.mxu0 0.0
      %6880 = vmatpush1.msra.mxu0 0.0
      %6881 = vmatprep.subr.mxu0 0.0
      %6882 = vmatpush1.msra.mxu0 0.0
      %6883 = vmatprep.subr.mxu0 0.0
      %6884 = vmatpush1.msra.mxu0 0.0
      %6885 = vmatprep.subr.mxu0 0.0
      %6886 = vmatpush1.msra.mxu0 0.0
      %6887 = vmatprep.subr.mxu0 0.0
      %6888 = vmatpush1.msra.mxu0 0.0
      %6889 = vmatprep.subr.mxu0 0.0
      %6890 = vmatpush1.msra.mxu0 0.0
      %6891 = vmatprep.subr.mxu0 0.0
      %6892 = vmatpush1.msra.mxu0 0.0
      %6893 = vmatprep.subr.mxu0 0.0
      %6894 = vmatpush1.msra.mxu0 0.0
      %6895 = vmatprep.subr.mxu0 0.0
      %6896 = vmatpush1.msra.mxu0 0.0
      %6897 = vmatprep.subr.mxu0 0.0
      %6898 = vmatpush1.msra.mxu0 0.0
      %6899 = vmatprep.subr.mxu0 0.0
      %6900 = vmatpush1.msra.mxu0 0.0
      %6901 = vmatprep.subr.mxu0 0.0
      %6902 = vmatpush1.msra.mxu0 0.0
      %6903 = vmatprep.subr.mxu0 0.0
      %6904 = vmatpush1.msra.mxu0 0.0
      %6905 = vmatprep.subr.mxu0 0.0
      %6906 = vmatpush1.msra.mxu0 0.0
      %6907 = vmatprep.subr.mxu0 0.0
      %6908 = vmatpush1.msra.mxu0 0.0
      %6909 = vmatprep.subr.mxu0 0.0
      %6910 = vmatpush1.msra.mxu0 0.0
      %6911 = vmatprep.subr.mxu0 0.0
      %6912 = vmatpush1.msra.mxu0 0.0
      %6913 = vmatprep.subr.mxu0 0.0
      %6914 = vmatpush1.msra.mxu0 0.0
      %6915 = vmatprep.subr.mxu0 0.0
      %6916 = vmatpush1.msra.mxu0 0.0
      %6917 = vmatprep.subr.mxu0 0.0
      %6918 = vmatpush1.msra.mxu0 0.0
      %6919 = vmatprep.subr.mxu0 0.0
      %6920 = vmatpush1.msra.mxu0 0.0
      %6921 = vmatprep.mubr.f32.mxu0 0.0
      %6922 = vmatmul.mubr.f32.gmra.mrb[0].mxu0 %v6849
      %v6923 = vpop.f32.mrb[0].mxu0
      %v6924 = vadd.f32 0.0, %v6923
      %v6925 = vpop.f32.mrb[0].mxu0
      %6926 = vmatprep.mubr.f32.mxu0 0.0
      %6927 = vmatmul.mubr.f32.gmra.mrb[0].mxu0 %v6852
      %v6928 = vpop.f32.mrb[0].mxu0
      %v6929 = vadd.f32 0.0, %v6928
      %v6930 = vpop.f32.mrb[0].mxu0
      %6931 = vdwg.mxu0
      %v6933 = vsel %vm6342, %v6340, 0
      %v6936 = vsel %vm6342, %v6341, 0
      %v6939 = vsel %vm6349, %v6325, 0
      %6941 = vmatprep.subr.mxu0 0.0
      %6942 = vmatpush1.msra.mxu0 %v6322
      %6943 = vmatprep.subr.mxu0 0.0
      %6944 = vmatpush1.msra.mxu0 %v6323
      %6945 = vmatprep.subr.mxu0 0.0
      %6946 = vmatpush1.msra.mxu0 %v6324
      %6947 = vmatprep.subr.mxu0 0.0
      %6948 = vmatpush1.msra.mxu0 %v6939
      %6949 = vmatprep.subr.mxu0 0.0
      %6950 = vmatpush1.msra.mxu0 0.0
      %6951 = vmatprep.subr.mxu0 0.0
      %6952 = vmatpush1.msra.mxu0 0.0
      %6953 = vmatprep.subr.mxu0 0.0
      %6954 = vmatpush1.msra.mxu0 0.0
      %6955 = vmatprep.subr.mxu0 0.0
      %6956 = vmatpush1.msra.mxu0 0.0
      %6957 = vmatprep.subr.mxu0 0.0
      %6958 = vmatpush1.msra.mxu0 0.0
      %6959 = vmatprep.subr.mxu0 0.0
      %6960 = vmatpush1.msra.mxu0 0.0
      %6961 = vmatprep.subr.mxu0 0.0
      %6962 = vmatpush1.msra.mxu0 0.0
      %6963 = vmatprep.subr.mxu0 0.0
      %6964 = vmatpush1.msra.mxu0 0.0
      %6965 = vmatprep.subr.mxu0 0.0
      %6966 = vmatpush1.msra.mxu0 0.0
      %6967 = vmatprep.subr.mxu0 0.0
      %6968 = vmatpush1.msra.mxu0 0.0
      %6969 = vmatprep.subr.mxu0 0.0
      %6970 = vmatpush1.msra.mxu0 0.0
      %6971 = vmatprep.subr.mxu0 0.0
      %6972 = vmatpush1.msra.mxu0 0.0
      %6973 = vmatprep.subr.mxu0 0.0
      %6974 = vmatpush1.msra.mxu0 0.0
      %6975 = vmatprep.subr.mxu0 0.0
      %6976 = vmatpush1.msra.mxu0 0.0
      %6977 = vmatprep.subr.mxu0 0.0
      %6978 = vmatpush1.msra.mxu0 0.0
      %6979 = vmatprep.subr.mxu0 0.0
      %6980 = vmatpush1.msra.mxu0 0.0
      %6981 = vmatprep.subr.mxu0 0.0
      %6982 = vmatpush1.msra.mxu0 0.0
      %6983 = vmatprep.subr.mxu0 0.0
      %6984 = vmatpush1.msra.mxu0 0.0
      %6985 = vmatprep.subr.mxu0 0.0
      %6986 = vmatpush1.msra.mxu0 0.0
      %6987 = vmatprep.subr.mxu0 0.0
      %6988 = vmatpush1.msra.mxu0 0.0
      %6989 = vmatprep.subr.mxu0 0.0
      %6990 = vmatpush1.msra.mxu0 0.0
      %6991 = vmatprep.subr.mxu0 0.0
      %6992 = vmatpush1.msra.mxu0 0.0
      %6993 = vmatprep.subr.mxu0 0.0
      %6994 = vmatpush1.msra.mxu0 0.0
      %6995 = vmatprep.subr.mxu0 0.0
      %6996 = vmatpush1.msra.mxu0 0.0
      %6997 = vmatprep.subr.mxu0 0.0
      %6998 = vmatpush1.msra.mxu0 0.0
      %6999 = vmatprep.subr.mxu0 0.0
      %7000 = vmatpush1.msra.mxu0 0.0
      %7001 = vmatprep.subr.mxu0 0.0
      %7002 = vmatpush1.msra.mxu0 0.0
      %7003 = vmatprep.subr.mxu0 0.0
      %7004 = vmatpush1.msra.mxu0 0.0
      %7005 = vmatprep.mubr.f32.mxu0 0.0
      %7006 = vmatmul.mubr.f32.gmra.mrb[0].mxu0 %v6933
      %v7007 = vpop.f32.mrb[0].mxu0
      %v7008 = vadd.f32 0.0, %v7007
      %v7009 = vpop.f32.mrb[0].mxu0
      %7010 = vmatprep.mubr.f32.mxu0 0.0
      %7011 = vmatmul.mubr.f32.gmra.mrb[0].mxu0 %v6936
      %v7012 = vpop.f32.mrb[0].mxu0
      %v7013 = vadd.f32 0.0, %v7012
      %v7014 = vpop.f32.mrb[0].mxu0
      %7015 = vdwg.mxu0
      %v7016 = vld [vmem:[%s5] sm:$0xff]
      %v7017 = vld [vmem:[%s5 + $0x8] sm:$0xff]
      %v7018 = vld [vmem:[%s5 + $0x10] sm:$0xff]
      %v7019 = vld [vmem:[%s5 + $0x18] sm:$0xff]
      %v7020 = vld [vmem:[%s5 + $0x20] sm:$0xff]
      %v7021 = vld [vmem:[%s5 + $0x28] sm:$0xff]
      %v7022 = vld [vmem:[%s5 + $0x30] sm:$0xff]
      %v7023 = vld [vmem:[%s5 + $0x38] sm:$0xff]
      %v7024 = vld [vmem:[%s5 + $0x40] sm:$0xff]
      %v7025 = vld [vmem:[%s5 + $0x48] sm:$0xff]
      %v7026 = vld [vmem:[%s5 + $0x50] sm:$0xff]
      %v7027 = vld [vmem:[%s5 + $0x58] sm:$0xff]
      %v7028 = vld [vmem:[%s5 + $0x60] sm:$0xff]
      %v7029 = vld [vmem:[%s5 + $0x68] sm:$0xff]
      %v7030 = vld [vmem:[%s5 + $0x70] sm:$0xff]
      %v7031 = vld [vmem:[%s5 + $0x78] sm:$0xff]
      %v7032 = vld [vmem:[%s5 + $0x80] sm:$0xff]
      %v7033 = vld [vmem:[%s5 + $0x88] sm:$0xff]
      %v7034 = vld [vmem:[%s5 + $0x90] sm:$0xff]
      %v7035 = vld [vmem:[%s5 + $0x98] sm:$0xff]
      %v7036 = vld [vmem:[%s5 + $0xa0] sm:$0xf]
      %v7037 = vld [vmem:[%s5 + $0xa8] sm:$0xf]
      %s7038 = scalar_lea.vmem %s5, 176
      %v7039 = vld [vmem:[%s7038] sm:$0xff]
      %v7040 = vld [vmem:[%s7038 + $0x8] sm:$0xff]
      %v7041 = vld [vmem:[%s7038 + $0x10] sm:$0xff]
      %v7042 = vld [vmem:[%s7038 + $0x18] sm:$0xff]
      %v7043 = vld [vmem:[%s7038 + $0x20] sm:$0xff]
      %v7044 = vld [vmem:[%s7038 + $0x28] sm:$0xff]
      %v7045 = vld [vmem:[%s7038 + $0x30] sm:$0xff]
      %v7046 = vld [vmem:[%s7038 + $0x38] sm:$0xff]
      %v7047 = vld [vmem:[%s7038 + $0x40] sm:$0xff]
      %v7048 = vld [vmem:[%s7038 + $0x48] sm:$0xff]
      %v7049 = vld [vmem:[%s7038 + $0x50] sm:$0xff]
      %v7050 = vld [vmem:[%s7038 + $0x58] sm:$0xff]
      %v7051 = vld [vmem:[%s7038 + $0x60] sm:$0xff]
      %v7052 = vld [vmem:[%s7038 + $0x68] sm:$0xff]
      %v7053 = vld [vmem:[%s7038 + $0x70] sm:$0xff]
      %v7054 = vld [vmem:[%s7038 + $0x78] sm:$0xff]
      %v7055 = vld [vmem:[%s7038 + $0x80] sm:$0xff]
      %v7056 = vld [vmem:[%s7038 + $0x88] sm:$0xff]
      %v7057 = vld [vmem:[%s7038 + $0x90] sm:$0xff]
      %v7058 = vld [vmem:[%s7038 + $0x98] sm:$0xff]
      %v7059 = vld [vmem:[%s7038 + $0xa0] sm:$0xf]
      %v7060 = vld [vmem:[%s7038 + $0xa8] sm:$0xf]
      %v7063 = vrot.slane %v6420, 1
      %v7064 = vrot.slane %v6425, 1
      %v7065 = vsel %vm524, %v7063, %v7064
      %vm7066 = vcmask 687104
      %v7067 = vsel %vm7066, %v7065, 0
      %v7069 = vsel %vm7066, %v7064, 0
      %v7072 = vsel %vm3983, %v7059, 0
      %v7075 = vsel %vm3983, %v7060, 0
      %7077 = vmatprep.subr.mxu0 %v7040
      %7078 = vmatpush1.msra.mxu0 %v7039
      %7079 = vmatprep.subr.mxu0 %v7042
      %7080 = vmatpush1.msra.mxu0 %v7041
      %7081 = vmatprep.subr.mxu0 %v7044
      %7082 = vmatpush1.msra.mxu0 %v7043
      %7083 = vmatprep.subr.mxu0 %v7046
      %7084 = vmatpush1.msra.mxu0 %v7045
      %7085 = vmatprep.subr.mxu0 %v7048
      %7086 = vmatpush1.msra.mxu0 %v7047
      %7087 = vmatprep.subr.mxu0 %v7050
      %7088 = vmatpush1.msra.mxu0 %v7049
      %7089 = vmatprep.subr.mxu0 %v7052
      %7090 = vmatpush1.msra.mxu0 %v7051
      %7091 = vmatprep.subr.mxu0 %v7054
      %7092 = vmatpush1.msra.mxu0 %v7053
      %7093 = vmatprep.subr.mxu0 %v7056
      %7094 = vmatpush1.msra.mxu0 %v7055
      %7095 = vmatprep.subr.mxu0 %v7058
      %7096 = vmatpush1.msra.mxu0 %v7057
      %7097 = vmatprep.subr.mxu0 %v7075
      %7098 = vmatpush1.msra.mxu0 %v7072
      %7099 = vmatprep.subr.mxu0 0.0
      %7100 = vmatpush1.msra.mxu0 0.0
      %7101 = vmatprep.subr.mxu0 0.0
      %7102 = vmatpush1.msra.mxu0 0.0
      %7103 = vmatprep.subr.mxu0 0.0
      %7104 = vmatpush1.msra.mxu0 0.0
      %7105 = vmatprep.subr.mxu0 0.0
      %7106 = vmatpush1.msra.mxu0 0.0
      %7107 = vmatprep.subr.mxu0 0.0
      %7108 = vmatpush1.msra.mxu0 0.0
      %7109 = vmatprep.subr.mxu0 0.0
      %7110 = vmatpush1.msra.mxu0 0.0
      %7111 = vmatprep.subr.mxu0 0.0
      %7112 = vmatpush1.msra.mxu0 0.0
      %7113 = vmatprep.subr.mxu0 0.0
      %7114 = vmatpush1.msra.mxu0 0.0
      %7115 = vmatprep.subr.mxu0 0.0
      %7116 = vmatpush1.msra.mxu0 0.0
      %7117 = vmatprep.subr.mxu0 0.0
      %7118 = vmatpush1.msra.mxu0 0.0
      %7119 = vmatprep.subr.mxu0 0.0
      %7120 = vmatpush1.msra.mxu0 0.0
      %7121 = vmatprep.subr.mxu0 0.0
      %7122 = vmatpush1.msra.mxu0 0.0
      %7123 = vmatprep.subr.mxu0 0.0
      %7124 = vmatpush1.msra.mxu0 0.0
      %7125 = vmatprep.subr.mxu0 0.0
      %7126 = vmatpush1.msra.mxu0 0.0
      %7127 = vmatprep.subr.mxu0 0.0
      %7128 = vmatpush1.msra.mxu0 0.0
      %7129 = vmatprep.subr.mxu0 0.0
      %7130 = vmatpush1.msra.mxu0 0.0
      %7131 = vmatprep.subr.mxu0 0.0
      %7132 = vmatpush1.msra.mxu0 0.0
      %7133 = vmatprep.subr.mxu0 0.0
      %7134 = vmatpush1.msra.mxu0 0.0
      %7135 = vmatprep.subr.mxu0 0.0
      %7136 = vmatpush1.msra.mxu0 0.0
      %7137 = vmatprep.subr.mxu0 0.0
      %7138 = vmatpush1.msra.mxu0 0.0
      %7139 = vmatprep.subr.mxu0 0.0
      %7140 = vmatpush1.msra.mxu0 0.0
      %7141 = vmatprep.mubr.f32.mxu0 0.0
      %7142 = vmatmul.mubr.f32.gmra.mrb[0].mxu0 %v7067
      %v7143 = vpop.f32.mrb[0].mxu0
      %v7144 = vadd.f32 0.0, %v7143
      %v7145 = vpop.f32.mrb[0].mxu0
      %v7146 = vadd.f32 0.0, %v7145
      %7147 = vmatprep.mubr.f32.mxu0 0.0
      %7148 = vmatmul.mubr.f32.gmra.mrb[0].mxu0 %v7069
      %v7149 = vpop.f32.mrb[0].mxu0
      %v7150 = vadd.f32 0.0, %v7149
      %v7151 = vpop.f32.mrb[0].mxu0
      %v7152 = vadd.f32 0.0, %v7151
      %7153 = vdwg.mxu0
      %v7156 = vrot.slane %v6504, 1
      %v7157 = vrot.slane %v6509, 1
      %v7158 = vsel %vm524, %v7156, %v7157
      %v7159 = vsel %vm7066, %v7158, 0
      %v7161 = vsel %vm7066, %v7157, 0
      %7163 = vmatprep.subr.mxu0 %v7040
      %7164 = vmatpush1.msra.mxu0 %v7039
      %7165 = vmatprep.subr.mxu0 %v7042
      %7166 = vmatpush1.msra.mxu0 %v7041
      %7167 = vmatprep.subr.mxu0 %v7044
      %7168 = vmatpush1.msra.mxu0 %v7043
      %7169 = vmatprep.subr.mxu0 %v7046
      %7170 = vmatpush1.msra.mxu0 %v7045
      %7171 = vmatprep.subr.mxu0 %v7048
      %7172 = vmatpush1.msra.mxu0 %v7047
      %7173 = vmatprep.subr.mxu0 %v7050
      %7174 = vmatpush1.msra.mxu0 %v7049
      %7175 = vmatprep.subr.mxu0 %v7052
      %7176 = vmatpush1.msra.mxu0 %v7051
      %7177 = vmatprep.subr.mxu0 %v7054
      %7178 = vmatpush1.msra.mxu0 %v7053
      %7179 = vmatprep.subr.mxu0 %v7056
      %7180 = vmatpush1.msra.mxu0 %v7055
      %7181 = vmatprep.subr.mxu0 %v7058
      %7182 = vmatpush1.msra.mxu0 %v7057
      %7183 = vmatprep.subr.mxu0 %v7075
      %7184 = vmatpush1.msra.mxu0 %v7072
      %7185 = vmatprep.subr.mxu0 0.0
      %7186 = vmatpush1.msra.mxu0 0.0
      %7187 = vmatprep.subr.mxu0 0.0
      %7188 = vmatpush1.msra.mxu0 0.0
      %7189 = vmatprep.subr.mxu0 0.0
      %7190 = vmatpush1.msra.mxu0 0.0
      %7191 = vmatprep.subr.mxu0 0.0
      %7192 = vmatpush1.msra.mxu0 0.0
      %7193 = vmatprep.subr.mxu0 0.0
      %7194 = vmatpush1.msra.mxu0 0.0
      %7195 = vmatprep.subr.mxu0 0.0
      %7196 = vmatpush1.msra.mxu0 0.0
      %7197 = vmatprep.subr.mxu0 0.0
      %7198 = vmatpush1.msra.mxu0 0.0
      %7199 = vmatprep.subr.mxu0 0.0
      %7200 = vmatpush1.msra.mxu0 0.0
      %7201 = vmatprep.subr.mxu0 0.0
      %7202 = vmatpush1.msra.mxu0 0.0
      %7203 = vmatprep.subr.mxu0 0.0
      %7204 = vmatpush1.msra.mxu0 0.0
      %7205 = vmatprep.subr.mxu0 0.0
      %7206 = vmatpush1.msra.mxu0 0.0
      %7207 = vmatprep.subr.mxu0 0.0
      %7208 = vmatpush1.msra.mxu0 0.0
      %7209 = vmatprep.subr.mxu0 0.0
      %7210 = vmatpush1.msra.mxu0 0.0
      %7211 = vmatprep.subr.mxu0 0.0
      %7212 = vmatpush1.msra.mxu0 0.0
      %7213 = vmatprep.subr.mxu0 0.0
      %7214 = vmatpush1.msra.mxu0 0.0
      %7215 = vmatprep.subr.mxu0 0.0
      %7216 = vmatpush1.msra.mxu0 0.0
      %7217 = vmatprep.subr.mxu0 0.0
      %7218 = vmatpush1.msra.mxu0 0.0
      %7219 = vmatprep.subr.mxu0 0.0
      %7220 = vmatpush1.msra.mxu0 0.0
      %7221 = vmatprep.subr.mxu0 0.0
      %7222 = vmatpush1.msra.mxu0 0.0
      %7223 = vmatprep.subr.mxu0 0.0
      %7224 = vmatpush1.msra.mxu0 0.0
      %7225 = vmatprep.subr.mxu0 0.0
      %7226 = vmatpush1.msra.mxu0 0.0
      %7227 = vmatprep.mubr.f32.mxu0 0.0
      %7228 = vmatmul.mubr.f32.gmra.mrb[0].mxu0 %v7159
      %v7229 = vpop.f32.mrb[0].mxu0
      %v7230 = vadd.f32 0.0, %v7229
      %v7231 = vpop.f32.mrb[0].mxu0
      %v7232 = vadd.f32 0.0, %v7231
      %7233 = vmatprep.mubr.f32.mxu0 0.0
      %7234 = vmatmul.mubr.f32.gmra.mrb[0].mxu0 %v7161
      %v7235 = vpop.f32.mrb[0].mxu0
      %v7236 = vadd.f32 0.0, %v7235
      %v7237 = vpop.f32.mrb[0].mxu0
      %v7238 = vadd.f32 0.0, %v7237
      %7239 = vdwg.mxu0
      %v7242 = vrot.slane %v6588, 1
      %v7243 = vrot.slane %v6593, 1
      %v7244 = vsel %vm524, %v7242, %v7243
      %v7245 = vsel %vm7066, %v7244, 0
      %v7247 = vsel %vm7066, %v7243, 0
      %7249 = vmatprep.subr.mxu0 %v7040
      %7250 = vmatpush1.msra.mxu0 %v7039
      %7251 = vmatprep.subr.mxu0 %v7042
      %7252 = vmatpush1.msra.mxu0 %v7041
      %7253 = vmatprep.subr.mxu0 %v7044
      %7254 = vmatpush1.msra.mxu0 %v7043
      %7255 = vmatprep.subr.mxu0 %v7046
      %7256 = vmatpush1.msra.mxu0 %v7045
      %7257 = vmatprep.subr.mxu0 %v7048
      %7258 = vmatpush1.msra.mxu0 %v7047
      %7259 = vmatprep.subr.mxu0 %v7050
      %7260 = vmatpush1.msra.mxu0 %v7049
      %7261 = vmatprep.subr.mxu0 %v7052
      %7262 = vmatpush1.msra.mxu0 %v7051
      %7263 = vmatprep.subr.mxu0 %v7054
      %7264 = vmatpush1.msra.mxu0 %v7053
      %7265 = vmatprep.subr.mxu0 %v7056
      %7266 = vmatpush1.msra.mxu0 %v7055
      %7267 = vmatprep.subr.mxu0 %v7058
      %7268 = vmatpush1.msra.mxu0 %v7057
      %7269 = vmatprep.subr.mxu0 %v7075
      %7270 = vmatpush1.msra.mxu0 %v7072
      %7271 = vmatprep.subr.mxu0 0.0
      %7272 = vmatpush1.msra.mxu0 0.0
      %7273 = vmatprep.subr.mxu0 0.0
      %7274 = vmatpush1.msra.mxu0 0.0
      %7275 = vmatprep.subr.mxu0 0.0
      %7276 = vmatpush1.msra.mxu0 0.0
      %7277 = vmatprep.subr.mxu0 0.0
      %7278 = vmatpush1.msra.mxu0 0.0
      %7279 = vmatprep.subr.mxu0 0.0
      %7280 = vmatpush1.msra.mxu0 0.0
      %7281 = vmatprep.subr.mxu0 0.0
      %7282 = vmatpush1.msra.mxu0 0.0
      %7283 = vmatprep.subr.mxu0 0.0
      %7284 = vmatpush1.msra.mxu0 0.0
      %7285 = vmatprep.subr.mxu0 0.0
      %7286 = vmatpush1.msra.mxu0 0.0
      %7287 = vmatprep.subr.mxu0 0.0
      %7288 = vmatpush1.msra.mxu0 0.0
      %7289 = vmatprep.subr.mxu0 0.0
      %7290 = vmatpush1.msra.mxu0 0.0
      %7291 = vmatprep.subr.mxu0 0.0
      %7292 = vmatpush1.msra.mxu0 0.0
      %7293 = vmatprep.subr.mxu0 0.0
      %7294 = vmatpush1.msra.mxu0 0.0
      %7295 = vmatprep.subr.mxu0 0.0
      %7296 = vmatpush1.msra.mxu0 0.0
      %7297 = vmatprep.subr.mxu0 0.0
      %7298 = vmatpush1.msra.mxu0 0.0
      %7299 = vmatprep.subr.mxu0 0.0
      %7300 = vmatpush1.msra.mxu0 0.0
      %7301 = vmatprep.subr.mxu0 0.0
      %7302 = vmatpush1.msra.mxu0 0.0
      %7303 = vmatprep.subr.mxu0 0.0
      %7304 = vmatpush1.msra.mxu0 0.0
      %7305 = vmatprep.subr.mxu0 0.0
      %7306 = vmatpush1.msra.mxu0 0.0
      %7307 = vmatprep.subr.mxu0 0.0
      %7308 = vmatpush1.msra.mxu0 0.0
      %7309 = vmatprep.subr.mxu0 0.0
      %7310 = vmatpush1.msra.mxu0 0.0
      %7311 = vmatprep.subr.mxu0 0.0
      %7312 = vmatpush1.msra.mxu0 0.0
      %7313 = vmatprep.mubr.f32.mxu0 0.0
      %7314 = vmatmul.mubr.f32.gmra.mrb[0].mxu0 %v7245
      %v7315 = vpop.f32.mrb[0].mxu0
      %v7316 = vadd.f32 0.0, %v7315
      %v7317 = vpop.f32.mrb[0].mxu0
      %v7318 = vadd.f32 0.0, %v7317
      %7319 = vmatprep.mubr.f32.mxu0 0.0
      %7320 = vmatmul.mubr.f32.gmra.mrb[0].mxu0 %v7247
      %v7321 = vpop.f32.mrb[0].mxu0
      %v7322 = vadd.f32 0.0, %v7321
      %v7323 = vpop.f32.mrb[0].mxu0
      %v7324 = vadd.f32 0.0, %v7323
      %7325 = vdwg.mxu0
      %v7328 = vrot.slane %v6672, 1
      %v7329 = vrot.slane %v6677, 1
      %v7330 = vsel %vm524, %v7328, %v7329
      %v7331 = vsel %vm7066, %v7330, 0
      %v7333 = vsel %vm7066, %v7329, 0
      %7335 = vmatprep.subr.mxu0 %v7040
      %7336 = vmatpush1.msra.mxu0 %v7039
      %7337 = vmatprep.subr.mxu0 %v7042
      %7338 = vmatpush1.msra.mxu0 %v7041
      %7339 = vmatprep.subr.mxu0 %v7044
      %7340 = vmatpush1.msra.mxu0 %v7043
      %7341 = vmatprep.subr.mxu0 %v7046
      %7342 = vmatpush1.msra.mxu0 %v7045
      %7343 = vmatprep.subr.mxu0 %v7048
      %7344 = vmatpush1.msra.mxu0 %v7047
      %7345 = vmatprep.subr.mxu0 %v7050
      %7346 = vmatpush1.msra.mxu0 %v7049
      %7347 = vmatprep.subr.mxu0 %v7052
      %7348 = vmatpush1.msra.mxu0 %v7051
      %7349 = vmatprep.subr.mxu0 %v7054
      %7350 = vmatpush1.msra.mxu0 %v7053
      %7351 = vmatprep.subr.mxu0 %v7056
      %7352 = vmatpush1.msra.mxu0 %v7055
      %7353 = vmatprep.subr.mxu0 %v7058
      %7354 = vmatpush1.msra.mxu0 %v7057
      %7355 = vmatprep.subr.mxu0 %v7075
      %7356 = vmatpush1.msra.mxu0 %v7072
      %7357 = vmatprep.subr.mxu0 0.0
      %7358 = vmatpush1.msra.mxu0 0.0
      %7359 = vmatprep.subr.mxu0 0.0
      %7360 = vmatpush1.msra.mxu0 0.0
      %7361 = vmatprep.subr.mxu0 0.0
      %7362 = vmatpush1.msra.mxu0 0.0
      %7363 = vmatprep.subr.mxu0 0.0
      %7364 = vmatpush1.msra.mxu0 0.0
      %7365 = vmatprep.subr.mxu0 0.0
      %7366 = vmatpush1.msra.mxu0 0.0
      %7367 = vmatprep.subr.mxu0 0.0
      %7368 = vmatpush1.msra.mxu0 0.0
      %7369 = vmatprep.subr.mxu0 0.0
      %7370 = vmatpush1.msra.mxu0 0.0
      %7371 = vmatprep.subr.mxu0 0.0
      %7372 = vmatpush1.msra.mxu0 0.0
      %7373 = vmatprep.subr.mxu0 0.0
      %7374 = vmatpush1.msra.mxu0 0.0
      %7375 = vmatprep.subr.mxu0 0.0
      %7376 = vmatpush1.msra.mxu0 0.0
      %7377 = vmatprep.subr.mxu0 0.0
      %7378 = vmatpush1.msra.mxu0 0.0
      %7379 = vmatprep.subr.mxu0 0.0
      %7380 = vmatpush1.msra.mxu0 0.0
      %7381 = vmatprep.subr.mxu0 0.0
      %7382 = vmatpush1.msra.mxu0 0.0
      %7383 = vmatprep.subr.mxu0 0.0
      %7384 = vmatpush1.msra.mxu0 0.0
      %7385 = vmatprep.subr.mxu0 0.0
      %7386 = vmatpush1.msra.mxu0 0.0
      %7387 = vmatprep.subr.mxu0 0.0
      %7388 = vmatpush1.msra.mxu0 0.0
      %7389 = vmatprep.subr.mxu0 0.0
      %7390 = vmatpush1.msra.mxu0 0.0
      %7391 = vmatprep.subr.mxu0 0.0
      %7392 = vmatpush1.msra.mxu0 0.0
      %7393 = vmatprep.subr.mxu0 0.0
      %7394 = vmatpush1.msra.mxu0 0.0
      %7395 = vmatprep.subr.mxu0 0.0
      %7396 = vmatpush1.msra.mxu0 0.0
      %7397 = vmatprep.subr.mxu0 0.0
      %7398 = vmatpush1.msra.mxu0 0.0
      %7399 = vmatprep.mubr.f32.mxu0 0.0
      %7400 = vmatmul.mubr.f32.gmra.mrb[0].mxu0 %v7331
      %v7401 = vpop.f32.mrb[0].mxu0
      %v7402 = vadd.f32 0.0, %v7401
      %v7403 = vpop.f32.mrb[0].mxu0
      %v7404 = vadd.f32 0.0, %v7403
      %7405 = vmatprep.mubr.f32.mxu0 0.0
      %7406 = vmatmul.mubr.f32.gmra.mrb[0].mxu0 %v7333
      %v7407 = vpop.f32.mrb[0].mxu0
      %v7408 = vadd.f32 0.0, %v7407
      %v7409 = vpop.f32.mrb[0].mxu0
      %v7410 = vadd.f32 0.0, %v7409
      %7411 = vdwg.mxu0
      %v7414 = vrot.slane %v6756, 1
      %v7415 = vrot.slane %v6761, 1
      %v7416 = vsel %vm524, %v7414, %v7415
      %v7417 = vsel %vm7066, %v7416, 0
      %v7419 = vsel %vm7066, %v7415, 0
      %7421 = vmatprep.subr.mxu0 %v7040
      %7422 = vmatpush1.msra.mxu0 %v7039
      %7423 = vmatprep.subr.mxu0 %v7042
      %7424 = vmatpush1.msra.mxu0 %v7041
      %7425 = vmatprep.subr.mxu0 %v7044
      %7426 = vmatpush1.msra.mxu0 %v7043
      %7427 = vmatprep.subr.mxu0 %v7046
      %7428 = vmatpush1.msra.mxu0 %v7045
      %7429 = vmatprep.subr.mxu0 %v7048
      %7430 = vmatpush1.msra.mxu0 %v7047
      %7431 = vmatprep.subr.mxu0 %v7050
      %7432 = vmatpush1.msra.mxu0 %v7049
      %7433 = vmatprep.subr.mxu0 %v7052
      %7434 = vmatpush1.msra.mxu0 %v7051
      %7435 = vmatprep.subr.mxu0 %v7054
      %7436 = vmatpush1.msra.mxu0 %v7053
      %7437 = vmatprep.subr.mxu0 %v7056
      %7438 = vmatpush1.msra.mxu0 %v7055
      %7439 = vmatprep.subr.mxu0 %v7058
      %7440 = vmatpush1.msra.mxu0 %v7057
      %7441 = vmatprep.subr.mxu0 %v7075
      %7442 = vmatpush1.msra.mxu0 %v7072
      %7443 = vmatprep.subr.mxu0 0.0
      %7444 = vmatpush1.msra.mxu0 0.0
      %7445 = vmatprep.subr.mxu0 0.0
      %7446 = vmatpush1.msra.mxu0 0.0
      %7447 = vmatprep.subr.mxu0 0.0
      %7448 = vmatpush1.msra.mxu0 0.0
      %7449 = vmatprep.subr.mxu0 0.0
      %7450 = vmatpush1.msra.mxu0 0.0
      %7451 = vmatprep.subr.mxu0 0.0
      %7452 = vmatpush1.msra.mxu0 0.0
      %7453 = vmatprep.subr.mxu0 0.0
      %7454 = vmatpush1.msra.mxu0 0.0
      %7455 = vmatprep.subr.mxu0 0.0
      %7456 = vmatpush1.msra.mxu0 0.0
      %7457 = vmatprep.subr.mxu0 0.0
      %7458 = vmatpush1.msra.mxu0 0.0
      %7459 = vmatprep.subr.mxu0 0.0
      %7460 = vmatpush1.msra.mxu0 0.0
      %7461 = vmatprep.subr.mxu0 0.0
      %7462 = vmatpush1.msra.mxu0 0.0
      %7463 = vmatprep.subr.mxu0 0.0
      %7464 = vmatpush1.msra.mxu0 0.0
      %7465 = vmatprep.subr.mxu0 0.0
      %7466 = vmatpush1.msra.mxu0 0.0
      %7467 = vmatprep.subr.mxu0 0.0
      %7468 = vmatpush1.msra.mxu0 0.0
      %7469 = vmatprep.subr.mxu0 0.0
      %7470 = vmatpush1.msra.mxu0 0.0
      %7471 = vmatprep.subr.mxu0 0.0
      %7472 = vmatpush1.msra.mxu0 0.0
      %7473 = vmatprep.subr.mxu0 0.0
      %7474 = vmatpush1.msra.mxu0 0.0
      %7475 = vmatprep.subr.mxu0 0.0
      %7476 = vmatpush1.msra.mxu0 0.0
      %7477 = vmatprep.subr.mxu0 0.0
      %7478 = vmatpush1.msra.mxu0 0.0
      %7479 = vmatprep.subr.mxu0 0.0
      %7480 = vmatpush1.msra.mxu0 0.0
      %7481 = vmatprep.subr.mxu0 0.0
      %7482 = vmatpush1.msra.mxu0 0.0
      %7483 = vmatprep.subr.mxu0 0.0
      %7484 = vmatpush1.msra.mxu0 0.0
      %7485 = vmatprep.mubr.f32.mxu0 0.0
      %7486 = vmatmul.mubr.f32.gmra.mrb[0].mxu0 %v7417
      %v7487 = vpop.f32.mrb[0].mxu0
      %v7488 = vadd.f32 0.0, %v7487
      %v7489 = vpop.f32.mrb[0].mxu0
      %v7490 = vadd.f32 0.0, %v7489
      %7491 = vmatprep.mubr.f32.mxu0 0.0
      %7492 = vmatmul.mubr.f32.gmra.mrb[0].mxu0 %v7419
      %v7493 = vpop.f32.mrb[0].mxu0
      %v7494 = vadd.f32 0.0, %v7493
      %v7495 = vpop.f32.mrb[0].mxu0
      %v7496 = vadd.f32 0.0, %v7495
      %7497 = vdwg.mxu0
      %v7500 = vrot.slane %v6840, 1
      %v7501 = vrot.slane %v6845, 1
      %v7502 = vsel %vm524, %v7500, %v7501
      %v7503 = vsel %vm7066, %v7502, 0
      %v7505 = vsel %vm7066, %v7501, 0
      %7507 = vmatprep.subr.mxu0 %v7040
      %7508 = vmatpush1.msra.mxu0 %v7039
      %7509 = vmatprep.subr.mxu0 %v7042
      %7510 = vmatpush1.msra.mxu0 %v7041
      %7511 = vmatprep.subr.mxu0 %v7044
      %7512 = vmatpush1.msra.mxu0 %v7043
      %7513 = vmatprep.subr.mxu0 %v7046
      %7514 = vmatpush1.msra.mxu0 %v7045
      %7515 = vmatprep.subr.mxu0 %v7048
      %7516 = vmatpush1.msra.mxu0 %v7047
      %7517 = vmatprep.subr.mxu0 %v7050
      %7518 = vmatpush1.msra.mxu0 %v7049
      %7519 = vmatprep.subr.mxu0 %v7052
      %7520 = vmatpush1.msra.mxu0 %v7051
      %7521 = vmatprep.subr.mxu0 %v7054
      %7522 = vmatpush1.msra.mxu0 %v7053
      %7523 = vmatprep.subr.mxu0 %v7056
      %7524 = vmatpush1.msra.mxu0 %v7055
      %7525 = vmatprep.subr.mxu0 %v7058
      %7526 = vmatpush1.msra.mxu0 %v7057
      %7527 = vmatprep.subr.mxu0 %v7075
      %7528 = vmatpush1.msra.mxu0 %v7072
      %7529 = vmatprep.subr.mxu0 0.0
      %7530 = vmatpush1.msra.mxu0 0.0
      %7531 = vmatprep.subr.mxu0 0.0
      %7532 = vmatpush1.msra.mxu0 0.0
      %7533 = vmatprep.subr.mxu0 0.0
      %7534 = vmatpush1.msra.mxu0 0.0
      %7535 = vmatprep.subr.mxu0 0.0
      %7536 = vmatpush1.msra.mxu0 0.0
      %7537 = vmatprep.subr.mxu0 0.0
      %7538 = vmatpush1.msra.mxu0 0.0
      %7539 = vmatprep.subr.mxu0 0.0
      %7540 = vmatpush1.msra.mxu0 0.0
      %7541 = vmatprep.subr.mxu0 0.0
      %7542 = vmatpush1.msra.mxu0 0.0
      %7543 = vmatprep.subr.mxu0 0.0
      %7544 = vmatpush1.msra.mxu0 0.0
      %7545 = vmatprep.subr.mxu0 0.0
      %7546 = vmatpush1.msra.mxu0 0.0
      %7547 = vmatprep.subr.mxu0 0.0
      %7548 = vmatpush1.msra.mxu0 0.0
      %7549 = vmatprep.subr.mxu0 0.0
      %7550 = vmatpush1.msra.mxu0 0.0
      %7551 = vmatprep.subr.mxu0 0.0
      %7552 = vmatpush1.msra.mxu0 0.0
      %7553 = vmatprep.subr.mxu0 0.0
      %7554 = vmatpush1.msra.mxu0 0.0
      %7555 = vmatprep.subr.mxu0 0.0
      %7556 = vmatpush1.msra.mxu0 0.0
      %7557 = vmatprep.subr.mxu0 0.0
      %7558 = vmatpush1.msra.mxu0 0.0
      %7559 = vmatprep.subr.mxu0 0.0
      %7560 = vmatpush1.msra.mxu0 0.0
      %7561 = vmatprep.subr.mxu0 0.0
      %7562 = vmatpush1.msra.mxu0 0.0
      %7563 = vmatprep.subr.mxu0 0.0
      %7564 = vmatpush1.msra.mxu0 0.0
      %7565 = vmatprep.subr.mxu0 0.0
      %7566 = vmatpush1.msra.mxu0 0.0
      %7567 = vmatprep.subr.mxu0 0.0
      %7568 = vmatpush1.msra.mxu0 0.0
      %7569 = vmatprep.subr.mxu0 0.0
      %7570 = vmatpush1.msra.mxu0 0.0
      %7571 = vmatprep.mubr.f32.mxu0 0.0
      %7572 = vmatmul.mubr.f32.gmra.mrb[0].mxu0 %v7503
      %v7573 = vpop.f32.mrb[0].mxu0
      %v7574 = vadd.f32 0.0, %v7573
      %v7575 = vpop.f32.mrb[0].mxu0
      %v7576 = vadd.f32 0.0, %v7575
      %7577 = vmatprep.mubr.f32.mxu0 0.0
      %7578 = vmatmul.mubr.f32.gmra.mrb[0].mxu0 %v7505
      %v7579 = vpop.f32.mrb[0].mxu0
      %v7580 = vadd.f32 0.0, %v7579
      %v7581 = vpop.f32.mrb[0].mxu0
      %v7582 = vadd.f32 0.0, %v7581
      %7583 = vdwg.mxu0
      %v7586 = vrot.slane %v6924, 1
      %v7587 = vrot.slane %v6929, 1
      %v7588 = vsel %vm524, %v7586, %v7587
      %v7589 = vsel %vm7066, %v7588, 0
      %v7591 = vsel %vm7066, %v7587, 0
      %7593 = vmatprep.subr.mxu0 %v7040
      %7594 = vmatpush1.msra.mxu0 %v7039
      %7595 = vmatprep.subr.mxu0 %v7042
      %7596 = vmatpush1.msra.mxu0 %v7041
      %7597 = vmatprep.subr.mxu0 %v7044
      %7598 = vmatpush1.msra.mxu0 %v7043
      %7599 = vmatprep.subr.mxu0 %v7046
      %7600 = vmatpush1.msra.mxu0 %v7045
      %7601 = vmatprep.subr.mxu0 %v7048
      %7602 = vmatpush1.msra.mxu0 %v7047
      %7603 = vmatprep.subr.mxu0 %v7050
      %7604 = vmatpush1.msra.mxu0 %v7049
      %7605 = vmatprep.subr.mxu0 %v7052
      %7606 = vmatpush1.msra.mxu0 %v7051
      %7607 = vmatprep.subr.mxu0 %v7054
      %7608 = vmatpush1.msra.mxu0 %v7053
      %7609 = vmatprep.subr.mxu0 %v7056
      %7610 = vmatpush1.msra.mxu0 %v7055
      %7611 = vmatprep.subr.mxu0 %v7058
      %7612 = vmatpush1.msra.mxu0 %v7057
      %7613 = vmatprep.subr.mxu0 %v7075
      %7614 = vmatpush1.msra.mxu0 %v7072
      %7615 = vmatprep.subr.mxu0 0.0
      %7616 = vmatpush1.msra.mxu0 0.0
      %7617 = vmatprep.subr.mxu0 0.0
      %7618 = vmatpush1.msra.mxu0 0.0
      %7619 = vmatprep.subr.mxu0 0.0
      %7620 = vmatpush1.msra.mxu0 0.0
      %7621 = vmatprep.subr.mxu0 0.0
      %7622 = vmatpush1.msra.mxu0 0.0
      %7623 = vmatprep.subr.mxu0 0.0
      %7624 = vmatpush1.msra.mxu0 0.0
      %7625 = vmatprep.subr.mxu0 0.0
      %7626 = vmatpush1.msra.mxu0 0.0
      %7627 = vmatprep.subr.mxu0 0.0
      %7628 = vmatpush1.msra.mxu0 0.0
      %7629 = vmatprep.subr.mxu0 0.0
      %7630 = vmatpush1.msra.mxu0 0.0
      %7631 = vmatprep.subr.mxu0 0.0
      %7632 = vmatpush1.msra.mxu0 0.0
      %7633 = vmatprep.subr.mxu0 0.0
      %7634 = vmatpush1.msra.mxu0 0.0
      %7635 = vmatprep.subr.mxu0 0.0
      %7636 = vmatpush1.msra.mxu0 0.0
      %7637 = vmatprep.subr.mxu0 0.0
      %7638 = vmatpush1.msra.mxu0 0.0
      %7639 = vmatprep.subr.mxu0 0.0
      %7640 = vmatpush1.msra.mxu0 0.0
      %7641 = vmatprep.subr.mxu0 0.0
      %7642 = vmatpush1.msra.mxu0 0.0
      %7643 = vmatprep.subr.mxu0 0.0
      %7644 = vmatpush1.msra.mxu0 0.0
      %7645 = vmatprep.subr.mxu0 0.0
      %7646 = vmatpush1.msra.mxu0 0.0
      %7647 = vmatprep.subr.mxu0 0.0
      %7648 = vmatpush1.msra.mxu0 0.0
      %7649 = vmatprep.subr.mxu0 0.0
      %7650 = vmatpush1.msra.mxu0 0.0
      %7651 = vmatprep.subr.mxu0 0.0
      %7652 = vmatpush1.msra.mxu0 0.0
      %7653 = vmatprep.subr.mxu0 0.0
      %7654 = vmatpush1.msra.mxu0 0.0
      %7655 = vmatprep.subr.mxu0 0.0
      %7656 = vmatpush1.msra.mxu0 0.0
      %7657 = vmatprep.mubr.f32.mxu0 0.0
      %7658 = vmatmul.mubr.f32.gmra.mrb[0].mxu0 %v7589
      %v7659 = vpop.f32.mrb[0].mxu0
      %v7660 = vadd.f32 0.0, %v7659
      %v7661 = vpop.f32.mrb[0].mxu0
      %v7662 = vadd.f32 0.0, %v7661
      %7663 = vmatprep.mubr.f32.mxu0 0.0
      %7664 = vmatmul.mubr.f32.gmra.mrb[0].mxu0 %v7591
      %v7665 = vpop.f32.mrb[0].mxu0
      %v7666 = vadd.f32 0.0, %v7665
      %v7667 = vpop.f32.mrb[0].mxu0
      %v7668 = vadd.f32 0.0, %v7667
      %7669 = vdwg.mxu0
      %v7672 = vrot.slane %v7008, 1
      %v7673 = vrot.slane %v7013, 1
      %v7674 = vsel %vm524, %v7672, %v7673
      %v7675 = vsel %vm7066, %v7674, 0
      %v7677 = vsel %vm7066, %v7673, 0
      %7679 = vmatprep.subr.mxu0 %v7040
      %7680 = vmatpush1.msra.mxu0 %v7039
      %7681 = vmatprep.subr.mxu0 %v7042
      %7682 = vmatpush1.msra.mxu0 %v7041
      %7683 = vmatprep.subr.mxu0 %v7044
      %7684 = vmatpush1.msra.mxu0 %v7043
      %7685 = vmatprep.subr.mxu0 %v7046
      %7686 = vmatpush1.msra.mxu0 %v7045
      %7687 = vmatprep.subr.mxu0 %v7048
      %7688 = vmatpush1.msra.mxu0 %v7047
      %7689 = vmatprep.subr.mxu0 %v7050
      %7690 = vmatpush1.msra.mxu0 %v7049
      %7691 = vmatprep.subr.mxu0 %v7052
      %7692 = vmatpush1.msra.mxu0 %v7051
      %7693 = vmatprep.subr.mxu0 %v7054
      %7694 = vmatpush1.msra.mxu0 %v7053
      %7695 = vmatprep.subr.mxu0 %v7056
      %7696 = vmatpush1.msra.mxu0 %v7055
      %7697 = vmatprep.subr.mxu0 %v7058
      %7698 = vmatpush1.msra.mxu0 %v7057
      %7699 = vmatprep.subr.mxu0 %v7075
      %7700 = vmatpush1.msra.mxu0 %v7072
      %7701 = vmatprep.subr.mxu0 0.0
      %7702 = vmatpush1.msra.mxu0 0.0
      %7703 = vmatprep.subr.mxu0 0.0
      %7704 = vmatpush1.msra.mxu0 0.0
      %7705 = vmatprep.subr.mxu0 0.0
      %7706 = vmatpush1.msra.mxu0 0.0
      %7707 = vmatprep.subr.mxu0 0.0
      %7708 = vmatpush1.msra.mxu0 0.0
      %7709 = vmatprep.subr.mxu0 0.0
      %7710 = vmatpush1.msra.mxu0 0.0
      %7711 = vmatprep.subr.mxu0 0.0
      %7712 = vmatpush1.msra.mxu0 0.0
      %7713 = vmatprep.subr.mxu0 0.0
      %7714 = vmatpush1.msra.mxu0 0.0
      %7715 = vmatprep.subr.mxu0 0.0
      %7716 = vmatpush1.msra.mxu0 0.0
      %7717 = vmatprep.subr.mxu0 0.0
      %7718 = vmatpush1.msra.mxu0 0.0
      %7719 = vmatprep.subr.mxu0 0.0
      %7720 = vmatpush1.msra.mxu0 0.0
      %7721 = vmatprep.subr.mxu0 0.0
      %7722 = vmatpush1.msra.mxu0 0.0
      %7723 = vmatprep.subr.mxu0 0.0
      %7724 = vmatpush1.msra.mxu0 0.0
      %7725 = vmatprep.subr.mxu0 0.0
      %7726 = vmatpush1.msra.mxu0 0.0
      %7727 = vmatprep.subr.mxu0 0.0
      %7728 = vmatpush1.msra.mxu0 0.0
      %7729 = vmatprep.subr.mxu0 0.0
      %7730 = vmatpush1.msra.mxu0 0.0
      %7731 = vmatprep.subr.mxu0 0.0
      %7732 = vmatpush1.msra.mxu0 0.0
      %7733 = vmatprep.subr.mxu0 0.0
      %7734 = vmatpush1.msra.mxu0 0.0
      %7735 = vmatprep.subr.mxu0 0.0
      %7736 = vmatpush1.msra.mxu0 0.0
      %7737 = vmatprep.subr.mxu0 0.0
      %7738 = vmatpush1.msra.mxu0 0.0
      %7739 = vmatprep.subr.mxu0 0.0
      %7740 = vmatpush1.msra.mxu0 0.0
      %7741 = vmatprep.subr.mxu0 0.0
      %7742 = vmatpush1.msra.mxu0 0.0
      %7743 = vmatprep.mubr.f32.mxu0 0.0
      %7744 = vmatmul.mubr.f32.gmra.mrb[0].mxu0 %v7675
      %v7745 = vpop.f32.mrb[0].mxu0
      %v7746 = vadd.f32 0.0, %v7745
      %v7747 = vpop.f32.mrb[0].mxu0
      %v7748 = vadd.f32 0.0, %v7747
      %7749 = vmatprep.mubr.f32.mxu0 0.0
      %7750 = vmatmul.mubr.f32.gmra.mrb[0].mxu0 %v7677
      %v7751 = vpop.f32.mrb[0].mxu0
      %v7752 = vadd.f32 0.0, %v7751
      %v7753 = vpop.f32.mrb[0].mxu0
      %v7754 = vadd.f32 0.0, %v7753
      %7755 = vdwg.mxu0
      %v7756 = vsel %vm7066, %v6420, 0
      %v7758 = vsel %vm7066, %v6425, 0
      %v7761 = vsel %vm3983, %v7036, 0
      %v7764 = vsel %vm3983, %v7037, 0
      %7766 = vmatprep.subr.mxu0 %v7017
      %7767 = vmatpush1.msra.mxu0 %v7016
      %7768 = vmatprep.subr.mxu0 %v7019
      %7769 = vmatpush1.msra.mxu0 %v7018
      %7770 = vmatprep.subr.mxu0 %v7021
      %7771 = vmatpush1.msra.mxu0 %v7020
      %7772 = vmatprep.subr.mxu0 %v7023
      %7773 = vmatpush1.msra.mxu0 %v7022
      %7774 = vmatprep.subr.mxu0 %v7025
      %7775 = vmatpush1.msra.mxu0 %v7024
      %7776 = vmatprep.subr.mxu0 %v7027
      %7777 = vmatpush1.msra.mxu0 %v7026
      %7778 = vmatprep.subr.mxu0 %v7029
      %7779 = vmatpush1.msra.mxu0 %v7028
      %7780 = vmatprep.subr.mxu0 %v7031
      %7781 = vmatpush1.msra.mxu0 %v7030
      %7782 = vmatprep.subr.mxu0 %v7033
      %7783 = vmatpush1.msra.mxu0 %v7032
      %7784 = vmatprep.subr.mxu0 %v7035
      %7785 = vmatpush1.msra.mxu0 %v7034
      %7786 = vmatprep.subr.mxu0 %v7764
      %7787 = vmatpush1.msra.mxu0 %v7761
      %7788 = vmatprep.subr.mxu0 0.0
      %7789 = vmatpush1.msra.mxu0 0.0
      %7790 = vmatprep.subr.mxu0 0.0
      %7791 = vmatpush1.msra.mxu0 0.0
      %7792 = vmatprep.subr.mxu0 0.0
      %7793 = vmatpush1.msra.mxu0 0.0
      %7794 = vmatprep.subr.mxu0 0.0
      %7795 = vmatpush1.msra.mxu0 0.0
      %7796 = vmatprep.subr.mxu0 0.0
      %7797 = vmatpush1.msra.mxu0 0.0
      %7798 = vmatprep.subr.mxu0 0.0
      %7799 = vmatpush1.msra.mxu0 0.0
      %7800 = vmatprep.subr.mxu0 0.0
      %7801 = vmatpush1.msra.mxu0 0.0
      %7802 = vmatprep.subr.mxu0 0.0
      %7803 = vmatpush1.msra.mxu0 0.0
      %7804 = vmatprep.subr.mxu0 0.0
      %7805 = vmatpush1.msra.mxu0 0.0
      %7806 = vmatprep.subr.mxu0 0.0
      %7807 = vmatpush1.msra.mxu0 0.0
      %7808 = vmatprep.subr.mxu0 0.0
      %7809 = vmatpush1.msra.mxu0 0.0
      %7810 = vmatprep.subr.mxu0 0.0
      %7811 = vmatpush1.msra.mxu0 0.0
      %7812 = vmatprep.subr.mxu0 0.0
      %7813 = vmatpush1.msra.mxu0 0.0
      %7814 = vmatprep.subr.mxu0 0.0
      %7815 = vmatpush1.msra.mxu0 0.0
      %7816 = vmatprep.subr.mxu0 0.0
      %7817 = vmatpush1.msra.mxu0 0.0
      %7818 = vmatprep.subr.mxu0 0.0
      %7819 = vmatpush1.msra.mxu0 0.0
      %7820 = vmatprep.subr.mxu0 0.0
      %7821 = vmatpush1.msra.mxu0 0.0
      %7822 = vmatprep.subr.mxu0 0.0
      %7823 = vmatpush1.msra.mxu0 0.0
      %7824 = vmatprep.subr.mxu0 0.0
      %7825 = vmatpush1.msra.mxu0 0.0
      %7826 = vmatprep.subr.mxu0 0.0
      %7827 = vmatpush1.msra.mxu0 0.0
      %7828 = vmatprep.subr.mxu0 0.0
      %7829 = vmatpush1.msra.mxu0 0.0
      %7830 = vmatprep.mubr.f32.mxu0 0.0
      %7831 = vmatmul.mubr.f32.gmra.mrb[0].mxu0 %v7756
      %v7832 = vpop.f32.mrb[0].mxu0
      %v7833 = vadd.f32 %v7144, %v7832
      %v7834 = vpop.f32.mrb[0].mxu0
      %v7835 = vadd.f32 %v7146, %v7834
      %7836 = vmatprep.mubr.f32.mxu0 0.0
      %7837 = vmatmul.mubr.f32.gmra.mrb[0].mxu0 %v7758
      %v7838 = vpop.f32.mrb[0].mxu0
      %v7839 = vadd.f32 %v7150, %v7838
      %v7840 = vpop.f32.mrb[0].mxu0
      %v7841 = vadd.f32 %v7152, %v7840
      %7842 = vdwg.mxu0
      %v7843 = vsel %vm7066, %v6504, 0
      %v7845 = vsel %vm7066, %v6509, 0
      %7847 = vmatprep.subr.mxu0 %v7017
      %7848 = vmatpush1.msra.mxu0 %v7016
      %7849 = vmatprep.subr.mxu0 %v7019
      %7850 = vmatpush1.msra.mxu0 %v7018
      %7851 = vmatprep.subr.mxu0 %v7021
      %7852 = vmatpush1.msra.mxu0 %v7020
      %7853 = vmatprep.subr.mxu0 %v7023
      %7854 = vmatpush1.msra.mxu0 %v7022
      %7855 = vmatprep.subr.mxu0 %v7025
      %7856 = vmatpush1.msra.mxu0 %v7024
      %7857 = vmatprep.subr.mxu0 %v7027
      %7858 = vmatpush1.msra.mxu0 %v7026
      %7859 = vmatprep.subr.mxu0 %v7029
      %7860 = vmatpush1.msra.mxu0 %v7028
      %7861 = vmatprep.subr.mxu0 %v7031
      %7862 = vmatpush1.msra.mxu0 %v7030
      %7863 = vmatprep.subr.mxu0 %v7033
      %7864 = vmatpush1.msra.mxu0 %v7032
      %7865 = vmatprep.subr.mxu0 %v7035
      %7866 = vmatpush1.msra.mxu0 %v7034
      %7867 = vmatprep.subr.mxu0 %v7764
      %7868 = vmatpush1.msra.mxu0 %v7761
      %7869 = vmatprep.subr.mxu0 0.0
      %7870 = vmatpush1.msra.mxu0 0.0
      %7871 = vmatprep.subr.mxu0 0.0
      %7872 = vmatpush1.msra.mxu0 0.0
      %7873 = vmatprep.subr.mxu0 0.0
      %7874 = vmatpush1.msra.mxu0 0.0
      %7875 = vmatprep.subr.mxu0 0.0
      %7876 = vmatpush1.msra.mxu0 0.0
      %7877 = vmatprep.subr.mxu0 0.0
      %7878 = vmatpush1.msra.mxu0 0.0
      %7879 = vmatprep.subr.mxu0 0.0
      %7880 = vmatpush1.msra.mxu0 0.0
      %7881 = vmatprep.subr.mxu0 0.0
      %7882 = vmatpush1.msra.mxu0 0.0
      %7883 = vmatprep.subr.mxu0 0.0
      %7884 = vmatpush1.msra.mxu0 0.0
      %7885 = vmatprep.subr.mxu0 0.0
      %7886 = vmatpush1.msra.mxu0 0.0
      %7887 = vmatprep.subr.mxu0 0.0
      %7888 = vmatpush1.msra.mxu0 0.0
      %7889 = vmatprep.subr.mxu0 0.0
      %7890 = vmatpush1.msra.mxu0 0.0
      %7891 = vmatprep.subr.mxu0 0.0
      %7892 = vmatpush1.msra.mxu0 0.0
      %7893 = vmatprep.subr.mxu0 0.0
      %7894 = vmatpush1.msra.mxu0 0.0
      %7895 = vmatprep.subr.mxu0 0.0
      %7896 = vmatpush1.msra.mxu0 0.0
      %7897 = vmatprep.subr.mxu0 0.0
      %7898 = vmatpush1.msra.mxu0 0.0
      %7899 = vmatprep.subr.mxu0 0.0
      %7900 = vmatpush1.msra.mxu0 0.0
      %7901 = vmatprep.subr.mxu0 0.0
      %7902 = vmatpush1.msra.mxu0 0.0
      %7903 = vmatprep.subr.mxu0 0.0
      %7904 = vmatpush1.msra.mxu0 0.0
      %7905 = vmatprep.subr.mxu0 0.0
      %7906 = vmatpush1.msra.mxu0 0.0
      %7907 = vmatprep.subr.mxu0 0.0
      %7908 = vmatpush1.msra.mxu0 0.0
      %7909 = vmatprep.subr.mxu0 0.0
      %7910 = vmatpush1.msra.mxu0 0.0
      %7911 = vmatprep.mubr.f32.mxu0 0.0
      %7912 = vmatmul.mubr.f32.gmra.mrb[0].mxu0 %v7843
      %v7913 = vpop.f32.mrb[0].mxu0
      %v7914 = vadd.f32 %v7230, %v7913
      %v7915 = vpop.f32.mrb[0].mxu0
      %v7916 = vadd.f32 %v7232, %v7915
      %7917 = vmatprep.mubr.f32.mxu0 0.0
      %7918 = vmatmul.mubr.f32.gmra.mrb[0].mxu0 %v7845
      %v7919 = vpop.f32.mrb[0].mxu0
      %v7920 = vadd.f32 %v7236, %v7919
      %v7921 = vpop.f32.mrb[0].mxu0
      %v7922 = vadd.f32 %v7238, %v7921
      %7923 = vdwg.mxu0
      %v7924 = vsel %vm7066, %v6588, 0
      %v7926 = vsel %vm7066, %v6593, 0
      %7928 = vmatprep.subr.mxu0 %v7017
      %7929 = vmatpush1.msra.mxu0 %v7016
      %7930 = vmatprep.subr.mxu0 %v7019
      %7931 = vmatpush1.msra.mxu0 %v7018
      %7932 = vmatprep.subr.mxu0 %v7021
      %7933 = vmatpush1.msra.mxu0 %v7020
      %7934 = vmatprep.subr.mxu0 %v7023
      %7935 = vmatpush1.msra.mxu0 %v7022
      %7936 = vmatprep.subr.mxu0 %v7025
      %7937 = vmatpush1.msra.mxu0 %v7024
      %7938 = vmatprep.subr.mxu0 %v7027
      %7939 = vmatpush1.msra.mxu0 %v7026
      %7940 = vmatprep.subr.mxu0 %v7029
      %7941 = vmatpush1.msra.mxu0 %v7028
      %7942 = vmatprep.subr.mxu0 %v7031
      %7943 = vmatpush1.msra.mxu0 %v7030
      %7944 = vmatprep.subr.mxu0 %v7033
      %7945 = vmatpush1.msra.mxu0 %v7032
      %7946 = vmatprep.subr.mxu0 %v7035
      %7947 = vmatpush1.msra.mxu0 %v7034
      %7948 = vmatprep.subr.mxu0 %v7764
      %7949 = vmatpush1.msra.mxu0 %v7761
      %7950 = vmatprep.subr.mxu0 0.0
      %7951 = vmatpush1.msra.mxu0 0.0
      %7952 = vmatprep.subr.mxu0 0.0
      %7953 = vmatpush1.msra.mxu0 0.0
      %7954 = vmatprep.subr.mxu0 0.0
      %7955 = vmatpush1.msra.mxu0 0.0
      %7956 = vmatprep.subr.mxu0 0.0
      %7957 = vmatpush1.msra.mxu0 0.0
      %7958 = vmatprep.subr.mxu0 0.0
      %7959 = vmatpush1.msra.mxu0 0.0
      %7960 = vmatprep.subr.mxu0 0.0
      %7961 = vmatpush1.msra.mxu0 0.0
      %7962 = vmatprep.subr.mxu0 0.0
      %7963 = vmatpush1.msra.mxu0 0.0
      %7964 = vmatprep.subr.mxu0 0.0
      %7965 = vmatpush1.msra.mxu0 0.0
      %7966 = vmatprep.subr.mxu0 0.0
      %7967 = vmatpush1.msra.mxu0 0.0
      %7968 = vmatprep.subr.mxu0 0.0
      %7969 = vmatpush1.msra.mxu0 0.0
      %7970 = vmatprep.subr.mxu0 0.0
      %7971 = vmatpush1.msra.mxu0 0.0
      %7972 = vmatprep.subr.mxu0 0.0
      %7973 = vmatpush1.msra.mxu0 0.0
      %7974 = vmatprep.subr.mxu0 0.0
      %7975 = vmatpush1.msra.mxu0 0.0
      %7976 = vmatprep.subr.mxu0 0.0
      %7977 = vmatpush1.msra.mxu0 0.0
      %7978 = vmatprep.subr.mxu0 0.0
      %7979 = vmatpush1.msra.mxu0 0.0
      %7980 = vmatprep.subr.mxu0 0.0
      %7981 = vmatpush1.msra.mxu0 0.0
      %7982 = vmatprep.subr.mxu0 0.0
      %7983 = vmatpush1.msra.mxu0 0.0
      %7984 = vmatprep.subr.mxu0 0.0
      %7985 = vmatpush1.msra.mxu0 0.0
      %7986 = vmatprep.subr.mxu0 0.0
      %7987 = vmatpush1.msra.mxu0 0.0
      %7988 = vmatprep.subr.mxu0 0.0
      %7989 = vmatpush1.msra.mxu0 0.0
      %7990 = vmatprep.subr.mxu0 0.0
      %7991 = vmatpush1.msra.mxu0 0.0
      %7992 = vmatprep.mubr.f32.mxu0 0.0
      %7993 = vmatmul.mubr.f32.gmra.mrb[0].mxu0 %v7924
      %v7994 = vpop.f32.mrb[0].mxu0
      %v7995 = vadd.f32 %v7316, %v7994
      %v7996 = vpop.f32.mrb[0].mxu0
      %v7997 = vadd.f32 %v7318, %v7996
      %7998 = vmatprep.mubr.f32.mxu0 0.0
      %7999 = vmatmul.mubr.f32.gmra.mrb[0].mxu0 %v7926
      %v8000 = vpop.f32.mrb[0].mxu0
      %v8001 = vadd.f32 %v7322, %v8000
      %v8002 = vpop.f32.mrb[0].mxu0
      %v8003 = vadd.f32 %v7324, %v8002
      %8004 = vdwg.mxu0
      %v8005 = vsel %vm7066, %v6672, 0
      %v8007 = vsel %vm7066, %v6677, 0
      %8009 = vmatprep.subr.mxu0 %v7017
      %8010 = vmatpush1.msra.mxu0 %v7016
      %8011 = vmatprep.subr.mxu0 %v7019
      %8012 = vmatpush1.msra.mxu0 %v7018
      %8013 = vmatprep.subr.mxu0 %v7021
      %8014 = vmatpush1.msra.mxu0 %v7020
      %8015 = vmatprep.subr.mxu0 %v7023
      %8016 = vmatpush1.msra.mxu0 %v7022
      %8017 = vmatprep.subr.mxu0 %v7025
      %8018 = vmatpush1.msra.mxu0 %v7024
      %8019 = vmatprep.subr.mxu0 %v7027
      %8020 = vmatpush1.msra.mxu0 %v7026
      %8021 = vmatprep.subr.mxu0 %v7029
      %8022 = vmatpush1.msra.mxu0 %v7028
      %8023 = vmatprep.subr.mxu0 %v7031
      %8024 = vmatpush1.msra.mxu0 %v7030
      %8025 = vmatprep.subr.mxu0 %v7033
      %8026 = vmatpush1.msra.mxu0 %v7032
      %8027 = vmatprep.subr.mxu0 %v7035
      %8028 = vmatpush1.msra.mxu0 %v7034
      %8029 = vmatprep.subr.mxu0 %v7764
      %8030 = vmatpush1.msra.mxu0 %v7761
      %8031 = vmatprep.subr.mxu0 0.0
      %8032 = vmatpush1.msra.mxu0 0.0
      %8033 = vmatprep.subr.mxu0 0.0
      %8034 = vmatpush1.msra.mxu0 0.0
      %8035 = vmatprep.subr.mxu0 0.0
      %8036 = vmatpush1.msra.mxu0 0.0
      %8037 = vmatprep.subr.mxu0 0.0
      %8038 = vmatpush1.msra.mxu0 0.0
      %8039 = vmatprep.subr.mxu0 0.0
      %8040 = vmatpush1.msra.mxu0 0.0
      %8041 = vmatprep.subr.mxu0 0.0
      %8042 = vmatpush1.msra.mxu0 0.0
      %8043 = vmatprep.subr.mxu0 0.0
      %8044 = vmatpush1.msra.mxu0 0.0
      %8045 = vmatprep.subr.mxu0 0.0
      %8046 = vmatpush1.msra.mxu0 0.0
      %8047 = vmatprep.subr.mxu0 0.0
      %8048 = vmatpush1.msra.mxu0 0.0
      %8049 = vmatprep.subr.mxu0 0.0
      %8050 = vmatpush1.msra.mxu0 0.0
      %8051 = vmatprep.subr.mxu0 0.0
      %8052 = vmatpush1.msra.mxu0 0.0
      %8053 = vmatprep.subr.mxu0 0.0
      %8054 = vmatpush1.msra.mxu0 0.0
      %8055 = vmatprep.subr.mxu0 0.0
      %8056 = vmatpush1.msra.mxu0 0.0
      %8057 = vmatprep.subr.mxu0 0.0
      %8058 = vmatpush1.msra.mxu0 0.0
      %8059 = vmatprep.subr.mxu0 0.0
      %8060 = vmatpush1.msra.mxu0 0.0
      %8061 = vmatprep.subr.mxu0 0.0
      %8062 = vmatpush1.msra.mxu0 0.0
      %8063 = vmatprep.subr.mxu0 0.0
      %8064 = vmatpush1.msra.mxu0 0.0
      %8065 = vmatprep.subr.mxu0 0.0
      %8066 = vmatpush1.msra.mxu0 0.0
      %8067 = vmatprep.subr.mxu0 0.0
      %8068 = vmatpush1.msra.mxu0 0.0
      %8069 = vmatprep.subr.mxu0 0.0
      %8070 = vmatpush1.msra.mxu0 0.0
      %8071 = vmatprep.subr.mxu0 0.0
      %8072 = vmatpush1.msra.mxu0 0.0
      %8073 = vmatprep.mubr.f32.mxu0 0.0
      %8074 = vmatmul.mubr.f32.gmra.mrb[0].mxu0 %v8005
      %v8075 = vpop.f32.mrb[0].mxu0
      %v8076 = vadd.f32 %v7402, %v8075
      %v8077 = vpop.f32.mrb[0].mxu0
      %v8078 = vadd.f32 %v7404, %v8077
      %8079 = vmatprep.mubr.f32.mxu0 0.0
      %8080 = vmatmul.mubr.f32.gmra.mrb[0].mxu0 %v8007
      %v8081 = vpop.f32.mrb[0].mxu0
      %v8082 = vadd.f32 %v7408, %v8081
      %v8083 = vpop.f32.mrb[0].mxu0
      %v8084 = vadd.f32 %v7410, %v8083
      %8085 = vdwg.mxu0
      %v8086 = vsel %vm7066, %v6756, 0
      %v8088 = vsel %vm7066, %v6761, 0
      %8090 = vmatprep.subr.mxu0 %v7017
      %8091 = vmatpush1.msra.mxu0 %v7016
      %8092 = vmatprep.subr.mxu0 %v7019
      %8093 = vmatpush1.msra.mxu0 %v7018
      %8094 = vmatprep.subr.mxu0 %v7021
      %8095 = vmatpush1.msra.mxu0 %v7020
      %8096 = vmatprep.subr.mxu0 %v7023
      %8097 = vmatpush1.msra.mxu0 %v7022
      %8098 = vmatprep.subr.mxu0 %v7025
      %8099 = vmatpush1.msra.mxu0 %v7024
      %8100 = vmatprep.subr.mxu0 %v7027
      %8101 = vmatpush1.msra.mxu0 %v7026
      %8102 = vmatprep.subr.mxu0 %v7029
      %8103 = vmatpush1.msra.mxu0 %v7028
      %8104 = vmatprep.subr.mxu0 %v7031
      %8105 = vmatpush1.msra.mxu0 %v7030
      %8106 = vmatprep.subr.mxu0 %v7033
      %8107 = vmatpush1.msra.mxu0 %v7032
      %8108 = vmatprep.subr.mxu0 %v7035
      %8109 = vmatpush1.msra.mxu0 %v7034
      %8110 = vmatprep.subr.mxu0 %v7764
      %8111 = vmatpush1.msra.mxu0 %v7761
      %8112 = vmatprep.subr.mxu0 0.0
      %8113 = vmatpush1.msra.mxu0 0.0
      %8114 = vmatprep.subr.mxu0 0.0
      %8115 = vmatpush1.msra.mxu0 0.0
      %8116 = vmatprep.subr.mxu0 0.0
      %8117 = vmatpush1.msra.mxu0 0.0
      %8118 = vmatprep.subr.mxu0 0.0
      %8119 = vmatpush1.msra.mxu0 0.0
      %8120 = vmatprep.subr.mxu0 0.0
      %8121 = vmatpush1.msra.mxu0 0.0
      %8122 = vmatprep.subr.mxu0 0.0
      %8123 = vmatpush1.msra.mxu0 0.0
      %8124 = vmatprep.subr.mxu0 0.0
      %8125 = vmatpush1.msra.mxu0 0.0
      %8126 = vmatprep.subr.mxu0 0.0
      %8127 = vmatpush1.msra.mxu0 0.0
      %8128 = vmatprep.subr.mxu0 0.0
      %8129 = vmatpush1.msra.mxu0 0.0
      %8130 = vmatprep.subr.mxu0 0.0
      %8131 = vmatpush1.msra.mxu0 0.0
      %8132 = vmatprep.subr.mxu0 0.0
      %8133 = vmatpush1.msra.mxu0 0.0
      %8134 = vmatprep.subr.mxu0 0.0
      %8135 = vmatpush1.msra.mxu0 0.0
      %8136 = vmatprep.subr.mxu0 0.0
      %8137 = vmatpush1.msra.mxu0 0.0
      %8138 = vmatprep.subr.mxu0 0.0
      %8139 = vmatpush1.msra.mxu0 0.0
      %8140 = vmatprep.subr.mxu0 0.0
      %8141 = vmatpush1.msra.mxu0 0.0
      %8142 = vmatprep.subr.mxu0 0.0
      %8143 = vmatpush1.msra.mxu0 0.0
      %8144 = vmatprep.subr.mxu0 0.0
      %8145 = vmatpush1.msra.mxu0 0.0
      %8146 = vmatprep.subr.mxu0 0.0
      %8147 = vmatpush1.msra.mxu0 0.0
      %8148 = vmatprep.subr.mxu0 0.0
      %8149 = vmatpush1.msra.mxu0 0.0
      %8150 = vmatprep.subr.mxu0 0.0
      %8151 = vmatpush1.msra.mxu0 0.0
      %8152 = vmatprep.subr.mxu0 0.0
      %8153 = vmatpush1.msra.mxu0 0.0
      %8154 = vmatprep.mubr.f32.mxu0 0.0
      %8155 = vmatmul.mubr.f32.gmra.mrb[0].mxu0 %v8086
      %v8156 = vpop.f32.mrb[0].mxu0
      %v8157 = vadd.f32 %v7488, %v8156
      %v8158 = vpop.f32.mrb[0].mxu0
      %v8159 = vadd.f32 %v7490, %v8158
      %8160 = vmatprep.mubr.f32.mxu0 0.0
      %8161 = vmatmul.mubr.f32.gmra.mrb[0].mxu0 %v8088
      %v8162 = vpop.f32.mrb[0].mxu0
      %v8163 = vadd.f32 %v7494, %v8162
      %v8164 = vpop.f32.mrb[0].mxu0
      %v8165 = vadd.f32 %v7496, %v8164
      %8166 = vdwg.mxu0
      %v8167 = vsel %vm7066, %v6840, 0
      %v8169 = vsel %vm7066, %v6845, 0
      %8171 = vmatprep.subr.mxu0 %v7017
      %8172 = vmatpush1.msra.mxu0 %v7016
      %8173 = vmatprep.subr.mxu0 %v7019
      %8174 = vmatpush1.msra.mxu0 %v7018
      %8175 = vmatprep.subr.mxu0 %v7021
      %8176 = vmatpush1.msra.mxu0 %v7020
      %8177 = vmatprep.subr.mxu0 %v7023
      %8178 = vmatpush1.msra.mxu0 %v7022
      %8179 = vmatprep.subr.mxu0 %v7025
      %8180 = vmatpush1.msra.mxu0 %v7024
      %8181 = vmatprep.subr.mxu0 %v7027
      %8182 = vmatpush1.msra.mxu0 %v7026
      %8183 = vmatprep.subr.mxu0 %v7029
      %8184 = vmatpush1.msra.mxu0 %v7028
      %8185 = vmatprep.subr.mxu0 %v7031
      %8186 = vmatpush1.msra.mxu0 %v7030
      %8187 = vmatprep.subr.mxu0 %v7033
      %8188 = vmatpush1.msra.mxu0 %v7032
      %8189 = vmatprep.subr.mxu0 %v7035
      %8190 = vmatpush1.msra.mxu0 %v7034
      %8191 = vmatprep.subr.mxu0 %v7764
      %8192 = vmatpush1.msra.mxu0 %v7761
      %8193 = vmatprep.subr.mxu0 0.0
      %8194 = vmatpush1.msra.mxu0 0.0
      %8195 = vmatprep.subr.mxu0 0.0
      %8196 = vmatpush1.msra.mxu0 0.0
      %8197 = vmatprep.subr.mxu0 0.0
      %8198 = vmatpush1.msra.mxu0 0.0
      %8199 = vmatprep.subr.mxu0 0.0
      %8200 = vmatpush1.msra.mxu0 0.0
      %8201 = vmatprep.subr.mxu0 0.0
      %8202 = vmatpush1.msra.mxu0 0.0
      %8203 = vmatprep.subr.mxu0 0.0
      %8204 = vmatpush1.msra.mxu0 0.0
      %8205 = vmatprep.subr.mxu0 0.0
      %8206 = vmatpush1.msra.mxu0 0.0
      %8207 = vmatprep.subr.mxu0 0.0
      %8208 = vmatpush1.msra.mxu0 0.0
      %8209 = vmatprep.subr.mxu0 0.0
      %8210 = vmatpush1.msra.mxu0 0.0
      %8211 = vmatprep.subr.mxu0 0.0
      %8212 = vmatpush1.msra.mxu0 0.0
      %8213 = vmatprep.subr.mxu0 0.0
      %8214 = vmatpush1.msra.mxu0 0.0
      %8215 = vmatprep.subr.mxu0 0.0
      %8216 = vmatpush1.msra.mxu0 0.0
      %8217 = vmatprep.subr.mxu0 0.0
      %8218 = vmatpush1.msra.mxu0 0.0
      %8219 = vmatprep.subr.mxu0 0.0
      %8220 = vmatpush1.msra.mxu0 0.0
      %8221 = vmatprep.subr.mxu0 0.0
      %8222 = vmatpush1.msra.mxu0 0.0
      %8223 = vmatprep.subr.mxu0 0.0
      %8224 = vmatpush1.msra.mxu0 0.0
      %8225 = vmatprep.subr.mxu0 0.0
      %8226 = vmatpush1.msra.mxu0 0.0
      %8227 = vmatprep.subr.mxu0 0.0
      %8228 = vmatpush1.msra.mxu0 0.0
      %8229 = vmatprep.subr.mxu0 0.0
      %8230 = vmatpush1.msra.mxu0 0.0
      %8231 = vmatprep.subr.mxu0 0.0
      %8232 = vmatpush1.msra.mxu0 0.0
      %8233 = vmatprep.subr.mxu0 0.0
      %8234 = vmatpush1.msra.mxu0 0.0
      %8235 = vmatprep.mubr.f32.mxu0 0.0
      %8236 = vmatmul.mubr.f32.gmra.mrb[0].mxu0 %v8167
      %v8237 = vpop.f32.mrb[0].mxu0
      %v8238 = vadd.f32 %v7574, %v8237
      %v8239 = vpop.f32.mrb[0].mxu0
      %v8240 = vadd.f32 %v7576, %v8239
      %8241 = vmatprep.mubr.f32.mxu0 0.0
      %8242 = vmatmul.mubr.f32.gmra.mrb[0].mxu0 %v8169
      %v8243 = vpop.f32.mrb[0].mxu0
      %v8244 = vadd.f32 %v7580, %v8243
      %v8245 = vpop.f32.mrb[0].mxu0
      %v8246 = vadd.f32 %v7582, %v8245
      %8247 = vdwg.mxu0
      %v8248 = vsel %vm7066, %v6924, 0
      %v8250 = vsel %vm7066, %v6929, 0
      %8252 = vmatprep.subr.mxu0 %v7017
      %8253 = vmatpush1.msra.mxu0 %v7016
      %8254 = vmatprep.subr.mxu0 %v7019
      %8255 = vmatpush1.msra.mxu0 %v7018
      %8256 = vmatprep.subr.mxu0 %v7021
      %8257 = vmatpush1.msra.mxu0 %v7020
      %8258 = vmatprep.subr.mxu0 %v7023
      %8259 = vmatpush1.msra.mxu0 %v7022
      %8260 = vmatprep.subr.mxu0 %v7025
      %8261 = vmatpush1.msra.mxu0 %v7024
      %8262 = vmatprep.subr.mxu0 %v7027
      %8263 = vmatpush1.msra.mxu0 %v7026
      %8264 = vmatprep.subr.mxu0 %v7029
      %8265 = vmatpush1.msra.mxu0 %v7028
      %8266 = vmatprep.subr.mxu0 %v7031
      %8267 = vmatpush1.msra.mxu0 %v7030
      %8268 = vmatprep.subr.mxu0 %v7033
      %8269 = vmatpush1.msra.mxu0 %v7032
      %8270 = vmatprep.subr.mxu0 %v7035
      %8271 = vmatpush1.msra.mxu0 %v7034
      %8272 = vmatprep.subr.mxu0 %v7764
      %8273 = vmatpush1.msra.mxu0 %v7761
      %8274 = vmatprep.subr.mxu0 0.0
      %8275 = vmatpush1.msra.mxu0 0.0
      %8276 = vmatprep.subr.mxu0 0.0
      %8277 = vmatpush1.msra.mxu0 0.0
      %8278 = vmatprep.subr.mxu0 0.0
      %8279 = vmatpush1.msra.mxu0 0.0
      %8280 = vmatprep.subr.mxu0 0.0
      %8281 = vmatpush1.msra.mxu0 0.0
      %8282 = vmatprep.subr.mxu0 0.0
      %8283 = vmatpush1.msra.mxu0 0.0
      %8284 = vmatprep.subr.mxu0 0.0
      %8285 = vmatpush1.msra.mxu0 0.0
      %8286 = vmatprep.subr.mxu0 0.0
      %8287 = vmatpush1.msra.mxu0 0.0
      %8288 = vmatprep.subr.mxu0 0.0
      %8289 = vmatpush1.msra.mxu0 0.0
      %8290 = vmatprep.subr.mxu0 0.0
      %8291 = vmatpush1.msra.mxu0 0.0
      %8292 = vmatprep.subr.mxu0 0.0
      %8293 = vmatpush1.msra.mxu0 0.0
      %8294 = vmatprep.subr.mxu0 0.0
      %8295 = vmatpush1.msra.mxu0 0.0
      %8296 = vmatprep.subr.mxu0 0.0
      %8297 = vmatpush1.msra.mxu0 0.0
      %8298 = vmatprep.subr.mxu0 0.0
      %8299 = vmatpush1.msra.mxu0 0.0
      %8300 = vmatprep.subr.mxu0 0.0
      %8301 = vmatpush1.msra.mxu0 0.0
      %8302 = vmatprep.subr.mxu0 0.0
      %8303 = vmatpush1.msra.mxu0 0.0
      %8304 = vmatprep.subr.mxu0 0.0
      %8305 = vmatpush1.msra.mxu0 0.0
      %8306 = vmatprep.subr.mxu0 0.0
      %8307 = vmatpush1.msra.mxu0 0.0
      %8308 = vmatprep.subr.mxu0 0.0
      %8309 = vmatpush1.msra.mxu0 0.0
      %8310 = vmatprep.subr.mxu0 0.0
      %8311 = vmatpush1.msra.mxu0 0.0
      %8312 = vmatprep.subr.mxu0 0.0
      %8313 = vmatpush1.msra.mxu0 0.0
      %8314 = vmatprep.subr.mxu0 0.0
      %8315 = vmatpush1.msra.mxu0 0.0
      %8316 = vmatprep.mubr.f32.mxu0 0.0
      %8317 = vmatmul.mubr.f32.gmra.mrb[0].mxu0 %v8248
      %v8318 = vpop.f32.mrb[0].mxu0
      %v8319 = vadd.f32 %v7660, %v8318
      %v8320 = vpop.f32.mrb[0].mxu0
      %v8321 = vadd.f32 %v7662, %v8320
      %8322 = vmatprep.mubr.f32.mxu0 0.0
      %8323 = vmatmul.mubr.f32.gmra.mrb[0].mxu0 %v8250
      %v8324 = vpop.f32.mrb[0].mxu0
      %v8325 = vadd.f32 %v7666, %v8324
      %v8326 = vpop.f32.mrb[0].mxu0
      %v8327 = vadd.f32 %v7668, %v8326
      %8328 = vdwg.mxu0
      %v8329 = vsel %vm7066, %v7008, 0
      %v8331 = vsel %vm7066, %v7013, 0
      %8333 = vmatprep.subr.mxu0 %v7017
      %8334 = vmatpush1.msra.mxu0 %v7016
      %8335 = vmatprep.subr.mxu0 %v7019
      %8336 = vmatpush1.msra.mxu0 %v7018
      %8337 = vmatprep.subr.mxu0 %v7021
      %8338 = vmatpush1.msra.mxu0 %v7020
      %8339 = vmatprep.subr.mxu0 %v7023
      %8340 = vmatpush1.msra.mxu0 %v7022
      %8341 = vmatprep.subr.mxu0 %v7025
      %8342 = vmatpush1.msra.mxu0 %v7024
      %8343 = vmatprep.subr.mxu0 %v7027
      %8344 = vmatpush1.msra.mxu0 %v7026
      %8345 = vmatprep.subr.mxu0 %v7029
      %8346 = vmatpush1.msra.mxu0 %v7028
      %8347 = vmatprep.subr.mxu0 %v7031
      %8348 = vmatpush1.msra.mxu0 %v7030
      %8349 = vmatprep.subr.mxu0 %v7033
      %8350 = vmatpush1.msra.mxu0 %v7032
      %8351 = vmatprep.subr.mxu0 %v7035
      %8352 = vmatpush1.msra.mxu0 %v7034
      %8353 = vmatprep.subr.mxu0 %v7764
      %8354 = vmatpush1.msra.mxu0 %v7761
      %8355 = vmatprep.subr.mxu0 0.0
      %8356 = vmatpush1.msra.mxu0 0.0
      %8357 = vmatprep.subr.mxu0 0.0
      %8358 = vmatpush1.msra.mxu0 0.0
      %8359 = vmatprep.subr.mxu0 0.0
      %8360 = vmatpush1.msra.mxu0 0.0
      %8361 = vmatprep.subr.mxu0 0.0
      %8362 = vmatpush1.msra.mxu0 0.0
      %8363 = vmatprep.subr.mxu0 0.0
      %8364 = vmatpush1.msra.mxu0 0.0
      %8365 = vmatprep.subr.mxu0 0.0
      %8366 = vmatpush1.msra.mxu0 0.0
      %8367 = vmatprep.subr.mxu0 0.0
      %8368 = vmatpush1.msra.mxu0 0.0
      %8369 = vmatprep.subr.mxu0 0.0
      %8370 = vmatpush1.msra.mxu0 0.0
      %8371 = vmatprep.subr.mxu0 0.0
      %8372 = vmatpush1.msra.mxu0 0.0
      %8373 = vmatprep.subr.mxu0 0.0
      %8374 = vmatpush1.msra.mxu0 0.0
      %8375 = vmatprep.subr.mxu0 0.0
      %8376 = vmatpush1.msra.mxu0 0.0
      %8377 = vmatprep.subr.mxu0 0.0
      %8378 = vmatpush1.msra.mxu0 0.0
      %8379 = vmatprep.subr.mxu0 0.0
      %8380 = vmatpush1.msra.mxu0 0.0
      %8381 = vmatprep.subr.mxu0 0.0
      %8382 = vmatpush1.msra.mxu0 0.0
      %8383 = vmatprep.subr.mxu0 0.0
      %8384 = vmatpush1.msra.mxu0 0.0
      %8385 = vmatprep.subr.mxu0 0.0
      %8386 = vmatpush1.msra.mxu0 0.0
      %8387 = vmatprep.subr.mxu0 0.0
      %8388 = vmatpush1.msra.mxu0 0.0
      %8389 = vmatprep.subr.mxu0 0.0
      %8390 = vmatpush1.msra.mxu0 0.0
      %8391 = vmatprep.subr.mxu0 0.0
      %8392 = vmatpush1.msra.mxu0 0.0
      %8393 = vmatprep.subr.mxu0 0.0
      %8394 = vmatpush1.msra.mxu0 0.0
      %8395 = vmatprep.subr.mxu0 0.0
      %8396 = vmatpush1.msra.mxu0 0.0
      %8397 = vmatprep.mubr.f32.mxu0 0.0
      %8398 = vmatmul.mubr.f32.gmra.mrb[0].mxu0 %v8329
      %v8399 = vpop.f32.mrb[0].mxu0
      %v8400 = vadd.f32 %v7746, %v8399
      %v8401 = vpop.f32.mrb[0].mxu0
      %v8402 = vadd.f32 %v7748, %v8401
      %8403 = vmatprep.mubr.f32.mxu0 0.0
      %8404 = vmatmul.mubr.f32.gmra.mrb[0].mxu0 %v8331
      %v8405 = vpop.f32.mrb[0].mxu0
      %v8406 = vadd.f32 %v7752, %v8405
      %v8407 = vpop.f32.mrb[0].mxu0
      %v8408 = vadd.f32 %v7754, %v8407
      %8409 = vdwg.mxu0
      %s8410 = scalar_lea.vmem %s5, 352
      %v8411 = vld [vmem:[%s8410] sm:$0xff]
      %v8412 = vld [vmem:[%s8410 + $0x8] sm:$0xff]
      %v8413 = vld [vmem:[%s8410 + $0x10] sm:$0xff]
      %v8414 = vld [vmem:[%s8410 + $0x18] sm:$0xff]
      %v8415 = vld [vmem:[%s8410 + $0x20] sm:$0xff]
      %v8416 = vld [vmem:[%s8410 + $0x28] sm:$0xff]
      %v8417 = vld [vmem:[%s8410 + $0x30] sm:$0xff]
      %v8418 = vld [vmem:[%s8410 + $0x38] sm:$0xff]
      %v8419 = vld [vmem:[%s8410 + $0x40] sm:$0xff]
      %v8420 = vld [vmem:[%s8410 + $0x48] sm:$0xff]
      %v8421 = vld [vmem:[%s8410 + $0x50] sm:$0xff]
      %v8422 = vld [vmem:[%s8410 + $0x58] sm:$0xff]
      %v8423 = vld [vmem:[%s8410 + $0x60] sm:$0xff]
      %v8424 = vld [vmem:[%s8410 + $0x68] sm:$0xff]
      %v8425 = vld [vmem:[%s8410 + $0x70] sm:$0xff]
      %v8426 = vld [vmem:[%s8410 + $0x78] sm:$0xff]
      %v8427 = vld [vmem:[%s8410 + $0x80] sm:$0xff]
      %v8428 = vld [vmem:[%s8410 + $0x88] sm:$0xff]
      %v8429 = vld [vmem:[%s8410 + $0x90] sm:$0xff]
      %v8430 = vld [vmem:[%s8410 + $0x98] sm:$0xff]
      %v8431 = vld [vmem:[%s8410 + $0xa0] sm:$0xf]
      %v8432 = vld [vmem:[%s8410 + $0xa8] sm:$0xf]
      %v8433 = vrot.slane %v6420, 2
      %v8434 = vrot.slane %v6425, 2
      %v8435 = vsel %vm2171, %v8433, %v8434
      %v8436 = vsel %vm7066, %v8435, 0
      %v8438 = vsel %vm7066, %v8434, 0
      %v8441 = vsel %vm3983, %v8431, 0
      %v8444 = vsel %vm3983, %v8432, 0
      %8446 = vmatprep.subr.mxu0 %v8412
      %8447 = vmatpush1.msra.mxu0 %v8411
      %8448 = vmatprep.subr.mxu0 %v8414
      %8449 = vmatpush1.msra.mxu0 %v8413
      %8450 = vmatprep.subr.mxu0 %v8416
      %8451 = vmatpush1.msra.mxu0 %v8415
      %8452 = vmatprep.subr.mxu0 %v8418
      %8453 = vmatpush1.msra.mxu0 %v8417
      %8454 = vmatprep.subr.mxu0 %v8420
      %8455 = vmatpush1.msra.mxu0 %v8419
      %8456 = vmatprep.subr.mxu0 %v8422
      %8457 = vmatpush1.msra.mxu0 %v8421
      %8458 = vmatprep.subr.mxu0 %v8424
      %8459 = vmatpush1.msra.mxu0 %v8423
      %8460 = vmatprep.subr.mxu0 %v8426
      %8461 = vmatpush1.msra.mxu0 %v8425
      %8462 = vmatprep.subr.mxu0 %v8428
      %8463 = vmatpush1.msra.mxu0 %v8427
      %8464 = vmatprep.subr.mxu0 %v8430
      %8465 = vmatpush1.msra.mxu0 %v8429
      %8466 = vmatprep.subr.mxu0 %v8444
      %8467 = vmatpush1.msra.mxu0 %v8441
      %8468 = vmatprep.subr.mxu0 0.0
      %8469 = vmatpush1.msra.mxu0 0.0
      %8470 = vmatprep.subr.mxu0 0.0
      %8471 = vmatpush1.msra.mxu0 0.0
      %8472 = vmatprep.subr.mxu0 0.0
      %8473 = vmatpush1.msra.mxu0 0.0
      %8474 = vmatprep.subr.mxu0 0.0
      %8475 = vmatpush1.msra.mxu0 0.0
      %8476 = vmatprep.subr.mxu0 0.0
      %8477 = vmatpush1.msra.mxu0 0.0
      %8478 = vmatprep.subr.mxu0 0.0
      %8479 = vmatpush1.msra.mxu0 0.0
      %8480 = vmatprep.subr.mxu0 0.0
      %8481 = vmatpush1.msra.mxu0 0.0
      %8482 = vmatprep.subr.mxu0 0.0
      %8483 = vmatpush1.msra.mxu0 0.0
      %8484 = vmatprep.subr.mxu0 0.0
      %8485 = vmatpush1.msra.mxu0 0.0
      %8486 = vmatprep.subr.mxu0 0.0
      %8487 = vmatpush1.msra.mxu0 0.0
      %8488 = vmatprep.subr.mxu0 0.0
      %8489 = vmatpush1.msra.mxu0 0.0
      %8490 = vmatprep.subr.mxu0 0.0
      %8491 = vmatpush1.msra.mxu0 0.0
      %8492 = vmatprep.subr.mxu0 0.0
      %8493 = vmatpush1.msra.mxu0 0.0
      %8494 = vmatprep.subr.mxu0 0.0
      %8495 = vmatpush1.msra.mxu0 0.0
      %8496 = vmatprep.subr.mxu0 0.0
      %8497 = vmatpush1.msra.mxu0 0.0
      %8498 = vmatprep.subr.mxu0 0.0
      %8499 = vmatpush1.msra.mxu0 0.0
      %8500 = vmatprep.subr.mxu0 0.0
      %8501 = vmatpush1.msra.mxu0 0.0
      %8502 = vmatprep.subr.mxu0 0.0
      %8503 = vmatpush1.msra.mxu0 0.0
      %8504 = vmatprep.subr.mxu0 0.0
      %8505 = vmatpush1.msra.mxu0 0.0
      %8506 = vmatprep.subr.mxu0 0.0
      %8507 = vmatpush1.msra.mxu0 0.0
      %8508 = vmatprep.subr.mxu0 0.0
      %8509 = vmatpush1.msra.mxu0 0.0
      %8510 = vmatprep.mubr.f32.mxu0 0.0
      %8511 = vmatmul.mubr.f32.gmra.mrb[0].mxu0 %v8436
      %v8512 = vpop.f32.mrb[0].mxu0
      %v8513 = vadd.f32 0.0, %v8512
      %v8514 = vpop.f32.mrb[0].mxu0
      %v8515 = vadd.f32 0.0, %v8514
      %8516 = vmatprep.mubr.f32.mxu0 0.0
      %8517 = vmatmul.mubr.f32.gmra.mrb[0].mxu0 %v8438
      %v8518 = vpop.f32.mrb[0].mxu0
      %v8519 = vadd.f32 0.0, %v8518
      %v8520 = vpop.f32.mrb[0].mxu0
      %v8521 = vadd.f32 0.0, %v8520
      %8522 = vdwg.mxu0
      %v8523 = vrot.slane %v6504, 2
      %v8524 = vrot.slane %v6509, 2
      %v8525 = vsel %vm2171, %v8523, %v8524
      %v8526 = vsel %vm7066, %v8525, 0
      %v8528 = vsel %vm7066, %v8524, 0
      %8530 = vmatprep.subr.mxu0 %v8412
      %8531 = vmatpush1.msra.mxu0 %v8411
      %8532 = vmatprep.subr.mxu0 %v8414
      %8533 = vmatpush1.msra.mxu0 %v8413
      %8534 = vmatprep.subr.mxu0 %v8416
      %8535 = vmatpush1.msra.mxu0 %v8415
      %8536 = vmatprep.subr.mxu0 %v8418
      %8537 = vmatpush1.msra.mxu0 %v8417
      %8538 = vmatprep.subr.mxu0 %v8420
      %8539 = vmatpush1.msra.mxu0 %v8419
      %8540 = vmatprep.subr.mxu0 %v8422
      %8541 = vmatpush1.msra.mxu0 %v8421
      %8542 = vmatprep.subr.mxu0 %v8424
      %8543 = vmatpush1.msra.mxu0 %v8423
      %8544 = vmatprep.subr.mxu0 %v8426
      %8545 = vmatpush1.msra.mxu0 %v8425
      %8546 = vmatprep.subr.mxu0 %v8428
      %8547 = vmatpush1.msra.mxu0 %v8427
      %8548 = vmatprep.subr.mxu0 %v8430
      %8549 = vmatpush1.msra.mxu0 %v8429
      %8550 = vmatprep.subr.mxu0 %v8444
      %8551 = vmatpush1.msra.mxu0 %v8441
      %8552 = vmatprep.subr.mxu0 0.0
      %8553 = vmatpush1.msra.mxu0 0.0
      %8554 = vmatprep.subr.mxu0 0.0
      %8555 = vmatpush1.msra.mxu0 0.0
      %8556 = vmatprep.subr.mxu0 0.0
      %8557 = vmatpush1.msra.mxu0 0.0
      %8558 = vmatprep.subr.mxu0 0.0
      %8559 = vmatpush1.msra.mxu0 0.0
      %8560 = vmatprep.subr.mxu0 0.0
      %8561 = vmatpush1.msra.mxu0 0.0
      %8562 = vmatprep.subr.mxu0 0.0
      %8563 = vmatpush1.msra.mxu0 0.0
      %8564 = vmatprep.subr.mxu0 0.0
      %8565 = vmatpush1.msra.mxu0 0.0
      %8566 = vmatprep.subr.mxu0 0.0
      %8567 = vmatpush1.msra.mxu0 0.0
      %8568 = vmatprep.subr.mxu0 0.0
      %8569 = vmatpush1.msra.mxu0 0.0
      %8570 = vmatprep.subr.mxu0 0.0
      %8571 = vmatpush1.msra.mxu0 0.0
      %8572 = vmatprep.subr.mxu0 0.0
      %8573 = vmatpush1.msra.mxu0 0.0
      %8574 = vmatprep.subr.mxu0 0.0
      %8575 = vmatpush1.msra.mxu0 0.0
      %8576 = vmatprep.subr.mxu0 0.0
      %8577 = vmatpush1.msra.mxu0 0.0
      %8578 = vmatprep.subr.mxu0 0.0
      %8579 = vmatpush1.msra.mxu0 0.0
      %8580 = vmatprep.subr.mxu0 0.0
      %8581 = vmatpush1.msra.mxu0 0.0
      %8582 = vmatprep.subr.mxu0 0.0
      %8583 = vmatpush1.msra.mxu0 0.0
      %8584 = vmatprep.subr.mxu0 0.0
      %8585 = vmatpush1.msra.mxu0 0.0
      %8586 = vmatprep.subr.mxu0 0.0
      %8587 = vmatpush1.msra.mxu0 0.0
      %8588 = vmatprep.subr.mxu0 0.0
      %8589 = vmatpush1.msra.mxu0 0.0
      %8590 = vmatprep.subr.mxu0 0.0
      %8591 = vmatpush1.msra.mxu0 0.0
      %8592 = vmatprep.subr.mxu0 0.0
      %8593 = vmatpush1.msra.mxu0 0.0
      %8594 = vmatprep.mubr.f32.mxu0 0.0
      %8595 = vmatmul.mubr.f32.gmra.mrb[0].mxu0 %v8526
      %v8596 = vpop.f32.mrb[0].mxu0
      %v8597 = vadd.f32 0.0, %v8596
      %v8598 = vpop.f32.mrb[0].mxu0
      %v8599 = vadd.f32 0.0, %v8598
      %8600 = vmatprep.mubr.f32.mxu0 0.0
      %8601 = vmatmul.mubr.f32.gmra.mrb[0].mxu0 %v8528
      %v8602 = vpop.f32.mrb[0].mxu0
      %v8603 = vadd.f32 0.0, %v8602
      %v8604 = vpop.f32.mrb[0].mxu0
      %v8605 = vadd.f32 0.0, %v8604
      %8606 = vdwg.mxu0
      %v8607 = vrot.slane %v6588, 2
      %v8608 = vrot.slane %v6593, 2
      %v8609 = vsel %vm2171, %v8607, %v8608
      %v8610 = vsel %vm7066, %v8609, 0
      %v8612 = vsel %vm7066, %v8608, 0
      %8614 = vmatprep.subr.mxu0 %v8412
      %8615 = vmatpush1.msra.mxu0 %v8411
      %8616 = vmatprep.subr.mxu0 %v8414
      %8617 = vmatpush1.msra.mxu0 %v8413
      %8618 = vmatprep.subr.mxu0 %v8416
      %8619 = vmatpush1.msra.mxu0 %v8415
      %8620 = vmatprep.subr.mxu0 %v8418
      %8621 = vmatpush1.msra.mxu0 %v8417
      %8622 = vmatprep.subr.mxu0 %v8420
      %8623 = vmatpush1.msra.mxu0 %v8419
      %8624 = vmatprep.subr.mxu0 %v8422
      %8625 = vmatpush1.msra.mxu0 %v8421
      %8626 = vmatprep.subr.mxu0 %v8424
      %8627 = vmatpush1.msra.mxu0 %v8423
      %8628 = vmatprep.subr.mxu0 %v8426
      %8629 = vmatpush1.msra.mxu0 %v8425
      %8630 = vmatprep.subr.mxu0 %v8428
      %8631 = vmatpush1.msra.mxu0 %v8427
      %8632 = vmatprep.subr.mxu0 %v8430
      %8633 = vmatpush1.msra.mxu0 %v8429
      %8634 = vmatprep.subr.mxu0 %v8444
      %8635 = vmatpush1.msra.mxu0 %v8441
      %8636 = vmatprep.subr.mxu0 0.0
      %8637 = vmatpush1.msra.mxu0 0.0
      %8638 = vmatprep.subr.mxu0 0.0
      %8639 = vmatpush1.msra.mxu0 0.0
      %8640 = vmatprep.subr.mxu0 0.0
      %8641 = vmatpush1.msra.mxu0 0.0
      %8642 = vmatprep.subr.mxu0 0.0
      %8643 = vmatpush1.msra.mxu0 0.0
      %8644 = vmatprep.subr.mxu0 0.0
      %8645 = vmatpush1.msra.mxu0 0.0
      %8646 = vmatprep.subr.mxu0 0.0
      %8647 = vmatpush1.msra.mxu0 0.0
      %8648 = vmatprep.subr.mxu0 0.0
      %8649 = vmatpush1.msra.mxu0 0.0
      %8650 = vmatprep.subr.mxu0 0.0
      %8651 = vmatpush1.msra.mxu0 0.0
      %8652 = vmatprep.subr.mxu0 0.0
      %8653 = vmatpush1.msra.mxu0 0.0
      %8654 = vmatprep.subr.mxu0 0.0
      %8655 = vmatpush1.msra.mxu0 0.0
      %8656 = vmatprep.subr.mxu0 0.0
      %8657 = vmatpush1.msra.mxu0 0.0
      %8658 = vmatprep.subr.mxu0 0.0
      %8659 = vmatpush1.msra.mxu0 0.0
      %8660 = vmatprep.subr.mxu0 0.0
      %8661 = vmatpush1.msra.mxu0 0.0
      %8662 = vmatprep.subr.mxu0 0.0
      %8663 = vmatpush1.msra.mxu0 0.0
      %8664 = vmatprep.subr.mxu0 0.0
      %8665 = vmatpush1.msra.mxu0 0.0
      %8666 = vmatprep.subr.mxu0 0.0
      %8667 = vmatpush1.msra.mxu0 0.0
      %8668 = vmatprep.subr.mxu0 0.0
      %8669 = vmatpush1.msra.mxu0 0.0
      %8670 = vmatprep.subr.mxu0 0.0
      %8671 = vmatpush1.msra.mxu0 0.0
      %8672 = vmatprep.subr.mxu0 0.0
      %8673 = vmatpush1.msra.mxu0 0.0
      %8674 = vmatprep.subr.mxu0 0.0
      %8675 = vmatpush1.msra.mxu0 0.0
      %8676 = vmatprep.subr.mxu0 0.0
      %8677 = vmatpush1.msra.mxu0 0.0
      %8678 = vmatprep.mubr.f32.mxu0 0.0
      %8679 = vmatmul.mubr.f32.gmra.mrb[0].mxu0 %v8610
      %v8680 = vpop.f32.mrb[0].mxu0
      %v8681 = vadd.f32 0.0, %v8680
      %v8682 = vpop.f32.mrb[0].mxu0
      %v8683 = vadd.f32 0.0, %v8682
      %8684 = vmatprep.mubr.f32.mxu0 0.0
      %8685 = vmatmul.mubr.f32.gmra.mrb[0].mxu0 %v8612
      %v8686 = vpop.f32.mrb[0].mxu0
      %v8687 = vadd.f32 0.0, %v8686
      %v8688 = vpop.f32.mrb[0].mxu0
      %v8689 = vadd.f32 0.0, %v8688
      %8690 = vdwg.mxu0
      %v8691 = vrot.slane %v6672, 2
      %v8692 = vrot.slane %v6677, 2
      %v8693 = vsel %vm2171, %v8691, %v8692
      %v8694 = vsel %vm7066, %v8693, 0
      %v8696 = vsel %vm7066, %v8692, 0
      %8698 = vmatprep.subr.mxu0 %v8412
      %8699 = vmatpush1.msra.mxu0 %v8411
      %8700 = vmatprep.subr.mxu0 %v8414
      %8701 = vmatpush1.msra.mxu0 %v8413
      %8702 = vmatprep.subr.mxu0 %v8416
      %8703 = vmatpush1.msra.mxu0 %v8415
      %8704 = vmatprep.subr.mxu0 %v8418
      %8705 = vmatpush1.msra.mxu0 %v8417
      %8706 = vmatprep.subr.mxu0 %v8420
      %8707 = vmatpush1.msra.mxu0 %v8419
      %8708 = vmatprep.subr.mxu0 %v8422
      %8709 = vmatpush1.msra.mxu0 %v8421
      %8710 = vmatprep.subr.mxu0 %v8424
      %8711 = vmatpush1.msra.mxu0 %v8423
      %8712 = vmatprep.subr.mxu0 %v8426
      %8713 = vmatpush1.msra.mxu0 %v8425
      %8714 = vmatprep.subr.mxu0 %v8428
      %8715 = vmatpush1.msra.mxu0 %v8427
      %8716 = vmatprep.subr.mxu0 %v8430
      %8717 = vmatpush1.msra.mxu0 %v8429
      %8718 = vmatprep.subr.mxu0 %v8444
      %8719 = vmatpush1.msra.mxu0 %v8441
      %8720 = vmatprep.subr.mxu0 0.0
      %8721 = vmatpush1.msra.mxu0 0.0
      %8722 = vmatprep.subr.mxu0 0.0
      %8723 = vmatpush1.msra.mxu0 0.0
      %8724 = vmatprep.subr.mxu0 0.0
      %8725 = vmatpush1.msra.mxu0 0.0
      %8726 = vmatprep.subr.mxu0 0.0
      %8727 = vmatpush1.msra.mxu0 0.0
      %8728 = vmatprep.subr.mxu0 0.0
      %8729 = vmatpush1.msra.mxu0 0.0
      %8730 = vmatprep.subr.mxu0 0.0
      %8731 = vmatpush1.msra.mxu0 0.0
      %8732 = vmatprep.subr.mxu0 0.0
      %8733 = vmatpush1.msra.mxu0 0.0
      %8734 = vmatprep.subr.mxu0 0.0
      %8735 = vmatpush1.msra.mxu0 0.0
      %8736 = vmatprep.subr.mxu0 0.0
      %8737 = vmatpush1.msra.mxu0 0.0
      %8738 = vmatprep.subr.mxu0 0.0
      %8739 = vmatpush1.msra.mxu0 0.0
      %8740 = vmatprep.subr.mxu0 0.0
      %8741 = vmatpush1.msra.mxu0 0.0
      %8742 = vmatprep.subr.mxu0 0.0
      %8743 = vmatpush1.msra.mxu0 0.0
      %8744 = vmatprep.subr.mxu0 0.0
      %8745 = vmatpush1.msra.mxu0 0.0
      %8746 = vmatprep.subr.mxu0 0.0
      %8747 = vmatpush1.msra.mxu0 0.0
      %8748 = vmatprep.subr.mxu0 0.0
      %8749 = vmatpush1.msra.mxu0 0.0
      %8750 = vmatprep.subr.mxu0 0.0
      %8751 = vmatpush1.msra.mxu0 0.0
      %8752 = vmatprep.subr.mxu0 0.0
      %8753 = vmatpush1.msra.mxu0 0.0
      %8754 = vmatprep.subr.mxu0 0.0
      %8755 = vmatpush1.msra.mxu0 0.0
      %8756 = vmatprep.subr.mxu0 0.0
      %8757 = vmatpush1.msra.mxu0 0.0
      %8758 = vmatprep.subr.mxu0 0.0
      %8759 = vmatpush1.msra.mxu0 0.0
      %8760 = vmatprep.subr.mxu0 0.0
      %8761 = vmatpush1.msra.mxu0 0.0
      %8762 = vmatprep.mubr.f32.mxu0 0.0
      %8763 = vmatmul.mubr.f32.gmra.mrb[0].mxu0 %v8694
      %v8764 = vpop.f32.mrb[0].mxu0
      %v8765 = vadd.f32 0.0, %v8764
      %v8766 = vpop.f32.mrb[0].mxu0
      %v8767 = vadd.f32 0.0, %v8766
      %8768 = vmatprep.mubr.f32.mxu0 0.0
      %8769 = vmatmul.mubr.f32.gmra.mrb[0].mxu0 %v8696
      %v8770 = vpop.f32.mrb[0].mxu0
      %v8771 = vadd.f32 0.0, %v8770
      %v8772 = vpop.f32.mrb[0].mxu0
      %v8773 = vadd.f32 0.0, %v8772
      %8774 = vdwg.mxu0
      %v8775 = vrot.slane %v6756, 2
      %v8776 = vrot.slane %v6761, 2
      %v8777 = vsel %vm2171, %v8775, %v8776
      %v8778 = vsel %vm7066, %v8777, 0
      %v8780 = vsel %vm7066, %v8776, 0
      %8782 = vmatprep.subr.mxu0 %v8412
      %8783 = vmatpush1.msra.mxu0 %v8411
      %8784 = vmatprep.subr.mxu0 %v8414
      %8785 = vmatpush1.msra.mxu0 %v8413
      %8786 = vmatprep.subr.mxu0 %v8416
      %8787 = vmatpush1.msra.mxu0 %v8415
      %8788 = vmatprep.subr.mxu0 %v8418
      %8789 = vmatpush1.msra.mxu0 %v8417
      %8790 = vmatprep.subr.mxu0 %v8420
      %8791 = vmatpush1.msra.mxu0 %v8419
      %8792 = vmatprep.subr.mxu0 %v8422
      %8793 = vmatpush1.msra.mxu0 %v8421
      %8794 = vmatprep.subr.mxu0 %v8424
      %8795 = vmatpush1.msra.mxu0 %v8423
      %8796 = vmatprep.subr.mxu0 %v8426
      %8797 = vmatpush1.msra.mxu0 %v8425
      %8798 = vmatprep.subr.mxu0 %v8428
      %8799 = vmatpush1.msra.mxu0 %v8427
      %8800 = vmatprep.subr.mxu0 %v8430
      %8801 = vmatpush1.msra.mxu0 %v8429
      %8802 = vmatprep.subr.mxu0 %v8444
      %8803 = vmatpush1.msra.mxu0 %v8441
      %8804 = vmatprep.subr.mxu0 0.0
      %8805 = vmatpush1.msra.mxu0 0.0
      %8806 = vmatprep.subr.mxu0 0.0
      %8807 = vmatpush1.msra.mxu0 0.0
      %8808 = vmatprep.subr.mxu0 0.0
      %8809 = vmatpush1.msra.mxu0 0.0
      %8810 = vmatprep.subr.mxu0 0.0
      %8811 = vmatpush1.msra.mxu0 0.0
      %8812 = vmatprep.subr.mxu0 0.0
      %8813 = vmatpush1.msra.mxu0 0.0
      %8814 = vmatprep.subr.mxu0 0.0
      %8815 = vmatpush1.msra.mxu0 0.0
      %8816 = vmatprep.subr.mxu0 0.0
      %8817 = vmatpush1.msra.mxu0 0.0
      %8818 = vmatprep.subr.mxu0 0.0
      %8819 = vmatpush1.msra.mxu0 0.0
      %8820 = vmatprep.subr.mxu0 0.0
      %8821 = vmatpush1.msra.mxu0 0.0
      %8822 = vmatprep.subr.mxu0 0.0
      %8823 = vmatpush1.msra.mxu0 0.0
      %8824 = vmatprep.subr.mxu0 0.0
      %8825 = vmatpush1.msra.mxu0 0.0
      %8826 = vmatprep.subr.mxu0 0.0
      %8827 = vmatpush1.msra.mxu0 0.0
      %8828 = vmatprep.subr.mxu0 0.0
      %8829 = vmatpush1.msra.mxu0 0.0
      %8830 = vmatprep.subr.mxu0 0.0
      %8831 = vmatpush1.msra.mxu0 0.0
      %8832 = vmatprep.subr.mxu0 0.0
      %8833 = vmatpush1.msra.mxu0 0.0
      %8834 = vmatprep.subr.mxu0 0.0
      %8835 = vmatpush1.msra.mxu0 0.0
      %8836 = vmatprep.subr.mxu0 0.0
      %8837 = vmatpush1.msra.mxu0 0.0
      %8838 = vmatprep.subr.mxu0 0.0
      %8839 = vmatpush1.msra.mxu0 0.0
      %8840 = vmatprep.subr.mxu0 0.0
      %8841 = vmatpush1.msra.mxu0 0.0
      %8842 = vmatprep.subr.mxu0 0.0
      %8843 = vmatpush1.msra.mxu0 0.0
      %8844 = vmatprep.subr.mxu0 0.0
      %8845 = vmatpush1.msra.mxu0 0.0
      %8846 = vmatprep.mubr.f32.mxu0 0.0
      %8847 = vmatmul.mubr.f32.gmra.mrb[0].mxu0 %v8778
      %v8848 = vpop.f32.mrb[0].mxu0
      %v8849 = vadd.f32 0.0, %v8848
      %v8850 = vpop.f32.mrb[0].mxu0
      %v8851 = vadd.f32 0.0, %v8850
      %8852 = vmatprep.mubr.f32.mxu0 0.0
      %8853 = vmatmul.mubr.f32.gmra.mrb[0].mxu0 %v8780
      %v8854 = vpop.f32.mrb[0].mxu0
      %v8855 = vadd.f32 0.0, %v8854
      %v8856 = vpop.f32.mrb[0].mxu0
      %v8857 = vadd.f32 0.0, %v8856
      %8858 = vdwg.mxu0
      %v8859 = vrot.slane %v6840, 2
      %v8860 = vrot.slane %v6845, 2
      %v8861 = vsel %vm2171, %v8859, %v8860
      %v8862 = vsel %vm7066, %v8861, 0
      %v8864 = vsel %vm7066, %v8860, 0
      %8866 = vmatprep.subr.mxu0 %v8412
      %8867 = vmatpush1.msra.mxu0 %v8411
      %8868 = vmatprep.subr.mxu0 %v8414
      %8869 = vmatpush1.msra.mxu0 %v8413
      %8870 = vmatprep.subr.mxu0 %v8416
      %8871 = vmatpush1.msra.mxu0 %v8415
      %8872 = vmatprep.subr.mxu0 %v8418
      %8873 = vmatpush1.msra.mxu0 %v8417
      %8874 = vmatprep.subr.mxu0 %v8420
      %8875 = vmatpush1.msra.mxu0 %v8419
      %8876 = vmatprep.subr.mxu0 %v8422
      %8877 = vmatpush1.msra.mxu0 %v8421
      %8878 = vmatprep.subr.mxu0 %v8424
      %8879 = vmatpush1.msra.mxu0 %v8423
      %8880 = vmatprep.subr.mxu0 %v8426
      %8881 = vmatpush1.msra.mxu0 %v8425
      %8882 = vmatprep.subr.mxu0 %v8428
      %8883 = vmatpush1.msra.mxu0 %v8427
      %8884 = vmatprep.subr.mxu0 %v8430
      %8885 = vmatpush1.msra.mxu0 %v8429
      %8886 = vmatprep.subr.mxu0 %v8444
      %8887 = vmatpush1.msra.mxu0 %v8441
      %8888 = vmatprep.subr.mxu0 0.0
      %8889 = vmatpush1.msra.mxu0 0.0
      %8890 = vmatprep.subr.mxu0 0.0
      %8891 = vmatpush1.msra.mxu0 0.0
      %8892 = vmatprep.subr.mxu0 0.0
      %8893 = vmatpush1.msra.mxu0 0.0
      %8894 = vmatprep.subr.mxu0 0.0
      %8895 = vmatpush1.msra.mxu0 0.0
      %8896 = vmatprep.subr.mxu0 0.0
      %8897 = vmatpush1.msra.mxu0 0.0
      %8898 = vmatprep.subr.mxu0 0.0
      %8899 = vmatpush1.msra.mxu0 0.0
      %8900 = vmatprep.subr.mxu0 0.0
      %8901 = vmatpush1.msra.mxu0 0.0
      %8902 = vmatprep.subr.mxu0 0.0
      %8903 = vmatpush1.msra.mxu0 0.0
      %8904 = vmatprep.subr.mxu0 0.0
      %8905 = vmatpush1.msra.mxu0 0.0
      %8906 = vmatprep.subr.mxu0 0.0
      %8907 = vmatpush1.msra.mxu0 0.0
      %8908 = vmatprep.subr.mxu0 0.0
      %8909 = vmatpush1.msra.mxu0 0.0
      %8910 = vmatprep.subr.mxu0 0.0
      %8911 = vmatpush1.msra.mxu0 0.0
      %8912 = vmatprep.subr.mxu0 0.0
      %8913 = vmatpush1.msra.mxu0 0.0
      %8914 = vmatprep.subr.mxu0 0.0
      %8915 = vmatpush1.msra.mxu0 0.0
      %8916 = vmatprep.subr.mxu0 0.0
      %8917 = vmatpush1.msra.mxu0 0.0
      %8918 = vmatprep.subr.mxu0 0.0
      %8919 = vmatpush1.msra.mxu0 0.0
      %8920 = vmatprep.subr.mxu0 0.0
      %8921 = vmatpush1.msra.mxu0 0.0
      %8922 = vmatprep.subr.mxu0 0.0
      %8923 = vmatpush1.msra.mxu0 0.0
      %8924 = vmatprep.subr.mxu0 0.0
      %8925 = vmatpush1.msra.mxu0 0.0
      %8926 = vmatprep.subr.mxu0 0.0
      %8927 = vmatpush1.msra.mxu0 0.0
      %8928 = vmatprep.subr.mxu0 0.0
      %8929 = vmatpush1.msra.mxu0 0.0
      %8930 = vmatprep.mubr.f32.mxu0 0.0
      %8931 = vmatmul.mubr.f32.gmra.mrb[0].mxu0 %v8862
      %v8932 = vpop.f32.mrb[0].mxu0
      %v8933 = vadd.f32 0.0, %v8932
      %v8934 = vpop.f32.mrb[0].mxu0
      %v8935 = vadd.f32 0.0, %v8934
      %8936 = vmatprep.mubr.f32.mxu0 0.0
      %8937 = vmatmul.mubr.f32.gmra.mrb[0].mxu0 %v8864
      %v8938 = vpop.f32.mrb[0].mxu0
      %v8939 = vadd.f32 0.0, %v8938
      %v8940 = vpop.f32.mrb[0].mxu0
      %v8941 = vadd.f32 0.0, %v8940
      %8942 = vdwg.mxu0
      %v8943 = vrot.slane %v6924, 2
      %v8944 = vrot.slane %v6929, 2
      %v8945 = vsel %vm2171, %v8943, %v8944
      %v8946 = vsel %vm7066, %v8945, 0
      %v8948 = vsel %vm7066, %v8944, 0
      %8950 = vmatprep.subr.mxu0 %v8412
      %8951 = vmatpush1.msra.mxu0 %v8411
      %8952 = vmatprep.subr.mxu0 %v8414
      %8953 = vmatpush1.msra.mxu0 %v8413
      %8954 = vmatprep.subr.mxu0 %v8416
      %8955 = vmatpush1.msra.mxu0 %v8415
      %8956 = vmatprep.subr.mxu0 %v8418
      %8957 = vmatpush1.msra.mxu0 %v8417
      %8958 = vmatprep.subr.mxu0 %v8420
      %8959 = vmatpush1.msra.mxu0 %v8419
      %8960 = vmatprep.subr.mxu0 %v8422
      %8961 = vmatpush1.msra.mxu0 %v8421
      %8962 = vmatprep.subr.mxu0 %v8424
      %8963 = vmatpush1.msra.mxu0 %v8423
      %8964 = vmatprep.subr.mxu0 %v8426
      %8965 = vmatpush1.msra.mxu0 %v8425
      %8966 = vmatprep.subr.mxu0 %v8428
      %8967 = vmatpush1.msra.mxu0 %v8427
      %8968 = vmatprep.subr.mxu0 %v8430
      %8969 = vmatpush1.msra.mxu0 %v8429
      %8970 = vmatprep.subr.mxu0 %v8444
      %8971 = vmatpush1.msra.mxu0 %v8441
      %8972 = vmatprep.subr.mxu0 0.0
      %8973 = vmatpush1.msra.mxu0 0.0
      %8974 = vmatprep.subr.mxu0 0.0
      %8975 = vmatpush1.msra.mxu0 0.0
      %8976 = vmatprep.subr.mxu0 0.0
      %8977 = vmatpush1.msra.mxu0 0.0
      %8978 = vmatprep.subr.mxu0 0.0
      %8979 = vmatpush1.msra.mxu0 0.0
      %8980 = vmatprep.subr.mxu0 0.0
      %8981 = vmatpush1.msra.mxu0 0.0
      %8982 = vmatprep.subr.mxu0 0.0
      %8983 = vmatpush1.msra.mxu0 0.0
      %8984 = vmatprep.subr.mxu0 0.0
      %8985 = vmatpush1.msra.mxu0 0.0
      %8986 = vmatprep.subr.mxu0 0.0
      %8987 = vmatpush1.msra.mxu0 0.0
      %8988 = vmatprep.subr.mxu0 0.0
      %8989 = vmatpush1.msra.mxu0 0.0
      %8990 = vmatprep.subr.mxu0 0.0
      %8991 = vmatpush1.msra.mxu0 0.0
      %8992 = vmatprep.subr.mxu0 0.0
      %8993 = vmatpush1.msra.mxu0 0.0
      %8994 = vmatprep.subr.mxu0 0.0
      %8995 = vmatpush1.msra.mxu0 0.0
      %8996 = vmatprep.subr.mxu0 0.0
      %8997 = vmatpush1.msra.mxu0 0.0
      %8998 = vmatprep.subr.mxu0 0.0
      %8999 = vmatpush1.msra.mxu0 0.0
      %9000 = vmatprep.subr.mxu0 0.0
      %9001 = vmatpush1.msra.mxu0 0.0
      %9002 = vmatprep.subr.mxu0 0.0
      %9003 = vmatpush1.msra.mxu0 0.0
      %9004 = vmatprep.subr.mxu0 0.0
      %9005 = vmatpush1.msra.mxu0 0.0
      %9006 = vmatprep.subr.mxu0 0.0
      %9007 = vmatpush1.msra.mxu0 0.0
      %9008 = vmatprep.subr.mxu0 0.0
      %9009 = vmatpush1.msra.mxu0 0.0
      %9010 = vmatprep.subr.mxu0 0.0
      %9011 = vmatpush1.msra.mxu0 0.0
      %9012 = vmatprep.subr.mxu0 0.0
      %9013 = vmatpush1.msra.mxu0 0.0
      %9014 = vmatprep.mubr.f32.mxu0 0.0
      %9015 = vmatmul.mubr.f32.gmra.mrb[0].mxu0 %v8946
      %v9016 = vpop.f32.mrb[0].mxu0
      %v9017 = vadd.f32 0.0, %v9016
      %v9018 = vpop.f32.mrb[0].mxu0
      %v9019 = vadd.f32 0.0, %v9018
      %9020 = vmatprep.mubr.f32.mxu0 0.0
      %9021 = vmatmul.mubr.f32.gmra.mrb[0].mxu0 %v8948
      %v9022 = vpop.f32.mrb[0].mxu0
      %v9023 = vadd.f32 0.0, %v9022
      %v9024 = vpop.f32.mrb[0].mxu0
      %v9025 = vadd.f32 0.0, %v9024
      %9026 = vdwg.mxu0
      %v9027 = vrot.slane %v7008, 2
      %v9028 = vrot.slane %v7013, 2
      %v9029 = vsel %vm2171, %v9027, %v9028
      %v9030 = vsel %vm7066, %v9029, 0
      %v9032 = vsel %vm7066, %v9028, 0
      %9034 = vmatprep.subr.mxu0 %v8412
      %9035 = vmatpush1.msra.mxu0 %v8411
      %9036 = vmatprep.subr.mxu0 %v8414
      %9037 = vmatpush1.msra.mxu0 %v8413
      %9038 = vmatprep.subr.mxu0 %v8416
      %9039 = vmatpush1.msra.mxu0 %v8415
      %9040 = vmatprep.subr.mxu0 %v8418
      %9041 = vmatpush1.msra.mxu0 %v8417
      %9042 = vmatprep.subr.mxu0 %v8420
      %9043 = vmatpush1.msra.mxu0 %v8419
      %9044 = vmatprep.subr.mxu0 %v8422
      %9045 = vmatpush1.msra.mxu0 %v8421
      %9046 = vmatprep.subr.mxu0 %v8424
      %9047 = vmatpush1.msra.mxu0 %v8423
      %9048 = vmatprep.subr.mxu0 %v8426
      %9049 = vmatpush1.msra.mxu0 %v8425
      %9050 = vmatprep.subr.mxu0 %v8428
      %9051 = vmatpush1.msra.mxu0 %v8427
      %9052 = vmatprep.subr.mxu0 %v8430
      %9053 = vmatpush1.msra.mxu0 %v8429
      %9054 = vmatprep.subr.mxu0 %v8444
      %9055 = vmatpush1.msra.mxu0 %v8441
      %9056 = vmatprep.subr.mxu0 0.0
      %9057 = vmatpush1.msra.mxu0 0.0
      %9058 = vmatprep.subr.mxu0 0.0
      %9059 = vmatpush1.msra.mxu0 0.0
      %9060 = vmatprep.subr.mxu0 0.0
      %9061 = vmatpush1.msra.mxu0 0.0
      %9062 = vmatprep.subr.mxu0 0.0
      %9063 = vmatpush1.msra.mxu0 0.0
      %9064 = vmatprep.subr.mxu0 0.0
      %9065 = vmatpush1.msra.mxu0 0.0
      %9066 = vmatprep.subr.mxu0 0.0
      %9067 = vmatpush1.msra.mxu0 0.0
      %9068 = vmatprep.subr.mxu0 0.0
      %9069 = vmatpush1.msra.mxu0 0.0
      %9070 = vmatprep.subr.mxu0 0.0
      %9071 = vmatpush1.msra.mxu0 0.0
      %9072 = vmatprep.subr.mxu0 0.0
      %9073 = vmatpush1.msra.mxu0 0.0
      %9074 = vmatprep.subr.mxu0 0.0
      %9075 = vmatpush1.msra.mxu0 0.0
      %9076 = vmatprep.subr.mxu0 0.0
      %9077 = vmatpush1.msra.mxu0 0.0
      %9078 = vmatprep.subr.mxu0 0.0
      %9079 = vmatpush1.msra.mxu0 0.0
      %9080 = vmatprep.subr.mxu0 0.0
      %9081 = vmatpush1.msra.mxu0 0.0
      %9082 = vmatprep.subr.mxu0 0.0
      %9083 = vmatpush1.msra.mxu0 0.0
      %9084 = vmatprep.subr.mxu0 0.0
      %9085 = vmatpush1.msra.mxu0 0.0
      %9086 = vmatprep.subr.mxu0 0.0
      %9087 = vmatpush1.msra.mxu0 0.0
      %9088 = vmatprep.subr.mxu0 0.0
      %9089 = vmatpush1.msra.mxu0 0.0
      %9090 = vmatprep.subr.mxu0 0.0
      %9091 = vmatpush1.msra.mxu0 0.0
      %9092 = vmatprep.subr.mxu0 0.0
      %9093 = vmatpush1.msra.mxu0 0.0
      %9094 = vmatprep.subr.mxu0 0.0
      %9095 = vmatpush1.msra.mxu0 0.0
      %9096 = vmatprep.subr.mxu0 0.0
      %9097 = vmatpush1.msra.mxu0 0.0
      %9098 = vmatprep.mubr.f32.mxu0 0.0
      %9099 = vmatmul.mubr.f32.gmra.mrb[0].mxu0 %v9030
      %v9100 = vpop.f32.mrb[0].mxu0
      %v9101 = vadd.f32 0.0, %v9100
      %v9102 = vpop.f32.mrb[0].mxu0
      %v9103 = vadd.f32 0.0, %v9102
      %9104 = vmatprep.mubr.f32.mxu0 0.0
      %9105 = vmatmul.mubr.f32.gmra.mrb[0].mxu0 %v9032
      %v9106 = vpop.f32.mrb[0].mxu0
      %v9107 = vadd.f32 0.0, %v9106
      %v9108 = vpop.f32.mrb[0].mxu0
      %v9109 = vadd.f32 0.0, %v9108
      %9110 = vdwg.mxu0
      %v9111 = vadd.f32 %v7833, %v8513
      %v9112 = vadd.f32 %v7835, %v8515
      %v9113 = vadd.f32 %v7839, %v8519
      %v9114 = vadd.f32 %v7841, %v8521
      %v9115 = vadd.f32 %v7914, %v8597
      %v9116 = vadd.f32 %v7916, %v8599
      %v9117 = vadd.f32 %v7920, %v8603
      %v9118 = vadd.f32 %v7922, %v8605
      %v9119 = vadd.f32 %v7995, %v8681
      %v9120 = vadd.f32 %v7997, %v8683
      %v9121 = vadd.f32 %v8001, %v8687
      %v9122 = vadd.f32 %v8003, %v8689
      %v9123 = vadd.f32 %v8076, %v8765
      %v9124 = vadd.f32 %v8078, %v8767
      %v9125 = vadd.f32 %v8082, %v8771
      %v9126 = vadd.f32 %v8084, %v8773
      %v9127 = vadd.f32 %v8157, %v8849
      %v9128 = vadd.f32 %v8159, %v8851
      %v9129 = vadd.f32 %v8163, %v8855
      %v9130 = vadd.f32 %v8165, %v8857
      %v9131 = vadd.f32 %v8238, %v8933
      %v9132 = vadd.f32 %v8240, %v8935
      %v9133 = vadd.f32 %v8244, %v8939
      %v9134 = vadd.f32 %v8246, %v8941
      %v9135 = vadd.f32 %v8319, %v9017
      %v9136 = vadd.f32 %v8321, %v9019
      %v9137 = vadd.f32 %v8325, %v9023
      %v9138 = vadd.f32 %v8327, %v9025
      %v9139 = vadd.f32 %v8400, %v9101
      %v9140 = vadd.f32 %v8402, %v9103
      %v9141 = vadd.f32 %v8406, %v9107
      %v9142 = vadd.f32 %v8408, %v9109
      %s9143 = scalar_lea.vmem %s5, 528
      %v9144 = vld [vmem:[%s9143] sm:$0xff]
      %v9145 = vld [vmem:[%s9143 + $0x8] sm:$0xff]
      %v9146 = vld [vmem:[%s9143 + $0x10] sm:$0xff]
      %v9147 = vld [vmem:[%s9143 + $0x18] sm:$0xff]
      %v9148 = vld [vmem:[%s9143 + $0x20] sm:$0xff]
      %v9149 = vld [vmem:[%s9143 + $0x28] sm:$0xff]
      %v9150 = vld [vmem:[%s9143 + $0x30] sm:$0xff]
      %v9151 = vld [vmem:[%s9143 + $0x38] sm:$0xff]
      %v9152 = vld [vmem:[%s9143 + $0x40] sm:$0xff]
      %v9153 = vld [vmem:[%s9143 + $0x48] sm:$0xff]
      %v9154 = vld [vmem:[%s9143 + $0x50] sm:$0xff]
      %v9155 = vld [vmem:[%s9143 + $0x58] sm:$0xff]
      %v9156 = vld [vmem:[%s9143 + $0x60] sm:$0xff]
      %v9157 = vld [vmem:[%s9143 + $0x68] sm:$0xff]
      %v9158 = vld [vmem:[%s9143 + $0x70] sm:$0xff]
      %v9159 = vld [vmem:[%s9143 + $0x78] sm:$0xff]
      %v9160 = vld [vmem:[%s9143 + $0x80] sm:$0xff]
      %v9161 = vld [vmem:[%s9143 + $0x88] sm:$0xff]
      %v9162 = vld [vmem:[%s9143 + $0x90] sm:$0xff]
      %v9163 = vld [vmem:[%s9143 + $0x98] sm:$0xff]
      %v9164 = vld [vmem:[%s9143 + $0xa0] sm:$0xf]
      %v9165 = vld [vmem:[%s9143 + $0xa8] sm:$0xf]
      %v9166 = vrot.slane %v6420, 3
      %v9167 = vrot.slane %v6425, 3
      %v9168 = vsel %vm3077, %v9166, %v9167
      %v9169 = vsel %vm7066, %v9168, 0
      %v9171 = vsel %vm7066, %v9167, 0
      %v9174 = vsel %vm3983, %v9164, 0
      %v9177 = vsel %vm3983, %v9165, 0
      %9179 = vmatprep.subr.mxu0 %v9145
      %9180 = vmatpush1.msra.mxu0 %v9144
      %9181 = vmatprep.subr.mxu0 %v9147
      %9182 = vmatpush1.msra.mxu0 %v9146
      %9183 = vmatprep.subr.mxu0 %v9149
      %9184 = vmatpush1.msra.mxu0 %v9148
      %9185 = vmatprep.subr.mxu0 %v9151
      %9186 = vmatpush1.msra.mxu0 %v9150
      %9187 = vmatprep.subr.mxu0 %v9153
      %9188 = vmatpush1.msra.mxu0 %v9152
      %9189 = vmatprep.subr.mxu0 %v9155
      %9190 = vmatpush1.msra.mxu0 %v9154
      %9191 = vmatprep.subr.mxu0 %v9157
      %9192 = vmatpush1.msra.mxu0 %v9156
      %9193 = vmatprep.subr.mxu0 %v9159
      %9194 = vmatpush1.msra.mxu0 %v9158
      %9195 = vmatprep.subr.mxu0 %v9161
      %9196 = vmatpush1.msra.mxu0 %v9160
      %9197 = vmatprep.subr.mxu0 %v9163
      %9198 = vmatpush1.msra.mxu0 %v9162
      %9199 = vmatprep.subr.mxu0 %v9177
      %9200 = vmatpush1.msra.mxu0 %v9174
      %9201 = vmatprep.subr.mxu0 0.0
      %9202 = vmatpush1.msra.mxu0 0.0
      %9203 = vmatprep.subr.mxu0 0.0
      %9204 = vmatpush1.msra.mxu0 0.0
      %9205 = vmatprep.subr.mxu0 0.0
      %9206 = vmatpush1.msra.mxu0 0.0
      %9207 = vmatprep.subr.mxu0 0.0
      %9208 = vmatpush1.msra.mxu0 0.0
      %9209 = vmatprep.subr.mxu0 0.0
      %9210 = vmatpush1.msra.mxu0 0.0
      %9211 = vmatprep.subr.mxu0 0.0
      %9212 = vmatpush1.msra.mxu0 0.0
      %9213 = vmatprep.subr.mxu0 0.0
      %9214 = vmatpush1.msra.mxu0 0.0
      %9215 = vmatprep.subr.mxu0 0.0
      %9216 = vmatpush1.msra.mxu0 0.0
      %9217 = vmatprep.subr.mxu0 0.0
      %9218 = vmatpush1.msra.mxu0 0.0
      %9219 = vmatprep.subr.mxu0 0.0
      %9220 = vmatpush1.msra.mxu0 0.0
      %9221 = vmatprep.subr.mxu0 0.0
      %9222 = vmatpush1.msra.mxu0 0.0
      %9223 = vmatprep.subr.mxu0 0.0
      %9224 = vmatpush1.msra.mxu0 0.0
      %9225 = vmatprep.subr.mxu0 0.0
      %9226 = vmatpush1.msra.mxu0 0.0
      %9227 = vmatprep.subr.mxu0 0.0
      %9228 = vmatpush1.msra.mxu0 0.0
      %9229 = vmatprep.subr.mxu0 0.0
      %9230 = vmatpush1.msra.mxu0 0.0
      %9231 = vmatprep.subr.mxu0 0.0
      %9232 = vmatpush1.msra.mxu0 0.0
      %9233 = vmatprep.subr.mxu0 0.0
      %9234 = vmatpush1.msra.mxu0 0.0
      %9235 = vmatprep.subr.mxu0 0.0
      %9236 = vmatpush1.msra.mxu0 0.0
      %9237 = vmatprep.subr.mxu0 0.0
      %9238 = vmatpush1.msra.mxu0 0.0
      %9239 = vmatprep.subr.mxu0 0.0
      %9240 = vmatpush1.msra.mxu0 0.0
      %9241 = vmatprep.subr.mxu0 0.0
      %9242 = vmatpush1.msra.mxu0 0.0
      %9243 = vmatprep.mubr.f32.mxu0 0.0
      %9244 = vmatmul.mubr.f32.gmra.mrb[0].mxu0 %v9169
      %v9245 = vpop.f32.mrb[0].mxu0
      %v9246 = vadd.f32 0.0, %v9245
      %v9247 = vpop.f32.mrb[0].mxu0
      %v9248 = vadd.f32 0.0, %v9247
      %9249 = vmatprep.mubr.f32.mxu0 0.0
      %9250 = vmatmul.mubr.f32.gmra.mrb[0].mxu0 %v9171
      %v9251 = vpop.f32.mrb[0].mxu0
      %v9252 = vadd.f32 0.0, %v9251
      %v9253 = vpop.f32.mrb[0].mxu0
      %v9254 = vadd.f32 0.0, %v9253
      %9255 = vdwg.mxu0
      %v9256 = vrot.slane %v6504, 3
      %v9257 = vrot.slane %v6509, 3
      %v9258 = vsel %vm3077, %v9256, %v9257
      %v9259 = vsel %vm7066, %v9258, 0
      %v9261 = vsel %vm7066, %v9257, 0
      %9263 = vmatprep.subr.mxu0 %v9145
      %9264 = vmatpush1.msra.mxu0 %v9144
      %9265 = vmatprep.subr.mxu0 %v9147
      %9266 = vmatpush1.msra.mxu0 %v9146
      %9267 = vmatprep.subr.mxu0 %v9149
      %9268 = vmatpush1.msra.mxu0 %v9148
      %9269 = vmatprep.subr.mxu0 %v9151
      %9270 = vmatpush1.msra.mxu0 %v9150
      %9271 = vmatprep.subr.mxu0 %v9153
      %9272 = vmatpush1.msra.mxu0 %v9152
      %9273 = vmatprep.subr.mxu0 %v9155
      %9274 = vmatpush1.msra.mxu0 %v9154
      %9275 = vmatprep.subr.mxu0 %v9157
      %9276 = vmatpush1.msra.mxu0 %v9156
      %9277 = vmatprep.subr.mxu0 %v9159
      %9278 = vmatpush1.msra.mxu0 %v9158
      %9279 = vmatprep.subr.mxu0 %v9161
      %9280 = vmatpush1.msra.mxu0 %v9160
      %9281 = vmatprep.subr.mxu0 %v9163
      %9282 = vmatpush1.msra.mxu0 %v9162
      %9283 = vmatprep.subr.mxu0 %v9177
      %9284 = vmatpush1.msra.mxu0 %v9174
      %9285 = vmatprep.subr.mxu0 0.0
      %9286 = vmatpush1.msra.mxu0 0.0
      %9287 = vmatprep.subr.mxu0 0.0
      %9288 = vmatpush1.msra.mxu0 0.0
      %9289 = vmatprep.subr.mxu0 0.0
      %9290 = vmatpush1.msra.mxu0 0.0
      %9291 = vmatprep.subr.mxu0 0.0
      %9292 = vmatpush1.msra.mxu0 0.0
      %9293 = vmatprep.subr.mxu0 0.0
      %9294 = vmatpush1.msra.mxu0 0.0
      %9295 = vmatprep.subr.mxu0 0.0
      %9296 = vmatpush1.msra.mxu0 0.0
      %9297 = vmatprep.subr.mxu0 0.0
      %9298 = vmatpush1.msra.mxu0 0.0
      %9299 = vmatprep.subr.mxu0 0.0
      %9300 = vmatpush1.msra.mxu0 0.0
      %9301 = vmatprep.subr.mxu0 0.0
      %9302 = vmatpush1.msra.mxu0 0.0
      %9303 = vmatprep.subr.mxu0 0.0
      %9304 = vmatpush1.msra.mxu0 0.0
      %9305 = vmatprep.subr.mxu0 0.0
      %9306 = vmatpush1.msra.mxu0 0.0
      %9307 = vmatprep.subr.mxu0 0.0
      %9308 = vmatpush1.msra.mxu0 0.0
      %9309 = vmatprep.subr.mxu0 0.0
      %9310 = vmatpush1.msra.mxu0 0.0
      %9311 = vmatprep.subr.mxu0 0.0
      %9312 = vmatpush1.msra.mxu0 0.0
      %9313 = vmatprep.subr.mxu0 0.0
      %9314 = vmatpush1.msra.mxu0 0.0
      %9315 = vmatprep.subr.mxu0 0.0
      %9316 = vmatpush1.msra.mxu0 0.0
      %9317 = vmatprep.subr.mxu0 0.0
      %9318 = vmatpush1.msra.mxu0 0.0
      %9319 = vmatprep.subr.mxu0 0.0
      %9320 = vmatpush1.msra.mxu0 0.0
      %9321 = vmatprep.subr.mxu0 0.0
      %9322 = vmatpush1.msra.mxu0 0.0
      %9323 = vmatprep.subr.mxu0 0.0
      %9324 = vmatpush1.msra.mxu0 0.0
      %9325 = vmatprep.subr.mxu0 0.0
      %9326 = vmatpush1.msra.mxu0 0.0
      %9327 = vmatprep.mubr.f32.mxu0 0.0
      %9328 = vmatmul.mubr.f32.gmra.mrb[0].mxu0 %v9259
      %v9329 = vpop.f32.mrb[0].mxu0
      %v9330 = vadd.f32 0.0, %v9329
      %v9331 = vpop.f32.mrb[0].mxu0
      %v9332 = vadd.f32 0.0, %v9331
      %9333 = vmatprep.mubr.f32.mxu0 0.0
      %9334 = vmatmul.mubr.f32.gmra.mrb[0].mxu0 %v9261
      %v9335 = vpop.f32.mrb[0].mxu0
      %v9336 = vadd.f32 0.0, %v9335
      %v9337 = vpop.f32.mrb[0].mxu0
      %v9338 = vadd.f32 0.0, %v9337
      %9339 = vdwg.mxu0
      %v9340 = vrot.slane %v6588, 3
      %v9341 = vrot.slane %v6593, 3
      %v9342 = vsel %vm3077, %v9340, %v9341
      %v9343 = vsel %vm7066, %v9342, 0
      %v9345 = vsel %vm7066, %v9341, 0
      %9347 = vmatprep.subr.mxu0 %v9145
      %9348 = vmatpush1.msra.mxu0 %v9144
      %9349 = vmatprep.subr.mxu0 %v9147
      %9350 = vmatpush1.msra.mxu0 %v9146
      %9351 = vmatprep.subr.mxu0 %v9149
      %9352 = vmatpush1.msra.mxu0 %v9148
      %9353 = vmatprep.subr.mxu0 %v9151
      %9354 = vmatpush1.msra.mxu0 %v9150
      %9355 = vmatprep.subr.mxu0 %v9153
      %9356 = vmatpush1.msra.mxu0 %v9152
      %9357 = vmatprep.subr.mxu0 %v9155
      %9358 = vmatpush1.msra.mxu0 %v9154
      %9359 = vmatprep.subr.mxu0 %v9157
      %9360 = vmatpush1.msra.mxu0 %v9156
      %9361 = vmatprep.subr.mxu0 %v9159
      %9362 = vmatpush1.msra.mxu0 %v9158
      %9363 = vmatprep.subr.mxu0 %v9161
      %9364 = vmatpush1.msra.mxu0 %v9160
      %9365 = vmatprep.subr.mxu0 %v9163
      %9366 = vmatpush1.msra.mxu0 %v9162
      %9367 = vmatprep.subr.mxu0 %v9177
      %9368 = vmatpush1.msra.mxu0 %v9174
      %9369 = vmatprep.subr.mxu0 0.0
      %9370 = vmatpush1.msra.mxu0 0.0
      %9371 = vmatprep.subr.mxu0 0.0
      %9372 = vmatpush1.msra.mxu0 0.0
      %9373 = vmatprep.subr.mxu0 0.0
      %9374 = vmatpush1.msra.mxu0 0.0
      %9375 = vmatprep.subr.mxu0 0.0
      %9376 = vmatpush1.msra.mxu0 0.0
      %9377 = vmatprep.subr.mxu0 0.0
      %9378 = vmatpush1.msra.mxu0 0.0
      %9379 = vmatprep.subr.mxu0 0.0
      %9380 = vmatpush1.msra.mxu0 0.0
      %9381 = vmatprep.subr.mxu0 0.0
      %9382 = vmatpush1.msra.mxu0 0.0
      %9383 = vmatprep.subr.mxu0 0.0
      %9384 = vmatpush1.msra.mxu0 0.0
      %9385 = vmatprep.subr.mxu0 0.0
      %9386 = vmatpush1.msra.mxu0 0.0
      %9387 = vmatprep.subr.mxu0 0.0
      %9388 = vmatpush1.msra.mxu0 0.0
      %9389 = vmatprep.subr.mxu0 0.0
      %9390 = vmatpush1.msra.mxu0 0.0
      %9391 = vmatprep.subr.mxu0 0.0
      %9392 = vmatpush1.msra.mxu0 0.0
      %9393 = vmatprep.subr.mxu0 0.0
      %9394 = vmatpush1.msra.mxu0 0.0
      %9395 = vmatprep.subr.mxu0 0.0
      %9396 = vmatpush1.msra.mxu0 0.0
      %9397 = vmatprep.subr.mxu0 0.0
      %9398 = vmatpush1.msra.mxu0 0.0
      %9399 = vmatprep.subr.mxu0 0.0
      %9400 = vmatpush1.msra.mxu0 0.0
      %9401 = vmatprep.subr.mxu0 0.0
      %9402 = vmatpush1.msra.mxu0 0.0
      %9403 = vmatprep.subr.mxu0 0.0
      %9404 = vmatpush1.msra.mxu0 0.0
      %9405 = vmatprep.subr.mxu0 0.0
      %9406 = vmatpush1.msra.mxu0 0.0
      %9407 = vmatprep.subr.mxu0 0.0
      %9408 = vmatpush1.msra.mxu0 0.0
      %9409 = vmatprep.subr.mxu0 0.0
      %9410 = vmatpush1.msra.mxu0 0.0
      %9411 = vmatprep.mubr.f32.mxu0 0.0
      %9412 = vmatmul.mubr.f32.gmra.mrb[0].mxu0 %v9343
      %v9413 = vpop.f32.mrb[0].mxu0
      %v9414 = vadd.f32 0.0, %v9413
      %v9415 = vpop.f32.mrb[0].mxu0
      %v9416 = vadd.f32 0.0, %v9415
      %9417 = vmatprep.mubr.f32.mxu0 0.0
      %9418 = vmatmul.mubr.f32.gmra.mrb[0].mxu0 %v9345
      %v9419 = vpop.f32.mrb[0].mxu0
      %v9420 = vadd.f32 0.0, %v9419
      %v9421 = vpop.f32.mrb[0].mxu0
      %v9422 = vadd.f32 0.0, %v9421
      %9423 = vdwg.mxu0
      %v9424 = vrot.slane %v6672, 3
      %v9425 = vrot.slane %v6677, 3
      %v9426 = vsel %vm3077, %v9424, %v9425
      %v9427 = vsel %vm7066, %v9426, 0
      %v9429 = vsel %vm7066, %v9425, 0
      %9431 = vmatprep.subr.mxu0 %v9145
      %9432 = vmatpush1.msra.mxu0 %v9144
      %9433 = vmatprep.subr.mxu0 %v9147
      %9434 = vmatpush1.msra.mxu0 %v9146
      %9435 = vmatprep.subr.mxu0 %v9149
      %9436 = vmatpush1.msra.mxu0 %v9148
      %9437 = vmatprep.subr.mxu0 %v9151
      %9438 = vmatpush1.msra.mxu0 %v9150
      %9439 = vmatprep.subr.mxu0 %v9153
      %9440 = vmatpush1.msra.mxu0 %v9152
      %9441 = vmatprep.subr.mxu0 %v9155
      %9442 = vmatpush1.msra.mxu0 %v9154
      %9443 = vmatprep.subr.mxu0 %v9157
      %9444 = vmatpush1.msra.mxu0 %v9156
      %9445 = vmatprep.subr.mxu0 %v9159
      %9446 = vmatpush1.msra.mxu0 %v9158
      %9447 = vmatprep.subr.mxu0 %v9161
      %9448 = vmatpush1.msra.mxu0 %v9160
      %9449 = vmatprep.subr.mxu0 %v9163
      %9450 = vmatpush1.msra.mxu0 %v9162
      %9451 = vmatprep.subr.mxu0 %v9177
      %9452 = vmatpush1.msra.mxu0 %v9174
      %9453 = vmatprep.subr.mxu0 0.0
      %9454 = vmatpush1.msra.mxu0 0.0
      %9455 = vmatprep.subr.mxu0 0.0
      %9456 = vmatpush1.msra.mxu0 0.0
      %9457 = vmatprep.subr.mxu0 0.0
      %9458 = vmatpush1.msra.mxu0 0.0
      %9459 = vmatprep.subr.mxu0 0.0
      %9460 = vmatpush1.msra.mxu0 0.0
      %9461 = vmatprep.subr.mxu0 0.0
      %9462 = vmatpush1.msra.mxu0 0.0
      %9463 = vmatprep.subr.mxu0 0.0
      %9464 = vmatpush1.msra.mxu0 0.0
      %9465 = vmatprep.subr.mxu0 0.0
      %9466 = vmatpush1.msra.mxu0 0.0
      %9467 = vmatprep.subr.mxu0 0.0
      %9468 = vmatpush1.msra.mxu0 0.0
      %9469 = vmatprep.subr.mxu0 0.0
      %9470 = vmatpush1.msra.mxu0 0.0
      %9471 = vmatprep.subr.mxu0 0.0
      %9472 = vmatpush1.msra.mxu0 0.0
      %9473 = vmatprep.subr.mxu0 0.0
      %9474 = vmatpush1.msra.mxu0 0.0
      %9475 = vmatprep.subr.mxu0 0.0
      %9476 = vmatpush1.msra.mxu0 0.0
      %9477 = vmatprep.subr.mxu0 0.0
      %9478 = vmatpush1.msra.mxu0 0.0
      %9479 = vmatprep.subr.mxu0 0.0
      %9480 = vmatpush1.msra.mxu0 0.0
      %9481 = vmatprep.subr.mxu0 0.0
      %9482 = vmatpush1.msra.mxu0 0.0
      %9483 = vmatprep.subr.mxu0 0.0
      %9484 = vmatpush1.msra.mxu0 0.0
      %9485 = vmatprep.subr.mxu0 0.0
      %9486 = vmatpush1.msra.mxu0 0.0
      %9487 = vmatprep.subr.mxu0 0.0
      %9488 = vmatpush1.msra.mxu0 0.0
      %9489 = vmatprep.subr.mxu0 0.0
      %9490 = vmatpush1.msra.mxu0 0.0
      %9491 = vmatprep.subr.mxu0 0.0
      %9492 = vmatpush1.msra.mxu0 0.0
      %9493 = vmatprep.subr.mxu0 0.0
      %9494 = vmatpush1.msra.mxu0 0.0
      %9495 = vmatprep.mubr.f32.mxu0 0.0
      %9496 = vmatmul.mubr.f32.gmra.mrb[0].mxu0 %v9427
      %v9497 = vpop.f32.mrb[0].mxu0
      %v9498 = vadd.f32 0.0, %v9497
      %v9499 = vpop.f32.mrb[0].mxu0
      %v9500 = vadd.f32 0.0, %v9499
      %9501 = vmatprep.mubr.f32.mxu0 0.0
      %9502 = vmatmul.mubr.f32.gmra.mrb[0].mxu0 %v9429
      %v9503 = vpop.f32.mrb[0].mxu0
      %v9504 = vadd.f32 0.0, %v9503
      %v9505 = vpop.f32.mrb[0].mxu0
      %v9506 = vadd.f32 0.0, %v9505
      %9507 = vdwg.mxu0
      %v9508 = vrot.slane %v6756, 3
      %v9509 = vrot.slane %v6761, 3
      %v9510 = vsel %vm3077, %v9508, %v9509
      %v9511 = vsel %vm7066, %v9510, 0
      %v9513 = vsel %vm7066, %v9509, 0
      %9515 = vmatprep.subr.mxu0 %v9145
      %9516 = vmatpush1.msra.mxu0 %v9144
      %9517 = vmatprep.subr.mxu0 %v9147
      %9518 = vmatpush1.msra.mxu0 %v9146
      %9519 = vmatprep.subr.mxu0 %v9149
      %9520 = vmatpush1.msra.mxu0 %v9148
      %9521 = vmatprep.subr.mxu0 %v9151
      %9522 = vmatpush1.msra.mxu0 %v9150
      %9523 = vmatprep.subr.mxu0 %v9153
      %9524 = vmatpush1.msra.mxu0 %v9152
      %9525 = vmatprep.subr.mxu0 %v9155
      %9526 = vmatpush1.msra.mxu0 %v9154
      %9527 = vmatprep.subr.mxu0 %v9157
      %9528 = vmatpush1.msra.mxu0 %v9156
      %9529 = vmatprep.subr.mxu0 %v9159
      %9530 = vmatpush1.msra.mxu0 %v9158
      %9531 = vmatprep.subr.mxu0 %v9161
      %9532 = vmatpush1.msra.mxu0 %v9160
      %9533 = vmatprep.subr.mxu0 %v9163
      %9534 = vmatpush1.msra.mxu0 %v9162
      %9535 = vmatprep.subr.mxu0 %v9177
      %9536 = vmatpush1.msra.mxu0 %v9174
      %9537 = vmatprep.subr.mxu0 0.0
      %9538 = vmatpush1.msra.mxu0 0.0
      %9539 = vmatprep.subr.mxu0 0.0
      %9540 = vmatpush1.msra.mxu0 0.0
      %9541 = vmatprep.subr.mxu0 0.0
      %9542 = vmatpush1.msra.mxu0 0.0
      %9543 = vmatprep.subr.mxu0 0.0
      %9544 = vmatpush1.msra.mxu0 0.0
      %9545 = vmatprep.subr.mxu0 0.0
      %9546 = vmatpush1.msra.mxu0 0.0
      %9547 = vmatprep.subr.mxu0 0.0
      %9548 = vmatpush1.msra.mxu0 0.0
      %9549 = vmatprep.subr.mxu0 0.0
      %9550 = vmatpush1.msra.mxu0 0.0
      %9551 = vmatprep.subr.mxu0 0.0
      %9552 = vmatpush1.msra.mxu0 0.0
      %9553 = vmatprep.subr.mxu0 0.0
      %9554 = vmatpush1.msra.mxu0 0.0
      %9555 = vmatprep.subr.mxu0 0.0
      %9556 = vmatpush1.msra.mxu0 0.0
      %9557 = vmatprep.subr.mxu0 0.0
      %9558 = vmatpush1.msra.mxu0 0.0
      %9559 = vmatprep.subr.mxu0 0.0
      %9560 = vmatpush1.msra.mxu0 0.0
      %9561 = vmatprep.subr.mxu0 0.0
      %9562 = vmatpush1.msra.mxu0 0.0
      %9563 = vmatprep.subr.mxu0 0.0
      %9564 = vmatpush1.msra.mxu0 0.0
      %9565 = vmatprep.subr.mxu0 0.0
      %9566 = vmatpush1.msra.mxu0 0.0
      %9567 = vmatprep.subr.mxu0 0.0
      %9568 = vmatpush1.msra.mxu0 0.0
      %9569 = vmatprep.subr.mxu0 0.0
      %9570 = vmatpush1.msra.mxu0 0.0
      %9571 = vmatprep.subr.mxu0 0.0
      %9572 = vmatpush1.msra.mxu0 0.0
      %9573 = vmatprep.subr.mxu0 0.0
      %9574 = vmatpush1.msra.mxu0 0.0
      %9575 = vmatprep.subr.mxu0 0.0
      %9576 = vmatpush1.msra.mxu0 0.0
      %9577 = vmatprep.subr.mxu0 0.0
      %9578 = vmatpush1.msra.mxu0 0.0
      %9579 = vmatprep.mubr.f32.mxu0 0.0
      %9580 = vmatmul.mubr.f32.gmra.mrb[0].mxu0 %v9511
      %v9581 = vpop.f32.mrb[0].mxu0
      %v9582 = vadd.f32 0.0, %v9581
      %v9583 = vpop.f32.mrb[0].mxu0
      %v9584 = vadd.f32 0.0, %v9583
      %9585 = vmatprep.mubr.f32.mxu0 0.0
      %9586 = vmatmul.mubr.f32.gmra.mrb[0].mxu0 %v9513
      %v9587 = vpop.f32.mrb[0].mxu0
      %v9588 = vadd.f32 0.0, %v9587
      %v9589 = vpop.f32.mrb[0].mxu0
      %v9590 = vadd.f32 0.0, %v9589
      %9591 = vdwg.mxu0
      %v9592 = vrot.slane %v6840, 3
      %v9593 = vrot.slane %v6845, 3
      %v9594 = vsel %vm3077, %v9592, %v9593
      %v9595 = vsel %vm7066, %v9594, 0
      %v9597 = vsel %vm7066, %v9593, 0
      %9599 = vmatprep.subr.mxu0 %v9145
      %9600 = vmatpush1.msra.mxu0 %v9144
      %9601 = vmatprep.subr.mxu0 %v9147
      %9602 = vmatpush1.msra.mxu0 %v9146
      %9603 = vmatprep.subr.mxu0 %v9149
      %9604 = vmatpush1.msra.mxu0 %v9148
      %9605 = vmatprep.subr.mxu0 %v9151
      %9606 = vmatpush1.msra.mxu0 %v9150
      %9607 = vmatprep.subr.mxu0 %v9153
      %9608 = vmatpush1.msra.mxu0 %v9152
      %9609 = vmatprep.subr.mxu0 %v9155
      %9610 = vmatpush1.msra.mxu0 %v9154
      %9611 = vmatprep.subr.mxu0 %v9157
      %9612 = vmatpush1.msra.mxu0 %v9156
      %9613 = vmatprep.subr.mxu0 %v9159
      %9614 = vmatpush1.msra.mxu0 %v9158
      %9615 = vmatprep.subr.mxu0 %v9161
      %9616 = vmatpush1.msra.mxu0 %v9160
      %9617 = vmatprep.subr.mxu0 %v9163
      %9618 = vmatpush1.msra.mxu0 %v9162
      %9619 = vmatprep.subr.mxu0 %v9177
      %9620 = vmatpush1.msra.mxu0 %v9174
      %9621 = vmatprep.subr.mxu0 0.0
      %9622 = vmatpush1.msra.mxu0 0.0
      %9623 = vmatprep.subr.mxu0 0.0
      %9624 = vmatpush1.msra.mxu0 0.0
      %9625 = vmatprep.subr.mxu0 0.0
      %9626 = vmatpush1.msra.mxu0 0.0
      %9627 = vmatprep.subr.mxu0 0.0
      %9628 = vmatpush1.msra.mxu0 0.0
      %9629 = vmatprep.subr.mxu0 0.0
      %9630 = vmatpush1.msra.mxu0 0.0
      %9631 = vmatprep.subr.mxu0 0.0
      %9632 = vmatpush1.msra.mxu0 0.0
      %9633 = vmatprep.subr.mxu0 0.0
      %9634 = vmatpush1.msra.mxu0 0.0
      %9635 = vmatprep.subr.mxu0 0.0
      %9636 = vmatpush1.msra.mxu0 0.0
      %9637 = vmatprep.subr.mxu0 0.0
      %9638 = vmatpush1.msra.mxu0 0.0
      %9639 = vmatprep.subr.mxu0 0.0
      %9640 = vmatpush1.msra.mxu0 0.0
      %9641 = vmatprep.subr.mxu0 0.0
      %9642 = vmatpush1.msra.mxu0 0.0
      %9643 = vmatprep.subr.mxu0 0.0
      %9644 = vmatpush1.msra.mxu0 0.0
      %9645 = vmatprep.subr.mxu0 0.0
      %9646 = vmatpush1.msra.mxu0 0.0
      %9647 = vmatprep.subr.mxu0 0.0
      %9648 = vmatpush1.msra.mxu0 0.0
      %9649 = vmatprep.subr.mxu0 0.0
      %9650 = vmatpush1.msra.mxu0 0.0
      %9651 = vmatprep.subr.mxu0 0.0
      %9652 = vmatpush1.msra.mxu0 0.0
      %9653 = vmatprep.subr.mxu0 0.0
      %9654 = vmatpush1.msra.mxu0 0.0
      %9655 = vmatprep.subr.mxu0 0.0
      %9656 = vmatpush1.msra.mxu0 0.0
      %9657 = vmatprep.subr.mxu0 0.0
      %9658 = vmatpush1.msra.mxu0 0.0
      %9659 = vmatprep.subr.mxu0 0.0
      %9660 = vmatpush1.msra.mxu0 0.0
      %9661 = vmatprep.subr.mxu0 0.0
      %9662 = vmatpush1.msra.mxu0 0.0
      %9663 = vmatprep.mubr.f32.mxu0 0.0
      %9664 = vmatmul.mubr.f32.gmra.mrb[0].mxu0 %v9595
      %v9665 = vpop.f32.mrb[0].mxu0
      %v9666 = vadd.f32 0.0, %v9665
      %v9667 = vpop.f32.mrb[0].mxu0
      %v9668 = vadd.f32 0.0, %v9667
      %9669 = vmatprep.mubr.f32.mxu0 0.0
      %9670 = vmatmul.mubr.f32.gmra.mrb[0].mxu0 %v9597
      %v9671 = vpop.f32.mrb[0].mxu0
      %v9672 = vadd.f32 0.0, %v9671
      %v9673 = vpop.f32.mrb[0].mxu0
      %v9674 = vadd.f32 0.0, %v9673
      %9675 = vdwg.mxu0
      %v9676 = vrot.slane %v6924, 3
      %v9677 = vrot.slane %v6929, 3
      %v9678 = vsel %vm3077, %v9676, %v9677
      %v9679 = vsel %vm7066, %v9678, 0
      %v9681 = vsel %vm7066, %v9677, 0
      %9683 = vmatprep.subr.mxu0 %v9145
      %9684 = vmatpush1.msra.mxu0 %v9144
      %9685 = vmatprep.subr.mxu0 %v9147
      %9686 = vmatpush1.msra.mxu0 %v9146
      %9687 = vmatprep.subr.mxu0 %v9149
      %9688 = vmatpush1.msra.mxu0 %v9148
      %9689 = vmatprep.subr.mxu0 %v9151
      %9690 = vmatpush1.msra.mxu0 %v9150
      %9691 = vmatprep.subr.mxu0 %v9153
      %9692 = vmatpush1.msra.mxu0 %v9152
      %9693 = vmatprep.subr.mxu0 %v9155
      %9694 = vmatpush1.msra.mxu0 %v9154
      %9695 = vmatprep.subr.mxu0 %v9157
      %9696 = vmatpush1.msra.mxu0 %v9156
      %9697 = vmatprep.subr.mxu0 %v9159
      %9698 = vmatpush1.msra.mxu0 %v9158
      %9699 = vmatprep.subr.mxu0 %v9161
      %9700 = vmatpush1.msra.mxu0 %v9160
      %9701 = vmatprep.subr.mxu0 %v9163
      %9702 = vmatpush1.msra.mxu0 %v9162
      %9703 = vmatprep.subr.mxu0 %v9177
      %9704 = vmatpush1.msra.mxu0 %v9174
      %9705 = vmatprep.subr.mxu0 0.0
      %9706 = vmatpush1.msra.mxu0 0.0
      %9707 = vmatprep.subr.mxu0 0.0
      %9708 = vmatpush1.msra.mxu0 0.0
      %9709 = vmatprep.subr.mxu0 0.0
      %9710 = vmatpush1.msra.mxu0 0.0
      %9711 = vmatprep.subr.mxu0 0.0
      %9712 = vmatpush1.msra.mxu0 0.0
      %9713 = vmatprep.subr.mxu0 0.0
      %9714 = vmatpush1.msra.mxu0 0.0
      %9715 = vmatprep.subr.mxu0 0.0
      %9716 = vmatpush1.msra.mxu0 0.0
      %9717 = vmatprep.subr.mxu0 0.0
      %9718 = vmatpush1.msra.mxu0 0.0
      %9719 = vmatprep.subr.mxu0 0.0
      %9720 = vmatpush1.msra.mxu0 0.0
      %9721 = vmatprep.subr.mxu0 0.0
      %9722 = vmatpush1.msra.mxu0 0.0
      %9723 = vmatprep.subr.mxu0 0.0
      %9724 = vmatpush1.msra.mxu0 0.0
      %9725 = vmatprep.subr.mxu0 0.0
      %9726 = vmatpush1.msra.mxu0 0.0
      %9727 = vmatprep.subr.mxu0 0.0
      %9728 = vmatpush1.msra.mxu0 0.0
      %9729 = vmatprep.subr.mxu0 0.0
      %9730 = vmatpush1.msra.mxu0 0.0
      %9731 = vmatprep.subr.mxu0 0.0
      %9732 = vmatpush1.msra.mxu0 0.0
      %9733 = vmatprep.subr.mxu0 0.0
      %9734 = vmatpush1.msra.mxu0 0.0
      %9735 = vmatprep.subr.mxu0 0.0
      %9736 = vmatpush1.msra.mxu0 0.0
      %9737 = vmatprep.subr.mxu0 0.0
      %9738 = vmatpush1.msra.mxu0 0.0
      %9739 = vmatprep.subr.mxu0 0.0
      %9740 = vmatpush1.msra.mxu0 0.0
      %9741 = vmatprep.subr.mxu0 0.0
      %9742 = vmatpush1.msra.mxu0 0.0
      %9743 = vmatprep.subr.mxu0 0.0
      %9744 = vmatpush1.msra.mxu0 0.0
      %9745 = vmatprep.subr.mxu0 0.0
      %9746 = vmatpush1.msra.mxu0 0.0
      %9747 = vmatprep.mubr.f32.mxu0 0.0
      %9748 = vmatmul.mubr.f32.gmra.mrb[0].mxu0 %v9679
      %v9749 = vpop.f32.mrb[0].mxu0
      %v9750 = vadd.f32 0.0, %v9749
      %v9751 = vpop.f32.mrb[0].mxu0
      %v9752 = vadd.f32 0.0, %v9751
      %9753 = vmatprep.mubr.f32.mxu0 0.0
      %9754 = vmatmul.mubr.f32.gmra.mrb[0].mxu0 %v9681
      %v9755 = vpop.f32.mrb[0].mxu0
      %v9756 = vadd.f32 0.0, %v9755
      %v9757 = vpop.f32.mrb[0].mxu0
      %v9758 = vadd.f32 0.0, %v9757
      %9759 = vdwg.mxu0
      %v9760 = vrot.slane %v7008, 3
      %v9761 = vrot.slane %v7013, 3
      %v9762 = vsel %vm3077, %v9760, %v9761
      %v9763 = vsel %vm7066, %v9762, 0
      %v9765 = vsel %vm7066, %v9761, 0
      %9767 = vmatprep.subr.mxu0 %v9145
      %9768 = vmatpush1.msra.mxu0 %v9144
      %9769 = vmatprep.subr.mxu0 %v9147
      %9770 = vmatpush1.msra.mxu0 %v9146
      %9771 = vmatprep.subr.mxu0 %v9149
      %9772 = vmatpush1.msra.mxu0 %v9148
      %9773 = vmatprep.subr.mxu0 %v9151
      %9774 = vmatpush1.msra.mxu0 %v9150
      %9775 = vmatprep.subr.mxu0 %v9153
      %9776 = vmatpush1.msra.mxu0 %v9152
      %9777 = vmatprep.subr.mxu0 %v9155
      %9778 = vmatpush1.msra.mxu0 %v9154
      %9779 = vmatprep.subr.mxu0 %v9157
      %9780 = vmatpush1.msra.mxu0 %v9156
      %9781 = vmatprep.subr.mxu0 %v9159
      %9782 = vmatpush1.msra.mxu0 %v9158
      %9783 = vmatprep.subr.mxu0 %v9161
      %9784 = vmatpush1.msra.mxu0 %v9160
      %9785 = vmatprep.subr.mxu0 %v9163
      %9786 = vmatpush1.msra.mxu0 %v9162
      %9787 = vmatprep.subr.mxu0 %v9177
      %9788 = vmatpush1.msra.mxu0 %v9174
      %9789 = vmatprep.subr.mxu0 0.0
      %9790 = vmatpush1.msra.mxu0 0.0
      %9791 = vmatprep.subr.mxu0 0.0
      %9792 = vmatpush1.msra.mxu0 0.0
      %9793 = vmatprep.subr.mxu0 0.0
      %9794 = vmatpush1.msra.mxu0 0.0
      %9795 = vmatprep.subr.mxu0 0.0
      %9796 = vmatpush1.msra.mxu0 0.0
      %9797 = vmatprep.subr.mxu0 0.0
      %9798 = vmatpush1.msra.mxu0 0.0
      %9799 = vmatprep.subr.mxu0 0.0
      %9800 = vmatpush1.msra.mxu0 0.0
      %9801 = vmatprep.subr.mxu0 0.0
      %9802 = vmatpush1.msra.mxu0 0.0
      %9803 = vmatprep.subr.mxu0 0.0
      %9804 = vmatpush1.msra.mxu0 0.0
      %9805 = vmatprep.subr.mxu0 0.0
      %9806 = vmatpush1.msra.mxu0 0.0
      %9807 = vmatprep.subr.mxu0 0.0
      %9808 = vmatpush1.msra.mxu0 0.0
      %9809 = vmatprep.subr.mxu0 0.0
      %9810 = vmatpush1.msra.mxu0 0.0
      %9811 = vmatprep.subr.mxu0 0.0
      %9812 = vmatpush1.msra.mxu0 0.0
      %9813 = vmatprep.subr.mxu0 0.0
      %9814 = vmatpush1.msra.mxu0 0.0
      %9815 = vmatprep.subr.mxu0 0.0
      %9816 = vmatpush1.msra.mxu0 0.0
      %9817 = vmatprep.subr.mxu0 0.0
      %9818 = vmatpush1.msra.mxu0 0.0
      %9819 = vmatprep.subr.mxu0 0.0
      %9820 = vmatpush1.msra.mxu0 0.0
      %9821 = vmatprep.subr.mxu0 0.0
      %9822 = vmatpush1.msra.mxu0 0.0
      %9823 = vmatprep.subr.mxu0 0.0
      %9824 = vmatpush1.msra.mxu0 0.0
      %9825 = vmatprep.subr.mxu0 0.0
      %9826 = vmatpush1.msra.mxu0 0.0
      %9827 = vmatprep.subr.mxu0 0.0
      %9828 = vmatpush1.msra.mxu0 0.0
      %9829 = vmatprep.subr.mxu0 0.0
      %9830 = vmatpush1.msra.mxu0 0.0
      %9831 = vmatprep.mubr.f32.mxu0 0.0
      %9832 = vmatmul.mubr.f32.gmra.mrb[0].mxu0 %v9763
      %v9833 = vpop.f32.mrb[0].mxu0
      %v9834 = vadd.f32 0.0, %v9833
      %v9835 = vpop.f32.mrb[0].mxu0
      %v9836 = vadd.f32 0.0, %v9835
      %9837 = vmatprep.mubr.f32.mxu0 0.0
      %9838 = vmatmul.mubr.f32.gmra.mrb[0].mxu0 %v9765
      %v9839 = vpop.f32.mrb[0].mxu0
      %v9840 = vadd.f32 0.0, %v9839
      %v9841 = vpop.f32.mrb[0].mxu0
      %v9842 = vadd.f32 0.0, %v9841
      %9843 = vdwg.mxu0
      %v9844 = vadd.f32 %v9111, %v9246
      %v9845 = vadd.f32 %v9112, %v9248
      %v9846 = vadd.f32 %v9113, %v9252
      %v9847 = vadd.f32 %v9114, %v9254
      %v9848 = vadd.f32 %v9115, %v9330
      %v9849 = vadd.f32 %v9116, %v9332
      %v9850 = vadd.f32 %v9117, %v9336
      %v9851 = vadd.f32 %v9118, %v9338
      %v9852 = vadd.f32 %v9119, %v9414
      %v9853 = vadd.f32 %v9120, %v9416
      %v9854 = vadd.f32 %v9121, %v9420
      %v9855 = vadd.f32 %v9122, %v9422
      %v9856 = vadd.f32 %v9123, %v9498
      %v9857 = vadd.f32 %v9124, %v9500
      %v9858 = vadd.f32 %v9125, %v9504
      %v9859 = vadd.f32 %v9126, %v9506
      %v9860 = vadd.f32 %v9127, %v9582
      %v9861 = vadd.f32 %v9128, %v9584
      %v9862 = vadd.f32 %v9129, %v9588
      %v9863 = vadd.f32 %v9130, %v9590
      %v9864 = vadd.f32 %v9131, %v9666
      %v9865 = vadd.f32 %v9132, %v9668
      %v9866 = vadd.f32 %v9133, %v9672
      %v9867 = vadd.f32 %v9134, %v9674
      %v9868 = vadd.f32 %v9135, %v9750
      %v9869 = vadd.f32 %v9136, %v9752
      %v9870 = vadd.f32 %v9137, %v9756
      %v9871 = vadd.f32 %v9138, %v9758
      %v9872 = vadd.f32 %v9139, %v9834
      %v9873 = vadd.f32 %v9140, %v9836
      %v9874 = vadd.f32 %v9141, %v9840
      %v9875 = vadd.f32 %v9142, %v9842
      %s9876 = scalar_lea.vmem %s5, 704
      %v9877 = vld [vmem:[%s9876] sm:$0xff]
      %v9878 = vld [vmem:[%s9876 + $0x8] sm:$0xff]
      %v9879 = vld [vmem:[%s9876 + $0x10] sm:$0xff]
      %v9880 = vld [vmem:[%s9876 + $0x18] sm:$0xff]
      %v9881 = vld [vmem:[%s9876 + $0x20] sm:$0xff]
      %v9882 = vld [vmem:[%s9876 + $0x28] sm:$0xff]
      %v9883 = vld [vmem:[%s9876 + $0x30] sm:$0xff]
      %v9884 = vld [vmem:[%s9876 + $0x38] sm:$0xff]
      %v9885 = vld [vmem:[%s9876 + $0x40] sm:$0xff]
      %v9886 = vld [vmem:[%s9876 + $0x48] sm:$0xff]
      %v9887 = vld [vmem:[%s9876 + $0x50] sm:$0xff]
      %v9888 = vld [vmem:[%s9876 + $0x58] sm:$0xff]
      %v9889 = vld [vmem:[%s9876 + $0x60] sm:$0xff]
      %v9890 = vld [vmem:[%s9876 + $0x68] sm:$0xff]
      %v9891 = vld [vmem:[%s9876 + $0x70] sm:$0xff]
      %v9892 = vld [vmem:[%s9876 + $0x78] sm:$0xff]
      %v9893 = vld [vmem:[%s9876 + $0x80] sm:$0xff]
      %v9894 = vld [vmem:[%s9876 + $0x88] sm:$0xff]
      %v9895 = vld [vmem:[%s9876 + $0x90] sm:$0xff]
      %v9896 = vld [vmem:[%s9876 + $0x98] sm:$0xff]
      %v9897 = vld [vmem:[%s9876 + $0xa0] sm:$0xf]
      %v9898 = vld [vmem:[%s9876 + $0xa8] sm:$0xf]
      %v9899 = vrot.slane %v6420, 4
      %v9900 = vrot.slane %v6425, 4
      %v9901 = vsel %vm3983, %v9899, %v9900
      %v9902 = vsel %vm7066, %v9901, 0
      %v9904 = vsel %vm7066, %v9900, 0
      %v9907 = vsel %vm3983, %v9897, 0
      %v9910 = vsel %vm3983, %v9898, 0
      %9912 = vmatprep.subr.mxu0 %v9878
      %9913 = vmatpush1.msra.mxu0 %v9877
      %9914 = vmatprep.subr.mxu0 %v9880
      %9915 = vmatpush1.msra.mxu0 %v9879
      %9916 = vmatprep.subr.mxu0 %v9882
      %9917 = vmatpush1.msra.mxu0 %v9881
      %9918 = vmatprep.subr.mxu0 %v9884
      %9919 = vmatpush1.msra.mxu0 %v9883
      %9920 = vmatprep.subr.mxu0 %v9886
      %9921 = vmatpush1.msra.mxu0 %v9885
      %9922 = vmatprep.subr.mxu0 %v9888
      %9923 = vmatpush1.msra.mxu0 %v9887
      %9924 = vmatprep.subr.mxu0 %v9890
      %9925 = vmatpush1.msra.mxu0 %v9889
      %9926 = vmatprep.subr.mxu0 %v9892
      %9927 = vmatpush1.msra.mxu0 %v9891
      %9928 = vmatprep.subr.mxu0 %v9894
      %9929 = vmatpush1.msra.mxu0 %v9893
      %9930 = vmatprep.subr.mxu0 %v9896
      %9931 = vmatpush1.msra.mxu0 %v9895
      %9932 = vmatprep.subr.mxu0 %v9910
      %9933 = vmatpush1.msra.mxu0 %v9907
      %9934 = vmatprep.subr.mxu0 0.0
      %9935 = vmatpush1.msra.mxu0 0.0
      %9936 = vmatprep.subr.mxu0 0.0
      %9937 = vmatpush1.msra.mxu0 0.0
      %9938 = vmatprep.subr.mxu0 0.0
      %9939 = vmatpush1.msra.mxu0 0.0
      %9940 = vmatprep.subr.mxu0 0.0
      %9941 = vmatpush1.msra.mxu0 0.0
      %9942 = vmatprep.subr.mxu0 0.0
      %9943 = vmatpush1.msra.mxu0 0.0
      %9944 = vmatprep.subr.mxu0 0.0
      %9945 = vmatpush1.msra.mxu0 0.0
      %9946 = vmatprep.subr.mxu0 0.0
      %9947 = vmatpush1.msra.mxu0 0.0
      %9948 = vmatprep.subr.mxu0 0.0
      %9949 = vmatpush1.msra.mxu0 0.0
      %9950 = vmatprep.subr.mxu0 0.0
      %9951 = vmatpush1.msra.mxu0 0.0
      %9952 = vmatprep.subr.mxu0 0.0
      %9953 = vmatpush1.msra.mxu0 0.0
      %9954 = vmatprep.subr.mxu0 0.0
      %9955 = vmatpush1.msra.mxu0 0.0
      %9956 = vmatprep.subr.mxu0 0.0
      %9957 = vmatpush1.msra.mxu0 0.0
      %9958 = vmatprep.subr.mxu0 0.0
      %9959 = vmatpush1.msra.mxu0 0.0
      %9960 = vmatprep.subr.mxu0 0.0
      %9961 = vmatpush1.msra.mxu0 0.0
      %9962 = vmatprep.subr.mxu0 0.0
      %9963 = vmatpush1.msra.mxu0 0.0
      %9964 = vmatprep.subr.mxu0 0.0
      %9965 = vmatpush1.msra.mxu0 0.0
      %9966 = vmatprep.subr.mxu0 0.0
      %9967 = vmatpush1.msra.mxu0 0.0
      %9968 = vmatprep.subr.mxu0 0.0
      %9969 = vmatpush1.msra.mxu0 0.0
      %9970 = vmatprep.subr.mxu0 0.0
      %9971 = vmatpush1.msra.mxu0 0.0
      %9972 = vmatprep.subr.mxu0 0.0
      %9973 = vmatpush1.msra.mxu0 0.0
      %9974 = vmatprep.subr.mxu0 0.0
      %9975 = vmatpush1.msra.mxu0 0.0
      %9976 = vmatprep.mubr.f32.mxu0 0.0
      %9977 = vmatmul.mubr.f32.gmra.mrb[0].mxu0 %v9902
      %v9978 = vpop.f32.mrb[0].mxu0
      %v9979 = vadd.f32 0.0, %v9978
      %v9980 = vpop.f32.mrb[0].mxu0
      %v9981 = vadd.f32 0.0, %v9980
      %9982 = vmatprep.mubr.f32.mxu0 0.0
      %9983 = vmatmul.mubr.f32.gmra.mrb[0].mxu0 %v9904
      %v9984 = vpop.f32.mrb[0].mxu0
      %v9985 = vadd.f32 0.0, %v9984
      %v9986 = vpop.f32.mrb[0].mxu0
      %v9987 = vadd.f32 0.0, %v9986
      %9988 = vdwg.mxu0
      %v9989 = vrot.slane %v6504, 4
      %v9990 = vrot.slane %v6509, 4
      %v9991 = vsel %vm3983, %v9989, %v9990
      %v9992 = vsel %vm7066, %v9991, 0
      %v9994 = vsel %vm7066, %v9990, 0
      %9996 = vmatprep.subr.mxu0 %v9878
      %9997 = vmatpush1.msra.mxu0 %v9877
      %9998 = vmatprep.subr.mxu0 %v9880
      %9999 = vmatpush1.msra.mxu0 %v9879
      %10000 = vmatprep.subr.mxu0 %v9882
      %10001 = vmatpush1.msra.mxu0 %v9881
      %10002 = vmatprep.subr.mxu0 %v9884
      %10003 = vmatpush1.msra.mxu0 %v9883
      %10004 = vmatprep.subr.mxu0 %v9886
      %10005 = vmatpush1.msra.mxu0 %v9885
      %10006 = vmatprep.subr.mxu0 %v9888
      %10007 = vmatpush1.msra.mxu0 %v9887
      %10008 = vmatprep.subr.mxu0 %v9890
      %10009 = vmatpush1.msra.mxu0 %v9889
      %10010 = vmatprep.subr.mxu0 %v9892
      %10011 = vmatpush1.msra.mxu0 %v9891
      %10012 = vmatprep.subr.mxu0 %v9894
      %10013 = vmatpush1.msra.mxu0 %v9893
      %10014 = vmatprep.subr.mxu0 %v9896
      %10015 = vmatpush1.msra.mxu0 %v9895
      %10016 = vmatprep.subr.mxu0 %v9910
      %10017 = vmatpush1.msra.mxu0 %v9907
      %10018 = vmatprep.subr.mxu0 0.0
      %10019 = vmatpush1.msra.mxu0 0.0
      %10020 = vmatprep.subr.mxu0 0.0
      %10021 = vmatpush1.msra.mxu0 0.0
      %10022 = vmatprep.subr.mxu0 0.0
      %10023 = vmatpush1.msra.mxu0 0.0
      %10024 = vmatprep.subr.mxu0 0.0
      %10025 = vmatpush1.msra.mxu0 0.0
      %10026 = vmatprep.subr.mxu0 0.0
      %10027 = vmatpush1.msra.mxu0 0.0
      %10028 = vmatprep.subr.mxu0 0.0
      %10029 = vmatpush1.msra.mxu0 0.0
      %10030 = vmatprep.subr.mxu0 0.0
      %10031 = vmatpush1.msra.mxu0 0.0
      %10032 = vmatprep.subr.mxu0 0.0
      %10033 = vmatpush1.msra.mxu0 0.0
      %10034 = vmatprep.subr.mxu0 0.0
      %10035 = vmatpush1.msra.mxu0 0.0
      %10036 = vmatprep.subr.mxu0 0.0
      %10037 = vmatpush1.msra.mxu0 0.0
      %10038 = vmatprep.subr.mxu0 0.0
      %10039 = vmatpush1.msra.mxu0 0.0
      %10040 = vmatprep.subr.mxu0 0.0
      %10041 = vmatpush1.msra.mxu0 0.0
      %10042 = vmatprep.subr.mxu0 0.0
      %10043 = vmatpush1.msra.mxu0 0.0
      %10044 = vmatprep.subr.mxu0 0.0
      %10045 = vmatpush1.msra.mxu0 0.0
      %10046 = vmatprep.subr.mxu0 0.0
      %10047 = vmatpush1.msra.mxu0 0.0
      %10048 = vmatprep.subr.mxu0 0.0
      %10049 = vmatpush1.msra.mxu0 0.0
      %10050 = vmatprep.subr.mxu0 0.0
      %10051 = vmatpush1.msra.mxu0 0.0
      %10052 = vmatprep.subr.mxu0 0.0
      %10053 = vmatpush1.msra.mxu0 0.0
      %10054 = vmatprep.subr.mxu0 0.0
      %10055 = vmatpush1.msra.mxu0 0.0
      %10056 = vmatprep.subr.mxu0 0.0
      %10057 = vmatpush1.msra.mxu0 0.0
      %10058 = vmatprep.subr.mxu0 0.0
      %10059 = vmatpush1.msra.mxu0 0.0
      %10060 = vmatprep.mubr.f32.mxu0 0.0
      %10061 = vmatmul.mubr.f32.gmra.mrb[0].mxu0 %v9992
      %v10062 = vpop.f32.mrb[0].mxu0
      %v10063 = vadd.f32 0.0, %v10062
      %v10064 = vpop.f32.mrb[0].mxu0
      %v10065 = vadd.f32 0.0, %v10064
      %10066 = vmatprep.mubr.f32.mxu0 0.0
      %10067 = vmatmul.mubr.f32.gmra.mrb[0].mxu0 %v9994
      %v10068 = vpop.f32.mrb[0].mxu0
      %v10069 = vadd.f32 0.0, %v10068
      %v10070 = vpop.f32.mrb[0].mxu0
      %v10071 = vadd.f32 0.0, %v10070
      %10072 = vdwg.mxu0
      %v10073 = vrot.slane %v6588, 4
      %v10074 = vrot.slane %v6593, 4
      %v10075 = vsel %vm3983, %v10073, %v10074
      %v10076 = vsel %vm7066, %v10075, 0
      %v10078 = vsel %vm7066, %v10074, 0
      %10080 = vmatprep.subr.mxu0 %v9878
      %10081 = vmatpush1.msra.mxu0 %v9877
      %10082 = vmatprep.subr.mxu0 %v9880
      %10083 = vmatpush1.msra.mxu0 %v9879
      %10084 = vmatprep.subr.mxu0 %v9882
      %10085 = vmatpush1.msra.mxu0 %v9881
      %10086 = vmatprep.subr.mxu0 %v9884
      %10087 = vmatpush1.msra.mxu0 %v9883
      %10088 = vmatprep.subr.mxu0 %v9886
      %10089 = vmatpush1.msra.mxu0 %v9885
      %10090 = vmatprep.subr.mxu0 %v9888
      %10091 = vmatpush1.msra.mxu0 %v9887
      %10092 = vmatprep.subr.mxu0 %v9890
      %10093 = vmatpush1.msra.mxu0 %v9889
      %10094 = vmatprep.subr.mxu0 %v9892
      %10095 = vmatpush1.msra.mxu0 %v9891
      %10096 = vmatprep.subr.mxu0 %v9894
      %10097 = vmatpush1.msra.mxu0 %v9893
      %10098 = vmatprep.subr.mxu0 %v9896
      %10099 = vmatpush1.msra.mxu0 %v9895
      %10100 = vmatprep.subr.mxu0 %v9910
      %10101 = vmatpush1.msra.mxu0 %v9907
      %10102 = vmatprep.subr.mxu0 0.0
      %10103 = vmatpush1.msra.mxu0 0.0
      %10104 = vmatprep.subr.mxu0 0.0
      %10105 = vmatpush1.msra.mxu0 0.0
      %10106 = vmatprep.subr.mxu0 0.0
      %10107 = vmatpush1.msra.mxu0 0.0
      %10108 = vmatprep.subr.mxu0 0.0
      %10109 = vmatpush1.msra.mxu0 0.0
      %10110 = vmatprep.subr.mxu0 0.0
      %10111 = vmatpush1.msra.mxu0 0.0
      %10112 = vmatprep.subr.mxu0 0.0
      %10113 = vmatpush1.msra.mxu0 0.0
      %10114 = vmatprep.subr.mxu0 0.0
      %10115 = vmatpush1.msra.mxu0 0.0
      %10116 = vmatprep.subr.mxu0 0.0
      %10117 = vmatpush1.msra.mxu0 0.0
      %10118 = vmatprep.subr.mxu0 0.0
      %10119 = vmatpush1.msra.mxu0 0.0
      %10120 = vmatprep.subr.mxu0 0.0
      %10121 = vmatpush1.msra.mxu0 0.0
      %10122 = vmatprep.subr.mxu0 0.0
      %10123 = vmatpush1.msra.mxu0 0.0
      %10124 = vmatprep.subr.mxu0 0.0
      %10125 = vmatpush1.msra.mxu0 0.0
      %10126 = vmatprep.subr.mxu0 0.0
      %10127 = vmatpush1.msra.mxu0 0.0
      %10128 = vmatprep.subr.mxu0 0.0
      %10129 = vmatpush1.msra.mxu0 0.0
      %10130 = vmatprep.subr.mxu0 0.0
      %10131 = vmatpush1.msra.mxu0 0.0
      %10132 = vmatprep.subr.mxu0 0.0
      %10133 = vmatpush1.msra.mxu0 0.0
      %10134 = vmatprep.subr.mxu0 0.0
      %10135 = vmatpush1.msra.mxu0 0.0
      %10136 = vmatprep.subr.mxu0 0.0
      %10137 = vmatpush1.msra.mxu0 0.0
      %10138 = vmatprep.subr.mxu0 0.0
      %10139 = vmatpush1.msra.mxu0 0.0
      %10140 = vmatprep.subr.mxu0 0.0
      %10141 = vmatpush1.msra.mxu0 0.0
      %10142 = vmatprep.subr.mxu0 0.0
      %10143 = vmatpush1.msra.mxu0 0.0
      %10144 = vmatprep.mubr.f32.mxu0 0.0
      %10145 = vmatmul.mubr.f32.gmra.mrb[0].mxu0 %v10076
      %v10146 = vpop.f32.mrb[0].mxu0
      %v10147 = vadd.f32 0.0, %v10146
      %v10148 = vpop.f32.mrb[0].mxu0
      %v10149 = vadd.f32 0.0, %v10148
      %10150 = vmatprep.mubr.f32.mxu0 0.0
      %10151 = vmatmul.mubr.f32.gmra.mrb[0].mxu0 %v10078
      %v10152 = vpop.f32.mrb[0].mxu0
      %v10153 = vadd.f32 0.0, %v10152
      %v10154 = vpop.f32.mrb[0].mxu0
      %v10155 = vadd.f32 0.0, %v10154
      %10156 = vdwg.mxu0
      %v10157 = vrot.slane %v6672, 4
      %v10158 = vrot.slane %v6677, 4
      %v10159 = vsel %vm3983, %v10157, %v10158
      %v10160 = vsel %vm7066, %v10159, 0
      %v10162 = vsel %vm7066, %v10158, 0
      %10164 = vmatprep.subr.mxu0 %v9878
      %10165 = vmatpush1.msra.mxu0 %v9877
      %10166 = vmatprep.subr.mxu0 %v9880
      %10167 = vmatpush1.msra.mxu0 %v9879
      %10168 = vmatprep.subr.mxu0 %v9882
      %10169 = vmatpush1.msra.mxu0 %v9881
      %10170 = vmatprep.subr.mxu0 %v9884
      %10171 = vmatpush1.msra.mxu0 %v9883
      %10172 = vmatprep.subr.mxu0 %v9886
      %10173 = vmatpush1.msra.mxu0 %v9885
      %10174 = vmatprep.subr.mxu0 %v9888
      %10175 = vmatpush1.msra.mxu0 %v9887
      %10176 = vmatprep.subr.mxu0 %v9890
      %10177 = vmatpush1.msra.mxu0 %v9889
      %10178 = vmatprep.subr.mxu0 %v9892
      %10179 = vmatpush1.msra.mxu0 %v9891
      %10180 = vmatprep.subr.mxu0 %v9894
      %10181 = vmatpush1.msra.mxu0 %v9893
      %10182 = vmatprep.subr.mxu0 %v9896
      %10183 = vmatpush1.msra.mxu0 %v9895
      %10184 = vmatprep.subr.mxu0 %v9910
      %10185 = vmatpush1.msra.mxu0 %v9907
      %10186 = vmatprep.subr.mxu0 0.0
      %10187 = vmatpush1.msra.mxu0 0.0
      %10188 = vmatprep.subr.mxu0 0.0
      %10189 = vmatpush1.msra.mxu0 0.0
      %10190 = vmatprep.subr.mxu0 0.0
      %10191 = vmatpush1.msra.mxu0 0.0
      %10192 = vmatprep.subr.mxu0 0.0
      %10193 = vmatpush1.msra.mxu0 0.0
      %10194 = vmatprep.subr.mxu0 0.0
      %10195 = vmatpush1.msra.mxu0 0.0
      %10196 = vmatprep.subr.mxu0 0.0
      %10197 = vmatpush1.msra.mxu0 0.0
      %10198 = vmatprep.subr.mxu0 0.0
      %10199 = vmatpush1.msra.mxu0 0.0
      %10200 = vmatprep.subr.mxu0 0.0
      %10201 = vmatpush1.msra.mxu0 0.0
      %10202 = vmatprep.subr.mxu0 0.0
      %10203 = vmatpush1.msra.mxu0 0.0
      %10204 = vmatprep.subr.mxu0 0.0
      %10205 = vmatpush1.msra.mxu0 0.0
      %10206 = vmatprep.subr.mxu0 0.0
      %10207 = vmatpush1.msra.mxu0 0.0
      %10208 = vmatprep.subr.mxu0 0.0
      %10209 = vmatpush1.msra.mxu0 0.0
      %10210 = vmatprep.subr.mxu0 0.0
      %10211 = vmatpush1.msra.mxu0 0.0
      %10212 = vmatprep.subr.mxu0 0.0
      %10213 = vmatpush1.msra.mxu0 0.0
      %10214 = vmatprep.subr.mxu0 0.0
      %10215 = vmatpush1.msra.mxu0 0.0
      %10216 = vmatprep.subr.mxu0 0.0
      %10217 = vmatpush1.msra.mxu0 0.0
      %10218 = vmatprep.subr.mxu0 0.0
      %10219 = vmatpush1.msra.mxu0 0.0
      %10220 = vmatprep.subr.mxu0 0.0
      %10221 = vmatpush1.msra.mxu0 0.0
      %10222 = vmatprep.subr.mxu0 0.0
      %10223 = vmatpush1.msra.mxu0 0.0
      %10224 = vmatprep.subr.mxu0 0.0
      %10225 = vmatpush1.msra.mxu0 0.0
      %10226 = vmatprep.subr.mxu0 0.0
      %10227 = vmatpush1.msra.mxu0 0.0
      %10228 = vmatprep.mubr.f32.mxu0 0.0
      %10229 = vmatmul.mubr.f32.gmra.mrb[0].mxu0 %v10160
      %v10230 = vpop.f32.mrb[0].mxu0
      %v10231 = vadd.f32 0.0, %v10230
      %v10232 = vpop.f32.mrb[0].mxu0
      %v10233 = vadd.f32 0.0, %v10232
      %10234 = vmatprep.mubr.f32.mxu0 0.0
      %10235 = vmatmul.mubr.f32.gmra.mrb[0].mxu0 %v10162
      %v10236 = vpop.f32.mrb[0].mxu0
      %v10237 = vadd.f32 0.0, %v10236
      %v10238 = vpop.f32.mrb[0].mxu0
      %v10239 = vadd.f32 0.0, %v10238
      %10240 = vdwg.mxu0
      %v10241 = vrot.slane %v6756, 4
      %v10242 = vrot.slane %v6761, 4
      %v10243 = vsel %vm3983, %v10241, %v10242
      %v10244 = vsel %vm7066, %v10243, 0
      %v10246 = vsel %vm7066, %v10242, 0
      %10248 = vmatprep.subr.mxu0 %v9878
      %10249 = vmatpush1.msra.mxu0 %v9877
      %10250 = vmatprep.subr.mxu0 %v9880
      %10251 = vmatpush1.msra.mxu0 %v9879
      %10252 = vmatprep.subr.mxu0 %v9882
      %10253 = vmatpush1.msra.mxu0 %v9881
      %10254 = vmatprep.subr.mxu0 %v9884
      %10255 = vmatpush1.msra.mxu0 %v9883
      %10256 = vmatprep.subr.mxu0 %v9886
      %10257 = vmatpush1.msra.mxu0 %v9885
      %10258 = vmatprep.subr.mxu0 %v9888
      %10259 = vmatpush1.msra.mxu0 %v9887
      %10260 = vmatprep.subr.mxu0 %v9890
      %10261 = vmatpush1.msra.mxu0 %v9889
      %10262 = vmatprep.subr.mxu0 %v9892
      %10263 = vmatpush1.msra.mxu0 %v9891
      %10264 = vmatprep.subr.mxu0 %v9894
      %10265 = vmatpush1.msra.mxu0 %v9893
      %10266 = vmatprep.subr.mxu0 %v9896
      %10267 = vmatpush1.msra.mxu0 %v9895
      %10268 = vmatprep.subr.mxu0 %v9910
      %10269 = vmatpush1.msra.mxu0 %v9907
      %10270 = vmatprep.subr.mxu0 0.0
      %10271 = vmatpush1.msra.mxu0 0.0
      %10272 = vmatprep.subr.mxu0 0.0
      %10273 = vmatpush1.msra.mxu0 0.0
      %10274 = vmatprep.subr.mxu0 0.0
      %10275 = vmatpush1.msra.mxu0 0.0
      %10276 = vmatprep.subr.mxu0 0.0
      %10277 = vmatpush1.msra.mxu0 0.0
      %10278 = vmatprep.subr.mxu0 0.0
      %10279 = vmatpush1.msra.mxu0 0.0
      %10280 = vmatprep.subr.mxu0 0.0
      %10281 = vmatpush1.msra.mxu0 0.0
      %10282 = vmatprep.subr.mxu0 0.0
      %10283 = vmatpush1.msra.mxu0 0.0
      %10284 = vmatprep.subr.mxu0 0.0
      %10285 = vmatpush1.msra.mxu0 0.0
      %10286 = vmatprep.subr.mxu0 0.0
      %10287 = vmatpush1.msra.mxu0 0.0
      %10288 = vmatprep.subr.mxu0 0.0
      %10289 = vmatpush1.msra.mxu0 0.0
      %10290 = vmatprep.subr.mxu0 0.0
      %10291 = vmatpush1.msra.mxu0 0.0
      %10292 = vmatprep.subr.mxu0 0.0
      %10293 = vmatpush1.msra.mxu0 0.0
      %10294 = vmatprep.subr.mxu0 0.0
      %10295 = vmatpush1.msra.mxu0 0.0
      %10296 = vmatprep.subr.mxu0 0.0
      %10297 = vmatpush1.msra.mxu0 0.0
      %10298 = vmatprep.subr.mxu0 0.0
      %10299 = vmatpush1.msra.mxu0 0.0
      %10300 = vmatprep.subr.mxu0 0.0
      %10301 = vmatpush1.msra.mxu0 0.0
      %10302 = vmatprep.subr.mxu0 0.0
      %10303 = vmatpush1.msra.mxu0 0.0
      %10304 = vmatprep.subr.mxu0 0.0
      %10305 = vmatpush1.msra.mxu0 0.0
      %10306 = vmatprep.subr.mxu0 0.0
      %10307 = vmatpush1.msra.mxu0 0.0
      %10308 = vmatprep.subr.mxu0 0.0
      %10309 = vmatpush1.msra.mxu0 0.0
      %10310 = vmatprep.subr.mxu0 0.0
      %10311 = vmatpush1.msra.mxu0 0.0
      %10312 = vmatprep.mubr.f32.mxu0 0.0
      %10313 = vmatmul.mubr.f32.gmra.mrb[0].mxu0 %v10244
      %v10314 = vpop.f32.mrb[0].mxu0
      %v10315 = vadd.f32 0.0, %v10314
      %v10316 = vpop.f32.mrb[0].mxu0
      %v10317 = vadd.f32 0.0, %v10316
      %10318 = vmatprep.mubr.f32.mxu0 0.0
      %10319 = vmatmul.mubr.f32.gmra.mrb[0].mxu0 %v10246
      %v10320 = vpop.f32.mrb[0].mxu0
      %v10321 = vadd.f32 0.0, %v10320
      %v10322 = vpop.f32.mrb[0].mxu0
      %v10323 = vadd.f32 0.0, %v10322
      %10324 = vdwg.mxu0
      %v10325 = vrot.slane %v6840, 4
      %v10326 = vrot.slane %v6845, 4
      %v10327 = vsel %vm3983, %v10325, %v10326
      %v10328 = vsel %vm7066, %v10327, 0
      %v10330 = vsel %vm7066, %v10326, 0
      %10332 = vmatprep.subr.mxu0 %v9878
      %10333 = vmatpush1.msra.mxu0 %v9877
      %10334 = vmatprep.subr.mxu0 %v9880
      %10335 = vmatpush1.msra.mxu0 %v9879
      %10336 = vmatprep.subr.mxu0 %v9882
      %10337 = vmatpush1.msra.mxu0 %v9881
      %10338 = vmatprep.subr.mxu0 %v9884
      %10339 = vmatpush1.msra.mxu0 %v9883
      %10340 = vmatprep.subr.mxu0 %v9886
      %10341 = vmatpush1.msra.mxu0 %v9885
      %10342 = vmatprep.subr.mxu0 %v9888
      %10343 = vmatpush1.msra.mxu0 %v9887
      %10344 = vmatprep.subr.mxu0 %v9890
      %10345 = vmatpush1.msra.mxu0 %v9889
      %10346 = vmatprep.subr.mxu0 %v9892
      %10347 = vmatpush1.msra.mxu0 %v9891
      %10348 = vmatprep.subr.mxu0 %v9894
      %10349 = vmatpush1.msra.mxu0 %v9893
      %10350 = vmatprep.subr.mxu0 %v9896
      %10351 = vmatpush1.msra.mxu0 %v9895
      %10352 = vmatprep.subr.mxu0 %v9910
      %10353 = vmatpush1.msra.mxu0 %v9907
      %10354 = vmatprep.subr.mxu0 0.0
      %10355 = vmatpush1.msra.mxu0 0.0
      %10356 = vmatprep.subr.mxu0 0.0
      %10357 = vmatpush1.msra.mxu0 0.0
      %10358 = vmatprep.subr.mxu0 0.0
      %10359 = vmatpush1.msra.mxu0 0.0
      %10360 = vmatprep.subr.mxu0 0.0
      %10361 = vmatpush1.msra.mxu0 0.0
      %10362 = vmatprep.subr.mxu0 0.0
      %10363 = vmatpush1.msra.mxu0 0.0
      %10364 = vmatprep.subr.mxu0 0.0
      %10365 = vmatpush1.msra.mxu0 0.0
      %10366 = vmatprep.subr.mxu0 0.0
      %10367 = vmatpush1.msra.mxu0 0.0
      %10368 = vmatprep.subr.mxu0 0.0
      %10369 = vmatpush1.msra.mxu0 0.0
      %10370 = vmatprep.subr.mxu0 0.0
      %10371 = vmatpush1.msra.mxu0 0.0
      %10372 = vmatprep.subr.mxu0 0.0
      %10373 = vmatpush1.msra.mxu0 0.0
      %10374 = vmatprep.subr.mxu0 0.0
      %10375 = vmatpush1.msra.mxu0 0.0
      %10376 = vmatprep.subr.mxu0 0.0
      %10377 = vmatpush1.msra.mxu0 0.0
      %10378 = vmatprep.subr.mxu0 0.0
      %10379 = vmatpush1.msra.mxu0 0.0
      %10380 = vmatprep.subr.mxu0 0.0
      %10381 = vmatpush1.msra.mxu0 0.0
      %10382 = vmatprep.subr.mxu0 0.0
      %10383 = vmatpush1.msra.mxu0 0.0
      %10384 = vmatprep.subr.mxu0 0.0
      %10385 = vmatpush1.msra.mxu0 0.0
      %10386 = vmatprep.subr.mxu0 0.0
      %10387 = vmatpush1.msra.mxu0 0.0
      %10388 = vmatprep.subr.mxu0 0.0
      %10389 = vmatpush1.msra.mxu0 0.0
      %10390 = vmatprep.subr.mxu0 0.0
      %10391 = vmatpush1.msra.mxu0 0.0
      %10392 = vmatprep.subr.mxu0 0.0
      %10393 = vmatpush1.msra.mxu0 0.0
      %10394 = vmatprep.subr.mxu0 0.0
      %10395 = vmatpush1.msra.mxu0 0.0
      %10396 = vmatprep.mubr.f32.mxu0 0.0
      %10397 = vmatmul.mubr.f32.gmra.mrb[0].mxu0 %v10328
      %v10398 = vpop.f32.mrb[0].mxu0
      %v10399 = vadd.f32 0.0, %v10398
      %v10400 = vpop.f32.mrb[0].mxu0
      %v10401 = vadd.f32 0.0, %v10400
      %10402 = vmatprep.mubr.f32.mxu0 0.0
      %10403 = vmatmul.mubr.f32.gmra.mrb[0].mxu0 %v10330
      %v10404 = vpop.f32.mrb[0].mxu0
      %v10405 = vadd.f32 0.0, %v10404
      %v10406 = vpop.f32.mrb[0].mxu0
      %v10407 = vadd.f32 0.0, %v10406
      %10408 = vdwg.mxu0
      %v10409 = vrot.slane %v6924, 4
      %v10410 = vrot.slane %v6929, 4
      %v10411 = vsel %vm3983, %v10409, %v10410
      %v10412 = vsel %vm7066, %v10411, 0
      %v10414 = vsel %vm7066, %v10410, 0
      %10416 = vmatprep.subr.mxu0 %v9878
      %10417 = vmatpush1.msra.mxu0 %v9877
      %10418 = vmatprep.subr.mxu0 %v9880
      %10419 = vmatpush1.msra.mxu0 %v9879
      %10420 = vmatprep.subr.mxu0 %v9882
      %10421 = vmatpush1.msra.mxu0 %v9881
      %10422 = vmatprep.subr.mxu0 %v9884
      %10423 = vmatpush1.msra.mxu0 %v9883
      %10424 = vmatprep.subr.mxu0 %v9886
      %10425 = vmatpush1.msra.mxu0 %v9885
      %10426 = vmatprep.subr.mxu0 %v9888
      %10427 = vmatpush1.msra.mxu0 %v9887
      %10428 = vmatprep.subr.mxu0 %v9890
      %10429 = vmatpush1.msra.mxu0 %v9889
      %10430 = vmatprep.subr.mxu0 %v9892
      %10431 = vmatpush1.msra.mxu0 %v9891
      %10432 = vmatprep.subr.mxu0 %v9894
      %10433 = vmatpush1.msra.mxu0 %v9893
      %10434 = vmatprep.subr.mxu0 %v9896
      %10435 = vmatpush1.msra.mxu0 %v9895
      %10436 = vmatprep.subr.mxu0 %v9910
      %10437 = vmatpush1.msra.mxu0 %v9907
      %10438 = vmatprep.subr.mxu0 0.0
      %10439 = vmatpush1.msra.mxu0 0.0
      %10440 = vmatprep.subr.mxu0 0.0
      %10441 = vmatpush1.msra.mxu0 0.0
      %10442 = vmatprep.subr.mxu0 0.0
      %10443 = vmatpush1.msra.mxu0 0.0
      %10444 = vmatprep.subr.mxu0 0.0
      %10445 = vmatpush1.msra.mxu0 0.0
      %10446 = vmatprep.subr.mxu0 0.0
      %10447 = vmatpush1.msra.mxu0 0.0
      %10448 = vmatprep.subr.mxu0 0.0
      %10449 = vmatpush1.msra.mxu0 0.0
      %10450 = vmatprep.subr.mxu0 0.0
      %10451 = vmatpush1.msra.mxu0 0.0
      %10452 = vmatprep.subr.mxu0 0.0
      %10453 = vmatpush1.msra.mxu0 0.0
      %10454 = vmatprep.subr.mxu0 0.0
      %10455 = vmatpush1.msra.mxu0 0.0
      %10456 = vmatprep.subr.mxu0 0.0
      %10457 = vmatpush1.msra.mxu0 0.0
      %10458 = vmatprep.subr.mxu0 0.0
      %10459 = vmatpush1.msra.mxu0 0.0
      %10460 = vmatprep.subr.mxu0 0.0
      %10461 = vmatpush1.msra.mxu0 0.0
      %10462 = vmatprep.subr.mxu0 0.0
      %10463 = vmatpush1.msra.mxu0 0.0
      %10464 = vmatprep.subr.mxu0 0.0
      %10465 = vmatpush1.msra.mxu0 0.0
      %10466 = vmatprep.subr.mxu0 0.0
      %10467 = vmatpush1.msra.mxu0 0.0
      %10468 = vmatprep.subr.mxu0 0.0
      %10469 = vmatpush1.msra.mxu0 0.0
      %10470 = vmatprep.subr.mxu0 0.0
      %10471 = vmatpush1.msra.mxu0 0.0
      %10472 = vmatprep.subr.mxu0 0.0
      %10473 = vmatpush1.msra.mxu0 0.0
      %10474 = vmatprep.subr.mxu0 0.0
      %10475 = vmatpush1.msra.mxu0 0.0
      %10476 = vmatprep.subr.mxu0 0.0
      %10477 = vmatpush1.msra.mxu0 0.0
      %10478 = vmatprep.subr.mxu0 0.0
      %10479 = vmatpush1.msra.mxu0 0.0
      %10480 = vmatprep.mubr.f32.mxu0 0.0
      %10481 = vmatmul.mubr.f32.gmra.mrb[0].mxu0 %v10412
      %v10482 = vpop.f32.mrb[0].mxu0
      %v10483 = vadd.f32 0.0, %v10482
      %v10484 = vpop.f32.mrb[0].mxu0
      %v10485 = vadd.f32 0.0, %v10484
      %10486 = vmatprep.mubr.f32.mxu0 0.0
      %10487 = vmatmul.mubr.f32.gmra.mrb[0].mxu0 %v10414
      %v10488 = vpop.f32.mrb[0].mxu0
      %v10489 = vadd.f32 0.0, %v10488
      %v10490 = vpop.f32.mrb[0].mxu0
      %v10491 = vadd.f32 0.0, %v10490
      %10492 = vdwg.mxu0
      %v10493 = vrot.slane %v7008, 4
      %v10494 = vrot.slane %v7013, 4
      %v10495 = vsel %vm3983, %v10493, %v10494
      %v10496 = vsel %vm7066, %v10495, 0
      %v10498 = vsel %vm7066, %v10494, 0
      %10500 = vmatprep.subr.mxu0 %v9878
      %10501 = vmatpush1.msra.mxu0 %v9877
      %10502 = vmatprep.subr.mxu0 %v9880
      %10503 = vmatpush1.msra.mxu0 %v9879
      %10504 = vmatprep.subr.mxu0 %v9882
      %10505 = vmatpush1.msra.mxu0 %v9881
      %10506 = vmatprep.subr.mxu0 %v9884
      %10507 = vmatpush1.msra.mxu0 %v9883
      %10508 = vmatprep.subr.mxu0 %v9886
      %10509 = vmatpush1.msra.mxu0 %v9885
      %10510 = vmatprep.subr.mxu0 %v9888
      %10511 = vmatpush1.msra.mxu0 %v9887
      %10512 = vmatprep.subr.mxu0 %v9890
      %10513 = vmatpush1.msra.mxu0 %v9889
      %10514 = vmatprep.subr.mxu0 %v9892
      %10515 = vmatpush1.msra.mxu0 %v9891
      %10516 = vmatprep.subr.mxu0 %v9894
      %10517 = vmatpush1.msra.mxu0 %v9893
      %10518 = vmatprep.subr.mxu0 %v9896
      %10519 = vmatpush1.msra.mxu0 %v9895
      %10520 = vmatprep.subr.mxu0 %v9910
      %10521 = vmatpush1.msra.mxu0 %v9907
      %10522 = vmatprep.subr.mxu0 0.0
      %10523 = vmatpush1.msra.mxu0 0.0
      %10524 = vmatprep.subr.mxu0 0.0
      %10525 = vmatpush1.msra.mxu0 0.0
      %10526 = vmatprep.subr.mxu0 0.0
      %10527 = vmatpush1.msra.mxu0 0.0
      %10528 = vmatprep.subr.mxu0 0.0
      %10529 = vmatpush1.msra.mxu0 0.0
      %10530 = vmatprep.subr.mxu0 0.0
      %10531 = vmatpush1.msra.mxu0 0.0
      %10532 = vmatprep.subr.mxu0 0.0
      %10533 = vmatpush1.msra.mxu0 0.0
      %10534 = vmatprep.subr.mxu0 0.0
      %10535 = vmatpush1.msra.mxu0 0.0
      %10536 = vmatprep.subr.mxu0 0.0
      %10537 = vmatpush1.msra.mxu0 0.0
      %10538 = vmatprep.subr.mxu0 0.0
      %10539 = vmatpush1.msra.mxu0 0.0
      %10540 = vmatprep.subr.mxu0 0.0
      %10541 = vmatpush1.msra.mxu0 0.0
      %10542 = vmatprep.subr.mxu0 0.0
      %10543 = vmatpush1.msra.mxu0 0.0
      %10544 = vmatprep.subr.mxu0 0.0
      %10545 = vmatpush1.msra.mxu0 0.0
      %10546 = vmatprep.subr.mxu0 0.0
      %10547 = vmatpush1.msra.mxu0 0.0
      %10548 = vmatprep.subr.mxu0 0.0
      %10549 = vmatpush1.msra.mxu0 0.0
      %10550 = vmatprep.subr.mxu0 0.0
      %10551 = vmatpush1.msra.mxu0 0.0
      %10552 = vmatprep.subr.mxu0 0.0
      %10553 = vmatpush1.msra.mxu0 0.0
      %10554 = vmatprep.subr.mxu0 0.0
      %10555 = vmatpush1.msra.mxu0 0.0
      %10556 = vmatprep.subr.mxu0 0.0
      %10557 = vmatpush1.msra.mxu0 0.0
      %10558 = vmatprep.subr.mxu0 0.0
      %10559 = vmatpush1.msra.mxu0 0.0
      %10560 = vmatprep.subr.mxu0 0.0
      %10561 = vmatpush1.msra.mxu0 0.0
      %10562 = vmatprep.subr.mxu0 0.0
      %10563 = vmatpush1.msra.mxu0 0.0
      %10564 = vmatprep.mubr.f32.mxu0 0.0
      %10565 = vmatmul.mubr.f32.gmra.mrb[0].mxu0 %v10496
      %v10566 = vpop.f32.mrb[0].mxu0
      %v10567 = vadd.f32 0.0, %v10566
      %v10568 = vpop.f32.mrb[0].mxu0
      %v10569 = vadd.f32 0.0, %v10568
      %10570 = vmatprep.mubr.f32.mxu0 0.0
      %10571 = vmatmul.mubr.f32.gmra.mrb[0].mxu0 %v10498
      %v10572 = vpop.f32.mrb[0].mxu0
      %v10573 = vadd.f32 0.0, %v10572
      %v10574 = vpop.f32.mrb[0].mxu0
      %v10575 = vadd.f32 0.0, %v10574
      %10576 = vdwg.mxu0
      %v10577 = vadd.f32 %v9844, %v9979
      %v10578 = vadd.f32 %v9845, %v9981
      %v10579 = vadd.f32 %v9846, %v9985
      %v10580 = vadd.f32 %v9847, %v9987
      %v10581 = vadd.f32 %v9848, %v10063
      %v10582 = vadd.f32 %v9849, %v10065
      %v10583 = vadd.f32 %v9850, %v10069
      %v10584 = vadd.f32 %v9851, %v10071
      %v10585 = vadd.f32 %v9852, %v10147
      %v10586 = vadd.f32 %v9853, %v10149
      %v10587 = vadd.f32 %v9854, %v10153
      %v10588 = vadd.f32 %v9855, %v10155
      %v10589 = vadd.f32 %v9856, %v10231
      %v10590 = vadd.f32 %v9857, %v10233
      %v10591 = vadd.f32 %v9858, %v10237
      %v10592 = vadd.f32 %v9859, %v10239
      %v10593 = vadd.f32 %v9860, %v10315
      %v10594 = vadd.f32 %v9861, %v10317
      %v10595 = vadd.f32 %v9862, %v10321
      %v10596 = vadd.f32 %v9863, %v10323
      %v10597 = vadd.f32 %v9864, %v10399
      %v10598 = vadd.f32 %v9865, %v10401
      %v10599 = vadd.f32 %v9866, %v10405
      %v10600 = vadd.f32 %v9867, %v10407
      %v10601 = vadd.f32 %v9868, %v10483
      %v10602 = vadd.f32 %v9869, %v10485
      %v10603 = vadd.f32 %v9870, %v10489
      %v10604 = vadd.f32 %v9871, %v10491
      %v10605 = vadd.f32 %v9872, %v10567
      %v10606 = vadd.f32 %v9873, %v10569
      %v10607 = vadd.f32 %v9874, %v10573
      %v10608 = vadd.f32 %v9875, %v10575
      %v10609 = vld [vmem:[%s6] sm:$0x3]
      %v10611 = vlaneseq
      %v10612 = vshrl.u32 %v10611, 7
      %v10613 = vsub.s32 0, %v10612
      %v10614 = vrot.slane %v10609, %v10613
      %v10615 = vlaneseq
      %v10616 = vshrl.u32 %v10615, 7
      %v10617 = vsub.s32 1, %v10616
      %v10618 = vrot.slane %v10609, %v10617
      %v10621 = vadd.f32 %v10577, %v10614
      %v10622 = vadd.f32 %v10578, %v10618
      %v10623 = vadd.f32 %v10579, %v10614
      %v10624 = vadd.f32 %v10580, %v10618
      %v10625 = vadd.f32 %v10581, %v10614
      %v10626 = vadd.f32 %v10582, %v10618
      %v10627 = vadd.f32 %v10583, %v10614
      %v10628 = vadd.f32 %v10584, %v10618
      %v10629 = vadd.f32 %v10585, %v10614
      %v10630 = vadd.f32 %v10586, %v10618
      %v10631 = vadd.f32 %v10587, %v10614
      %v10632 = vadd.f32 %v10588, %v10618
      %v10633 = vadd.f32 %v10589, %v10614
      %v10634 = vadd.f32 %v10590, %v10618
      %v10635 = vadd.f32 %v10591, %v10614
      %v10636 = vadd.f32 %v10592, %v10618
      %v10637 = vadd.f32 %v10593, %v10614
      %v10638 = vadd.f32 %v10594, %v10618
      %v10639 = vadd.f32 %v10595, %v10614
      %v10640 = vadd.f32 %v10596, %v10618
      %v10641 = vadd.f32 %v10597, %v10614
      %v10642 = vadd.f32 %v10598, %v10618
      %v10643 = vadd.f32 %v10599, %v10614
      %v10644 = vadd.f32 %v10600, %v10618
      %v10645 = vadd.f32 %v10601, %v10614
      %v10646 = vadd.f32 %v10602, %v10618
      %v10647 = vadd.f32 %v10603, %v10614
      %v10648 = vadd.f32 %v10604, %v10618
      %v10649 = vadd.f32 %v10605, %v10614
      %v10650 = vadd.f32 %v10606, %v10618
      %v10651 = vadd.f32 %v10607, %v10614
      %v10652 = vadd.f32 %v10608, %v10618
      %v10653 = vmax.f32 %v10621, 0.0
      %v10654 = vmax.f32 %v10622, 0.0
      %v10655 = vmax.f32 %v10623, 0.0
      %v10656 = vmax.f32 %v10624, 0.0
      %v10657 = vmax.f32 %v10625, 0.0
      %v10658 = vmax.f32 %v10626, 0.0
      %v10659 = vmax.f32 %v10627, 0.0
      %v10660 = vmax.f32 %v10628, 0.0
      %v10661 = vmax.f32 %v10629, 0.0
      %v10662 = vmax.f32 %v10630, 0.0
      %v10663 = vmax.f32 %v10631, 0.0
      %v10664 = vmax.f32 %v10632, 0.0
      %v10665 = vmax.f32 %v10633, 0.0
      %v10666 = vmax.f32 %v10634, 0.0
      %v10667 = vmax.f32 %v10635, 0.0
      %v10668 = vmax.f32 %v10636, 0.0
      %v10669 = vmax.f32 %v10637, 0.0
      %v10670 = vmax.f32 %v10638, 0.0
      %v10671 = vmax.f32 %v10639, 0.0
      %v10672 = vmax.f32 %v10640, 0.0
      %v10673 = vmax.f32 %v10641, 0.0
      %v10674 = vmax.f32 %v10642, 0.0
      %v10675 = vmax.f32 %v10643, 0.0
      %v10676 = vmax.f32 %v10644, 0.0
      %v10677 = vmax.f32 %v10645, 0.0
      %v10678 = vmax.f32 %v10646, 0.0
      %v10679 = vmax.f32 %v10647, 0.0
      %v10680 = vmax.f32 %v10648, 0.0
      %v10681 = vmax.f32 %v10649, 0.0
      %v10682 = vmax.f32 %v10650, 0.0
      %v10683 = vmax.f32 %v10651, 0.0
      %v10684 = vmax.f32 %v10652, 0.0
      %10717 = vrot.lane.b32.xlu0 %v10653, 127
      %v10718 = vpop.permute.xlu0 %10717
      %10719 = vrot.lane.b32.xlu0 %v10654, 127
      %v10720 = vpop.permute.xlu0 %10719
      %10721 = vrot.lane.b32.xlu0 %v10655, 127
      %v10722 = vpop.permute.xlu0 %10721
      %10723 = vrot.lane.b32.xlu0 %v10656, 127
      %v10724 = vpop.permute.xlu0 %10723
      %10725 = vrot.lane.b32.xlu0 %v10657, 127
      %v10726 = vpop.permute.xlu0 %10725
      %10727 = vrot.lane.b32.xlu0 %v10658, 127
      %v10728 = vpop.permute.xlu0 %10727
      %10729 = vrot.lane.b32.xlu0 %v10659, 127
      %v10730 = vpop.permute.xlu0 %10729
      %10731 = vrot.lane.b32.xlu0 %v10660, 127
      %v10732 = vpop.permute.xlu0 %10731
      %10733 = vrot.lane.b32.xlu0 %v10661, 127
      %v10734 = vpop.permute.xlu0 %10733
      %10735 = vrot.lane.b32.xlu0 %v10662, 127
      %v10736 = vpop.permute.xlu0 %10735
      %10737 = vrot.lane.b32.xlu0 %v10663, 127
      %v10738 = vpop.permute.xlu0 %10737
      %10739 = vrot.lane.b32.xlu0 %v10664, 127
      %v10740 = vpop.permute.xlu0 %10739
      %10741 = vrot.lane.b32.xlu0 %v10665, 127
      %v10742 = vpop.permute.xlu0 %10741
      %10743 = vrot.lane.b32.xlu0 %v10666, 127
      %v10744 = vpop.permute.xlu0 %10743
      %10745 = vrot.lane.b32.xlu0 %v10667, 127
      %v10746 = vpop.permute.xlu0 %10745
      %10747 = vrot.lane.b32.xlu0 %v10668, 127
      %v10748 = vpop.permute.xlu0 %10747
      %10749 = vrot.lane.b32.xlu0 %v10669, 127
      %v10750 = vpop.permute.xlu0 %10749
      %10751 = vrot.lane.b32.xlu0 %v10670, 127
      %v10752 = vpop.permute.xlu0 %10751
      %10753 = vrot.lane.b32.xlu0 %v10671, 127
      %v10754 = vpop.permute.xlu0 %10753
      %10755 = vrot.lane.b32.xlu0 %v10672, 127
      %v10756 = vpop.permute.xlu0 %10755
      %10757 = vrot.lane.b32.xlu0 %v10673, 127
      %v10758 = vpop.permute.xlu0 %10757
      %10759 = vrot.lane.b32.xlu0 %v10674, 127
      %v10760 = vpop.permute.xlu0 %10759
      %10761 = vrot.lane.b32.xlu0 %v10675, 127
      %v10762 = vpop.permute.xlu0 %10761
      %10763 = vrot.lane.b32.xlu0 %v10676, 127
      %v10764 = vpop.permute.xlu0 %10763
      %10765 = vrot.lane.b32.xlu0 %v10677, 127
      %v10766 = vpop.permute.xlu0 %10765
      %10767 = vrot.lane.b32.xlu0 %v10678, 127
      %v10768 = vpop.permute.xlu0 %10767
      %10769 = vrot.lane.b32.xlu0 %v10679, 127
      %v10770 = vpop.permute.xlu0 %10769
      %10771 = vrot.lane.b32.xlu0 %v10680, 127
      %v10772 = vpop.permute.xlu0 %10771
      %10773 = vrot.lane.b32.xlu0 %v10681, 127
      %v10774 = vpop.permute.xlu0 %10773
      %10775 = vrot.lane.b32.xlu0 %v10682, 127
      %v10776 = vpop.permute.xlu0 %10775
      %10777 = vrot.lane.b32.xlu0 %v10683, 127
      %v10778 = vpop.permute.xlu0 %10777
      %10779 = vrot.lane.b32.xlu0 %v10684, 127
      %v10780 = vpop.permute.xlu0 %10779
      %v10781 = vsel %vm5212, %v10718, %v10720
      %v10782 = vsel %vm5212, %v10722, %v10724
      %v10783 = vsel %vm5212, %v10726, %v10728
      %v10784 = vsel %vm5212, %v10730, %v10732
      %v10785 = vsel %vm5212, %v10734, %v10736
      %v10786 = vsel %vm5212, %v10738, %v10740
      %v10787 = vsel %vm5212, %v10742, %v10744
      %v10788 = vsel %vm5212, %v10746, %v10748
      %v10789 = vsel %vm5212, %v10750, %v10752
      %v10790 = vsel %vm5212, %v10754, %v10756
      %v10791 = vsel %vm5212, %v10758, %v10760
      %v10792 = vsel %vm5212, %v10762, %v10764
      %v10793 = vsel %vm5212, %v10766, %v10768
      %v10794 = vsel %vm5212, %v10770, %v10772
      %v10795 = vsel %vm5212, %v10774, %v10776
      %v10796 = vsel %vm5212, %v10778, %v10780
      %v10829 = vmax.f32 %v10653, %v10781
      %v10830 = vmax.f32 %v10654, %v10720
      %v10831 = vmax.f32 %v10655, %v10782
      %v10832 = vmax.f32 %v10656, %v10724
      %v10833 = vmax.f32 %v10657, %v10783
      %v10834 = vmax.f32 %v10658, %v10728
      %v10835 = vmax.f32 %v10659, %v10784
      %v10836 = vmax.f32 %v10660, %v10732
      %v10837 = vmax.f32 %v10661, %v10785
      %v10838 = vmax.f32 %v10662, %v10736
      %v10839 = vmax.f32 %v10663, %v10786
      %v10840 = vmax.f32 %v10664, %v10740
      %v10841 = vmax.f32 %v10665, %v10787
      %v10842 = vmax.f32 %v10666, %v10744
      %v10843 = vmax.f32 %v10667, %v10788
      %v10844 = vmax.f32 %v10668, %v10748
      %v10845 = vmax.f32 %v10669, %v10789
      %v10846 = vmax.f32 %v10670, %v10752
      %v10847 = vmax.f32 %v10671, %v10790
      %v10848 = vmax.f32 %v10672, %v10756
      %v10849 = vmax.f32 %v10673, %v10791
      %v10850 = vmax.f32 %v10674, %v10760
      %v10851 = vmax.f32 %v10675, %v10792
      %v10852 = vmax.f32 %v10676, %v10764
      %v10853 = vmax.f32 %v10677, %v10793
      %v10854 = vmax.f32 %v10678, %v10768
      %v10855 = vmax.f32 %v10679, %v10794
      %v10856 = vmax.f32 %v10680, %v10772
      %v10857 = vmax.f32 %v10681, %v10795
      %v10858 = vmax.f32 %v10682, %v10776
      %v10859 = vmax.f32 %v10683, %v10796
      %v10860 = vmax.f32 %v10684, %v10780
      %v10861 = vld [vmem:[%s7] sm:$0xff]
      %v10862 = vld [vmem:[%s7 + $0x8] sm:$0xff]
      %v10863 = vld [vmem:[%s7 + $0x10] sm:$0xff]
      %v10864 = vld [vmem:[%s7 + $0x18] sm:$0xff]
      %v10865 = vld [vmem:[%s7 + $0x20] sm:$0xff]
      %v10866 = vld [vmem:[%s7 + $0x28] sm:$0xff]
      %v10867 = vld [vmem:[%s7 + $0x30] sm:$0xff]
      %v10868 = vld [vmem:[%s7 + $0x38] sm:$0xff]
      %v10869 = vld [vmem:[%s7 + $0x40] sm:$0xff]
      %v10870 = vld [vmem:[%s7 + $0x48] sm:$0xff]
      %v10871 = vld [vmem:[%s7 + $0x50] sm:$0xff]
      %v10872 = vld [vmem:[%s7 + $0x58] sm:$0xff]
      %v10873 = vld [vmem:[%s7 + $0x60] sm:$0xff]
      %v10874 = vld [vmem:[%s7 + $0x68] sm:$0xff]
      %v10875 = vld [vmem:[%s7 + $0x70] sm:$0xff]
      %v10876 = vld [vmem:[%s7 + $0x78] sm:$0xff]
      %v10877 = vld [vmem:[%s7 + $0x80] sm:$0xff]
      %v10878 = vld [vmem:[%s7 + $0x88] sm:$0xff]
      %v10879 = vld [vmem:[%s7 + $0x90] sm:$0xff]
      %v10880 = vld [vmem:[%s7 + $0x98] sm:$0x7f]
      %vm10881 = vcmask 252928
      %v10883 = vsel %vm10881, %v10830, 0
      %v10886 = vsel %vm10881, %v10832, 0
      %v10889 = vsel %vm524, %v10880, 0
      %10891 = vmatprep.subr.mxu0 0.0
      %10892 = vmatpush1.msra.mxu0 %v10861
      %10893 = vmatprep.subr.mxu0 0.0
      %10894 = vmatpush1.msra.mxu0 %v10862
      %10895 = vmatprep.subr.mxu0 0.0
      %10896 = vmatpush1.msra.mxu0 %v10863
      %10897 = vmatprep.subr.mxu0 0.0
      %10898 = vmatpush1.msra.mxu0 %v10864
      %10899 = vmatprep.subr.mxu0 0.0
      %10900 = vmatpush1.msra.mxu0 %v10865
      %10901 = vmatprep.subr.mxu0 0.0
      %10902 = vmatpush1.msra.mxu0 %v10866
      %10903 = vmatprep.subr.mxu0 0.0
      %10904 = vmatpush1.msra.mxu0 %v10867
      %10905 = vmatprep.subr.mxu0 0.0
      %10906 = vmatpush1.msra.mxu0 %v10868
      %10907 = vmatprep.subr.mxu0 0.0
      %10908 = vmatpush1.msra.mxu0 %v10869
      %10909 = vmatprep.subr.mxu0 0.0
      %10910 = vmatpush1.msra.mxu0 %v10870
      %10911 = vmatprep.subr.mxu0 0.0
      %10912 = vmatpush1.msra.mxu0 %v10871
      %10913 = vmatprep.subr.mxu0 0.0
      %10914 = vmatpush1.msra.mxu0 %v10872
      %10915 = vmatprep.subr.mxu0 0.0
      %10916 = vmatpush1.msra.mxu0 %v10873
      %10917 = vmatprep.subr.mxu0 0.0
      %10918 = vmatpush1.msra.mxu0 %v10874
      %10919 = vmatprep.subr.mxu0 0.0
      %10920 = vmatpush1.msra.mxu0 %v10875
      %10921 = vmatprep.subr.mxu0 0.0
      %10922 = vmatpush1.msra.mxu0 %v10876
      %10923 = vmatprep.subr.mxu0 0.0
      %10924 = vmatpush1.msra.mxu0 %v10877
      %10925 = vmatprep.subr.mxu0 0.0
      %10926 = vmatpush1.msra.mxu0 %v10878
      %10927 = vmatprep.subr.mxu0 0.0
      %10928 = vmatpush1.msra.mxu0 %v10879
      %10929 = vmatprep.subr.mxu0 0.0
      %10930 = vmatpush1.msra.mxu0 %v10889
      %10931 = vmatprep.subr.mxu0 0.0
      %10932 = vmatpush1.msra.mxu0 0.0
      %10933 = vmatprep.subr.mxu0 0.0
      %10934 = vmatpush1.msra.mxu0 0.0
      %10935 = vmatprep.subr.mxu0 0.0
      %10936 = vmatpush1.msra.mxu0 0.0
      %10937 = vmatprep.subr.mxu0 0.0
      %10938 = vmatpush1.msra.mxu0 0.0
      %10939 = vmatprep.subr.mxu0 0.0
      %10940 = vmatpush1.msra.mxu0 0.0
      %10941 = vmatprep.subr.mxu0 0.0
      %10942 = vmatpush1.msra.mxu0 0.0
      %10943 = vmatprep.subr.mxu0 0.0
      %10944 = vmatpush1.msra.mxu0 0.0
      %10945 = vmatprep.subr.mxu0 0.0
      %10946 = vmatpush1.msra.mxu0 0.0
      %10947 = vmatprep.subr.mxu0 0.0
      %10948 = vmatpush1.msra.mxu0 0.0
      %10949 = vmatprep.subr.mxu0 0.0
      %10950 = vmatpush1.msra.mxu0 0.0
      %10951 = vmatprep.subr.mxu0 0.0
      %10952 = vmatpush1.msra.mxu0 0.0
      %10953 = vmatprep.subr.mxu0 0.0
      %10954 = vmatpush1.msra.mxu0 0.0
      %10955 = vmatprep.mubr.f32.mxu0 %v10883
      %10956 = vmatmul.mubr.f32.gmra.mrb[0].mxu0 %v10829
      %v10957 = vpop.f32.mrb[0].mxu0
      %v10958 = vadd.f32 0.0, %v10957
      %v10959 = vpop.f32.mrb[0].mxu0
      %10960 = vmatprep.mubr.f32.mxu0 %v10886
      %10961 = vmatmul.mubr.f32.gmra.mrb[0].mxu0 %v10831
      %v10962 = vpop.f32.mrb[0].mxu0
      %v10963 = vadd.f32 0.0, %v10962
      %v10964 = vpop.f32.mrb[0].mxu0
      %10965 = vdwg.mxu0
      %v10967 = vsel %vm10881, %v10834, 0
      %v10970 = vsel %vm10881, %v10836, 0
      %10972 = vmatprep.subr.mxu0 0.0
      %10973 = vmatpush1.msra.mxu0 %v10861
      %10974 = vmatprep.subr.mxu0 0.0
      %10975 = vmatpush1.msra.mxu0 %v10862
      %10976 = vmatprep.subr.mxu0 0.0
      %10977 = vmatpush1.msra.mxu0 %v10863
      %10978 = vmatprep.subr.mxu0 0.0
      %10979 = vmatpush1.msra.mxu0 %v10864
      %10980 = vmatprep.subr.mxu0 0.0
      %10981 = vmatpush1.msra.mxu0 %v10865
      %10982 = vmatprep.subr.mxu0 0.0
      %10983 = vmatpush1.msra.mxu0 %v10866
      %10984 = vmatprep.subr.mxu0 0.0
      %10985 = vmatpush1.msra.mxu0 %v10867
      %10986 = vmatprep.subr.mxu0 0.0
      %10987 = vmatpush1.msra.mxu0 %v10868
      %10988 = vmatprep.subr.mxu0 0.0
      %10989 = vmatpush1.msra.mxu0 %v10869
      %10990 = vmatprep.subr.mxu0 0.0
      %10991 = vmatpush1.msra.mxu0 %v10870
      %10992 = vmatprep.subr.mxu0 0.0
      %10993 = vmatpush1.msra.mxu0 %v10871
      %10994 = vmatprep.subr.mxu0 0.0
      %10995 = vmatpush1.msra.mxu0 %v10872
      %10996 = vmatprep.subr.mxu0 0.0
      %10997 = vmatpush1.msra.mxu0 %v10873
      %10998 = vmatprep.subr.mxu0 0.0
      %10999 = vmatpush1.msra.mxu0 %v10874
      %11000 = vmatprep.subr.mxu0 0.0
      %11001 = vmatpush1.msra.mxu0 %v10875
      %11002 = vmatprep.subr.mxu0 0.0
      %11003 = vmatpush1.msra.mxu0 %v10876
      %11004 = vmatprep.subr.mxu0 0.0
      %11005 = vmatpush1.msra.mxu0 %v10877
      %11006 = vmatprep.subr.mxu0 0.0
      %11007 = vmatpush1.msra.mxu0 %v10878
      %11008 = vmatprep.subr.mxu0 0.0
      %11009 = vmatpush1.msra.mxu0 %v10879
      %11010 = vmatprep.subr.mxu0 0.0
      %11011 = vmatpush1.msra.mxu0 %v10889
      %11012 = vmatprep.subr.mxu0 0.0
      %11013 = vmatpush1.msra.mxu0 0.0
      %11014 = vmatprep.subr.mxu0 0.0
      %11015 = vmatpush1.msra.mxu0 0.0
      %11016 = vmatprep.subr.mxu0 0.0
      %11017 = vmatpush1.msra.mxu0 0.0
      %11018 = vmatprep.subr.mxu0 0.0
      %11019 = vmatpush1.msra.mxu0 0.0
      %11020 = vmatprep.subr.mxu0 0.0
      %11021 = vmatpush1.msra.mxu0 0.0
      %11022 = vmatprep.subr.mxu0 0.0
      %11023 = vmatpush1.msra.mxu0 0.0
      %11024 = vmatprep.subr.mxu0 0.0
      %11025 = vmatpush1.msra.mxu0 0.0
      %11026 = vmatprep.subr.mxu0 0.0
      %11027 = vmatpush1.msra.mxu0 0.0
      %11028 = vmatprep.subr.mxu0 0.0
      %11029 = vmatpush1.msra.mxu0 0.0
      %11030 = vmatprep.subr.mxu0 0.0
      %11031 = vmatpush1.msra.mxu0 0.0
      %11032 = vmatprep.subr.mxu0 0.0
      %11033 = vmatpush1.msra.mxu0 0.0
      %11034 = vmatprep.subr.mxu0 0.0
      %11035 = vmatpush1.msra.mxu0 0.0
      %11036 = vmatprep.mubr.f32.mxu0 %v10967
      %11037 = vmatmul.mubr.f32.gmra.mrb[0].mxu0 %v10833
      %v11038 = vpop.f32.mrb[0].mxu0
      %v11039 = vadd.f32 0.0, %v11038
      %v11040 = vpop.f32.mrb[0].mxu0
      %11041 = vmatprep.mubr.f32.mxu0 %v10970
      %11042 = vmatmul.mubr.f32.gmra.mrb[0].mxu0 %v10835
      %v11043 = vpop.f32.mrb[0].mxu0
      %v11044 = vadd.f32 0.0, %v11043
      %v11045 = vpop.f32.mrb[0].mxu0
      %11046 = vdwg.mxu0
      %v11048 = vsel %vm10881, %v10838, 0
      %v11051 = vsel %vm10881, %v10840, 0
      %11053 = vmatprep.subr.mxu0 0.0
      %11054 = vmatpush1.msra.mxu0 %v10861
      %11055 = vmatprep.subr.mxu0 0.0
      %11056 = vmatpush1.msra.mxu0 %v10862
      %11057 = vmatprep.subr.mxu0 0.0
      %11058 = vmatpush1.msra.mxu0 %v10863
      %11059 = vmatprep.subr.mxu0 0.0
      %11060 = vmatpush1.msra.mxu0 %v10864
      %11061 = vmatprep.subr.mxu0 0.0
      %11062 = vmatpush1.msra.mxu0 %v10865
      %11063 = vmatprep.subr.mxu0 0.0
      %11064 = vmatpush1.msra.mxu0 %v10866
      %11065 = vmatprep.subr.mxu0 0.0
      %11066 = vmatpush1.msra.mxu0 %v10867
      %11067 = vmatprep.subr.mxu0 0.0
      %11068 = vmatpush1.msra.mxu0 %v10868
      %11069 = vmatprep.subr.mxu0 0.0
      %11070 = vmatpush1.msra.mxu0 %v10869
      %11071 = vmatprep.subr.mxu0 0.0
      %11072 = vmatpush1.msra.mxu0 %v10870
      %11073 = vmatprep.subr.mxu0 0.0
      %11074 = vmatpush1.msra.mxu0 %v10871
      %11075 = vmatprep.subr.mxu0 0.0
      %11076 = vmatpush1.msra.mxu0 %v10872
      %11077 = vmatprep.subr.mxu0 0.0
      %11078 = vmatpush1.msra.mxu0 %v10873
      %11079 = vmatprep.subr.mxu0 0.0
      %11080 = vmatpush1.msra.mxu0 %v10874
      %11081 = vmatprep.subr.mxu0 0.0
      %11082 = vmatpush1.msra.mxu0 %v10875
      %11083 = vmatprep.subr.mxu0 0.0
      %11084 = vmatpush1.msra.mxu0 %v10876
      %11085 = vmatprep.subr.mxu0 0.0
      %11086 = vmatpush1.msra.mxu0 %v10877
      %11087 = vmatprep.subr.mxu0 0.0
      %11088 = vmatpush1.msra.mxu0 %v10878
      %11089 = vmatprep.subr.mxu0 0.0
      %11090 = vmatpush1.msra.mxu0 %v10879
      %11091 = vmatprep.subr.mxu0 0.0
      %11092 = vmatpush1.msra.mxu0 %v10889
      %11093 = vmatprep.subr.mxu0 0.0
      %11094 = vmatpush1.msra.mxu0 0.0
      %11095 = vmatprep.subr.mxu0 0.0
      %11096 = vmatpush1.msra.mxu0 0.0
      %11097 = vmatprep.subr.mxu0 0.0
      %11098 = vmatpush1.msra.mxu0 0.0
      %11099 = vmatprep.subr.mxu0 0.0
      %11100 = vmatpush1.msra.mxu0 0.0
      %11101 = vmatprep.subr.mxu0 0.0
      %11102 = vmatpush1.msra.mxu0 0.0
      %11103 = vmatprep.subr.mxu0 0.0
      %11104 = vmatpush1.msra.mxu0 0.0
      %11105 = vmatprep.subr.mxu0 0.0
      %11106 = vmatpush1.msra.mxu0 0.0
      %11107 = vmatprep.subr.mxu0 0.0
      %11108 = vmatpush1.msra.mxu0 0.0
      %11109 = vmatprep.subr.mxu0 0.0
      %11110 = vmatpush1.msra.mxu0 0.0
      %11111 = vmatprep.subr.mxu0 0.0
      %11112 = vmatpush1.msra.mxu0 0.0
      %11113 = vmatprep.subr.mxu0 0.0
      %11114 = vmatpush1.msra.mxu0 0.0
      %11115 = vmatprep.subr.mxu0 0.0
      %11116 = vmatpush1.msra.mxu0 0.0
      %11117 = vmatprep.mubr.f32.mxu0 %v11048
      %11118 = vmatmul.mubr.f32.gmra.mrb[0].mxu0 %v10837
      %v11119 = vpop.f32.mrb[0].mxu0
      %v11120 = vadd.f32 0.0, %v11119
      %v11121 = vpop.f32.mrb[0].mxu0
      %11122 = vmatprep.mubr.f32.mxu0 %v11051
      %11123 = vmatmul.mubr.f32.gmra.mrb[0].mxu0 %v10839
      %v11124 = vpop.f32.mrb[0].mxu0
      %v11125 = vadd.f32 0.0, %v11124
      %v11126 = vpop.f32.mrb[0].mxu0
      %11127 = vdwg.mxu0
      %v11129 = vsel %vm10881, %v10842, 0
      %v11132 = vsel %vm10881, %v10844, 0
      %11134 = vmatprep.subr.mxu0 0.0
      %11135 = vmatpush1.msra.mxu0 %v10861
      %11136 = vmatprep.subr.mxu0 0.0
      %11137 = vmatpush1.msra.mxu0 %v10862
      %11138 = vmatprep.subr.mxu0 0.0
      %11139 = vmatpush1.msra.mxu0 %v10863
      %11140 = vmatprep.subr.mxu0 0.0
      %11141 = vmatpush1.msra.mxu0 %v10864
      %11142 = vmatprep.subr.mxu0 0.0
      %11143 = vmatpush1.msra.mxu0 %v10865
      %11144 = vmatprep.subr.mxu0 0.0
      %11145 = vmatpush1.msra.mxu0 %v10866
      %11146 = vmatprep.subr.mxu0 0.0
      %11147 = vmatpush1.msra.mxu0 %v10867
      %11148 = vmatprep.subr.mxu0 0.0
      %11149 = vmatpush1.msra.mxu0 %v10868
      %11150 = vmatprep.subr.mxu0 0.0
      %11151 = vmatpush1.msra.mxu0 %v10869
      %11152 = vmatprep.subr.mxu0 0.0
      %11153 = vmatpush1.msra.mxu0 %v10870
      %11154 = vmatprep.subr.mxu0 0.0
      %11155 = vmatpush1.msra.mxu0 %v10871
      %11156 = vmatprep.subr.mxu0 0.0
      %11157 = vmatpush1.msra.mxu0 %v10872
      %11158 = vmatprep.subr.mxu0 0.0
      %11159 = vmatpush1.msra.mxu0 %v10873
      %11160 = vmatprep.subr.mxu0 0.0
      %11161 = vmatpush1.msra.mxu0 %v10874
      %11162 = vmatprep.subr.mxu0 0.0
      %11163 = vmatpush1.msra.mxu0 %v10875
      %11164 = vmatprep.subr.mxu0 0.0
      %11165 = vmatpush1.msra.mxu0 %v10876
      %11166 = vmatprep.subr.mxu0 0.0
      %11167 = vmatpush1.msra.mxu0 %v10877
      %11168 = vmatprep.subr.mxu0 0.0
      %11169 = vmatpush1.msra.mxu0 %v10878
      %11170 = vmatprep.subr.mxu0 0.0
      %11171 = vmatpush1.msra.mxu0 %v10879
      %11172 = vmatprep.subr.mxu0 0.0
      %11173 = vmatpush1.msra.mxu0 %v10889
      %11174 = vmatprep.subr.mxu0 0.0
      %11175 = vmatpush1.msra.mxu0 0.0
      %11176 = vmatprep.subr.mxu0 0.0
      %11177 = vmatpush1.msra.mxu0 0.0
      %11178 = vmatprep.subr.mxu0 0.0
      %11179 = vmatpush1.msra.mxu0 0.0
      %11180 = vmatprep.subr.mxu0 0.0
      %11181 = vmatpush1.msra.mxu0 0.0
      %11182 = vmatprep.subr.mxu0 0.0
      %11183 = vmatpush1.msra.mxu0 0.0
      %11184 = vmatprep.subr.mxu0 0.0
      %11185 = vmatpush1.msra.mxu0 0.0
      %11186 = vmatprep.subr.mxu0 0.0
      %11187 = vmatpush1.msra.mxu0 0.0
      %11188 = vmatprep.subr.mxu0 0.0
      %11189 = vmatpush1.msra.mxu0 0.0
      %11190 = vmatprep.subr.mxu0 0.0
      %11191 = vmatpush1.msra.mxu0 0.0
      %11192 = vmatprep.subr.mxu0 0.0
      %11193 = vmatpush1.msra.mxu0 0.0
      %11194 = vmatprep.subr.mxu0 0.0
      %11195 = vmatpush1.msra.mxu0 0.0
      %11196 = vmatprep.subr.mxu0 0.0
      %11197 = vmatpush1.msra.mxu0 0.0
      %11198 = vmatprep.mubr.f32.mxu0 %v11129
      %11199 = vmatmul.mubr.f32.gmra.mrb[0].mxu0 %v10841
      %v11200 = vpop.f32.mrb[0].mxu0
      %v11201 = vadd.f32 0.0, %v11200
      %v11202 = vpop.f32.mrb[0].mxu0
      %11203 = vmatprep.mubr.f32.mxu0 %v11132
      %11204 = vmatmul.mubr.f32.gmra.mrb[0].mxu0 %v10843
      %v11205 = vpop.f32.mrb[0].mxu0
      %v11206 = vadd.f32 0.0, %v11205
      %v11207 = vpop.f32.mrb[0].mxu0
      %11208 = vdwg.mxu0
      %v11210 = vsel %vm10881, %v10846, 0
      %v11213 = vsel %vm10881, %v10848, 0
      %11215 = vmatprep.subr.mxu0 0.0
      %11216 = vmatpush1.msra.mxu0 %v10861
      %11217 = vmatprep.subr.mxu0 0.0
      %11218 = vmatpush1.msra.mxu0 %v10862
      %11219 = vmatprep.subr.mxu0 0.0
      %11220 = vmatpush1.msra.mxu0 %v10863
      %11221 = vmatprep.subr.mxu0 0.0
      %11222 = vmatpush1.msra.mxu0 %v10864
      %11223 = vmatprep.subr.mxu0 0.0
      %11224 = vmatpush1.msra.mxu0 %v10865
      %11225 = vmatprep.subr.mxu0 0.0
      %11226 = vmatpush1.msra.mxu0 %v10866
      %11227 = vmatprep.subr.mxu0 0.0
      %11228 = vmatpush1.msra.mxu0 %v10867
      %11229 = vmatprep.subr.mxu0 0.0
      %11230 = vmatpush1.msra.mxu0 %v10868
      %11231 = vmatprep.subr.mxu0 0.0
      %11232 = vmatpush1.msra.mxu0 %v10869
      %11233 = vmatprep.subr.mxu0 0.0
      %11234 = vmatpush1.msra.mxu0 %v10870
      %11235 = vmatprep.subr.mxu0 0.0
      %11236 = vmatpush1.msra.mxu0 %v10871
      %11237 = vmatprep.subr.mxu0 0.0
      %11238 = vmatpush1.msra.mxu0 %v10872
      %11239 = vmatprep.subr.mxu0 0.0
      %11240 = vmatpush1.msra.mxu0 %v10873
      %11241 = vmatprep.subr.mxu0 0.0
      %11242 = vmatpush1.msra.mxu0 %v10874
      %11243 = vmatprep.subr.mxu0 0.0
      %11244 = vmatpush1.msra.mxu0 %v10875
      %11245 = vmatprep.subr.mxu0 0.0
      %11246 = vmatpush1.msra.mxu0 %v10876
      %11247 = vmatprep.subr.mxu0 0.0
      %11248 = vmatpush1.msra.mxu0 %v10877
      %11249 = vmatprep.subr.mxu0 0.0
      %11250 = vmatpush1.msra.mxu0 %v10878
      %11251 = vmatprep.subr.mxu0 0.0
      %11252 = vmatpush1.msra.mxu0 %v10879
      %11253 = vmatprep.subr.mxu0 0.0
      %11254 = vmatpush1.msra.mxu0 %v10889
      %11255 = vmatprep.subr.mxu0 0.0
      %11256 = vmatpush1.msra.mxu0 0.0
      %11257 = vmatprep.subr.mxu0 0.0
      %11258 = vmatpush1.msra.mxu0 0.0
      %11259 = vmatprep.subr.mxu0 0.0
      %11260 = vmatpush1.msra.mxu0 0.0
      %11261 = vmatprep.subr.mxu0 0.0
      %11262 = vmatpush1.msra.mxu0 0.0
      %11263 = vmatprep.subr.mxu0 0.0
      %11264 = vmatpush1.msra.mxu0 0.0
      %11265 = vmatprep.subr.mxu0 0.0
      %11266 = vmatpush1.msra.mxu0 0.0
      %11267 = vmatprep.subr.mxu0 0.0
      %11268 = vmatpush1.msra.mxu0 0.0
      %11269 = vmatprep.subr.mxu0 0.0
      %11270 = vmatpush1.msra.mxu0 0.0
      %11271 = vmatprep.subr.mxu0 0.0
      %11272 = vmatpush1.msra.mxu0 0.0
      %11273 = vmatprep.subr.mxu0 0.0
      %11274 = vmatpush1.msra.mxu0 0.0
      %11275 = vmatprep.subr.mxu0 0.0
      %11276 = vmatpush1.msra.mxu0 0.0
      %11277 = vmatprep.subr.mxu0 0.0
      %11278 = vmatpush1.msra.mxu0 0.0
      %11279 = vmatprep.mubr.f32.mxu0 %v11210
      %11280 = vmatmul.mubr.f32.gmra.mrb[0].mxu0 %v10845
      %v11281 = vpop.f32.mrb[0].mxu0
      %v11282 = vadd.f32 0.0, %v11281
      %v11283 = vpop.f32.mrb[0].mxu0
      %11284 = vmatprep.mubr.f32.mxu0 %v11213
      %11285 = vmatmul.mubr.f32.gmra.mrb[0].mxu0 %v10847
      %v11286 = vpop.f32.mrb[0].mxu0
      %v11287 = vadd.f32 0.0, %v11286
      %v11288 = vpop.f32.mrb[0].mxu0
      %11289 = vdwg.mxu0
      %v11291 = vsel %vm10881, %v10850, 0
      %v11294 = vsel %vm10881, %v10852, 0
      %11296 = vmatprep.subr.mxu0 0.0
      %11297 = vmatpush1.msra.mxu0 %v10861
      %11298 = vmatprep.subr.mxu0 0.0
      %11299 = vmatpush1.msra.mxu0 %v10862
      %11300 = vmatprep.subr.mxu0 0.0
      %11301 = vmatpush1.msra.mxu0 %v10863
      %11302 = vmatprep.subr.mxu0 0.0
      %11303 = vmatpush1.msra.mxu0 %v10864
      %11304 = vmatprep.subr.mxu0 0.0
      %11305 = vmatpush1.msra.mxu0 %v10865
      %11306 = vmatprep.subr.mxu0 0.0
      %11307 = vmatpush1.msra.mxu0 %v10866
      %11308 = vmatprep.subr.mxu0 0.0
      %11309 = vmatpush1.msra.mxu0 %v10867
      %11310 = vmatprep.subr.mxu0 0.0
      %11311 = vmatpush1.msra.mxu0 %v10868
      %11312 = vmatprep.subr.mxu0 0.0
      %11313 = vmatpush1.msra.mxu0 %v10869
      %11314 = vmatprep.subr.mxu0 0.0
      %11315 = vmatpush1.msra.mxu0 %v10870
      %11316 = vmatprep.subr.mxu0 0.0
      %11317 = vmatpush1.msra.mxu0 %v10871
      %11318 = vmatprep.subr.mxu0 0.0
      %11319 = vmatpush1.msra.mxu0 %v10872
      %11320 = vmatprep.subr.mxu0 0.0
      %11321 = vmatpush1.msra.mxu0 %v10873
      %11322 = vmatprep.subr.mxu0 0.0
      %11323 = vmatpush1.msra.mxu0 %v10874
      %11324 = vmatprep.subr.mxu0 0.0
      %11325 = vmatpush1.msra.mxu0 %v10875
      %11326 = vmatprep.subr.mxu0 0.0
      %11327 = vmatpush1.msra.mxu0 %v10876
      %11328 = vmatprep.subr.mxu0 0.0
      %11329 = vmatpush1.msra.mxu0 %v10877
      %11330 = vmatprep.subr.mxu0 0.0
      %11331 = vmatpush1.msra.mxu0 %v10878
      %11332 = vmatprep.subr.mxu0 0.0
      %11333 = vmatpush1.msra.mxu0 %v10879
      %11334 = vmatprep.subr.mxu0 0.0
      %11335 = vmatpush1.msra.mxu0 %v10889
      %11336 = vmatprep.subr.mxu0 0.0
      %11337 = vmatpush1.msra.mxu0 0.0
      %11338 = vmatprep.subr.mxu0 0.0
      %11339 = vmatpush1.msra.mxu0 0.0
      %11340 = vmatprep.subr.mxu0 0.0
      %11341 = vmatpush1.msra.mxu0 0.0
      %11342 = vmatprep.subr.mxu0 0.0
      %11343 = vmatpush1.msra.mxu0 0.0
      %11344 = vmatprep.subr.mxu0 0.0
      %11345 = vmatpush1.msra.mxu0 0.0
      %11346 = vmatprep.subr.mxu0 0.0
      %11347 = vmatpush1.msra.mxu0 0.0
      %11348 = vmatprep.subr.mxu0 0.0
      %11349 = vmatpush1.msra.mxu0 0.0
      %11350 = vmatprep.subr.mxu0 0.0
      %11351 = vmatpush1.msra.mxu0 0.0
      %11352 = vmatprep.subr.mxu0 0.0
      %11353 = vmatpush1.msra.mxu0 0.0
      %11354 = vmatprep.subr.mxu0 0.0
      %11355 = vmatpush1.msra.mxu0 0.0
      %11356 = vmatprep.subr.mxu0 0.0
      %11357 = vmatpush1.msra.mxu0 0.0
      %11358 = vmatprep.subr.mxu0 0.0
      %11359 = vmatpush1.msra.mxu0 0.0
      %11360 = vmatprep.mubr.f32.mxu0 %v11291
      %11361 = vmatmul.mubr.f32.gmra.mrb[0].mxu0 %v10849
      %v11362 = vpop.f32.mrb[0].mxu0
      %v11363 = vadd.f32 0.0, %v11362
      %v11364 = vpop.f32.mrb[0].mxu0
      %11365 = vmatprep.mubr.f32.mxu0 %v11294
      %11366 = vmatmul.mubr.f32.gmra.mrb[0].mxu0 %v10851
      %v11367 = vpop.f32.mrb[0].mxu0
      %v11368 = vadd.f32 0.0, %v11367
      %v11369 = vpop.f32.mrb[0].mxu0
      %11370 = vdwg.mxu0
      %v11372 = vsel %vm10881, %v10854, 0
      %v11375 = vsel %vm10881, %v10856, 0
      %11377 = vmatprep.subr.mxu0 0.0
      %11378 = vmatpush1.msra.mxu0 %v10861
      %11379 = vmatprep.subr.mxu0 0.0
      %11380 = vmatpush1.msra.mxu0 %v10862
      %11381 = vmatprep.subr.mxu0 0.0
      %11382 = vmatpush1.msra.mxu0 %v10863
      %11383 = vmatprep.subr.mxu0 0.0
      %11384 = vmatpush1.msra.mxu0 %v10864
      %11385 = vmatprep.subr.mxu0 0.0
      %11386 = vmatpush1.msra.mxu0 %v10865
      %11387 = vmatprep.subr.mxu0 0.0
      %11388 = vmatpush1.msra.mxu0 %v10866
      %11389 = vmatprep.subr.mxu0 0.0
      %11390 = vmatpush1.msra.mxu0 %v10867
      %11391 = vmatprep.subr.mxu0 0.0
      %11392 = vmatpush1.msra.mxu0 %v10868
      %11393 = vmatprep.subr.mxu0 0.0
      %11394 = vmatpush1.msra.mxu0 %v10869
      %11395 = vmatprep.subr.mxu0 0.0
      %11396 = vmatpush1.msra.mxu0 %v10870
      %11397 = vmatprep.subr.mxu0 0.0
      %11398 = vmatpush1.msra.mxu0 %v10871
      %11399 = vmatprep.subr.mxu0 0.0
      %11400 = vmatpush1.msra.mxu0 %v10872
      %11401 = vmatprep.subr.mxu0 0.0
      %11402 = vmatpush1.msra.mxu0 %v10873
      %11403 = vmatprep.subr.mxu0 0.0
      %11404 = vmatpush1.msra.mxu0 %v10874
      %11405 = vmatprep.subr.mxu0 0.0
      %11406 = vmatpush1.msra.mxu0 %v10875
      %11407 = vmatprep.subr.mxu0 0.0
      %11408 = vmatpush1.msra.mxu0 %v10876
      %11409 = vmatprep.subr.mxu0 0.0
      %11410 = vmatpush1.msra.mxu0 %v10877
      %11411 = vmatprep.subr.mxu0 0.0
      %11412 = vmatpush1.msra.mxu0 %v10878
      %11413 = vmatprep.subr.mxu0 0.0
      %11414 = vmatpush1.msra.mxu0 %v10879
      %11415 = vmatprep.subr.mxu0 0.0
      %11416 = vmatpush1.msra.mxu0 %v10889
      %11417 = vmatprep.subr.mxu0 0.0
      %11418 = vmatpush1.msra.mxu0 0.0
      %11419 = vmatprep.subr.mxu0 0.0
      %11420 = vmatpush1.msra.mxu0 0.0
      %11421 = vmatprep.subr.mxu0 0.0
      %11422 = vmatpush1.msra.mxu0 0.0
      %11423 = vmatprep.subr.mxu0 0.0
      %11424 = vmatpush1.msra.mxu0 0.0
      %11425 = vmatprep.subr.mxu0 0.0
      %11426 = vmatpush1.msra.mxu0 0.0
      %11427 = vmatprep.subr.mxu0 0.0
      %11428 = vmatpush1.msra.mxu0 0.0
      %11429 = vmatprep.subr.mxu0 0.0
      %11430 = vmatpush1.msra.mxu0 0.0
      %11431 = vmatprep.subr.mxu0 0.0
      %11432 = vmatpush1.msra.mxu0 0.0
      %11433 = vmatprep.subr.mxu0 0.0
      %11434 = vmatpush1.msra.mxu0 0.0
      %11435 = vmatprep.subr.mxu0 0.0
      %11436 = vmatpush1.msra.mxu0 0.0
      %11437 = vmatprep.subr.mxu0 0.0
      %11438 = vmatpush1.msra.mxu0 0.0
      %11439 = vmatprep.subr.mxu0 0.0
      %11440 = vmatpush1.msra.mxu0 0.0
      %11441 = vmatprep.mubr.f32.mxu0 %v11372
      %11442 = vmatmul.mubr.f32.gmra.mrb[0].mxu0 %v10853
      %v11443 = vpop.f32.mrb[0].mxu0
      %v11444 = vadd.f32 0.0, %v11443
      %v11445 = vpop.f32.mrb[0].mxu0
      %11446 = vmatprep.mubr.f32.mxu0 %v11375
      %11447 = vmatmul.mubr.f32.gmra.mrb[0].mxu0 %v10855
      %v11448 = vpop.f32.mrb[0].mxu0
      %v11449 = vadd.f32 0.0, %v11448
      %v11450 = vpop.f32.mrb[0].mxu0
      %11451 = vdwg.mxu0
      %v11453 = vsel %vm10881, %v10858, 0
      %v11456 = vsel %vm10881, %v10860, 0
      %11458 = vmatprep.subr.mxu0 0.0
      %11459 = vmatpush1.msra.mxu0 %v10861
      %11460 = vmatprep.subr.mxu0 0.0
      %11461 = vmatpush1.msra.mxu0 %v10862
      %11462 = vmatprep.subr.mxu0 0.0
      %11463 = vmatpush1.msra.mxu0 %v10863
      %11464 = vmatprep.subr.mxu0 0.0
      %11465 = vmatpush1.msra.mxu0 %v10864
      %11466 = vmatprep.subr.mxu0 0.0
      %11467 = vmatpush1.msra.mxu0 %v10865
      %11468 = vmatprep.subr.mxu0 0.0
      %11469 = vmatpush1.msra.mxu0 %v10866
      %11470 = vmatprep.subr.mxu0 0.0
      %11471 = vmatpush1.msra.mxu0 %v10867
      %11472 = vmatprep.subr.mxu0 0.0
      %11473 = vmatpush1.msra.mxu0 %v10868
      %11474 = vmatprep.subr.mxu0 0.0
      %11475 = vmatpush1.msra.mxu0 %v10869
      %11476 = vmatprep.subr.mxu0 0.0
      %11477 = vmatpush1.msra.mxu0 %v10870
      %11478 = vmatprep.subr.mxu0 0.0
      %11479 = vmatpush1.msra.mxu0 %v10871
      %11480 = vmatprep.subr.mxu0 0.0
      %11481 = vmatpush1.msra.mxu0 %v10872
      %11482 = vmatprep.subr.mxu0 0.0
      %11483 = vmatpush1.msra.mxu0 %v10873
      %11484 = vmatprep.subr.mxu0 0.0
      %11485 = vmatpush1.msra.mxu0 %v10874
      %11486 = vmatprep.subr.mxu0 0.0
      %11487 = vmatpush1.msra.mxu0 %v10875
      %11488 = vmatprep.subr.mxu0 0.0
      %11489 = vmatpush1.msra.mxu0 %v10876
      %11490 = vmatprep.subr.mxu0 0.0
      %11491 = vmatpush1.msra.mxu0 %v10877
      %11492 = vmatprep.subr.mxu0 0.0
      %11493 = vmatpush1.msra.mxu0 %v10878
      %11494 = vmatprep.subr.mxu0 0.0
      %11495 = vmatpush1.msra.mxu0 %v10879
      %11496 = vmatprep.subr.mxu0 0.0
      %11497 = vmatpush1.msra.mxu0 %v10889
      %11498 = vmatprep.subr.mxu0 0.0
      %11499 = vmatpush1.msra.mxu0 0.0
      %11500 = vmatprep.subr.mxu0 0.0
      %11501 = vmatpush1.msra.mxu0 0.0
      %11502 = vmatprep.subr.mxu0 0.0
      %11503 = vmatpush1.msra.mxu0 0.0
      %11504 = vmatprep.subr.mxu0 0.0
      %11505 = vmatpush1.msra.mxu0 0.0
      %11506 = vmatprep.subr.mxu0 0.0
      %11507 = vmatpush1.msra.mxu0 0.0
      %11508 = vmatprep.subr.mxu0 0.0
      %11509 = vmatpush1.msra.mxu0 0.0
      %11510 = vmatprep.subr.mxu0 0.0
      %11511 = vmatpush1.msra.mxu0 0.0
      %11512 = vmatprep.subr.mxu0 0.0
      %11513 = vmatpush1.msra.mxu0 0.0
      %11514 = vmatprep.subr.mxu0 0.0
      %11515 = vmatpush1.msra.mxu0 0.0
      %11516 = vmatprep.subr.mxu0 0.0
      %11517 = vmatpush1.msra.mxu0 0.0
      %11518 = vmatprep.subr.mxu0 0.0
      %11519 = vmatpush1.msra.mxu0 0.0
      %11520 = vmatprep.subr.mxu0 0.0
      %11521 = vmatpush1.msra.mxu0 0.0
      %11522 = vmatprep.mubr.f32.mxu0 %v11453
      %11523 = vmatmul.mubr.f32.gmra.mrb[0].mxu0 %v10857
      %v11524 = vpop.f32.mrb[0].mxu0
      %v11525 = vadd.f32 0.0, %v11524
      %v11526 = vpop.f32.mrb[0].mxu0
      %11527 = vmatprep.mubr.f32.mxu0 %v11456
      %11528 = vmatmul.mubr.f32.gmra.mrb[0].mxu0 %v10859
      %v11529 = vpop.f32.mrb[0].mxu0
      %v11530 = vadd.f32 0.0, %v11529
      %v11531 = vpop.f32.mrb[0].mxu0
      %11532 = vdwg.mxu0
      %v11549 = vrot.slane %v10958, 1
      %v11550 = vrot.slane %v10963, 1
      %v11551 = vsel %vm524, %v11549, %v11550
      %v11552 = vrot.slane %v11039, 1
      %v11553 = vrot.slane %v11044, 1
      %v11554 = vsel %vm524, %v11552, %v11553
      %v11555 = vrot.slane %v11120, 1
      %v11556 = vrot.slane %v11125, 1
      %v11557 = vsel %vm524, %v11555, %v11556
      %v11558 = vrot.slane %v11201, 1
      %v11559 = vrot.slane %v11206, 1
      %v11560 = vsel %vm524, %v11558, %v11559
      %v11561 = vrot.slane %v11282, 1
      %v11562 = vrot.slane %v11287, 1
      %v11563 = vsel %vm524, %v11561, %v11562
      %v11564 = vrot.slane %v11363, 1
      %v11565 = vrot.slane %v11368, 1
      %v11566 = vsel %vm524, %v11564, %v11565
      %v11567 = vrot.slane %v11444, 1
      %v11568 = vrot.slane %v11449, 1
      %v11569 = vsel %vm524, %v11567, %v11568
      %v11570 = vrot.slane %v11525, 1
      %v11571 = vrot.slane %v11530, 1
      %v11572 = vsel %vm524, %v11570, %v11571
      %v11589 = vmax.f32 %v10958, %v11551
      %v11590 = vmax.f32 %v10963, %v11550
      %v11591 = vmax.f32 %v11039, %v11554
      %v11592 = vmax.f32 %v11044, %v11553
      %v11593 = vmax.f32 %v11120, %v11557
      %v11594 = vmax.f32 %v11125, %v11556
      %v11595 = vmax.f32 %v11201, %v11560
      %v11596 = vmax.f32 %v11206, %v11559
      %v11597 = vmax.f32 %v11282, %v11563
      %v11598 = vmax.f32 %v11287, %v11562
      %v11599 = vmax.f32 %v11363, %v11566
      %v11600 = vmax.f32 %v11368, %v11565
      %v11601 = vmax.f32 %v11444, %v11569
      %v11602 = vmax.f32 %v11449, %v11568
      %v11603 = vmax.f32 %v11525, %v11572
      %v11604 = vmax.f32 %v11530, %v11571
      %v11613 = vrot.slane %v11589, 2
      %v11614 = vrot.slane %v11591, 2
      %v11615 = vrot.slane %v11593, 2
      %v11616 = vrot.slane %v11595, 2
      %v11617 = vrot.slane %v11597, 2
      %v11618 = vrot.slane %v11599, 2
      %v11619 = vrot.slane %v11601, 2
      %v11620 = vrot.slane %v11603, 2
      %11621 = vrot.lane.b32.xlu0 %v11613, 80
      %v11622 = vpop.permute.xlu0 %11621
      %11623 = vrot.lane.b32.xlu0 %v11614, 80
      %v11624 = vpop.permute.xlu0 %11623
      %11625 = vrot.lane.b32.xlu0 %v11615, 80
      %v11626 = vpop.permute.xlu0 %11625
      %11627 = vrot.lane.b32.xlu0 %v11616, 80
      %v11628 = vpop.permute.xlu0 %11627
      %11629 = vrot.lane.b32.xlu0 %v11617, 80
      %v11630 = vpop.permute.xlu0 %11629
      %11631 = vrot.lane.b32.xlu0 %v11618, 80
      %v11632 = vpop.permute.xlu0 %11631
      %11633 = vrot.lane.b32.xlu0 %v11619, 80
      %v11634 = vpop.permute.xlu0 %11633
      %11635 = vrot.lane.b32.xlu0 %v11620, 80
      %v11636 = vpop.permute.xlu0 %11635
      %v11645 = vrot.slane %v11589, 4
      %v11646 = vrot.slane %v11591, 4
      %v11647 = vrot.slane %v11593, 4
      %v11648 = vrot.slane %v11595, 4
      %v11649 = vrot.slane %v11597, 4
      %v11650 = vrot.slane %v11599, 4
      %v11651 = vrot.slane %v11601, 4
      %v11652 = vrot.slane %v11603, 4
      %11653 = vrot.lane.b32.xlu0 %v11645, 32
      %v11654 = vpop.permute.xlu0 %11653
      %11655 = vrot.lane.b32.xlu0 %v11646, 32
      %v11656 = vpop.permute.xlu0 %11655
      %11657 = vrot.lane.b32.xlu0 %v11647, 32
      %v11658 = vpop.permute.xlu0 %11657
      %11659 = vrot.lane.b32.xlu0 %v11648, 32
      %v11660 = vpop.permute.xlu0 %11659
      %11661 = vrot.lane.b32.xlu0 %v11649, 32
      %v11662 = vpop.permute.xlu0 %11661
      %11663 = vrot.lane.b32.xlu0 %v11650, 32
      %v11664 = vpop.permute.xlu0 %11663
      %11665 = vrot.lane.b32.xlu0 %v11651, 32
      %v11666 = vpop.permute.xlu0 %11665
      %11667 = vrot.lane.b32.xlu0 %v11652, 32
      %v11668 = vpop.permute.xlu0 %11667
      %v11677 = vrot.slane %v11589, 6
      %v11678 = vrot.slane %v11591, 6
      %v11679 = vrot.slane %v11593, 6
      %v11680 = vrot.slane %v11595, 6
      %v11681 = vrot.slane %v11597, 6
      %v11682 = vrot.slane %v11599, 6
      %v11683 = vrot.slane %v11601, 6
      %v11684 = vrot.slane %v11603, 6
      %11685 = vrot.lane.b32.xlu0 %v11677, 112
      %v11686 = vpop.permute.xlu0 %11685
      %11687 = vrot.lane.b32.xlu0 %v11678, 112
      %v11688 = vpop.permute.xlu0 %11687
      %11689 = vrot.lane.b32.xlu0 %v11679, 112
      %v11690 = vpop.permute.xlu0 %11689
      %11691 = vrot.lane.b32.xlu0 %v11680, 112
      %v11692 = vpop.permute.xlu0 %11691
      %11693 = vrot.lane.b32.xlu0 %v11681, 112
      %v11694 = vpop.permute.xlu0 %11693
      %11695 = vrot.lane.b32.xlu0 %v11682, 112
      %v11696 = vpop.permute.xlu0 %11695
      %11697 = vrot.lane.b32.xlu0 %v11683, 112
      %v11698 = vpop.permute.xlu0 %11697
      %11699 = vrot.lane.b32.xlu0 %v11684, 112
      %v11700 = vpop.permute.xlu0 %11699
      %11717 = vrot.lane.b32.xlu0 %v11590, 64
      %v11718 = vpop.permute.xlu0 %11717
      %11719 = vrot.lane.b32.xlu0 %v11592, 64
      %v11720 = vpop.permute.xlu0 %11719
      %11721 = vrot.lane.b32.xlu0 %v11594, 64
      %v11722 = vpop.permute.xlu0 %11721
      %11723 = vrot.lane.b32.xlu0 %v11596, 64
      %v11724 = vpop.permute.xlu0 %11723
      %11725 = vrot.lane.b32.xlu0 %v11598, 64
      %v11726 = vpop.permute.xlu0 %11725
      %11727 = vrot.lane.b32.xlu0 %v11600, 64
      %v11728 = vpop.permute.xlu0 %11727
      %11729 = vrot.lane.b32.xlu0 %v11602, 64
      %v11730 = vpop.permute.xlu0 %11729
      %11731 = vrot.lane.b32.xlu0 %v11604, 64
      %v11732 = vpop.permute.xlu0 %11731
      %vm11741 = vcmask 654336
      %v11742 = vsel %vm11741, %v11589, %v11622
      %v11743 = vsel %vm11741, %v11591, %v11624
      %v11744 = vsel %vm11741, %v11593, %v11626
      %v11745 = vsel %vm11741, %v11595, %v11628
      %v11746 = vsel %vm11741, %v11597, %v11630
      %v11747 = vsel %vm11741, %v11599, %v11632
      %v11748 = vsel %vm11741, %v11601, %v11634
      %v11749 = vsel %vm11741, %v11603, %v11636
      %v11750 = vsel %vm532, %v11622, %v11654
      %v11751 = vsel %vm532, %v11624, %v11656
      %v11752 = vsel %vm532, %v11626, %v11658
      %v11753 = vsel %vm532, %v11628, %v11660
      %v11754 = vsel %vm532, %v11630, %v11662
      %v11755 = vsel %vm532, %v11632, %v11664
      %v11756 = vsel %vm532, %v11634, %v11666
      %v11757 = vsel %vm532, %v11636, %v11668
      %vm11758 = vcmask 916480
      %v11759 = vsel %vm11758, %v11750, %v11686
      %v11760 = vsel %vm11758, %v11751, %v11688
      %v11761 = vsel %vm11758, %v11752, %v11690
      %v11762 = vsel %vm11758, %v11753, %v11692
      %v11763 = vsel %vm11758, %v11754, %v11694
      %v11764 = vsel %vm11758, %v11755, %v11696
      %v11765 = vsel %vm11758, %v11756, %v11698
      %v11766 = vsel %vm11758, %v11757, %v11700
      %vm11767 = vcmask 523264
      %v11768 = vsel %vm11767, %v11686, %v11718
      %v11769 = vsel %vm11767, %v11688, %v11720
      %v11770 = vsel %vm11767, %v11690, %v11722
      %v11771 = vsel %vm11767, %v11692, %v11724
      %v11772 = vsel %vm11767, %v11694, %v11726
      %v11773 = vsel %vm11767, %v11696, %v11728
      %v11774 = vsel %vm11767, %v11698, %v11730
      %v11775 = vsel %vm11767, %v11700, %v11732
      %v11776 = vld [vmem:[%s8] sm:$0xff]
      %v11777 = vld [vmem:[%s8 + $0x8] sm:$0xff]
      %v11778 = vld [vmem:[%s8 + $0x10] sm:$0xff]
      %v11779 = vld [vmem:[%s8 + $0x18] sm:$0xff]
      %v11780 = vld [vmem:[%s8 + $0x20] sm:$0xff]
      %v11781 = vld [vmem:[%s8 + $0x28] sm:$0xff]
      %v11782 = vld [vmem:[%s8 + $0x30] sm:$0xff]
      %v11783 = vld [vmem:[%s8 + $0x38] sm:$0xff]
      %v11784 = vld [vmem:[%s8 + $0x40] sm:$0xff]
      %v11785 = vld [vmem:[%s8 + $0x48] sm:$0xff]
      %v11786 = vld [vmem:[%s8 + $0x50] sm:$0xff]
      %v11787 = vld [vmem:[%s8 + $0x58] sm:$0xff]
      %v11788 = vld [vmem:[%s8 + $0x60] sm:$0xff]
      %v11789 = vld [vmem:[%s8 + $0x68] sm:$0xff]
      %v11790 = vld [vmem:[%s8 + $0x70] sm:$0xff]
      %v11791 = vld [vmem:[%s8 + $0x78] sm:$0xff]
      %v11792 = vld [vmem:[%s8 + $0x80] sm:$0xff]
      %v11793 = vld [vmem:[%s8 + $0x88] sm:$0xff]
      %v11794 = vld [vmem:[%s8 + $0x90] sm:$0xff]
      %v11795 = vld [vmem:[%s8 + $0x98] sm:$0xff]
      %v11796 = vld [vmem:[%s8 + $0xa0] sm:$0xff]
      %v11797 = vld [vmem:[%s8 + $0xa8] sm:$0xff]
      %v11798 = vld [vmem:[%s8 + $0xb0] sm:$0xff]
      %v11799 = vld [vmem:[%s8 + $0xb8] sm:$0xff]
      %v11800 = vld [vmem:[%s8 + $0xc0] sm:$0xff]
      %v11801 = vld [vmem:[%s8 + $0xc8] sm:$0xff]
      %v11802 = vld [vmem:[%s8 + $0xd0] sm:$0xff]
      %v11803 = vld [vmem:[%s8 + $0xd8] sm:$0xff]
      %v11804 = vld [vmem:[%s8 + $0xe0] sm:$0xff]
      %v11805 = vld [vmem:[%s8 + $0xe8] sm:$0xff]
      %v11806 = vld [vmem:[%s8 + $0xf0] sm:$0xff]
      %v11807 = vld [vmem:[%s8 + $0xf8] sm:$0xff]
      %v11808 = vld [vmem:[%s8 + $0x100] sm:$0xff]
      %v11809 = vld [vmem:[%s8 + $0x108] sm:$0xff]
      %v11810 = vld [vmem:[%s8 + $0x110] sm:$0xff]
      %v11811 = vld [vmem:[%s8 + $0x118] sm:$0xff]
      %v11812 = vld [vmem:[%s8 + $0x120] sm:$0xff]
      %v11813 = vld [vmem:[%s8 + $0x128] sm:$0xff]
      %v11814 = vld [vmem:[%s8 + $0x130] sm:$0xff]
      %v11815 = vld [vmem:[%s8 + $0x138] sm:$0xff]
      %v11816 = vld [vmem:[%s8 + $0x140] sm:$0xff]
      %v11817 = vld [vmem:[%s8 + $0x148] sm:$0xff]
      %v11818 = vld [vmem:[%s8 + $0x150] sm:$0xff]
      %v11819 = vld [vmem:[%s8 + $0x158] sm:$0xff]
      %v11820 = vld [vmem:[%s8 + $0x160] sm:$0xff]
      %v11821 = vld [vmem:[%s8 + $0x168] sm:$0xff]
      %v11822 = vld [vmem:[%s8 + $0x170] sm:$0xff]
      %v11823 = vld [vmem:[%s8 + $0x178] sm:$0xff]
      %v11824 = vld [vmem:[%s8 + $0x180] sm:$0xff]
      %v11825 = vld [vmem:[%s8 + $0x188] sm:$0xff]
      %v11826 = vld [vmem:[%s9] sm:$0x1]
      %v11828 = vlaneseq
      %v11829 = vshrl.u32 %v11828, 7
      %v11830 = vsub.s32 0, %v11829
      %v11831 = vrot.slane %v11826, %v11830
      %v11857 = vrot.slane %v11743, 7
      %vm11858 = vcmask 1041409
      %v11859 = vsel %vm11858, %v11857, %v11742
      %v11860 = vrot.slane %v11744, 6
      %vm11861 = vcmask 1042434
      %v11862 = vsel %vm11861, %v11860, %v11859
      %v11863 = vrot.slane %v11745, 5
      %vm11864 = vcmask 1043459
      %v11865 = vsel %vm11864, %v11863, %v11862
      %v11866 = vrot.slane %v11746, 4
      %vm11867 = vcmask 1044484
      %v11868 = vsel %vm11867, %v11866, %v11865
      %v11869 = vrot.slane %v11747, 3
      %vm11870 = vcmask 1045509
      %v11871 = vsel %vm11870, %v11869, %v11868
      %v11872 = vrot.slane %v11748, 2
      %vm11873 = vcmask 1046534
      %v11874 = vsel %vm11873, %v11872, %v11871
      %v11875 = vrot.slane %v11749, 1
      %vm11876 = vcmask 1047559
      %v11877 = vsel %vm11876, %v11875, %v11874
      %v11878 = vrot.slane %v11760, 7
      %v11879 = vsel %vm11858, %v11878, %v11759
      %v11880 = vrot.slane %v11761, 6
      %v11881 = vsel %vm11861, %v11880, %v11879
      %v11882 = vrot.slane %v11762, 5
      %v11883 = vsel %vm11864, %v11882, %v11881
      %v11884 = vrot.slane %v11763, 4
      %v11885 = vsel %vm11867, %v11884, %v11883
      %v11886 = vrot.slane %v11764, 3
      %v11887 = vsel %vm11870, %v11886, %v11885
      %v11888 = vrot.slane %v11765, 2
      %v11889 = vsel %vm11873, %v11888, %v11887
      %v11890 = vrot.slane %v11766, 1
      %v11891 = vsel %vm11876, %v11890, %v11889
      %v11892 = vrot.slane %v11769, 7
      %v11893 = vsel %vm11858, %v11892, %v11768
      %v11894 = vrot.slane %v11770, 6
      %v11895 = vsel %vm11861, %v11894, %v11893
      %v11896 = vrot.slane %v11771, 5
      %v11897 = vsel %vm11864, %v11896, %v11895
      %v11898 = vrot.slane %v11772, 4
      %v11899 = vsel %vm11867, %v11898, %v11897
      %v11900 = vrot.slane %v11773, 3
      %v11901 = vsel %vm11870, %v11900, %v11899
      %v11902 = vrot.slane %v11774, 2
      %v11903 = vsel %vm11873, %v11902, %v11901
      %v11904 = vrot.slane %v11775, 1
      %v11905 = vsel %vm11876, %v11904, %v11903
      %v11906 = vrot.slane %v11720, 7
      %v11907 = vsel %vm11858, %v11906, %v11718
      %v11908 = vrot.slane %v11722, 6
      %v11909 = vsel %vm11861, %v11908, %v11907
      %v11910 = vrot.slane %v11724, 5
      %v11911 = vsel %vm11864, %v11910, %v11909
      %v11912 = vrot.slane %v11726, 4
      %v11913 = vsel %vm11867, %v11912, %v11911
      %v11914 = vrot.slane %v11728, 3
      %v11915 = vsel %vm11870, %v11914, %v11913
      %v11916 = vrot.slane %v11730, 2
      %v11917 = vsel %vm11873, %v11916, %v11915
      %v11918 = vrot.slane %v11732, 1
      %v11919 = vsel %vm11876, %v11918, %v11917
      %vm11923 = vcmask 130048
      %v11924 = vsel %vm11923, %v11919, 0
      %11926 = vmatprep.subr.mxu0 0.0
      %11927 = vmatpush1.msra.mxu0 %v11776
      %11928 = vmatprep.subr.mxu0 0.0
      %11929 = vmatpush1.msra.mxu0 %v11777
      %11930 = vmatprep.subr.mxu0 0.0
      %11931 = vmatpush1.msra.mxu0 %v11778
      %11932 = vmatprep.subr.mxu0 0.0
      %11933 = vmatpush1.msra.mxu0 %v11779
      %11934 = vmatprep.subr.mxu0 0.0
      %11935 = vmatpush1.msra.mxu0 %v11780
      %11936 = vmatprep.subr.mxu0 0.0
      %11937 = vmatpush1.msra.mxu0 %v11781
      %11938 = vmatprep.subr.mxu0 0.0
      %11939 = vmatpush1.msra.mxu0 %v11782
      %11940 = vmatprep.subr.mxu0 0.0
      %11941 = vmatpush1.msra.mxu0 %v11783
      %11942 = vmatprep.subr.mxu0 0.0
      %11943 = vmatpush1.msra.mxu0 %v11784
      %11944 = vmatprep.subr.mxu0 0.0
      %11945 = vmatpush1.msra.mxu0 %v11785
      %11946 = vmatprep.subr.mxu0 0.0
      %11947 = vmatpush1.msra.mxu0 %v11786
      %11948 = vmatprep.subr.mxu0 0.0
      %11949 = vmatpush1.msra.mxu0 %v11787
      %11950 = vmatprep.subr.mxu0 0.0
      %11951 = vmatpush1.msra.mxu0 %v11788
      %11952 = vmatprep.subr.mxu0 0.0
      %11953 = vmatpush1.msra.mxu0 %v11789
      %11954 = vmatprep.subr.mxu0 0.0
      %11955 = vmatpush1.msra.mxu0 %v11790
      %11956 = vmatprep.subr.mxu0 0.0
      %11957 = vmatpush1.msra.mxu0 %v11791
      %11958 = vmatprep.subr.mxu0 0.0
      %11959 = vmatpush1.msra.mxu0 %v11792
      %11960 = vmatprep.subr.mxu0 0.0
      %11961 = vmatpush1.msra.mxu0 %v11793
      %11962 = vmatprep.subr.mxu0 0.0
      %11963 = vmatpush1.msra.mxu0 %v11794
      %11964 = vmatprep.subr.mxu0 0.0
      %11965 = vmatpush1.msra.mxu0 %v11795
      %11966 = vmatprep.subr.mxu0 0.0
      %11967 = vmatpush1.msra.mxu0 %v11796
      %11968 = vmatprep.subr.mxu0 0.0
      %11969 = vmatpush1.msra.mxu0 %v11797
      %11970 = vmatprep.subr.mxu0 0.0
      %11971 = vmatpush1.msra.mxu0 %v11798
      %11972 = vmatprep.subr.mxu0 0.0
      %11973 = vmatpush1.msra.mxu0 %v11799
      %11974 = vmatprep.subr.mxu0 0.0
      %11975 = vmatpush1.msra.mxu0 %v11800
      %11976 = vmatprep.subr.mxu0 0.0
      %11977 = vmatpush1.msra.mxu0 %v11801
      %11978 = vmatprep.subr.mxu0 0.0
      %11979 = vmatpush1.msra.mxu0 %v11802
      %11980 = vmatprep.subr.mxu0 0.0
      %11981 = vmatpush1.msra.mxu0 %v11803
      %11982 = vmatprep.subr.mxu0 0.0
      %11983 = vmatpush1.msra.mxu0 %v11804
      %11984 = vmatprep.subr.mxu0 0.0
      %11985 = vmatpush1.msra.mxu0 %v11805
      %11986 = vmatprep.subr.mxu0 0.0
      %11987 = vmatpush1.msra.mxu0 %v11806
      %11988 = vmatprep.subr.mxu0 0.0
      %11989 = vmatpush1.msra.mxu0 %v11807
      %11990 = vmatprep.mubr.f32.mxu0 %v11891
      %11991 = vmatmul.mubr.f32.gmra.mrb[0].mxu0 %v11877
      %v11992 = vpop.f32.mrb[0].mxu0
      %v11993 = vadd.f32 %v11831, %v11992
      %v11994 = vpop.f32.mrb[0].mxu0
      %11995 = vdwg.mxu0
      %11996 = vmatprep.subr.mxu0 0.0
      %11997 = vmatpush1.msra.mxu0 %v11808
      %11998 = vmatprep.subr.mxu0 0.0
      %11999 = vmatpush1.msra.mxu0 %v11809
      %12000 = vmatprep.subr.mxu0 0.0
      %12001 = vmatpush1.msra.mxu0 %v11810
      %12002 = vmatprep.subr.mxu0 0.0
      %12003 = vmatpush1.msra.mxu0 %v11811
      %12004 = vmatprep.subr.mxu0 0.0
      %12005 = vmatpush1.msra.mxu0 %v11812
      %12006 = vmatprep.subr.mxu0 0.0
      %12007 = vmatpush1.msra.mxu0 %v11813
      %12008 = vmatprep.subr.mxu0 0.0
      %12009 = vmatpush1.msra.mxu0 %v11814
      %12010 = vmatprep.subr.mxu0 0.0
      %12011 = vmatpush1.msra.mxu0 %v11815
      %12012 = vmatprep.subr.mxu0 0.0
      %12013 = vmatpush1.msra.mxu0 %v11816
      %12014 = vmatprep.subr.mxu0 0.0
      %12015 = vmatpush1.msra.mxu0 %v11817
      %12016 = vmatprep.subr.mxu0 0.0
      %12017 = vmatpush1.msra.mxu0 %v11818
      %12018 = vmatprep.subr.mxu0 0.0
      %12019 = vmatpush1.msra.mxu0 %v11819
      %12020 = vmatprep.subr.mxu0 0.0
      %12021 = vmatpush1.msra.mxu0 %v11820
      %12022 = vmatprep.subr.mxu0 0.0
      %12023 = vmatpush1.msra.mxu0 %v11821
      %12024 = vmatprep.subr.mxu0 0.0
      %12025 = vmatpush1.msra.mxu0 %v11822
      %12026 = vmatprep.subr.mxu0 0.0
      %12027 = vmatpush1.msra.mxu0 %v11823
      %12028 = vmatprep.subr.mxu0 0.0
      %12029 = vmatpush1.msra.mxu0 %v11824
      %12030 = vmatprep.subr.mxu0 0.0
      %12031 = vmatpush1.msra.mxu0 %v11825
      %12032 = vmatprep.subr.mxu0 0.0
      %12033 = vmatpush1.msra.mxu0 0.0
      %12034 = vmatprep.subr.mxu0 0.0
      %12035 = vmatpush1.msra.mxu0 0.0
      %12036 = vmatprep.subr.mxu0 0.0
      %12037 = vmatpush1.msra.mxu0 0.0
      %12038 = vmatprep.subr.mxu0 0.0
      %12039 = vmatpush1.msra.mxu0 0.0
      %12040 = vmatprep.subr.mxu0 0.0
      %12041 = vmatpush1.msra.mxu0 0.0
      %12042 = vmatprep.subr.mxu0 0.0
      %12043 = vmatpush1.msra.mxu0 0.0
      %12044 = vmatprep.subr.mxu0 0.0
      %12045 = vmatpush1.msra.mxu0 0.0
      %12046 = vmatprep.subr.mxu0 0.0
      %12047 = vmatpush1.msra.mxu0 0.0
      %12048 = vmatprep.subr.mxu0 0.0
      %12049 = vmatpush1.msra.mxu0 0.0
      %12050 = vmatprep.subr.mxu0 0.0
      %12051 = vmatpush1.msra.mxu0 0.0
      %12052 = vmatprep.subr.mxu0 0.0
      %12053 = vmatpush1.msra.mxu0 0.0
      %12054 = vmatprep.subr.mxu0 0.0
      %12055 = vmatpush1.msra.mxu0 0.0
      %12056 = vmatprep.subr.mxu0 0.0
      %12057 = vmatpush1.msra.mxu0 0.0
      %12058 = vmatprep.subr.mxu0 0.0
      %12059 = vmatpush1.msra.mxu0 0.0
      %12060 = vmatprep.mubr.f32.mxu0 %v11924
      %12061 = vmatmul.mubr.f32.gmra.mrb[0].mxu0 %v11905
      %v12062 = vpop.f32.mrb[0].mxu0
      %v12063 = vadd.f32 %v11993, %v12062
      %v12064 = vpop.f32.mrb[0].mxu0
      %12065 = vdwg.mxu0
      %v12066 = vmax.f32 %v12063, 0.0
      %v12067 = vld [vmem:[%s10] sm:$0xff]
      %v12068 = vld [vmem:[%s10 + $0x8] sm:$0xff]
      %v12069 = vld [vmem:[%s10 + $0x10] sm:$0xff]
      %v12070 = vld [vmem:[%s10 + $0x18] sm:$0xff]
      %v12071 = vld [vmem:[%s10 + $0x20] sm:$0xff]
      %v12072 = vld [vmem:[%s10 + $0x28] sm:$0xff]
      %v12073 = vld [vmem:[%s10 + $0x30] sm:$0xff]
      %v12074 = vld [vmem:[%s10 + $0x38] sm:$0xff]
      %v12075 = vld [vmem:[%s10 + $0x40] sm:$0xff]
      %v12076 = vld [vmem:[%s10 + $0x48] sm:$0xff]
      %v12077 = vld [vmem:[%s10 + $0x50] sm:$0xff]
      %v12078 = vld [vmem:[%s10 + $0x58] sm:$0xff]
      %v12079 = vld [vmem:[%s10 + $0x60] sm:$0xff]
      %v12080 = vld [vmem:[%s10 + $0x68] sm:$0xff]
      %v12081 = vld [vmem:[%s10 + $0x70] sm:$0xff]
      %v12082 = vld [vmem:[%s10 + $0x78] sm:$0xff]
      %v12083 = vld [vmem:[%s11] sm:$0x1]
      %v12085 = vlaneseq
      %v12086 = vshrl.u32 %v12085, 7
      %v12087 = vsub.s32 0, %v12086
      %v12088 = vrot.slane %v12083, %v12087
      %12090 = vmatprep.subr.mxu0 0.0
      %12091 = vmatpush1.msra.mxu0 %v12067
      %12092 = vmatprep.subr.mxu0 0.0
      %12093 = vmatpush1.msra.mxu0 %v12068
      %12094 = vmatprep.subr.mxu0 0.0
      %12095 = vmatpush1.msra.mxu0 %v12069
      %12096 = vmatprep.subr.mxu0 0.0
      %12097 = vmatpush1.msra.mxu0 %v12070
      %12098 = vmatprep.subr.mxu0 0.0
      %12099 = vmatpush1.msra.mxu0 %v12071
      %12100 = vmatprep.subr.mxu0 0.0
      %12101 = vmatpush1.msra.mxu0 %v12072
      %12102 = vmatprep.subr.mxu0 0.0
      %12103 = vmatpush1.msra.mxu0 %v12073
      %12104 = vmatprep.subr.mxu0 0.0
      %12105 = vmatpush1.msra.mxu0 %v12074
      %12106 = vmatprep.subr.mxu0 0.0
      %12107 = vmatpush1.msra.mxu0 %v12075
      %12108 = vmatprep.subr.mxu0 0.0
      %12109 = vmatpush1.msra.mxu0 %v12076
      %12110 = vmatprep.subr.mxu0 0.0
      %12111 = vmatpush1.msra.mxu0 %v12077
      %12112 = vmatprep.subr.mxu0 0.0
      %12113 = vmatpush1.msra.mxu0 %v12078
      %12114 = vmatprep.subr.mxu0 0.0
      %12115 = vmatpush1.msra.mxu0 %v12079
      %12116 = vmatprep.subr.mxu0 0.0
      %12117 = vmatpush1.msra.mxu0 %v12080
      %12118 = vmatprep.subr.mxu0 0.0
      %12119 = vmatpush1.msra.mxu0 %v12081
      %12120 = vmatprep.subr.mxu0 0.0
      %12121 = vmatpush1.msra.mxu0 %v12082
      %12122 = vmatprep.subr.mxu0 0.0
      %12123 = vmatpush1.msra.mxu0 0.0
      %12124 = vmatprep.subr.mxu0 0.0
      %12125 = vmatpush1.msra.mxu0 0.0
      %12126 = vmatprep.subr.mxu0 0.0
      %12127 = vmatpush1.msra.mxu0 0.0
      %12128 = vmatprep.subr.mxu0 0.0
      %12129 = vmatpush1.msra.mxu0 0.0
      %12130 = vmatprep.subr.mxu0 0.0
      %12131 = vmatpush1.msra.mxu0 0.0
      %12132 = vmatprep.subr.mxu0 0.0
      %12133 = vmatpush1.msra.mxu0 0.0
      %12134 = vmatprep.subr.mxu0 0.0
      %12135 = vmatpush1.msra.mxu0 0.0
      %12136 = vmatprep.subr.mxu0 0.0
      %12137 = vmatpush1.msra.mxu0 0.0
      %12138 = vmatprep.subr.mxu0 0.0
      %12139 = vmatpush1.msra.mxu0 0.0
      %12140 = vmatprep.subr.mxu0 0.0
      %12141 = vmatpush1.msra.mxu0 0.0
      %12142 = vmatprep.subr.mxu0 0.0
      %12143 = vmatpush1.msra.mxu0 0.0
      %12144 = vmatprep.subr.mxu0 0.0
      %12145 = vmatpush1.msra.mxu0 0.0
      %12146 = vmatprep.subr.mxu0 0.0
      %12147 = vmatpush1.msra.mxu0 0.0
      %12148 = vmatprep.subr.mxu0 0.0
      %12149 = vmatpush1.msra.mxu0 0.0
      %12150 = vmatprep.subr.mxu0 0.0
      %12151 = vmatpush1.msra.mxu0 0.0
      %12152 = vmatprep.subr.mxu0 0.0
      %12153 = vmatpush1.msra.mxu0 0.0
      %12154 = vmatprep.mubr.f32.mxu0 0.0
      %12155 = vmatmul.mubr.f32.gmra.mrb[0].mxu0 %v12066
      %v12156 = vpop.f32.mrb[0].mxu0
      %v12157 = vadd.f32 %v12088, %v12156
      %v12158 = vpop.f32.mrb[0].mxu0
      %12159 = vdwg.mxu0
      %v12160 = vmax.f32 %v12157, 0.0
      %v12161 = vld [vmem:[%s12] sm:$0xff]
      %v12162 = vld [vmem:[%s12 + $0x8] sm:$0xff]
      %v12163 = vld [vmem:[%s12 + $0x10] sm:$0xff]
      %v12164 = vld [vmem:[%s12 + $0x18] sm:$0xff]
      %v12165 = vld [vmem:[%s12 + $0x20] sm:$0xff]
      %v12166 = vld [vmem:[%s12 + $0x28] sm:$0xff]
      %v12167 = vld [vmem:[%s12 + $0x30] sm:$0xff]
      %v12168 = vld [vmem:[%s12 + $0x38] sm:$0xff]
      %v12169 = vld [vmem:[%s12 + $0x40] sm:$0xff]
      %v12170 = vld [vmem:[%s12 + $0x48] sm:$0xff]
      %v12171 = vld [vmem:[%s12 + $0x50] sm:$0xff]
      %v12172 = vld [vmem:[%s12 + $0x58] sm:$0xff]
      %v12173 = vld [vmem:[%s12 + $0x60] sm:$0xff]
      %v12174 = vld [vmem:[%s12 + $0x68] sm:$0xff]
      %v12175 = vld [vmem:[%s12 + $0x70] sm:$0xff]
      %v12176 = vld [vmem:[%s12 + $0x78] sm:$0xff]
      %v12177 = vld [vmem:[%s13] sm:$0x1]
      %v12179 = vlaneseq
      %v12180 = vshrl.u32 %v12179, 7
      %v12181 = vsub.s32 0, %v12180
      %v12182 = vrot.slane %v12177, %v12181
      %12184 = vmatprep.subr.mxu0 0.0
      %12185 = vmatpush1.msra.mxu0 %v12161
      %12186 = vmatprep.subr.mxu0 0.0
      %12187 = vmatpush1.msra.mxu0 %v12162
      %12188 = vmatprep.subr.mxu0 0.0
      %12189 = vmatpush1.msra.mxu0 %v12163
      %12190 = vmatprep.subr.mxu0 0.0
      %12191 = vmatpush1.msra.mxu0 %v12164
      %12192 = vmatprep.subr.mxu0 0.0
      %12193 = vmatpush1.msra.mxu0 %v12165
      %12194 = vmatprep.subr.mxu0 0.0
      %12195 = vmatpush1.msra.mxu0 %v12166
      %12196 = vmatprep.subr.mxu0 0.0
      %12197 = vmatpush1.msra.mxu0 %v12167
      %12198 = vmatprep.subr.mxu0 0.0
      %12199 = vmatpush1.msra.mxu0 %v12168
      %12200 = vmatprep.subr.mxu0 0.0
      %12201 = vmatpush1.msra.mxu0 %v12169
      %12202 = vmatprep.subr.mxu0 0.0
      %12203 = vmatpush1.msra.mxu0 %v12170
      %12204 = vmatprep.subr.mxu0 0.0
      %12205 = vmatpush1.msra.mxu0 %v12171
      %12206 = vmatprep.subr.mxu0 0.0
      %12207 = vmatpush1.msra.mxu0 %v12172
      %12208 = vmatprep.subr.mxu0 0.0
      %12209 = vmatpush1.msra.mxu0 %v12173
      %12210 = vmatprep.subr.mxu0 0.0
      %12211 = vmatpush1.msra.mxu0 %v12174
      %12212 = vmatprep.subr.mxu0 0.0
      %12213 = vmatpush1.msra.mxu0 %v12175
      %12214 = vmatprep.subr.mxu0 0.0
      %12215 = vmatpush1.msra.mxu0 %v12176
      %12216 = vmatprep.subr.mxu0 0.0
      %12217 = vmatpush1.msra.mxu0 0.0
      %12218 = vmatprep.subr.mxu0 0.0
      %12219 = vmatpush1.msra.mxu0 0.0
      %12220 = vmatprep.subr.mxu0 0.0
      %12221 = vmatpush1.msra.mxu0 0.0
      %12222 = vmatprep.subr.mxu0 0.0
      %12223 = vmatpush1.msra.mxu0 0.0
      %12224 = vmatprep.subr.mxu0 0.0
      %12225 = vmatpush1.msra.mxu0 0.0
      %12226 = vmatprep.subr.mxu0 0.0
      %12227 = vmatpush1.msra.mxu0 0.0
      %12228 = vmatprep.subr.mxu0 0.0
      %12229 = vmatpush1.msra.mxu0 0.0
      %12230 = vmatprep.subr.mxu0 0.0
      %12231 = vmatpush1.msra.mxu0 0.0
      %12232 = vmatprep.subr.mxu0 0.0
      %12233 = vmatpush1.msra.mxu0 0.0
      %12234 = vmatprep.subr.mxu0 0.0
      %12235 = vmatpush1.msra.mxu0 0.0
      %12236 = vmatprep.subr.mxu0 0.0
      %12237 = vmatpush1.msra.mxu0 0.0
      %12238 = vmatprep.subr.mxu0 0.0
      %12239 = vmatpush1.msra.mxu0 0.0
      %12240 = vmatprep.subr.mxu0 0.0
      %12241 = vmatpush1.msra.mxu0 0.0
      %12242 = vmatprep.subr.mxu0 0.0
      %12243 = vmatpush1.msra.mxu0 0.0
      %12244 = vmatprep.subr.mxu0 0.0
      %12245 = vmatpush1.msra.mxu0 0.0
      %12246 = vmatprep.subr.mxu0 0.0
      %12247 = vmatpush1.msra.mxu0 0.0
      %12248 = vmatprep.mubr.f32.mxu0 0.0
      %12249 = vmatmul.mubr.f32.gmra.mrb[0].mxu0 %v12160
      %v12250 = vpop.f32.mrb[0].mxu0
      %v12251 = vadd.f32 %v12182, %v12250
      %v12252 = vpop.f32.mrb[0].mxu0
      %12253 = vdwg.mxu0
      %12254 = vst [vmem:[%s470] sm:$0xff] %v12251
      %p12255 = scmp.lt.s32.totalorder %s25, 1
      %s12256 = scalar_select %p12255, %s25, 1
      %s12257 = smul.addr %s12256, 8
      %s12258 = scalar_lea.vmem %s14, %s12257
      // Predicated region
      $region77: #{lenet_forward.1} parent=75 // pred_check
        %p12259 = pneg %p342
      $region78: #{lenet_forward.1} parent=75 // pred_check_branch
        %12261 = sbr.rel (%p12259) target = $region80
      $region79: #{lenet_forward.1} parent=75 // pred_region
        _
      $region80: #{lenet_forward.1} parent=75 // pred_fallthru
        _
    $region76: #{lenet_forward.1} parent=5 // pred_fallthru
      _
    %p12262 = scmp.le.s32.totalorder 2, %s20
    // Predicated region
    $region81: #{lenet_forward.1} parent=5 // pred_check
      %p12263 = pneg %p12262
    $region82: #{lenet_forward.1} parent=5 // pred_check_branch
      %12265 = sbr.rel (%p12263) target = $region84
    $region83: #{lenet_forward.1} parent=5 // pred_region
      %s12266 = ssub.s32 %s20, 2
      // Predicated region
      $region85: #{lenet_forward.1} parent=83 // pred_check
        %p12267 = pneg %p348
      $region86: #{lenet_forward.1} parent=83 // pred_check_branch
        %12269 = sbr.rel (%p12267) target = $region88
      $region87: #{lenet_forward.1} parent=83 // pred_region
        %p12270 = scmp.lt.s32.totalorder %s26, 1
        %s12271 = scalar_select %p12270, %s26, 1
        %s12272 = smul.addr %s12271, 8
        %s12273 = scalar_lea.vmem %s14, %s12272
      $region88: #{lenet_forward.1} parent=83 // pred_fallthru
        _
    $region84: #{lenet_forward.1} parent=5 // pred_fallthru
      _
  $region6: #{lenet_forward.1} parent=0 // loop_footer
    %s24 = sadd.s32 1, %s20
  $region7: #{lenet_forward.1} parent=0 // loop_footer_branch
    %19 = sbr.rel target = $region3
  $region8: #{lenet_forward.1} parent=0 // loop_exit
    _

</llo_original>
